<compile_context>
chip_gen: v7x
topology: tpu7x:2x2x1
jax: 0.10.0
libtpu: 0.0.40
codegen_flags: <defaults>
</compile_context>

<pallas_src>
import functools

import jax
import jax.numpy as jnp
import numpy as np
from jax import lax
from jax.experimental import pallas as pl
from jax.experimental.pallas import tpu as pltpu

_BF16 = jnp.bfloat16
_F32 = jnp.float32
# Stand-in for -inf padding of the max pools.  Every SiLU output is > -0.279,
# so this never wins a max; keeping it finite means no inf/NaN ever reaches
# the MXU (garbage columns are sliced away at the module boundary).
_NEG = -1.0e30


def _round_up(x, m):
    return (x + m - 1) // m * m


# ---------------------------------------------------------------------------
# Circular row rotation: pltpu.roll (XLU) with a convention probe; safe
# concatenate-based fallback if roll is unavailable on this JAX/Mosaic build.
# ---------------------------------------------------------------------------
_ROTATE_MODE = ["concat"]          # "roll" | "roll_flipped" | "concat"
_ROTATE_PROBED = [False]


def _ensure_rotate_backend():
    if _ROTATE_PROBED[0]:
        return
    _ROTATE_PROBED[0] = True
    try:
        def kern(x_ref, o_ref):
            o_ref[...] = pltpu.roll(x_ref[...], 1, axis=0)

        x = jnp.arange(8 * 128, dtype=_F32).reshape(8, 128)
        got = np.asarray(
            pl.pallas_call(kern,
                           out_shape=jax.ShapeDtypeStruct((8, 128), _F32))(x))
        if np.array_equal(got, np.roll(np.asarray(x), 1, axis=0)):
            _ROTATE_MODE[0] = "roll"
        elif np.array_equal(got, np.roll(np.asarray(x), -1, axis=0)):
            _ROTATE_MODE[0] = "roll_flipped"
    except Exception:
        pass                        # keep the safe concatenate-based rotation


def _rotate_rows(x, k):
    """Circular shift along axis 0: out[r] = x[(r - k) % m]."""
    m = x.shape[0]
    k = k % m
    if k == 0:
        return x
    mode = _ROTATE_MODE[0]
    if mode == "roll":
        return pltpu.roll(x, k, axis=0)
    if mode == "roll_flipped":
        return pltpu.roll(x, m - k, axis=0)
    return jnp.concatenate([x[m - k:], x[:m - k]], axis=0)


# ---------------------------------------------------------------------------
# Separable 5-tap max helpers on the flattened (rows*wp, C) layout.
# ---------------------------------------------------------------------------
def _hmax5(x, col, wp, w_valid):
    """5-tap max along W.  `col` = per-row column index, shape (rows*wp, 1).

    Columns >= w_valid and positions outside [0, w_valid) act like the -inf
    padding of MaxPool2d(kernel=5, stride=1, padding=2)."""
    neg = jnp.asarray(_NEG, x.dtype)
    if w_valid < wp:
        x = jnp.where(col < w_valid, x, neg)
    out = x
    for d in (1, 2):
        lo = jnp.where(col >= d, _rotate_rows(x, d), neg)        # x[.., w-d, :]
        hi = jnp.where(col < wp - d, _rotate_rows(x, -d), neg)   # x[.., w+d, :]
        out = jnp.maximum(out, jnp.maximum(lo, hi))
    return out


def _vmax5(x, row, wp):
    """5-tap max along H of a row-major (h*wp, C) flattened image."""
    neg = jnp.asarray(_NEG, x.dtype)
    m = x.shape[0]
    out = x
    for d in (1, 2):
        up = jnp.where(row >= d * wp, _rotate_rows(x, d * wp), neg)       # h-d
        dn = jnp.where(row < m - d * wp, _rotate_rows(x, -d * wp), neg)   # h+d
        out = jnp.maximum(out, jnp.maximum(up, dn))
    return out


# ---------------------------------------------------------------------------
# Shared matmul (1x1 conv) helpers — bf16 into the MXU, f32 epilogue.
# ---------------------------------------------------------------------------
def _conv_bn_silu(x2d, w, s, b):
    y = jnp.dot(x2d, w, preferred_element_type=_F32)
    y = y * s + b                                   # folded BatchNorm (eval)
    return y * jax.nn.sigmoid(y)                    # SiLU


def _cv2(branches, w2, s2, b2, c_):
    """cv2 over the 4 concatenated branches (each f32 (m, c_))."""
    if c_ % 128 == 0:
        # Single (m, 4c_) x (4c_, c2) dot: K-accumulation stays in the MXU.
        cat = jnp.concatenate([t.astype(_BF16) for t in branches], axis=1)
        z = jnp.dot(cat, w2, preferred_element_type=_F32)
    else:
        # Lane-unaligned c_ (tiny test shapes): 4 accumulating dots.
        z = None
        for k, t in enumerate(branches):
            part = jnp.dot(t.astype(_BF16), w2[k * c_:(k + 1) * c_],
                           preferred_element_type=_F32)
            z = part if z is None else z + part
    z = z * s2 + b2
    return z * jax.nn.sigmoid(z)


# ---------------------------------------------------------------------------
# Fused kernel: cv1 + 3 x (5x5 max pool) + cv2, one batch image per grid step.
# ---------------------------------------------------------------------------
def _sppf_fused_kernel(col_ref, x_ref, w1_ref, s1_ref, b1_ref,
                       w2_ref, s2_ref, b2_ref, o_ref, *, w_valid):
    h, wp, c1 = x_ref.shape
    c_ = w1_ref.shape[1]
    c2 = o_ref.shape[-1]
    m = h * wp

    col = col_ref[...]                                       # (m, 1) int32
    row = lax.broadcasted_iota(jnp.int32, (m, 1), 0)         # flat row index

    x1 = _conv_bn_silu(x_ref[...].reshape(m, c1), w1_ref[...],
                       s1_ref[...], b1_ref[...])             # (m, c_) f32

    def pool5(t):                                            # one 5x5 max pool
        return _vmax5(_hmax5(t, col, wp, w_valid), row, wp)

    y1 = pool5(x1)
    y2 = pool5(y1)
    y3 = pool5(y2)

    out = _cv2((x1, y1, y2, y3), w2_ref[...], s2_ref[...], b2_ref[...], c_)
    o_ref[...] = out.reshape(h, wp, c2).astype(o_ref.dtype)


# ---------------------------------------------------------------------------
# Fallback split path (very large spatial extents only): kernel A tiles H,
# kernel B tiles W; intermediates are bf16 to halve the HBM round trip.
# ---------------------------------------------------------------------------
def _cv1_hpool_kernel(col_ref, x_ref, w1_ref, s1_ref, b1_ref,
                      x1_ref, h1_ref, h2_ref, h3_ref, *, w_valid):
    th, wp, c1 = x_ref.shape
    c_ = w1_ref.shape[1]
    m = th * wp
    col = col_ref[...]

    x1 = _conv_bn_silu(x_ref[...].reshape(m, c1), w1_ref[...],
                       s1_ref[...], b1_ref[...])
    h1 = _hmax5(x1, col, wp, w_valid)
    h2 = _hmax5(h1, col, wp, w_valid)
    h3 = _hmax5(h2, col, wp, w_valid)

    x1_ref[...] = x1.reshape(th, wp, c_).astype(x1_ref.dtype)
    h1_ref[...] = h1.reshape(th, wp, c_).astype(h1_ref.dtype)
    h2_ref[...] = h2.reshape(th, wp, c_).astype(h2_ref.dtype)
    h3_ref[...] = h3.reshape(th, wp, c_).astype(h3_ref.dtype)


def _vpool_cv2_kernel(x1_ref, h1_ref, h2_ref, h3_ref,
                      w2_ref, s2_ref, b2_ref, o_ref):
    h, tw, c_ = x1_ref.shape
    c2 = o_ref.shape[-1]
    m = h * tw
    row = lax.broadcasted_iota(jnp.int32, (m, 1), 0)

    def vchain(ref, times):
        t = ref[...].astype(_F32).reshape(m, c_)
        for _ in range(times):
            t = _vmax5(t, row, tw)
        return t

    x1 = vchain(x1_ref, 0)
    y1 = vchain(h1_ref, 1)       # P   = V   . Hz
    y2 = vchain(h2_ref, 2)       # P^2 = V^2 . Hz^2   (separable passes commute)
    y3 = vchain(h3_ref, 3)       # P^3 = V^3 . Hz^3

    out = _cv2((x1, y1, y2, y3), w2_ref[...], s2_ref[...], b2_ref[...], c_)
    o_ref[...] = out.reshape(h, tw, c2).astype(o_ref.dtype)


# ---------------------------------------------------------------------------
# VMEM budgeting (generation aware) and tile selection.
# ---------------------------------------------------------------------------
def _vmem_limit_bytes():
    cap = 64 * 1024 * 1024                        # conservative (v7x-sized)
    try:
        info = pltpu.get_tpu_info()
        cap = int(getattr(info, "vmem_capacity_bytes", cap) or cap)
    except Exception:
        pass
    return int(max(32 * 1024 * 1024, min(3 * cap // 4, cap - 16 * 1024 * 1024)))


def _fused_bytes(h, wp, c1, c_, c2):
    m = h * wp
    io = 2 * m * c1 * 2 + 2 * m * c2 * 4          # dbl-buffered x(bf16)/out(f32)
    wts = 2 * (c1 * c_ + 4 * c_ * c2) * 2         # dbl-buffered bf16 weights
    tmp = m * 4 * (7 * c_ + 2 * c2) + m * 2 * 4 * c_
    return io + wts + tmp + 4 * m + (2 << 20)


def _splitA_bytes(th, wp, c1, c_):
    m = th * wp
    io = 2 * m * c1 * 2 + 2 * 4 * m * c_ * 2
    return io + 2 * c1 * c_ * 2 + m * 4 * 6 * c_ + 4 * m + (2 << 20)


def _splitB_bytes(tw, h, c_, c2):
    m = h * tw
    io = 2 * 4 * m * c_ * 2 + 2 * m * c2 * 4
    return io + 2 * 4 * c_ * c2 * 2 + m * 4 * (6 * c_ + 2 * c2) + (2 << 20)


def _pick_tile(full, fits, step=8):
    if fits(full):
        return int(full)
    best = min(step, full)
    t = step
    while t < full:
        if fits(t):
            best = t
        t += step
    return int(best)


def _col_ids(rows, wp):
    return jnp.asarray(np.tile(np.arange(wp, dtype=np.int32), rows)[:, None])


# ---------------------------------------------------------------------------
# pallas_call wrappers
# ---------------------------------------------------------------------------
def _call_fused(x, w1, s1, b1, w2, s2, b2, *, w_valid, out_dtype, vmem_limit):
    n, h, wp, c1 = x.shape
    c_ = w1.shape[1]
    c2 = w2.shape[1]
    kern = functools.partial(_sppf_fused_kernel, w_valid=w_valid)
    return pl.pallas_call(
        kern,
        out_shape=jax.ShapeDtypeStruct((n, h, wp, c2), out_dtype),
        grid=(n,),
        in_specs=[
            pl.BlockSpec((h * wp, 1), lambda i: (0, 0)),
            pl.BlockSpec((None, h, wp, c1), lambda i: (i, 0, 0, 0)),
            pl.BlockSpec((c1, c_), lambda i: (0, 0)),
            pl.BlockSpec((1, c_), lambda i: (0, 0)),
            pl.BlockSpec((1, c_), lambda i: (0, 0)),
            pl.BlockSpec((4 * c_, c2), lambda i: (0, 0)),
            pl.BlockSpec((1, c2), lambda i: (0, 0)),
            pl.BlockSpec((1, c2), lambda i: (0, 0)),
        ],
        out_specs=pl.BlockSpec((None, h, wp, c2), lambda i: (i, 0, 0, 0)),
        compiler_params=pltpu.CompilerParams(
            dimension_semantics=("parallel",),
            vmem_limit_bytes=vmem_limit),
    )(_col_ids(h, wp), x, w1, s1, b1, w2, s2, b2)


def _call_split(x, w1, s1, b1, w2, s2, b2, *, w_valid, out_dtype, vmem_limit,
                budget):
    n, h, wp, c1 = x.shape
    c_ = w1.shape[1]
    c2 = w2.shape[1]

    # Kernel A: cv1 + three horizontal 5-max passes, tiled over H (no halo).
    th = _pick_tile(h, lambda t: _splitA_bytes(t, wp, c1, c_) <= budget)
    feat = jax.ShapeDtypeStruct((n, h, wp, c_), _BF16)   # bf16 intermediates
    feat_spec = pl.BlockSpec((None, th, wp, c_), lambda i, t: (i, t, 0, 0))
    ka = functools.partial(_cv1_hpool_kernel, w_valid=w_valid)
    x1, h1, h2, h3 = pl.pallas_call(
        ka,
        out_shape=(feat, feat, feat, feat),
        grid=(n, pl.cdiv(h, th)),
        in_specs=[
            pl.BlockSpec((th * wp, 1), lambda i, t: (0, 0)),
            pl.BlockSpec((None, th, wp, c1), lambda i, t: (i, t, 0, 0)),
            pl.BlockSpec((c1, c_), lambda i, t: (0, 0)),
            pl.BlockSpec((1, c_), lambda i, t: (0, 0)),
            pl.BlockSpec((1, c_), lambda i, t: (0, 0)),
        ],
        out_specs=[feat_spec] * 4,
        compiler_params=pltpu.CompilerParams(
            dimension_semantics=("parallel", "parallel"),
            vmem_limit_bytes=vmem_limit),
    )(_col_ids(th, wp), x, w1, s1, b1)

    # Kernel B: three vertical 5-max chains + cv2, tiled over W (no halo).
    tw = _pick_tile(wp, lambda t: _splitB_bytes(t, h, c_, c2) <= budget)
    in_spec = pl.BlockSpec((None, h, tw, c_), lambda i, j: (i, 0, j, 0))
    return pl.pallas_call(
        _vpool_cv2_kernel,
        out_shape=jax.ShapeDtypeStruct((n, h, wp, c2), out_dtype),
        grid=(n, pl.cdiv(wp, tw)),
        in_specs=[
            in_spec, in_spec, in_spec, in_spec,
            pl.BlockSpec((4 * c_, c2), lambda i, j: (0, 0)),
            pl.BlockSpec((1, c2), lambda i, j: (0, 0)),
            pl.BlockSpec((1, c2), lambda i, j: (0, 0)),
        ],
        out_specs=pl.BlockSpec((None, h, tw, c2), lambda i, j: (i, 0, j, 0)),
        compiler_params=pltpu.CompilerParams(
            dimension_semantics=("parallel", "parallel"),
            vmem_limit_bytes=vmem_limit),
    )(x1, h1, h2, h3, w2, s2, b2)


# ---------------------------------------------------------------------------
# Module forward
# ---------------------------------------------------------------------------
def sppf_forward(x_nchw, params, *, force_split=False):
    """SPPF forward (eval-mode BatchNorm folded into per-channel scale/bias)."""
    _ensure_rotate_backend()

    n, c1, h, w = x_nchw.shape
    c_ = params["w1"].shape[1]
    c2 = params["w2"].shape[1]
    out_dtype = x_nchw.dtype

    # TODO(synk): the NCHW<->NHWC transposes exist only for PyTorch interface
    # parity; drop them if the surrounding model is kept NHWC.
    x = jnp.transpose(x_nchw, (0, 2, 3, 1)).astype(_BF16)
    wp = _round_up(w, 8)                 # layout-friendly W (reshapes stay free)
    if wp != w:
        x = jnp.pad(x, ((0, 0), (0, 0), (0, wp - w), (0, 0)))

    w1 = params["w1"].astype(_BF16)
    w2 = params["w2"].astype(_BF16)
    s1, b1, s2, b2 = params["s1"], params["b1"], params["s2"], params["b2"]

    vmem_limit = _vmem_limit_bytes()
    budget = int(vmem_limit * 0.85)

    if not force_split and _fused_bytes(h, wp, c1, c_, c2) <= budget:
        out = _call_fused(x, w1, s1, b1, w2, s2, b2, w_valid=w,
                          out_dtype=out_dtype, vmem_limit=vmem_limit)
    else:
        out = _call_split(x, w1, s1, b1, w2, s2, b2, w_valid=w,
                          out_dtype=out_dtype, vmem_limit=vmem_limit,
                          budget=budget)

    if wp != w:
        out = out[:, :, :w, :]
    return jnp.transpose(out, (0, 3, 1, 2))


# ---------------------------------------------------------------------------
# Parameters (deterministic, synthetic) + pure-JAX f32 reference
# ---------------------------------------------------------------------------
def _fold_bn(gamma, beta, mean, var, eps=1e-5):
    scale = gamma / jnp.sqrt(var + eps)
    return scale, beta - mean * scale


def init_sppf_params(key, c1, c2):
    c_ = c1 // 2
    k1, k2, k3, k4 = jax.random.split(key, 4)
    w1 = 0.1 * jax.random.normal(k1, (c1, c_), _F32)
    w2 = 0.1 * jax.random.normal(k2, (4 * c_, c2), _F32)
    g1 = 1.0 + 0.1 * jax.random.normal(k3, (c_,), _F32)
    beta1 = 0.05 * jnp.arange(c_, dtype=_F32)
    m1 = 0.01 * jnp.arange(c_, dtype=_F32)
    v1 = 0.9 * jnp.ones((c_,), _F32)
    g2 = 1.0 + 0.1 * jax.random.normal(k4, (c2,), _F32)
    beta2 = -0.05 * jnp.arange(c2, dtype=_F32)
    m2 = 0.02 * jnp.arange(c2, dtype=_F32)
    v2 = 1.1 * jnp.ones((c2,), _F32)
    s1, b1 = _fold_bn(g1, beta1, m1, v1)
    s2, b2 = _fold_bn(g2, beta2, m2, v2)
    return dict(w1=w1, s1=s1.reshape(1, -1), b1=b1.reshape(1, -1),
                w2=w2, s2=s2.reshape(1, -1), b2=b2.reshape(1, -1))


def _ref_maxpool5(x):
    return lax.reduce_window(x, -jnp.inf, lax.max, (1, 5, 5, 1), (1, 1, 1, 1),
                             [(0, 0), (2, 2), (2, 2), (0, 0)])


def _ref_sppf(x_nchw, params):
    x = jnp.transpose(x_nchw, (0, 2, 3, 1)).astype(_F32)

    def pw(t, w, s, b):
        y = jnp.einsum("nhwc,cd->nhwd", t, w)
        y = y * s.reshape(1, 1, 1, -1) + b.reshape(1, 1, 1, -1)
        return y * jax.nn.sigmoid(y)

    x1 = pw(x, params["w1"], params["s1"], params["b1"])
    y1 = _ref_maxpool5(x1)
    y2 = _ref_maxpool5(y1)
    y3 = _ref_maxpool5(y2)
    out = pw(jnp.concatenate([x1, y1, y2, y3], -1),
             params["w2"], params["s2"], params["b2"])
    return jnp.transpose(out, (0, 3, 1, 2))


if __name__ == "__main__":
    key = jax.random.PRNGKey(0)

    # (N, C1, H, W, C2): a base case and a case exercising W-padding / masking.
    for shape_i, (n, c1, h, w, c2) in enumerate([(2, 4, 16, 16, 8),
                                                 (1, 8, 12, 10, 6)]):
        kx, kp = jax.random.split(jax.random.fold_in(key, shape_i))
        x = jax.random.normal(kx, (n, c1, h, w), _F32)
        params = init_sppf_params(kp, c1, c2)
        ref = np.asarray(jax.block_until_ready(_ref_sppf(x, params)))

        for force_split in (False, True):     # fused kernel and split fallback
            out = jax.block_until_ready(
                sppf_forward(x, params, force_split=force_split))
            assert out.shape == (n, c2, h, w), out.shape
            # bf16 MXU operands vs. an f32 end-to-end reference.
            np.testing.assert_allclose(np.asarray(out), ref,
                                       atol=5e-2, rtol=5e-2)

    print("KERNEL_OK")
</pallas_src>

<mosaic_0001>
module attributes {stable_mosaic.version = 11 : i64} {
  func.func @kern(%arg0: memref<8x128xf32, #tpu.memory_space<vmem>>, %arg1: memref<8x128xf32, #tpu.memory_space<vmem>>) attributes {dimension_semantics = [], scalar_prefetch = 0 : i64, scratch_operands = 0 : i64, tpu.core_type = #tpu.core_type<tc>} {
    %c0 = arith.constant 0 : index
    %c0_0 = arith.constant 0 : index
    %0 = vector.load %arg0[%c0, %c0_0] : memref<8x128xf32, #tpu.memory_space<vmem>>, vector<8x128xf32>
    %c1_i32 = arith.constant 1 : i32
    %1 = tpu.dynamic_rotate %0 by %c1_i32 dim 0 : vector<8x128xf32>, i32 -> vector<8x128xf32>
    %c0_1 = arith.constant 0 : index
    %c0_2 = arith.constant 0 : index
    %2 = vector.load %arg1[%c0_1, %c0_2] : memref<8x128xf32, #tpu.memory_space<vmem>>, vector<8x128xf32>
    tpu.vector_store %arg1[%c0_1, %c0_2], %1 {strides = array<i32>} : memref<8x128xf32, #tpu.memory_space<vmem>>, vector<8x128xf32>,
    return
  }
}

module attributes {stable_mosaic.version = 11 : i64} {
  func.func @_sppf_fused_kernel(%arg0: i32, %arg1: memref<256x1xi32, #tpu.memory_space<vmem>>, %arg2: memref<1x16x16x4xbf16, #tpu.memory_space<vmem>>, %arg3: memref<4x2xbf16, #tpu.memory_space<vmem>>, %arg4: memref<1x2xf32, #tpu.memory_space<vmem>>, %arg5: memref<1x2xf32, #tpu.memory_space<vmem>>, %arg6: memref<8x8xbf16, #tpu.memory_space<vmem>>, %arg7: memref<1x8xf32, #tpu.memory_space<vmem>>, %arg8: memref<1x8xf32, #tpu.memory_space<vmem>>, %arg9: memref<1x16x16x8xf32, #tpu.memory_space<vmem>>) attributes {dimension_semantics = [#tpu.dimension_semantics<parallel>], iteration_bounds = array<i64: 2>, scalar_prefetch = 0 : i64, scratch_operands = 0 : i64, tpu.core_type = #tpu.core_type<tc>, window_params = [{pipeline_mode = #tpu.pipeline_mode<synchronous>, transform_indices = @transform_0, window_bounds = array<i64: 256, 1>}, {transform_indices = @transform_1, window_bounds = array<i64: 1, 16, 16, 4>}, {pipeline_mode = #tpu.pipeline_mode<synchronous>, transform_indices = @transform_2, window_bounds = array<i64: 4, 2>}, {pipeline_mode = #tpu.pipeline_mode<synchronous>, transform_indices = @transform_3, window_bounds = array<i64: 1, 2>}, {pipeline_mode = #tpu.pipeline_mode<synchronous>, transform_indices = @transform_4, window_bounds = array<i64: 1, 2>}, {pipeline_mode = #tpu.pipeline_mode<synchronous>, transform_indices = @transform_5, window_bounds = array<i64: 8, 8>}, {pipeline_mode = #tpu.pipeline_mode<synchronous>, transform_indices = @transform_6, window_bounds = array<i64: 1, 8>}, {pipeline_mode = #tpu.pipeline_mode<synchronous>, transform_indices = @transform_7, window_bounds = array<i64: 1, 8>}, {transform_indices = @transform_8, window_bounds = array<i64: 1, 16, 16, 8>}]} {
    %c0 = arith.constant 0 : index
    %c0_0 = arith.constant 0 : index
    %0 = vector.load %arg1[%c0, %c0_0] : memref<256x1xi32, #tpu.memory_space<vmem>>, vector<256x1xi32>
    %1 = tpu.iota {dimensions = array<i32: 0>} : vector<256x1xi32>
    %c0_1 = arith.constant 0 : index
    %c0_2 = arith.constant 0 : index
    %c0_3 = arith.constant 0 : index
    %c0_4 = arith.constant 0 : index
    %2 = vector.load %arg2[%c0_1, %c0_2, %c0_3, %c0_4] : memref<1x16x16x4xbf16, #tpu.memory_space<vmem>>, vector<1x16x16x4xbf16>
    %3 = vector.shape_cast %2 : vector<1x16x16x4xbf16> to vector<16x16x4xbf16>
    %4 = vector.shape_cast %3 : vector<16x16x4xbf16> to vector<256x4xbf16>
    %c0_5 = arith.constant 0 : index
    %c0_6 = arith.constant 0 : index
    %5 = vector.load %arg3[%c0_5, %c0_6] : memref<4x2xbf16, #tpu.memory_space<vmem>>, vector<4x2xbf16>
    %c0_7 = arith.constant 0 : index
    %c0_8 = arith.constant 0 : index
    %6 = vector.load %arg4[%c0_7, %c0_8] : memref<1x2xf32, #tpu.memory_space<vmem>>, vector<1x2xf32>
    %c0_9 = arith.constant 0 : index
    %c0_10 = arith.constant 0 : index
    %7 = vector.load %arg5[%c0_9, %c0_10] : memref<1x2xf32, #tpu.memory_space<vmem>>, vector<1x2xf32>
    %cst = arith.constant dense<0.000000e+00> : vector<256x2xf32>
    %8 = tpu.matmul %4, %5, %cst {dimension_numbers = #tpu.dot_dimension_numbers<[1], [0], [0], [1], [0, 0, 1, 1], [], []>} : vector<256x4xbf16>, vector<4x2xbf16>, vector<256x2xf32> -> vector<256x2xf32>
    %9 = vector.broadcast %6 : vector<1x2xf32> to vector<256x2xf32>
    %10 = arith.mulf %8, %9 : vector<256x2xf32>
    %11 = vector.broadcast %7 : vector<1x2xf32> to vector<256x2xf32>
    %12 = arith.addf %10, %11 : vector<256x2xf32>
    %13 = arith.negf %12 : vector<256x2xf32>
    %14 = math.exp %13 : vector<256x2xf32>
    %cst_11 = arith.constant 1.000000e+00 : f32
    %15 = vector.broadcast %cst_11 : f32 to vector<256x2xf32>
    %16 = arith.addf %15, %14 : vector<256x2xf32>
    %17 = arith.divf %15, %16 : vector<256x2xf32>
    %18 = arith.mulf %12, %17 : vector<256x2xf32>
    %c1_i32 = arith.constant 1 : i32
    %19 = vector.broadcast %c1_i32 : i32 to vector<256x1xi32>
    %20 = arith.cmpi sge, %0, %19 : vector<256x1xi32>
    %21 = vector.extract_strided_slice %18 {offsets = [255, 0], sizes = [1, 2], strides = [1, 1]} : vector<256x2xf32> to vector<1x2xf32>
    %22 = vector.extract_strided_slice %18 {offsets = [0, 0], sizes = [255, 2], strides = [1, 1]} : vector<256x2xf32> to vector<255x2xf32>
    %23 = tpu.concatenate %21, %22 in 0 : vector<1x2xf32>, vector<255x2xf32> -> vector<256x2xf32>
    %cst_12 = arith.constant -1.000000e+30 : f32
    %24 = vector.shape_cast %20 : vector<256x1xi1> to vector<256x1xi1>
    %25 = vector.broadcast %24 : vector<256x1xi1> to vector<256x2xi1>
    %26 = vector.broadcast %cst_12 : f32 to vector<256x2xf32>
    %27 = arith.select %25, %23, %26 : vector<256x2xi1>, vector<256x2xf32>
    %c15_i32 = arith.constant 15 : i32
    %28 = vector.broadcast %c15_i32 : i32 to vector<256x1xi32>
    %29 = arith.cmpi slt, %0, %28 : vector<256x1xi32>
    %30 = vector.extract_strided_slice %18 {offsets = [1, 0], sizes = [255, 2], strides = [1, 1]} : vector<256x2xf32> to vector<255x2xf32>
    %31 = vector.extract_strided_slice %18 {offsets = [0, 0], sizes = [1, 2], strides = [1, 1]} : vector<256x2xf32> to vector<1x2xf32>
    %32 = tpu.concatenate %30, %31 in 0 : vector<255x2xf32>, vector<1x2xf32> -> vector<256x2xf32>
    %cst_13 = arith.constant -1.000000e+30 : f32
    %33 = vector.shape_cast %29 : vector<256x1xi1> to vector<256x1xi1>
    %34 = vector.broadcast %33 : vector<256x1xi1> to vector<256x2xi1>
    %35 = vector.broadcast %cst_13 : f32 to vector<256x2xf32>
    %36 = arith.select %34, %32, %35 : vector<256x2xi1>, vector<256x2xf32>
    %37 = arith.maximumf %27, %36 : vector<256x2xf32>
    %38 = arith.maximumf %18, %37 : vector<256x2xf32>
    %c2_i32 = arith.constant 2 : i32
    %39 = vector.broadcast %c2_i32 : i32 to vector<256x1xi32>
    %40 = arith.cmpi sge, %0, %39 : vector<256x1xi32>
    %41 = vector.extract_strided_slice %18 {offsets = [254, 0], sizes = [2, 2], strides = [1, 1]} : vector<256x2xf32> to vector<2x2xf32>
    %42 = vector.extract_strided_slice %18 {offsets = [0, 0], sizes = [254, 2], strides = [1, 1]} : vector<256x2xf32> to vector<254x2xf32>
    %43 = tpu.concatenate %41, %42 in 0 : vector<2x2xf32>, vector<254x2xf32> -> vector<256x2xf32>
    %cst_14 = arith.constant -1.000000e+30 : f32
    %44 = vector.shape_cast %40 : vector<256x1xi1> to vector<256x1xi1>
    %45 = vector.broadcast %44 : vector<256x1xi1> to vector<256x2xi1>
    %46 = vector.broadcast %cst_14 : f32 to vector<256x2xf32>
    %47 = arith.select %45, %43, %46 : vector<256x2xi1>, vector<256x2xf32>
    %c14_i32 = arith.constant 14 : i32
    %48 = vector.broadcast %c14_i32 : i32 to vector<256x1xi32>
    %49 = arith.cmpi slt, %0, %48 : vector<256x1xi32>
    %50 = vector.extract_strided_slice %18 {offsets = [2, 0], sizes = [254, 2], strides = [1, 1]} : vector<256x2xf32> to vector<254x2xf32>
    %51 = vector.extract_strided_slice %18 {offsets = [0, 0], sizes = [2, 2], strides = [1, 1]} : vector<256x2xf32> to vector<2x2xf32>
    %52 = tpu.concatenate %50, %51 in 0 : vector<254x2xf32>, vector<2x2xf32> -> vector<256x2xf32>
    %cst_15 = arith.constant -1.000000e+30 : f32
    %53 = vector.shape_cast %49 : vector<256x1xi1> to vector<256x1xi1>
    %54 = vector.broadcast %53 : vector<256x1xi1> to vector<256x2xi1>
    %55 = vector.broadcast %cst_15 : f32 to vector<256x2xf32>
    %56 = arith.select %54, %52, %55 : vector<256x2xi1>, vector<256x2xf32>
    %57 = arith.maximumf %47, %56 : vector<256x2xf32>
    %58 = arith.maximumf %38, %57 : vector<256x2xf32>
    %c16_i32 = arith.constant 16 : i32
    %59 = vector.broadcast %c16_i32 : i32 to vector<256x1xi32>
    %60 = arith.cmpi sge, %1, %59 : vector<256x1xi32>
    %61 = vector.extract_strided_slice %58 {offsets = [240, 0], sizes = [16, 2], strides = [1, 1]} : vector<256x2xf32> to vector<16x2xf32>
    %62 = vector.extract_strided_slice %58 {offsets = [0, 0], sizes = [240, 2], strides = [1, 1]} : vector<256x2xf32> to vector<240x2xf32>
    %63 = tpu.concatenate %61, %62 in 0 : vector<16x2xf32>, vector<240x2xf32> -> vector<256x2xf32>
    %cst_16 = arith.constant -1.000000e+30 : f32
    %64 = vector.shape_cast %60 : vector<256x1xi1> to vector<256x1xi1>
    %65 = vector.broadcast %64 : vector<256x1xi1> to vector<256x2xi1>
    %66 = vector.broadcast %cst_16 : f32 to vector<256x2xf32>
    %67 = arith.select %65, %63, %66 : vector<256x2xi1>, vector<256x2xf32>
    %c240_i32 = arith.constant 240 : i32
    %68 = vector.broadcast %c240_i32 : i32 to vector<256x1xi32>
    %69 = arith.cmpi slt, %1, %68 : vector<256x1xi32>
    %70 = vector.extract_strided_slice %58 {offsets = [16, 0], sizes = [240, 2], strides = [1, 1]} : vector<256x2xf32> to vector<240x2xf32>
    %71 = vector.extract_strided_slice %58 {offsets = [0, 0], sizes = [16, 2], strides = [1, 1]} : vector<256x2xf32> to vector<16x2xf32>
    %72 = tpu.concatenate %70, %71 in 0 : vector<240x2xf32>, vector<16x2xf32> -> vector<256x2xf32>
    %cst_17 = arith.constant -1.000000e+30 : f32
    %73 = vector.shape_cast %69 : vector<256x1xi1> to vector<256x1xi1>
    %74 = vector.broadcast %73 : vector<256x1xi1> to vector<256x2xi1>
    %75 = vector.broadcast %cst_17 : f32 to vector<256x2xf32>
    %76 = arith.select %74, %72, %75 : vector<256x2xi1>, vector<256x2xf32>
    %77 = arith.maximumf %67, %76 : vector<256x2xf32>
    %78 = arith.maximumf %58, %77 : vector<256x2xf32>
    %c32_i32 = arith.constant 32 : i32
    %79 = vector.broadcast %c32_i32 : i32 to vector<256x1xi32>
    %80 = arith.cmpi sge, %1, %79 : vector<256x1xi32>
    %81 = vector.extract_strided_slice %58 {offsets = [224, 0], sizes = [32, 2], strides = [1, 1]} : vector<256x2xf32> to vector<32x2xf32>
    %82 = vector.extract_strided_slice %58 {offsets = [0, 0], sizes = [224, 2], strides = [1, 1]} : vector<256x2xf32> to vector<224x2xf32>
    %83 = tpu.concatenate %81, %82 in 0 : vector<32x2xf32>, vector<224x2xf32> -> vector<256x2xf32>
    %cst_18 = arith.constant -1.000000e+30 : f32
    %84 = vector.shape_cast %80 : vector<256x1xi1> to vector<256x1xi1>
    %85 = vector.broadcast %84 : vector<256x1xi1> to vector<256x2xi1>
    %86 = vector.broadcast %cst_18 : f32 to vector<256x2xf32>
    %87 = arith.select %85, %83, %86 : vector<256x2xi1>, vector<256x2xf32>
    %c224_i32 = arith.constant 224 : i32
    %88 = vector.broadcast %c224_i32 : i32 to vector<256x1xi32>
    %89 = arith.cmpi slt, %1, %88 : vector<256x1xi32>
    %90 = vector.extract_strided_slice %58 {offsets = [32, 0], sizes = [224, 2], strides = [1, 1]} : vector<256x2xf32> to vector<224x2xf32>
    %91 = vector.extract_strided_slice %58 {offsets = [0, 0], sizes = [32, 2], strides = [1, 1]} : vector<256x2xf32> to vector<32x2xf32>
    %92 = tpu.concatenate %90, %91 in 0 : vector<224x2xf32>, vector<32x2xf32> -> vector<256x2xf32>
    %cst_19 = arith.constant -1.000000e+30 : f32
    %93 = vector.shape_cast %89 : vector<256x1xi1> to vector<256x1xi1>
    %94 = vector.broadcast %93 : vector<256x1xi1> to vector<256x2xi1>
    %95 = vector.broadcast %cst_19 : f32 to vector<256x2xf32>
    %96 = arith.select %94, %92, %95 : vector<256x2xi1>, vector<256x2xf32>
    %97 = arith.maximumf %87, %96 : vector<256x2xf32>
    %98 = arith.maximumf %78, %97 : vector<256x2xf32>
    %c1_i32_20 = arith.constant 1 : i32
    %99 = vector.broadcast %c1_i32_20 : i32 to vector<256x1xi32>
    %100 = arith.cmpi sge, %0, %99 : vector<256x1xi32>
    %101 = vector.extract_strided_slice %98 {offsets = [255, 0], sizes = [1, 2], strides = [1, 1]} : vector<256x2xf32> to vector<1x2xf32>
    %102 = vector.extract_strided_slice %98 {offsets = [0, 0], sizes = [255, 2], strides = [1, 1]} : vector<256x2xf32> to vector<255x2xf32>
    %103 = tpu.concatenate %101, %102 in 0 : vector<1x2xf32>, vector<255x2xf32> -> vector<256x2xf32>
    %cst_21 = arith.constant -1.000000e+30 : f32
    %104 = vector.shape_cast %100 : vector<256x1xi1> to vector<256x1xi1>
    %105 = vector.broadcast %104 : vector<256x1xi1> to vector<256x2xi1>
    %106 = vector.broadcast %cst_21 : f32 to vector<256x2xf32>
    %107 = arith.select %105, %103, %106 : vector<256x2xi1>, vector<256x2xf32>
    %c15_i32_22 = arith.constant 15 : i32
    %108 = vector.broadcast %c15_i32_22 : i32 to vector<256x1xi32>
    %109 = arith.cmpi slt, %0, %108 : vector<256x1xi32>
    %110 = vector.extract_strided_slice %98 {offsets = [1, 0], sizes = [255, 2], strides = [1, 1]} : vector<256x2xf32> to vector<255x2xf32>
    %111 = vector.extract_strided_slice %98 {offsets = [0, 0], sizes = [1, 2], strides = [1, 1]} : vector<256x2xf32> to vector<1x2xf32>
    %112 = tpu.concatenate %110, %111 in 0 : vector<255x2xf32>, vector<1x2xf32> -> vector<256x2xf32>
    %cst_23 = arith.constant -1.000000e+30 : f32
    %113 = vector.shape_cast %109 : vector<256x1xi1> to vector<256x1xi1>
    %114 = vector.broadcast %113 : vector<256x1xi1> to vector<256x2xi1>
    %115 = vector.broadcast %cst_23 : f32 to vector<256x2xf32>
    %116 = arith.select %114, %112, %115 : vector<256x2xi1>, vector<256x2xf32>
    %117 = arith.maximumf %107, %116 : vector<256x2xf32>
    %118 = arith.maximumf %98, %117 : vector<256x2xf32>
    %c2_i32_24 = arith.constant 2 : i32
    %119 = vector.broadcast %c2_i32_24 : i32 to vector<256x1xi32>
    %120 = arith.cmpi sge, %0, %119 : vector<256x1xi32>
    %121 = vector.extract_strided_slice %98 {offsets = [254, 0], sizes = [2, 2], strides = [1, 1]} : vector<256x2xf32> to vector<2x2xf32>
    %122 = vector.extract_strided_slice %98 {offsets = [0, 0], sizes = [254, 2], strides = [1, 1]} : vector<256x2xf32> to vector<254x2xf32>
    %123 = tpu.concatenate %121, %122 in 0 : vector<2x2xf32>, vector<254x2xf32> -> vector<256x2xf32>
    %cst_25 = arith.constant -1.000000e+30 : f32
    %124 = vector.shape_cast %120 : vector<256x1xi1> to vector<256x1xi1>
    %125 = vector.broadcast %124 : vector<256x1xi1> to vector<256x2xi1>
    %126 = vector.broadcast %cst_25 : f32 to vector<256x2xf32>
    %127 = arith.select %125, %123, %126 : vector<256x2xi1>, vector<256x2xf32>
    %c14_i32_26 = arith.constant 14 : i32
    %128 = vector.broadcast %c14_i32_26 : i32 to vector<256x1xi32>
    %129 = arith.cmpi slt, %0, %128 : vector<256x1xi32>
    %130 = vector.extract_strided_slice %98 {offsets = [2, 0], sizes = [254, 2], strides = [1, 1]} : vector<256x2xf32> to vector<254x2xf32>
    %131 = vector.extract_strided_slice %98 {offsets = [0, 0], sizes = [2, 2], strides = [1, 1]} : vector<256x2xf32> to vector<2x2xf32>
    %132 = tpu.concatenate %130, %131 in 0 : vector<254x2xf32>, vector<2x2xf32> -> vector<256x2xf32>
    %cst_27 = arith.constant -1.000000e+30 : f32
    %133 = vector.shape_cast %129 : vector<256x1xi1> to vector<256x1xi1>
    %134 = vector.broadcast %133 : vector<256x1xi1> to vector<256x2xi1>
    %135 = vector.broadcast %cst_27 : f32 to vector<256x2xf32>
    %136 = arith.select %134, %132, %135 : vector<256x2xi1>, vector<256x2xf32>
    %137 = arith.maximumf %127, %136 : vector<256x2xf32>
    %138 = arith.maximumf %118, %137 : vector<256x2xf32>
    %c16_i32_28 = arith.constant 16 : i32
    %139 = vector.broadcast %c16_i32_28 : i32 to vector<256x1xi32>
    %140 = arith.cmpi sge, %1, %139 : vector<256x1xi32>
    %141 = vector.extract_strided_slice %138 {offsets = [240, 0], sizes = [16, 2], strides = [1, 1]} : vector<256x2xf32> to vector<16x2xf32>
    %142 = vector.extract_strided_slice %138 {offsets = [0, 0], sizes = [240, 2], strides = [1, 1]} : vector<256x2xf32> to vector<240x2xf32>
    %143 = tpu.concatenate %141, %142 in 0 : vector<16x2xf32>, vector<240x2xf32> -> vector<256x2xf32>
    %cst_29 = arith.constant -1.000000e+30 : f32
    %144 = vector.shape_cast %140 : vector<256x1xi1> to vector<256x1xi1>
    %145 = vector.broadcast %144 : vector<256x1xi1> to vector<256x2xi1>
    %146 = vector.broadcast %cst_29 : f32 to vector<256x2xf32>
    %147 = arith.select %145, %143, %146 : vector<256x2xi1>, vector<256x2xf32>
    %c240_i32_30 = arith.constant 240 : i32
    %148 = vector.broadcast %c240_i32_30 : i32 to vector<256x1xi32>
    %149 = arith.cmpi slt, %1, %148 : vector<256x1xi32>
    %150 = vector.extract_strided_slice %138 {offsets = [16, 0], sizes = [240, 2], strides = [1, 1]} : vector<256x2xf32> to vector<240x2xf32>
    %151 = vector.extract_strided_slice %138 {offsets = [0, 0], sizes = [16, 2], strides = [1, 1]} : vector<256x2xf32> to vector<16x2xf32>
    %152 = tpu.concatenate %150, %151 in 0 : vector<240x2xf32>, vector<16x2xf32> -> vector<256x2xf32>
    %cst_31 = arith.constant -1.000000e+30 : f32
    %153 = vector.shape_cast %149 : vector<256x1xi1> to vector<256x1xi1>
    %154 = vector.broadcast %153 : vector<256x1xi1> to vector<256x2xi1>
    %155 = vector.broadcast %cst_31 : f32 to vector<256x2xf32>
    %156 = arith.select %154, %152, %155 : vector<256x2xi1>, vector<256x2xf32>
    %157 = arith.maximumf %147, %156 : vector<256x2xf32>
    %158 = arith.maximumf %138, %157 : vector<256x2xf32>
    %c32_i32_32 = arith.constant 32 : i32
    %159 = vector.broadcast %c32_i32_32 : i32 to vector<256x1xi32>
    %160 = arith.cmpi sge, %1, %159 : vector<256x1xi32>
    %161 = vector.extract_strided_slice %138 {offsets = [224, 0], sizes = [32, 2], strides = [1, 1]} : vector<256x2xf32> to vector<32x2xf32>
    %162 = vector.extract_strided_slice %138 {offsets = [0, 0], sizes = [224, 2], strides = [1, 1]} : vector<256x2xf32> to vector<224x2xf32>
    %163 = tpu.concatenate %161, %162 in 0 : vector<32x2xf32>, vector<224x2xf32> -> vector<256x2xf32>
    %cst_33 = arith.constant -1.000000e+30 : f32
    %164 = vector.shape_cast %160 : vector<256x1xi1> to vector<256x1xi1>
    %165 = vector.broadcast %164 : vector<256x1xi1> to vector<256x2xi1>
    %166 = vector.broadcast %cst_33 : f32 to vector<256x2xf32>
    %167 = arith.select %165, %163, %166 : vector<256x2xi1>, vector<256x2xf32>
    %c224_i32_34 = arith.constant 224 : i32
    %168 = vector.broadcast %c224_i32_34 : i32 to vector<256x1xi32>
    %169 = arith.cmpi slt, %1, %168 : vector<256x1xi32>
    %170 = vector.extract_strided_slice %138 {offsets = [32, 0], sizes = [224, 2], strides = [1, 1]} : vector<256x2xf32> to vector<224x2xf32>
    %171 = vector.extract_strided_slice %138 {offsets = [0, 0], sizes = [32, 2], strides = [1, 1]} : vector<256x2xf32> to vector<32x2xf32>
    %172 = tpu.concatenate %170, %171 in 0 : vector<224x2xf32>, vector<32x2xf32> -> vector<256x2xf32>
    %cst_35 = arith.constant -1.000000e+30 : f32
    %173 = vector.shape_cast %169 : vector<256x1xi1> to vector<256x1xi1>
    %174 = vector.broadcast %173 : vector<256x1xi1> to vector<256x2xi1>
    %175 = vector.broadcast %cst_35 : f32 to vector<256x2xf32>
    %176 = arith.select %174, %172, %175 : vector<256x2xi1>, vector<256x2xf32>
    %177 = arith.maximumf %167, %176 : vector<256x2xf32>
    %178 = arith.maximumf %158, %177 : vector<256x2xf32>
    %c1_i32_36 = arith.constant 1 : i32
    %179 = vector.broadcast %c1_i32_36 : i32 to vector<256x1xi32>
    %180 = arith.cmpi sge, %0, %179 : vector<256x1xi32>
    %181 = vector.extract_strided_slice %178 {offsets = [255, 0], sizes = [1, 2], strides = [1, 1]} : vector<256x2xf32> to vector<1x2xf32>
    %182 = vector.extract_strided_slice %178 {offsets = [0, 0], sizes = [255, 2], strides = [1, 1]} : vector<256x2xf32> to vector<255x2xf32>
    %183 = tpu.concatenate %181, %182 in 0 : vector<1x2xf32>, vector<255x2xf32> -> vector<256x2xf32>
    %cst_37 = arith.constant -1.000000e+30 : f32
    %184 = vector.shape_cast %180 : vector<256x1xi1> to vector<256x1xi1>
    %185 = vector.broadcast %184 : vector<256x1xi1> to vector<256x2xi1>
    %186 = vector.broadcast %cst_37 : f32 to vector<256x2xf32>
    %187 = arith.select %185, %183, %186 : vector<256x2xi1>, vector<256x2xf32>
    %c15_i32_38 = arith.constant 15 : i32
    %188 = vector.broadcast %c15_i32_38 : i32 to vector<256x1xi32>
    %189 = arith.cmpi slt, %0, %188 : vector<256x1xi32>
    %190 = vector.extract_strided_slice %178 {offsets = [1, 0], sizes = [255, 2], strides = [1, 1]} : vector<256x2xf32> to vector<255x2xf32>
    %191 = vector.extract_strided_slice %178 {offsets = [0, 0], sizes = [1, 2], strides = [1, 1]} : vector<256x2xf32> to vector<1x2xf32>
    %192 = tpu.concatenate %190, %191 in 0 : vector<255x2xf32>, vector<1x2xf32> -> vector<256x2xf32>
    %cst_39 = arith.constant -1.000000e+30 : f32
    %193 = vector.shape_cast %189 : vector<256x1xi1> to vector<256x1xi1>
    %194 = vector.broadcast %193 : vector<256x1xi1> to vector<256x2xi1>
    %195 = vector.broadcast %cst_39 : f32 to vector<256x2xf32>
    %196 = arith.select %194, %192, %195 : vector<256x2xi1>, vector<256x2xf32>
    %197 = arith.maximumf %187, %196 : vector<256x2xf32>
    %198 = arith.maximumf %178, %197 : vector<256x2xf32>
    %c2_i32_40 = arith.constant 2 : i32
    %199 = vector.broadcast %c2_i32_40 : i32 to vector<256x1xi32>
    %200 = arith.cmpi sge, %0, %199 : vector<256x1xi32>
    %201 = vector.extract_strided_slice %178 {offsets = [254, 0], sizes = [2, 2], strides = [1, 1]} : vector<256x2xf32> to vector<2x2xf32>
    %202 = vector.extract_strided_slice %178 {offsets = [0, 0], sizes = [254, 2], strides = [1, 1]} : vector<256x2xf32> to vector<254x2xf32>
    %203 = tpu.concatenate %201, %202 in 0 : vector<2x2xf32>, vector<254x2xf32> -> vector<256x2xf32>
    %cst_41 = arith.constant -1.000000e+30 : f32
    %204 = vector.shape_cast %200 : vector<256x1xi1> to vector<256x1xi1>
    %205 = vector.broadcast %204 : vector<256x1xi1> to vector<256x2xi1>
    %206 = vector.broadcast %cst_41 : f32 to vector<256x2xf32>
    %207 = arith.select %205, %203, %206 : vector<256x2xi1>, vector<256x2xf32>
    %c14_i32_42 = arith.constant 14 : i32
    %208 = vector.broadcast %c14_i32_42 : i32 to vector<256x1xi32>
    %209 = arith.cmpi slt, %0, %208 : vector<256x1xi32>
    %210 = vector.extract_strided_slice %178 {offsets = [2, 0], sizes = [254, 2], strides = [1, 1]} : vector<256x2xf32> to vector<254x2xf32>
    %211 = vector.extract_strided_slice %178 {offsets = [0, 0], sizes = [2, 2], strides = [1, 1]} : vector<256x2xf32> to vector<2x2xf32>
    %212 = tpu.concatenate %210, %211 in 0 : vector<254x2xf32>, vector<2x2xf32> -> vector<256x2xf32>
    %cst_43 = arith.constant -1.000000e+30 : f32
    %213 = vector.shape_cast %209 : vector<256x1xi1> to vector<256x1xi1>
    %214 = vector.broadcast %213 : vector<256x1xi1> to vector<256x2xi1>
    %215 = vector.broadcast %cst_43 : f32 to vector<256x2xf32>
    %216 = arith.select %214, %212, %215 : vector<256x2xi1>, vector<256x2xf32>
    %217 = arith.maximumf %207, %216 : vector<256x2xf32>
    %218 = arith.maximumf %198, %217 : vector<256x2xf32>
    %c16_i32_44 = arith.constant 16 : i32
    %219 = vector.broadcast %c16_i32_44 : i32 to vector<256x1xi32>
    %220 = arith.cmpi sge, %1, %219 : vector<256x1xi32>
    %221 = vector.extract_strided_slice %218 {offsets = [240, 0], sizes = [16, 2], strides = [1, 1]} : vector<256x2xf32> to vector<16x2xf32>
    %222 = vector.extract_strided_slice %218 {offsets = [0, 0], sizes = [240, 2], strides = [1, 1]} : vector<256x2xf32> to vector<240x2xf32>
    %223 = tpu.concatenate %221, %222 in 0 : vector<16x2xf32>, vector<240x2xf32> -> vector<256x2xf32>
    %cst_45 = arith.constant -1.000000e+30 : f32
    %224 = vector.shape_cast %220 : vector<256x1xi1> to vector<256x1xi1>
    %225 = vector.broadcast %224 : vector<256x1xi1> to vector<256x2xi1>
    %226 = vector.broadcast %cst_45 : f32 to vector<256x2xf32>
    %227 = arith.select %225, %223, %226 : vector<256x2xi1>, vector<256x2xf32>
    %c240_i32_46 = arith.constant 240 : i32
    %228 = vector.broadcast %c240_i32_46 : i32 to vector<256x1xi32>
    %229 = arith.cmpi slt, %1, %228 : vector<256x1xi32>
    %230 = vector.extract_strided_slice %218 {offsets = [16, 0], sizes = [240, 2], strides = [1, 1]} : vector<256x2xf32> to vector<240x2xf32>
    %231 = vector.extract_strided_slice %218 {offsets = [0, 0], sizes = [16, 2], strides = [1, 1]} : vector<256x2xf32> to vector<16x2xf32>
    %232 = tpu.concatenate %230, %231 in 0 : vector<240x2xf32>, vector<16x2xf32> -> vector<256x2xf32>
    %cst_47 = arith.constant -1.000000e+30 : f32
    %233 = vector.shape_cast %229 : vector<256x1xi1> to vector<256x1xi1>
    %234 = vector.broadcast %233 : vector<256x1xi1> to vector<256x2xi1>
    %235 = vector.broadcast %cst_47 : f32 to vector<256x2xf32>
    %236 = arith.select %234, %232, %235 : vector<256x2xi1>, vector<256x2xf32>
    %237 = arith.maximumf %227, %236 : vector<256x2xf32>
    %238 = arith.maximumf %218, %237 : vector<256x2xf32>
    %c32_i32_48 = arith.constant 32 : i32
    %239 = vector.broadcast %c32_i32_48 : i32 to vector<256x1xi32>
    %240 = arith.cmpi sge, %1, %239 : vector<256x1xi32>
    %241 = vector.extract_strided_slice %218 {offsets = [224, 0], sizes = [32, 2], strides = [1, 1]} : vector<256x2xf32> to vector<32x2xf32>
    %242 = vector.extract_strided_slice %218 {offsets = [0, 0], sizes = [224, 2], strides = [1, 1]} : vector<256x2xf32> to vector<224x2xf32>
    %243 = tpu.concatenate %241, %242 in 0 : vector<32x2xf32>, vector<224x2xf32> -> vector<256x2xf32>
    %cst_49 = arith.constant -1.000000e+30 : f32
    %244 = vector.shape_cast %240 : vector<256x1xi1> to vector<256x1xi1>
    %245 = vector.broadcast %244 : vector<256x1xi1> to vector<256x2xi1>
    %246 = vector.broadcast %cst_49 : f32 to vector<256x2xf32>
    %247 = arith.select %245, %243, %246 : vector<256x2xi1>, vector<256x2xf32>
    %c224_i32_50 = arith.constant 224 : i32
    %248 = vector.broadcast %c224_i32_50 : i32 to vector<256x1xi32>
    %249 = arith.cmpi slt, %1, %248 : vector<256x1xi32>
    %250 = vector.extract_strided_slice %218 {offsets = [32, 0], sizes = [224, 2], strides = [1, 1]} : vector<256x2xf32> to vector<224x2xf32>
    %251 = vector.extract_strided_slice %218 {offsets = [0, 0], sizes = [32, 2], strides = [1, 1]} : vector<256x2xf32> to vector<32x2xf32>
    %252 = tpu.concatenate %250, %251 in 0 : vector<224x2xf32>, vector<32x2xf32> -> vector<256x2xf32>
    %cst_51 = arith.constant -1.000000e+30 : f32
    %253 = vector.shape_cast %249 : vector<256x1xi1> to vector<256x1xi1>
    %254 = vector.broadcast %253 : vector<256x1xi1> to vector<256x2xi1>
    %255 = vector.broadcast %cst_51 : f32 to vector<256x2xf32>
    %256 = arith.select %254, %252, %255 : vector<256x2xi1>, vector<256x2xf32>
    %257 = arith.maximumf %247, %256 : vector<256x2xf32>
    %258 = arith.maximumf %238, %257 : vector<256x2xf32>
    %c0_52 = arith.constant 0 : index
    %c0_53 = arith.constant 0 : index
    %259 = vector.load %arg6[%c0_52, %c0_53] : memref<8x8xbf16, #tpu.memory_space<vmem>>, vector<8x8xbf16>
    %c0_54 = arith.constant 0 : index
    %c0_55 = arith.constant 0 : index
    %260 = vector.load %arg7[%c0_54, %c0_55] : memref<1x8xf32, #tpu.memory_space<vmem>>, vector<1x8xf32>
    %c0_56 = arith.constant 0 : index
    %c0_57 = arith.constant 0 : index
    %261 = vector.load %arg8[%c0_56, %c0_57] : memref<1x8xf32, #tpu.memory_space<vmem>>, vector<1x8xf32>
    %262 = arith.truncf %18 : vector<256x2xf32> to vector<256x2xbf16>
    %263 = vector.extract_strided_slice %259 {offsets = [0, 0], sizes = [2, 8], strides = [1, 1]} : vector<8x8xbf16> to vector<2x8xbf16>
    %cst_58 = arith.constant dense<0.000000e+00> : vector<256x8xf32>
    %264 = tpu.matmul %262, %263, %cst_58 {dimension_numbers = #tpu.dot_dimension_numbers<[1], [0], [0], [1], [0, 0, 1, 1], [], []>} : vector<256x2xbf16>, vector<2x8xbf16>, vector<256x8xf32> -> vector<256x8xf32>
    %265 = arith.truncf %98 : vector<256x2xf32> to vector<256x2xbf16>
    %266 = vector.extract_strided_slice %259 {offsets = [2, 0], sizes = [2, 8], strides = [1, 1]} : vector<8x8xbf16> to vector<2x8xbf16>
    %cst_59 = arith.constant dense<0.000000e+00> : vector<256x8xf32>
    %267 = tpu.matmul %265, %266, %cst_59 {dimension_numbers = #tpu.dot_dimension_numbers<[1], [0], [0], [1], [0, 0, 1, 1], [], []>} : vector<256x2xbf16>, vector<2x8xbf16>, vector<256x8xf32> -> vector<256x8xf32>
    %268 = arith.addf %264, %267 : vector<256x8xf32>
    %269 = arith.truncf %178 : vector<256x2xf32> to vector<256x2xbf16>
    %270 = vector.extract_strided_slice %259 {offsets = [4, 0], sizes = [2, 8], strides = [1, 1]} : vector<8x8xbf16> to vector<2x8xbf16>
    %cst_60 = arith.constant dense<0.000000e+00> : vector<256x8xf32>
    %271 = tpu.matmul %269, %270, %cst_60 {dimension_numbers = #tpu.dot_dimension_numbers<[1], [0], [0], [1], [0, 0, 1, 1], [], []>} : vector<256x2xbf16>, vector<2x8xbf16>, vector<256x8xf32> -> vector<256x8xf32>
    %272 = arith.addf %268, %271 : vector<256x8xf32>
    %273 = arith.truncf %258 : vector<256x2xf32> to vector<256x2xbf16>
    %274 = vector.extract_strided_slice %259 {offsets = [6, 0], sizes = [2, 8], strides = [1, 1]} : vector<8x8xbf16> to vector<2x8xbf16>
    %cst_61 = arith.constant dense<0.000000e+00> : vector<256x8xf32>
    %275 = tpu.matmul %273, %274, %cst_61 {dimension_numbers = #tpu.dot_dimension_numbers<[1], [0], [0], [1], [0, 0, 1, 1], [], []>} : vector<256x2xbf16>, vector<2x8xbf16>, vector<256x8xf32> -> vector<256x8xf32>
    %276 = arith.addf %272, %275 : vector<256x8xf32>
    %277 = vector.broadcast %260 : vector<1x8xf32> to vector<256x8xf32>
    %278 = arith.mulf %276, %277 : vector<256x8xf32>
    %279 = vector.broadcast %261 : vector<1x8xf32> to vector<256x8xf32>
    %280 = arith.addf %278, %279 : vector<256x8xf32>
    %281 = arith.negf %280 : vector<256x8xf32>
    %282 = math.exp %281 : vector<256x8xf32>
    %cst_62 = arith.constant 1.000000e+00 : f32
    %283 = vector.broadcast %cst_62 : f32 to vector<256x8xf32>
    %284 = arith.addf %283, %282 : vector<256x8xf32>
    %285 = arith.divf %283, %284 : vector<256x8xf32>
    %286 = arith.mulf %280, %285 : vector<256x8xf32>
    %287 = vector.shape_cast %286 : vector<256x8xf32> to vector<16x16x8xf32>
    %c0_63 = arith.constant 0 : index
    %c0_64 = arith.constant 0 : index
    %c0_65 = arith.constant 0 : index
    %c0_66 = arith.constant 0 : index
    %288 = vector.load %arg9[%c0_63, %c0_64, %c0_65, %c0_66] : memref<1x16x16x8xf32, #tpu.memory_space<vmem>>, vector<1x16x16x8xf32>
    %289 = vector.shape_cast %288 : vector<1x16x16x8xf32> to vector<16x16x8xf32>
    %290 = vector.shape_cast %287 : vector<16x16x8xf32> to vector<1x16x16x8xf32>
    tpu.vector_store %arg9[%c0_63, %c0_64, %c0_65, %c0_66], %290 {strides = array<i32>} : memref<1x16x16x8xf32, #tpu.memory_space<vmem>>, vector<1x16x16x8xf32>,
    return
  }
  func.func @transform_0(%arg0: i32) -> (i32, i32) {
    %c0_i32 = arith.constant 0 : i32
    %c0_i32_0 = arith.constant 0 : i32
    %c0_i32_1 = arith.constant 0 : i32
    return %c0_i32, %c0_i32_0 : i32, i32
  }
  func.func @transform_1(%arg0: i32) -> (i32, i32, i32, i32) {
    %c0_i32 = arith.constant 0 : i32
    %c0_i32_0 = arith.constant 0 : i32
    %c0_i32_1 = arith.constant 0 : i32
    %c0_i32_2 = arith.constant 0 : i32
    return %arg0, %c0_i32, %c0_i32_0, %c0_i32_1 : i32, i32, i32, i32
  }
  func.func @transform_2(%arg0: i32) -> (i32, i32) {
    %c0_i32 = arith.constant 0 : i32
    %c0_i32_0 = arith.constant 0 : i32
    %c0_i32_1 = arith.constant 0 : i32
    return %c0_i32, %c0_i32_0 : i32, i32
  }
  func.func @transform_3(%arg0: i32) -> (i32, i32) {
    %c0_i32 = arith.constant 0 : i32
    %c0_i32_0 = arith.constant 0 : i32
    %c0_i32_1 = arith.constant 0 : i32
    return %c0_i32, %c0_i32_0 : i32, i32
  }
  func.func @transform_4(%arg0: i32) -> (i32, i32) {
    %c0_i32 = arith.constant 0 : i32
    %c0_i32_0 = arith.constant 0 : i32
    %c0_i32_1 = arith.constant 0 : i32
    return %c0_i32, %c0_i32_0 : i32, i32
  }
  func.func @transform_5(%arg0: i32) -> (i32, i32) {
    %c0_i32 = arith.constant 0 : i32
    %c0_i32_0 = arith.constant 0 : i32
    %c0_i32_1 = arith.constant 0 : i32
    return %c0_i32, %c0_i32_0 : i32, i32
  }
  func.func @transform_6(%arg0: i32) -> (i32, i32) {
    %c0_i32 = arith.constant 0 : i32
    %c0_i32_0 = arith.constant 0 : i32
    %c0_i32_1 = arith.constant 0 : i32
    return %c0_i32, %c0_i32_0 : i32, i32
  }
  func.func @transform_7(%arg0: i32) -> (i32, i32) {
    %c0_i32 = arith.constant 0 : i32
    %c0_i32_0 = arith.constant 0 : i32
    %c0_i32_1 = arith.constant 0 : i32
    return %c0_i32, %c0_i32_0 : i32, i32
  }
  func.func @transform_8(%arg0: i32) -> (i32, i32, i32, i32) {
    %c0_i32 = arith.constant 0 : i32
    %c0_i32_0 = arith.constant 0 : i32
    %c0_i32_1 = arith.constant 0 : i32
    %c0_i32_2 = arith.constant 0 : i32
    return %arg0, %c0_i32, %c0_i32_0, %c0_i32_1 : i32, i32, i32, i32
  }
}

</mosaic_0001>

<llo_original>
// kernel: tpu_custom_call.1
$region0: #{tpu_custom_call.1}
  #allocation0 [shape = 'u32[]', space=smem, size = 0x4, offset = 0x4, fixed_abs, tag = 'smem constant byte address 0x4 - core index']
  #allocation1 [shape = 'u32[144,128]{1,0:T(1,128)}', space=vmem, size = 0x12000, scoped, tag = 'internal scratch']
  %s0 = inlined_call_operand.hbm [shape: f32[8,128], index: 0, kind: input, shape index: {}]
  %s1 = inlined_call_operand.hbm [shape: f32[8,128], index: 1, kind: output, shape index: {}]
  %s2 = sld [smem:[#allocation0]]
  $region18: #{tpu_custom_call.1} parent=0
    _
  %s4 = ssub.s32 1, %s2
  %s5 = scalar_select 0, %s4, %s2
  $region1: #{tpu_custom_call.1} parent=0
    #allocation2 [shape = 'u8[4096]{0}', space=vmem, size = 0x1000, scoped, tag = 'input window, operand 0, single buffered']
    #allocation3 [shape = 's32[1]{0}', space=sflag, size = 0x4, scoped, tag = 'scoped memory for tpu_custom_call.1']
    #allocation4 [shape = 's32[1]{0}', space=sflag, size = 0x4, scoped, tag = 'scoped memory for tpu_custom_call.1']
    #allocation5 [shape = 'u8[4096]{0}', space=vmem, size = 0x1000, scoped, tag = 'output window, operand 0, single buffered']
    %6 = vsyncpa [#allocation3], 0
    %7 = vsyncpa [#allocation4], 0
    // Predicated region
    $region2: #{tpu_custom_call.1} parent=1 // pred_check
      _
    $region3: #{tpu_custom_call.1} parent=1 // pred_check_branch
      %9 = sbr.rel (0) target = $region5
    $region4: #{tpu_custom_call.1} parent=1 // pred_region
      %s11 = ssub.s32 128, 128
      %12 = vsyncadd [#allocation3], %s11
      %s14 = sshll.u32 [#allocation2], 4
      %s15 = int_to_ptr.vmem [resolvable:$true] %s14
      %17 = dma.hbm_to_vmem [thread:$0]  %s0, 128, %s15, [#allocation3]
    $region5: #{tpu_custom_call.1} parent=1 // pred_fallthru
      _
    // Predicated region
    $region6: #{tpu_custom_call.1} parent=1 // pred_check
      _
    $region7: #{tpu_custom_call.1} parent=1 // pred_check_branch
      %19 = sbr.rel (0) target = $region9
    $region8: #{tpu_custom_call.1} parent=1 // pred_region
      %20 = dma.done [#allocation3], 128
    $region9: #{tpu_custom_call.1} parent=1 // pred_fallthru
      _
    %v21 = vld [vmem:[#allocation2] sm:$0xff]
    %v22 = vrot.slane %v21, 7
    %23 = vst [vmem:[#allocation5] sm:$0xff] %v22
    // Predicated region
    $region10: #{tpu_custom_call.1} parent=1 // pred_check
      _
    $region11: #{tpu_custom_call.1} parent=1 // pred_check_branch
      %25 = sbr.rel (0) target = $region13
    $region12: #{tpu_custom_call.1} parent=1 // pred_region
      %s27 = ssub.s32 128, 128
      %28 = vsyncadd [#allocation4], %s27
      %s30 = sshll.u32 [#allocation5], 4
      %s31 = int_to_ptr.vmem [resolvable:$true] %s30
      %33 = dma.vmem_to_hbm [thread:$0]  %s31, 128, %s1, [#allocation4]
    $region13: #{tpu_custom_call.1} parent=1 // pred_fallthru
      _
    // Predicated region
    $region14: #{tpu_custom_call.1} parent=1 // pred_check
      _
    $region15: #{tpu_custom_call.1} parent=1 // pred_check_branch
      %35 = sbr.rel (0) target = $region17
    $region16: #{tpu_custom_call.1} parent=1 // pred_region
      %36 = dma.done [#allocation4], 128
    $region17: #{tpu_custom_call.1} parent=1 // pred_fallthru
      _
    %37 = vsyncpa [#allocation3], 1
    %38 = vsyncpa [#allocation4], 1

// kernel: tpu_custom_call.1
$region0: #{tpu_custom_call.1}
  #allocation0 [shape = 'u32[]', space=smem, size = 0x4, offset = 0x4, fixed_abs, tag = 'smem constant byte address 0x4 - core index']
  #allocation1 [shape = 'u32[144,128]{1,0:T(1,128)}', space=vmem, size = 0x12000, scoped, tag = 'internal scratch']
  %s0 = inlined_call_operand.vmem [shape: s32[256,1], index: 0, kind: input, shape index: {}]
  %s1 = inlined_call_operand.vmem [shape: bf16[2,16,16,4], index: 1, kind: input, shape index: {}]
  %s2 = inlined_call_operand.vmem [shape: bf16[4,2], index: 2, kind: input, shape index: {}]
  %s3 = inlined_call_operand.vmem [shape: f32[1,2], index: 3, kind: input, shape index: {}]
  %s4 = inlined_call_operand.vmem [shape: f32[1,2], index: 4, kind: input, shape index: {}]
  %s5 = inlined_call_operand.vmem [shape: bf16[8,8], index: 5, kind: input, shape index: {}]
  %s6 = inlined_call_operand.vmem [shape: f32[1,8], index: 6, kind: input, shape index: {}]
  %s7 = inlined_call_operand.vmem [shape: f32[1,8], index: 7, kind: input, shape index: {}]
  %s8 = inlined_call_operand.vmem [shape: f32[2,16,16,8], index: 8, kind: output, shape index: {}]
  %s9 = sld [smem:[#allocation0]]
  $region65: #{tpu_custom_call.1} parent=0
    _
  %s11 = ssub.s32 1, %s9
  %s12 = scalar_select 0, %s11, %s9
  loop: start=0, step=1, limit=4
  $region2: #{tpu_custom_call.1} parent=0 // loop_pre_header
    _
  $region3: #{tpu_custom_call.1} parent=0 // loop_header
    %s14 = sphi 0, %s18
    %p15 = scmp.ge.s32.totalorder %s14, 4
    %s22 = sphi 0, %s22
    %s24 = sphi 0, %s22
    %s25 = sphi 0, %s24
    %s39 = sphi 0, %s25
    %s45 = sphi 0, %s47
    %s48 = sphi 0, %s45
    %s49 = sphi 0, %s48
    %s65 = sphi 0, %s49
    %s69 = sphi 0, %s69
    %s71 = sphi 0, %s69
    %s72 = sphi 0, %s71
    %s86 = sphi 0, %s72
    %s90 = sphi 0, %s90
    %s92 = sphi 0, %s90
    %s93 = sphi 0, %s92
    %s107 = sphi 0, %s93
    %s111 = sphi 0, %s111
    %s113 = sphi 0, %s111
    %s114 = sphi 0, %s113
    %s128 = sphi 0, %s114
    %s132 = sphi 0, %s132
    %s134 = sphi 0, %s132
    %s135 = sphi 0, %s134
    %s149 = sphi 0, %s135
    %s153 = sphi 0, %s153
    %s155 = sphi 0, %s153
    %s156 = sphi 0, %s155
    %s170 = sphi 0, %s156
    %s174 = sphi 0, %s174
    %s176 = sphi 0, %s174
    %s177 = sphi 0, %s176
    %s191 = sphi 0, %s177
    %s197 = sphi 0, %s199
    %s200 = sphi 0, %s197
    %s201 = sphi 0, %s200
    %s217 = sphi 0, %s201
  $region4: #{tpu_custom_call.1} parent=0 // loop_header_branch
    %17 = sbr.rel (%p15) target = $region8
  $region5: #{tpu_custom_call.1} parent=0 // loop_body
    %s19 = ssub.s32 %s14, 1
    %s20 = ssub.s32 %s14, 2
    %s21 = sadd.s32 %s14, 1
    %s23 = sadd.s32 %s22, 1
    %p26 = scmp.eq.s32.totalorder %s14, 1
    %p27 = scmp.ne.s32.totalorder %s22, %s24
    %p28 = scmp.eq.s32.totalorder %s14, 0
    %p29 = por %p27, %p28
    %p30 = scmp.ne.s32.totalorder %s22, %s24
    %p31 = scmp.eq.s32.totalorder %s19, 1
    %p32 = por %p30, %p31
    %p33 = scmp.ne.s32.totalorder %s24, %s25
    %p34 = scmp.eq.s32.totalorder %s19, 0
    %p35 = por %p33, %p34
    %p36 = scmp.ne.s32.totalorder %s24, %s25
    %p37 = scmp.eq.s32.totalorder %s20, 1
    %p38 = por %p36, %p37
    %p40 = scmp.ne.s32.totalorder %s25, %s39
    %p41 = scmp.eq.s32.totalorder %s20, 0
    %p42 = por %p40, %p41
    %s43 = ssub.s32 %s14, %s21
    %p44 = scmp.eq.s32.totalorder %s43, 0
    %s46 = sadd.s32 %s45, 1
    %s47 = scalar_select %p44, %s45, %s46
    %p50 = pneg %p44
    %p51 = scmp.eq.s32.totalorder %s14, 1
    %p52 = por %p50, %p51
    %p53 = scmp.ne.s32.totalorder %s45, %s48
    %p54 = scmp.eq.s32.totalorder %s14, 0
    %p55 = por %p53, %p54
    %p56 = scmp.ne.s32.totalorder %s45, %s48
    %p57 = scmp.eq.s32.totalorder %s19, 1
    %p58 = por %p56, %p57
    %p59 = scmp.ne.s32.totalorder %s48, %s49
    %p60 = scmp.eq.s32.totalorder %s19, 0
    %p61 = por %p59, %p60
    %p62 = scmp.ne.s32.totalorder %s48, %s49
    %p63 = scmp.eq.s32.totalorder %s20, 1
    %p64 = por %p62, %p63
    %p66 = scmp.ne.s32.totalorder %s49, %s65
    %p67 = scmp.eq.s32.totalorder %s20, 0
    %p68 = por %p66, %p67
    %s70 = sadd.s32 %s69, 1
    %p73 = scmp.eq.s32.totalorder %s14, 1
    %p74 = scmp.ne.s32.totalorder %s69, %s71
    %p75 = scmp.eq.s32.totalorder %s14, 0
    %p76 = por %p74, %p75
    %p77 = scmp.ne.s32.totalorder %s69, %s71
    %p78 = scmp.eq.s32.totalorder %s19, 1
    %p79 = por %p77, %p78
    %p80 = scmp.ne.s32.totalorder %s71, %s72
    %p81 = scmp.eq.s32.totalorder %s19, 0
    %p82 = por %p80, %p81
    %p83 = scmp.ne.s32.totalorder %s71, %s72
    %p84 = scmp.eq.s32.totalorder %s20, 1
    %p85 = por %p83, %p84
    %p87 = scmp.ne.s32.totalorder %s72, %s86
    %p88 = scmp.eq.s32.totalorder %s20, 0
    %p89 = por %p87, %p88
    %s91 = sadd.s32 %s90, 1
    %p94 = scmp.eq.s32.totalorder %s14, 1
    %p95 = scmp.ne.s32.totalorder %s90, %s92
    %p96 = scmp.eq.s32.totalorder %s14, 0
    %p97 = por %p95, %p96
    %p98 = scmp.ne.s32.totalorder %s90, %s92
    %p99 = scmp.eq.s32.totalorder %s19, 1
    %p100 = por %p98, %p99
    %p101 = scmp.ne.s32.totalorder %s92, %s93
    %p102 = scmp.eq.s32.totalorder %s19, 0
    %p103 = por %p101, %p102
    %p104 = scmp.ne.s32.totalorder %s92, %s93
    %p105 = scmp.eq.s32.totalorder %s20, 1
    %p106 = por %p104, %p105
    %p108 = scmp.ne.s32.totalorder %s93, %s107
    %p109 = scmp.eq.s32.totalorder %s20, 0
    %p110 = por %p108, %p109
    %s112 = sadd.s32 %s111, 1
    %p115 = scmp.eq.s32.totalorder %s14, 1
    %p116 = scmp.ne.s32.totalorder %s111, %s113
    %p117 = scmp.eq.s32.totalorder %s14, 0
    %p118 = por %p116, %p117
    %p119 = scmp.ne.s32.totalorder %s111, %s113
    %p120 = scmp.eq.s32.totalorder %s19, 1
    %p121 = por %p119, %p120
    %p122 = scmp.ne.s32.totalorder %s113, %s114
    %p123 = scmp.eq.s32.totalorder %s19, 0
    %p124 = por %p122, %p123
    %p125 = scmp.ne.s32.totalorder %s113, %s114
    %p126 = scmp.eq.s32.totalorder %s20, 1
    %p127 = por %p125, %p126
    %p129 = scmp.ne.s32.totalorder %s114, %s128
    %p130 = scmp.eq.s32.totalorder %s20, 0
    %p131 = por %p129, %p130
    %s133 = sadd.s32 %s132, 1
    %p136 = scmp.eq.s32.totalorder %s14, 1
    %p137 = scmp.ne.s32.totalorder %s132, %s134
    %p138 = scmp.eq.s32.totalorder %s14, 0
    %p139 = por %p137, %p138
    %p140 = scmp.ne.s32.totalorder %s132, %s134
    %p141 = scmp.eq.s32.totalorder %s19, 1
    %p142 = por %p140, %p141
    %p143 = scmp.ne.s32.totalorder %s134, %s135
    %p144 = scmp.eq.s32.totalorder %s19, 0
    %p145 = por %p143, %p144
    %p146 = scmp.ne.s32.totalorder %s134, %s135
    %p147 = scmp.eq.s32.totalorder %s20, 1
    %p148 = por %p146, %p147
    %p150 = scmp.ne.s32.totalorder %s135, %s149
    %p151 = scmp.eq.s32.totalorder %s20, 0
    %p152 = por %p150, %p151
    %s154 = sadd.s32 %s153, 1
    %p157 = scmp.eq.s32.totalorder %s14, 1
    %p158 = scmp.ne.s32.totalorder %s153, %s155
    %p159 = scmp.eq.s32.totalorder %s14, 0
    %p160 = por %p158, %p159
    %p161 = scmp.ne.s32.totalorder %s153, %s155
    %p162 = scmp.eq.s32.totalorder %s19, 1
    %p163 = por %p161, %p162
    %p164 = scmp.ne.s32.totalorder %s155, %s156
    %p165 = scmp.eq.s32.totalorder %s19, 0
    %p166 = por %p164, %p165
    %p167 = scmp.ne.s32.totalorder %s155, %s156
    %p168 = scmp.eq.s32.totalorder %s20, 1
    %p169 = por %p167, %p168
    %p171 = scmp.ne.s32.totalorder %s156, %s170
    %p172 = scmp.eq.s32.totalorder %s20, 0
    %p173 = por %p171, %p172
    %s175 = sadd.s32 %s174, 1
    %p178 = scmp.eq.s32.totalorder %s14, 1
    %p179 = scmp.ne.s32.totalorder %s174, %s176
    %p180 = scmp.eq.s32.totalorder %s14, 0
    %p181 = por %p179, %p180
    %p182 = scmp.ne.s32.totalorder %s174, %s176
    %p183 = scmp.eq.s32.totalorder %s19, 1
    %p184 = por %p182, %p183
    %p185 = scmp.ne.s32.totalorder %s176, %s177
    %p186 = scmp.eq.s32.totalorder %s19, 0
    %p187 = por %p185, %p186
    %p188 = scmp.ne.s32.totalorder %s176, %s177
    %p189 = scmp.eq.s32.totalorder %s20, 1
    %p190 = por %p188, %p189
    %p192 = scmp.ne.s32.totalorder %s177, %s191
    %p193 = scmp.eq.s32.totalorder %s20, 0
    %p194 = por %p192, %p193
    %s195 = ssub.s32 %s14, %s21
    %p196 = scmp.eq.s32.totalorder %s195, 0
    %s198 = sadd.s32 %s197, 1
    %s199 = scalar_select %p196, %s197, %s198
    %p202 = pneg %p196
    %p203 = scmp.eq.s32.totalorder %s14, 1
    %p204 = por %p202, %p203
    %p205 = scmp.ne.s32.totalorder %s197, %s200
    %p206 = scmp.eq.s32.totalorder %s14, 0
    %p207 = por %p205, %p206
    %p208 = scmp.ne.s32.totalorder %s197, %s200
    %p209 = scmp.eq.s32.totalorder %s19, 1
    %p210 = por %p208, %p209
    %p211 = scmp.ne.s32.totalorder %s200, %s201
    %p212 = scmp.eq.s32.totalorder %s19, 0
    %p213 = por %p211, %p212
    %p214 = scmp.ne.s32.totalorder %s200, %s201
    %p215 = scmp.eq.s32.totalorder %s20, 1
    %p216 = por %p214, %p215
    %p218 = scmp.ne.s32.totalorder %s201, %s217
    %p219 = scmp.eq.s32.totalorder %s20, 0
    %p220 = por %p218, %p219
    %p221 = scmp.le.s32.totalorder 1, %s14
    %p222 = scmp.lt.s32.totalorder %s14, 3
    %p223 = pnand %p221, %p222
    %p224 = pneg %p223
    // Predicated region
    $region9: #{tpu_custom_call.1} parent=5 // pred_check
      _
    $region10: #{tpu_custom_call.1} parent=5 // pred_check_branch
      %226 = sbr.rel (%p223) target = $region12
    $region11: #{tpu_custom_call.1} parent=5 // pred_region
      %s227 = ssub.s32 %s14, 1
      // Predicated region
      $region13: #{tpu_custom_call.1} parent=11 // pred_check
        %p228 = pneg %p35
      $region14: #{tpu_custom_call.1} parent=11 // pred_check_branch
        %230 = sbr.rel (%p228) target = $region16
      $region15: #{tpu_custom_call.1} parent=11 // pred_region
        _
      $region16: #{tpu_custom_call.1} parent=11 // pred_fallthru
        _
      // Predicated region
      $region17: #{tpu_custom_call.1} parent=11 // pred_check
        %p231 = pneg %p82
      $region18: #{tpu_custom_call.1} parent=11 // pred_check_branch
        %233 = sbr.rel (%p231) target = $region20
      $region19: #{tpu_custom_call.1} parent=11 // pred_region
        _
      $region20: #{tpu_custom_call.1} parent=11 // pred_fallthru
        _
      // Predicated region
      $region21: #{tpu_custom_call.1} parent=11 // pred_check
        %p234 = pneg %p103
      $region22: #{tpu_custom_call.1} parent=11 // pred_check_branch
        %236 = sbr.rel (%p234) target = $region24
      $region23: #{tpu_custom_call.1} parent=11 // pred_region
        _
      $region24: #{tpu_custom_call.1} parent=11 // pred_fallthru
        _
      // Predicated region
      $region25: #{tpu_custom_call.1} parent=11 // pred_check
        %p237 = pneg %p124
      $region26: #{tpu_custom_call.1} parent=11 // pred_check_branch
        %239 = sbr.rel (%p237) target = $region28
      $region27: #{tpu_custom_call.1} parent=11 // pred_region
        _
      $region28: #{tpu_custom_call.1} parent=11 // pred_fallthru
        _
      // Predicated region
      $region29: #{tpu_custom_call.1} parent=11 // pred_check
        %p240 = pneg %p145
      $region30: #{tpu_custom_call.1} parent=11 // pred_check_branch
        %242 = sbr.rel (%p240) target = $region32
      $region31: #{tpu_custom_call.1} parent=11 // pred_region
        _
      $region32: #{tpu_custom_call.1} parent=11 // pred_fallthru
        _
      // Predicated region
      $region33: #{tpu_custom_call.1} parent=11 // pred_check
        %p243 = pneg %p166
      $region34: #{tpu_custom_call.1} parent=11 // pred_check_branch
        %245 = sbr.rel (%p243) target = $region36
      $region35: #{tpu_custom_call.1} parent=11 // pred_region
        _
      $region36: #{tpu_custom_call.1} parent=11 // pred_fallthru
        _
      // Predicated region
      $region37: #{tpu_custom_call.1} parent=11 // pred_check
        %p246 = pneg %p187
      $region38: #{tpu_custom_call.1} parent=11 // pred_check_branch
        %248 = sbr.rel (%p246) target = $region40
      $region39: #{tpu_custom_call.1} parent=11 // pred_region
        _
      $region40: #{tpu_custom_call.1} parent=11 // pred_fallthru
        _
    $region12: #{tpu_custom_call.1} parent=5 // pred_fallthru
      _
    %p249 = scmp.lt.s32.totalorder %s14, 2
    // Predicated region
    $region41: #{tpu_custom_call.1} parent=5 // pred_check
      %p250 = pneg %p249
    $region42: #{tpu_custom_call.1} parent=5 // pred_check_branch
      %252 = sbr.rel (%p250) target = $region44
    $region43: #{tpu_custom_call.1} parent=5 // pred_region
      // Predicated region
      $region45: #{tpu_custom_call.1} parent=43 // pred_check
        %p253 = pneg %p55
      $region46: #{tpu_custom_call.1} parent=43 // pred_check_branch
        %255 = sbr.rel (%p253) target = $region48
      $region47: #{tpu_custom_call.1} parent=43 // pred_region
        %p256 = scmp.lt.s32.totalorder %s14, 1
        %s257 = scalar_select %p256, %s14, 1
        %s258 = smul.addr %s257, 32
        %s259 = smul.addr %s258, 4
        %s260 = scalar_lea.vmem %s1, %s259
      $region48: #{tpu_custom_call.1} parent=43 // pred_fallthru
        _
    $region44: #{tpu_custom_call.1} parent=5 // pred_fallthru
      _
    %p261 = scmp.le.s32.totalorder 1, %s14
    %p262 = scmp.lt.s32.totalorder %s14, 3
    %p263 = pnand %p261, %p262
    %p264 = pneg %p263
    // Predicated region
    $region49: #{tpu_custom_call.1} parent=5 // pred_check
      _
    $region50: #{tpu_custom_call.1} parent=5 // pred_check_branch
      %266 = sbr.rel (%p263) target = $region52
    $region51: #{tpu_custom_call.1} parent=5 // pred_region
      %s267 = ssub.s32 %s14, 1
      %p268 = pneg %p35
      %p269 = pneg %p32
      %p270 = scmp.lt.s32.totalorder %s19, 1
      %s271 = scalar_select %p270, %s19, 1
      %s272 = smul.addr %s271, 32
      %s273 = smul.addr %s272, 4
      %s274 = scalar_lea.vmem %s1, %s273
      %p275 = pneg %p61
      %p276 = pneg %p58
      %p277 = pneg %p82
      %p278 = pneg %p79
      %p279 = pneg %p103
      %p280 = pneg %p100
      %p281 = pneg %p124
      %p282 = pneg %p121
      %p283 = pneg %p145
      %p284 = pneg %p142
      %p285 = pneg %p166
      %p286 = pneg %p163
      %p287 = pneg %p187
      %p288 = pneg %p184
      %p289 = pneg %p213
      %p290 = pneg %p210
      %p291 = scmp.lt.s32.totalorder %s19, 1
      %s292 = scalar_select %p291, %s19, 1
      %s293 = smul.addr %s292, 32
      %s294 = smul.addr %s293, 8
      %s295 = scalar_lea.vmem %s8, %s294
      %p296 = scmp.lt.s32.totalorder %s19, 1
      %s297 = scalar_select %p296, %s19, 1
      %s298 = smul.addr %s297, 32
      %s299 = smul.addr %s298, 4
      %s300 = scalar_lea.vmem %s1, %s299
      %p301 = scmp.lt.s32.totalorder %s19, 1
      %s302 = scalar_select %p301, %s19, 1
      %s303 = smul.addr %s302, 32
      %s304 = smul.addr %s303, 8
      %s305 = scalar_lea.vmem %s8, %s304
      %v307 = vld [vmem:[%s0] sm:$0xff]
      %v308 = vld [vmem:[%s0 + $0x8] sm:$0xff]
      %v309 = vld [vmem:[%s0 + $0x10] sm:$0xff]
      %v310 = vld [vmem:[%s0 + $0x18] sm:$0xff]
      %v311 = vld [vmem:[%s0 + $0x20] sm:$0xff]
      %v312 = vld [vmem:[%s0 + $0x28] sm:$0xff]
      %v313 = vld [vmem:[%s0 + $0x30] sm:$0xff]
      %v314 = vld [vmem:[%s0 + $0x38] sm:$0xff]
      %v315 = vld [vmem:[%s0 + $0x40] sm:$0xff]
      %v316 = vld [vmem:[%s0 + $0x48] sm:$0xff]
      %v317 = vld [vmem:[%s0 + $0x50] sm:$0xff]
      %v318 = vld [vmem:[%s0 + $0x58] sm:$0xff]
      %v319 = vld [vmem:[%s0 + $0x60] sm:$0xff]
      %v320 = vld [vmem:[%s0 + $0x68] sm:$0xff]
      %v321 = vld [vmem:[%s0 + $0x70] sm:$0xff]
      %v322 = vld [vmem:[%s0 + $0x78] sm:$0xff]
      %v323 = vld [vmem:[%s0 + $0x80] sm:$0xff]
      %v324 = vld [vmem:[%s0 + $0x88] sm:$0xff]
      %v325 = vld [vmem:[%s0 + $0x90] sm:$0xff]
      %v326 = vld [vmem:[%s0 + $0x98] sm:$0xff]
      %v327 = vld [vmem:[%s0 + $0xa0] sm:$0xff]
      %v328 = vld [vmem:[%s0 + $0xa8] sm:$0xff]
      %v329 = vld [vmem:[%s0 + $0xb0] sm:$0xff]
      %v330 = vld [vmem:[%s0 + $0xb8] sm:$0xff]
      %v331 = vld [vmem:[%s0 + $0xc0] sm:$0xff]
      %v332 = vld [vmem:[%s0 + $0xc8] sm:$0xff]
      %v333 = vld [vmem:[%s0 + $0xd0] sm:$0xff]
      %v334 = vld [vmem:[%s0 + $0xd8] sm:$0xff]
      %v335 = vld [vmem:[%s0 + $0xe0] sm:$0xff]
      %v336 = vld [vmem:[%s0 + $0xe8] sm:$0xff]
      %v337 = vld [vmem:[%s0 + $0xf0] sm:$0xff]
      %v338 = vld [vmem:[%s0 + $0xf8] sm:$0xff]
      %v339 = vlaneseq
      %v340 = vshrl.u32 %v339, 7
      %v341 = vadd.s32 %v340, 8
      %v342 = vadd.s32 %v340, 16
      %v343 = vadd.s32 %v340, 24
      %v344 = vadd.s32 %v340, 32
      %v345 = vadd.s32 %v340, 40
      %v346 = vadd.s32 %v340, 48
      %v347 = vadd.s32 %v340, 56
      %v348 = vadd.s32 %v340, 64
      %v349 = vadd.s32 %v340, 72
      %v350 = vadd.s32 %v340, 80
      %v351 = vadd.s32 %v340, 88
      %v352 = vadd.s32 %v340, 96
      %v353 = vadd.s32 %v340, 104
      %v354 = vadd.s32 %v340, 112
      %v355 = vadd.s32 %v340, 120
      %v356 = vadd.s32 %v340, 128
      %v357 = vadd.s32 %v340, 136
      %v358 = vadd.s32 %v340, 144
      %v359 = vadd.s32 %v340, 152
      %v360 = vadd.s32 %v340, 160
      %v361 = vadd.s32 %v340, 168
      %v362 = vadd.s32 %v340, 176
      %v363 = vadd.s32 %v340, 184
      %v364 = vadd.s32 %v340, 192
      %v365 = vadd.s32 %v340, 200
      %v366 = vadd.s32 %v340, 208
      %v367 = vadd.s32 %v340, 216
      %v368 = vadd.s32 %v340, 224
      %v369 = vadd.s32 %v340, 232
      %v370 = vadd.s32 %v340, 240
      %v371 = vadd.s32 %v340, 248
      %v372 = vld [vmem:[%s300] sm:$0xf]
      %v373 = vld [vmem:[%s300 + $0x4] sm:$0xf]
      %v374 = vld [vmem:[%s300 + $0x8] sm:$0xf]
      %v375 = vld [vmem:[%s300 + $0xc] sm:$0xf]
      %v376 = vld [vmem:[%s300 + $0x10] sm:$0xf]
      %v377 = vld [vmem:[%s300 + $0x14] sm:$0xf]
      %v378 = vld [vmem:[%s300 + $0x18] sm:$0xf]
      %v379 = vld [vmem:[%s300 + $0x1c] sm:$0xf]
      %v380 = vld [vmem:[%s300 + $0x20] sm:$0xf]
      %v381 = vld [vmem:[%s300 + $0x24] sm:$0xf]
      %v382 = vld [vmem:[%s300 + $0x28] sm:$0xf]
      %v383 = vld [vmem:[%s300 + $0x2c] sm:$0xf]
      %v384 = vld [vmem:[%s300 + $0x30] sm:$0xf]
      %v385 = vld [vmem:[%s300 + $0x34] sm:$0xf]
      %v386 = vld [vmem:[%s300 + $0x38] sm:$0xf]
      %v387 = vld [vmem:[%s300 + $0x3c] sm:$0xf]
      %v388 = vld [vmem:[%s300 + $0x40] sm:$0xf]
      %v389 = vld [vmem:[%s300 + $0x44] sm:$0xf]
      %v390 = vld [vmem:[%s300 + $0x48] sm:$0xf]
      %v391 = vld [vmem:[%s300 + $0x4c] sm:$0xf]
      %v392 = vld [vmem:[%s300 + $0x50] sm:$0xf]
      %v393 = vld [vmem:[%s300 + $0x54] sm:$0xf]
      %v394 = vld [vmem:[%s300 + $0x58] sm:$0xf]
      %v395 = vld [vmem:[%s300 + $0x5c] sm:$0xf]
      %v396 = vld [vmem:[%s300 + $0x60] sm:$0xf]
      %v397 = vld [vmem:[%s300 + $0x64] sm:$0xf]
      %v398 = vld [vmem:[%s300 + $0x68] sm:$0xf]
      %v399 = vld [vmem:[%s300 + $0x6c] sm:$0xf]
      %v400 = vld [vmem:[%s300 + $0x70] sm:$0xf]
      %v401 = vld [vmem:[%s300 + $0x74] sm:$0xf]
      %v402 = vld [vmem:[%s300 + $0x78] sm:$0xf]
      %v403 = vld [vmem:[%s300 + $0x7c] sm:$0xf]
      %v404 = vld [vmem:[%s2] sm:$0x3]
      %v405 = vld [vmem:[%s3] sm:$0x1]
      %v406 = vld [vmem:[%s4] sm:$0x1]
      %v439 = vunpack.c.l.b16 %v372
      %v440 = vunpack.c.l.b16 %v373
      %v441 = vunpack.c.l.b16 %v374
      %v442 = vunpack.c.l.b16 %v375
      %v443 = vunpack.c.l.b16 %v376
      %v444 = vunpack.c.l.b16 %v377
      %v445 = vunpack.c.l.b16 %v378
      %v446 = vunpack.c.l.b16 %v379
      %v447 = vunpack.c.l.b16 %v380
      %v448 = vunpack.c.l.b16 %v381
      %v449 = vunpack.c.l.b16 %v382
      %v450 = vunpack.c.l.b16 %v383
      %v451 = vunpack.c.l.b16 %v384
      %v452 = vunpack.c.l.b16 %v385
      %v453 = vunpack.c.l.b16 %v386
      %v454 = vunpack.c.l.b16 %v387
      %v455 = vunpack.c.l.b16 %v388
      %v456 = vunpack.c.l.b16 %v389
      %v457 = vunpack.c.l.b16 %v390
      %v458 = vunpack.c.l.b16 %v391
      %v459 = vunpack.c.l.b16 %v392
      %v460 = vunpack.c.l.b16 %v393
      %v461 = vunpack.c.l.b16 %v394
      %v462 = vunpack.c.l.b16 %v395
      %v463 = vunpack.c.l.b16 %v396
      %v464 = vunpack.c.l.b16 %v397
      %v465 = vunpack.c.l.b16 %v398
      %v466 = vunpack.c.l.b16 %v399
      %v467 = vunpack.c.l.b16 %v400
      %v468 = vunpack.c.l.b16 %v401
      %v469 = vunpack.c.l.b16 %v402
      %v470 = vunpack.c.l.b16 %v403
      %v471 = vpack.c.b16 %v440, %v439
      %v472 = vpack.c.b16 %v442, %v441
      %v473 = vpack.c.b16 %v444, %v443
      %v474 = vpack.c.b16 %v446, %v445
      %v475 = vpack.c.b16 %v448, %v447
      %v476 = vpack.c.b16 %v450, %v449
      %v477 = vpack.c.b16 %v452, %v451
      %v478 = vpack.c.b16 %v454, %v453
      %v479 = vpack.c.b16 %v456, %v455
      %v480 = vpack.c.b16 %v458, %v457
      %v481 = vpack.c.b16 %v460, %v459
      %v482 = vpack.c.b16 %v462, %v461
      %v483 = vpack.c.b16 %v464, %v463
      %v484 = vpack.c.b16 %v466, %v465
      %v485 = vpack.c.b16 %v468, %v467
      %v486 = vpack.c.b16 %v470, %v469
      %vm487 = vcmask 31744
      %v489 = vsel %vm487, %v471, 0
      %v492 = vsel %vm487, %v472, 0
      %v495 = vsel %vm487, %v473, 0
      %v498 = vsel %vm487, %v474, 0
      %v501 = vsel %vm487, %v475, 0
      %v504 = vsel %vm487, %v476, 0
      %v507 = vsel %vm487, %v477, 0
      %v510 = vsel %vm487, %v478, 0
      %v513 = vsel %vm487, %v479, 0
      %v516 = vsel %vm487, %v480, 0
      %v519 = vsel %vm487, %v481, 0
      %v522 = vsel %vm487, %v482, 0
      %v525 = vsel %vm487, %v483, 0
      %v528 = vsel %vm487, %v484, 0
      %v531 = vsel %vm487, %v485, 0
      %v534 = vsel %vm487, %v486, 0
      %vm536 = vcmask 1041408
      %v538 = vsel %vm536, %v404, 0
      %540 = vmatprep.subr.bf16.mxu0 0
      %541 = vmatpush1.bf16.msra.mxu0 %v538
      %542 = vmatprep.subr.bf16.mxu0 0
      %543 = vmatpush1.bf16.msra.mxu0 0
      %544 = vmatprep.subr.bf16.mxu0 0
      %545 = vmatpush1.bf16.msra.mxu0 0
      %546 = vmatprep.subr.bf16.mxu0 0
      %547 = vmatpush1.bf16.msra.mxu0 0
      %548 = vmatprep.subr.bf16.mxu0 0
      %549 = vmatpush1.bf16.msra.mxu0 0
      %550 = vmatprep.subr.bf16.mxu0 0
      %551 = vmatpush1.bf16.msra.mxu0 0
      %552 = vmatprep.subr.bf16.mxu0 0
      %553 = vmatpush1.bf16.msra.mxu0 0
      %554 = vmatprep.subr.bf16.mxu0 0
      %555 = vmatpush1.bf16.msra.mxu0 0
      %556 = vmatprep.subr.bf16.mxu0 0
      %557 = vmatpush1.bf16.msra.mxu0 0
      %558 = vmatprep.subr.bf16.mxu0 0
      %559 = vmatpush1.bf16.msra.mxu0 0
      %560 = vmatprep.subr.bf16.mxu0 0
      %561 = vmatpush1.bf16.msra.mxu0 0
      %562 = vmatprep.subr.bf16.mxu0 0
      %563 = vmatpush1.bf16.msra.mxu0 0
      %564 = vmatprep.subr.bf16.mxu0 0
      %565 = vmatpush1.bf16.msra.mxu0 0
      %566 = vmatprep.subr.bf16.mxu0 0
      %567 = vmatpush1.bf16.msra.mxu0 0
      %568 = vmatprep.subr.bf16.mxu0 0
      %569 = vmatpush1.bf16.msra.mxu0 0
      %570 = vmatprep.subr.bf16.mxu0 0
      %571 = vmatpush1.bf16.msra.mxu0 0
      %572 = vmatprep.mubr.bf16.mxu0 0
      %573 = vmatmul.mubr.bf16.gmra.mrb[0].mxu0 %v489
      %v574 = vpop.f32.mrb[0].mxu0
      %v575 = vadd.f32 0.0, %v574
      %v576 = vpop.f32.mrb[0].mxu0
      %v577 = vpop.f32.mrb[0].mxu0
      %v578 = vadd.f32 0.0, %v577
      %v579 = vpop.f32.mrb[0].mxu0
      %580 = vmatprep.mubr.bf16.mxu0 0
      %581 = vmatmul.mubr.bf16.gmra.mrb[0].mxu0 %v492
      %v582 = vpop.f32.mrb[0].mxu0
      %v583 = vadd.f32 0.0, %v582
      %v584 = vpop.f32.mrb[0].mxu0
      %v585 = vpop.f32.mrb[0].mxu0
      %v586 = vadd.f32 0.0, %v585
      %v587 = vpop.f32.mrb[0].mxu0
      %588 = vmatprep.mubr.bf16.mxu0 0
      %589 = vmatmul.mubr.bf16.gmra.mrb[0].mxu0 %v495
      %v590 = vpop.f32.mrb[0].mxu0
      %v591 = vadd.f32 0.0, %v590
      %v592 = vpop.f32.mrb[0].mxu0
      %v593 = vpop.f32.mrb[0].mxu0
      %v594 = vadd.f32 0.0, %v593
      %v595 = vpop.f32.mrb[0].mxu0
      %596 = vmatprep.mubr.bf16.mxu0 0
      %597 = vmatmul.mubr.bf16.gmra.mrb[0].mxu0 %v498
      %v598 = vpop.f32.mrb[0].mxu0
      %v599 = vadd.f32 0.0, %v598
      %v600 = vpop.f32.mrb[0].mxu0
      %v601 = vpop.f32.mrb[0].mxu0
      %v602 = vadd.f32 0.0, %v601
      %v603 = vpop.f32.mrb[0].mxu0
      %604 = vmatprep.mubr.bf16.mxu0 0
      %605 = vmatmul.mubr.bf16.gmra.mrb[0].mxu0 %v501
      %v606 = vpop.f32.mrb[0].mxu0
      %v607 = vadd.f32 0.0, %v606
      %v608 = vpop.f32.mrb[0].mxu0
      %v609 = vpop.f32.mrb[0].mxu0
      %v610 = vadd.f32 0.0, %v609
      %v611 = vpop.f32.mrb[0].mxu0
      %612 = vmatprep.mubr.bf16.mxu0 0
      %613 = vmatmul.mubr.bf16.gmra.mrb[0].mxu0 %v504
      %v614 = vpop.f32.mrb[0].mxu0
      %v615 = vadd.f32 0.0, %v614
      %v616 = vpop.f32.mrb[0].mxu0
      %v617 = vpop.f32.mrb[0].mxu0
      %v618 = vadd.f32 0.0, %v617
      %v619 = vpop.f32.mrb[0].mxu0
      %620 = vmatprep.mubr.bf16.mxu0 0
      %621 = vmatmul.mubr.bf16.gmra.mrb[0].mxu0 %v507
      %v622 = vpop.f32.mrb[0].mxu0
      %v623 = vadd.f32 0.0, %v622
      %v624 = vpop.f32.mrb[0].mxu0
      %v625 = vpop.f32.mrb[0].mxu0
      %v626 = vadd.f32 0.0, %v625
      %v627 = vpop.f32.mrb[0].mxu0
      %628 = vmatprep.mubr.bf16.mxu0 0
      %629 = vmatmul.mubr.bf16.gmra.mrb[0].mxu0 %v510
      %v630 = vpop.f32.mrb[0].mxu0
      %v631 = vadd.f32 0.0, %v630
      %v632 = vpop.f32.mrb[0].mxu0
      %v633 = vpop.f32.mrb[0].mxu0
      %v634 = vadd.f32 0.0, %v633
      %v635 = vpop.f32.mrb[0].mxu0
      %636 = vmatprep.mubr.bf16.mxu0 0
      %637 = vmatmul.mubr.bf16.gmra.mrb[0].mxu0 %v513
      %v638 = vpop.f32.mrb[0].mxu0
      %v639 = vadd.f32 0.0, %v638
      %v640 = vpop.f32.mrb[0].mxu0
      %v641 = vpop.f32.mrb[0].mxu0
      %v642 = vadd.f32 0.0, %v641
      %v643 = vpop.f32.mrb[0].mxu0
      %644 = vmatprep.mubr.bf16.mxu0 0
      %645 = vmatmul.mubr.bf16.gmra.mrb[0].mxu0 %v516
      %v646 = vpop.f32.mrb[0].mxu0
      %v647 = vadd.f32 0.0, %v646
      %v648 = vpop.f32.mrb[0].mxu0
      %v649 = vpop.f32.mrb[0].mxu0
      %v650 = vadd.f32 0.0, %v649
      %v651 = vpop.f32.mrb[0].mxu0
      %652 = vmatprep.mubr.bf16.mxu0 0
      %653 = vmatmul.mubr.bf16.gmra.mrb[0].mxu0 %v519
      %v654 = vpop.f32.mrb[0].mxu0
      %v655 = vadd.f32 0.0, %v654
      %v656 = vpop.f32.mrb[0].mxu0
      %v657 = vpop.f32.mrb[0].mxu0
      %v658 = vadd.f32 0.0, %v657
      %v659 = vpop.f32.mrb[0].mxu0
      %660 = vmatprep.mubr.bf16.mxu0 0
      %661 = vmatmul.mubr.bf16.gmra.mrb[0].mxu0 %v522
      %v662 = vpop.f32.mrb[0].mxu0
      %v663 = vadd.f32 0.0, %v662
      %v664 = vpop.f32.mrb[0].mxu0
      %v665 = vpop.f32.mrb[0].mxu0
      %v666 = vadd.f32 0.0, %v665
      %v667 = vpop.f32.mrb[0].mxu0
      %668 = vmatprep.mubr.bf16.mxu0 0
      %669 = vmatmul.mubr.bf16.gmra.mrb[0].mxu0 %v525
      %v670 = vpop.f32.mrb[0].mxu0
      %v671 = vadd.f32 0.0, %v670
      %v672 = vpop.f32.mrb[0].mxu0
      %v673 = vpop.f32.mrb[0].mxu0
      %v674 = vadd.f32 0.0, %v673
      %v675 = vpop.f32.mrb[0].mxu0
      %676 = vmatprep.mubr.bf16.mxu0 0
      %677 = vmatmul.mubr.bf16.gmra.mrb[0].mxu0 %v528
      %v678 = vpop.f32.mrb[0].mxu0
      %v679 = vadd.f32 0.0, %v678
      %v680 = vpop.f32.mrb[0].mxu0
      %v681 = vpop.f32.mrb[0].mxu0
      %v682 = vadd.f32 0.0, %v681
      %v683 = vpop.f32.mrb[0].mxu0
      %684 = vmatprep.mubr.bf16.mxu0 0
      %685 = vmatmul.mubr.bf16.gmra.mrb[0].mxu0 %v531
      %v686 = vpop.f32.mrb[0].mxu0
      %v687 = vadd.f32 0.0, %v686
      %v688 = vpop.f32.mrb[0].mxu0
      %v689 = vpop.f32.mrb[0].mxu0
      %v690 = vadd.f32 0.0, %v689
      %v691 = vpop.f32.mrb[0].mxu0
      %692 = vmatprep.mubr.bf16.mxu0 0
      %693 = vmatmul.mubr.bf16.gmra.mrb[0].mxu0 %v534
      %v694 = vpop.f32.mrb[0].mxu0
      %v695 = vadd.f32 0.0, %v694
      %v696 = vpop.f32.mrb[0].mxu0
      %v697 = vpop.f32.mrb[0].mxu0
      %v698 = vadd.f32 0.0, %v697
      %v699 = vpop.f32.mrb[0].mxu0
      %700 = vdwg.mxu0
      %v702 = vlaneseq
      %v703 = vshrl.u32 %v702, 7
      %v704 = vsub.s32 0, %v703
      %v705 = vrot.slane %v405, %v704
      %v707 = vmul.f32 %v575, %v705
      %v708 = vmul.f32 %v578, %v705
      %v709 = vmul.f32 %v583, %v705
      %v710 = vmul.f32 %v586, %v705
      %v711 = vmul.f32 %v591, %v705
      %v712 = vmul.f32 %v594, %v705
      %v713 = vmul.f32 %v599, %v705
      %v714 = vmul.f32 %v602, %v705
      %v715 = vmul.f32 %v607, %v705
      %v716 = vmul.f32 %v610, %v705
      %v717 = vmul.f32 %v615, %v705
      %v718 = vmul.f32 %v618, %v705
      %v719 = vmul.f32 %v623, %v705
      %v720 = vmul.f32 %v626, %v705
      %v721 = vmul.f32 %v631, %v705
      %v722 = vmul.f32 %v634, %v705
      %v723 = vmul.f32 %v639, %v705
      %v724 = vmul.f32 %v642, %v705
      %v725 = vmul.f32 %v647, %v705
      %v726 = vmul.f32 %v650, %v705
      %v727 = vmul.f32 %v655, %v705
      %v728 = vmul.f32 %v658, %v705
      %v729 = vmul.f32 %v663, %v705
      %v730 = vmul.f32 %v666, %v705
      %v731 = vmul.f32 %v671, %v705
      %v732 = vmul.f32 %v674, %v705
      %v733 = vmul.f32 %v679, %v705
      %v734 = vmul.f32 %v682, %v705
      %v735 = vmul.f32 %v687, %v705
      %v736 = vmul.f32 %v690, %v705
      %v737 = vmul.f32 %v695, %v705
      %v738 = vmul.f32 %v698, %v705
      %v740 = vlaneseq
      %v741 = vshrl.u32 %v740, 7
      %v742 = vsub.s32 0, %v741
      %v743 = vrot.slane %v406, %v742
      %v745 = vadd.f32 %v707, %v743
      %v746 = vadd.f32 %v708, %v743
      %v747 = vadd.f32 %v709, %v743
      %v748 = vadd.f32 %v710, %v743
      %v749 = vadd.f32 %v711, %v743
      %v750 = vadd.f32 %v712, %v743
      %v751 = vadd.f32 %v713, %v743
      %v752 = vadd.f32 %v714, %v743
      %v753 = vadd.f32 %v715, %v743
      %v754 = vadd.f32 %v716, %v743
      %v755 = vadd.f32 %v717, %v743
      %v756 = vadd.f32 %v718, %v743
      %v757 = vadd.f32 %v719, %v743
      %v758 = vadd.f32 %v720, %v743
      %v759 = vadd.f32 %v721, %v743
      %v760 = vadd.f32 %v722, %v743
      %v761 = vadd.f32 %v723, %v743
      %v762 = vadd.f32 %v724, %v743
      %v763 = vadd.f32 %v725, %v743
      %v764 = vadd.f32 %v726, %v743
      %v765 = vadd.f32 %v727, %v743
      %v766 = vadd.f32 %v728, %v743
      %v767 = vadd.f32 %v729, %v743
      %v768 = vadd.f32 %v730, %v743
      %v769 = vadd.f32 %v731, %v743
      %v770 = vadd.f32 %v732, %v743
      %v771 = vadd.f32 %v733, %v743
      %v772 = vadd.f32 %v734, %v743
      %v773 = vadd.f32 %v735, %v743
      %v774 = vadd.f32 %v736, %v743
      %v775 = vadd.f32 %v737, %v743
      %v776 = vadd.f32 %v738, %v743
      %v777 = vxor.u32 %v745, 2147483648
      %v778 = vxor.u32 %v746, 2147483648
      %v779 = vxor.u32 %v747, 2147483648
      %v780 = vxor.u32 %v748, 2147483648
      %v781 = vxor.u32 %v749, 2147483648
      %v782 = vxor.u32 %v750, 2147483648
      %v783 = vxor.u32 %v751, 2147483648
      %v784 = vxor.u32 %v752, 2147483648
      %v785 = vxor.u32 %v753, 2147483648
      %v786 = vxor.u32 %v754, 2147483648
      %v787 = vxor.u32 %v755, 2147483648
      %v788 = vxor.u32 %v756, 2147483648
      %v789 = vxor.u32 %v757, 2147483648
      %v790 = vxor.u32 %v758, 2147483648
      %v791 = vxor.u32 %v759, 2147483648
      %v792 = vxor.u32 %v760, 2147483648
      %v793 = vxor.u32 %v761, 2147483648
      %v794 = vxor.u32 %v762, 2147483648
      %v795 = vxor.u32 %v763, 2147483648
      %v796 = vxor.u32 %v764, 2147483648
      %v797 = vxor.u32 %v765, 2147483648
      %v798 = vxor.u32 %v766, 2147483648
      %v799 = vxor.u32 %v767, 2147483648
      %v800 = vxor.u32 %v768, 2147483648
      %v801 = vxor.u32 %v769, 2147483648
      %v802 = vxor.u32 %v770, 2147483648
      %v803 = vxor.u32 %v771, 2147483648
      %v804 = vxor.u32 %v772, 2147483648
      %v805 = vxor.u32 %v773, 2147483648
      %v806 = vxor.u32 %v774, 2147483648
      %v807 = vxor.u32 %v775, 2147483648
      %v808 = vxor.u32 %v776, 2147483648
      %v809 = vmul.f32 %v777, 1.442695
      %v810 = vpow.pop %v809
      %v811 = vmul.f32 %v778, 1.442695
      %v812 = vpow.pop %v811
      %v813 = vmul.f32 %v779, 1.442695
      %v814 = vpow.pop %v813
      %v815 = vmul.f32 %v780, 1.442695
      %v816 = vpow.pop %v815
      %v817 = vmul.f32 %v781, 1.442695
      %v818 = vpow.pop %v817
      %v819 = vmul.f32 %v782, 1.442695
      %v820 = vpow.pop %v819
      %v821 = vmul.f32 %v783, 1.442695
      %v822 = vpow.pop %v821
      %v823 = vmul.f32 %v784, 1.442695
      %v824 = vpow.pop %v823
      %v825 = vmul.f32 %v785, 1.442695
      %v826 = vpow.pop %v825
      %v827 = vmul.f32 %v786, 1.442695
      %v828 = vpow.pop %v827
      %v829 = vmul.f32 %v787, 1.442695
      %v830 = vpow.pop %v829
      %v831 = vmul.f32 %v788, 1.442695
      %v832 = vpow.pop %v831
      %v833 = vmul.f32 %v789, 1.442695
      %v834 = vpow.pop %v833
      %v835 = vmul.f32 %v790, 1.442695
      %v836 = vpow.pop %v835
      %v837 = vmul.f32 %v791, 1.442695
      %v838 = vpow.pop %v837
      %v839 = vmul.f32 %v792, 1.442695
      %v840 = vpow.pop %v839
      %v841 = vmul.f32 %v793, 1.442695
      %v842 = vpow.pop %v841
      %v843 = vmul.f32 %v794, 1.442695
      %v844 = vpow.pop %v843
      %v845 = vmul.f32 %v795, 1.442695
      %v846 = vpow.pop %v845
      %v847 = vmul.f32 %v796, 1.442695
      %v848 = vpow.pop %v847
      %v849 = vmul.f32 %v797, 1.442695
      %v850 = vpow.pop %v849
      %v851 = vmul.f32 %v798, 1.442695
      %v852 = vpow.pop %v851
      %v853 = vmul.f32 %v799, 1.442695
      %v854 = vpow.pop %v853
      %v855 = vmul.f32 %v800, 1.442695
      %v856 = vpow.pop %v855
      %v857 = vmul.f32 %v801, 1.442695
      %v858 = vpow.pop %v857
      %v859 = vmul.f32 %v802, 1.442695
      %v860 = vpow.pop %v859
      %v861 = vmul.f32 %v803, 1.442695
      %v862 = vpow.pop %v861
      %v863 = vmul.f32 %v804, 1.442695
      %v864 = vpow.pop %v863
      %v865 = vmul.f32 %v805, 1.442695
      %v866 = vpow.pop %v865
      %v867 = vmul.f32 %v806, 1.442695
      %v868 = vpow.pop %v867
      %v869 = vmul.f32 %v807, 1.442695
      %v870 = vpow.pop %v869
      %v871 = vmul.f32 %v808, 1.442695
      %v872 = vpow.pop %v871
      %v873 = vadd.f32 %v810, 1.0
      %v874 = vadd.f32 %v812, 1.0
      %v875 = vadd.f32 %v814, 1.0
      %v876 = vadd.f32 %v816, 1.0
      %v877 = vadd.f32 %v818, 1.0
      %v878 = vadd.f32 %v820, 1.0
      %v879 = vadd.f32 %v822, 1.0
      %v880 = vadd.f32 %v824, 1.0
      %v881 = vadd.f32 %v826, 1.0
      %v882 = vadd.f32 %v828, 1.0
      %v883 = vadd.f32 %v830, 1.0
      %v884 = vadd.f32 %v832, 1.0
      %v885 = vadd.f32 %v834, 1.0
      %v886 = vadd.f32 %v836, 1.0
      %v887 = vadd.f32 %v838, 1.0
      %v888 = vadd.f32 %v840, 1.0
      %v889 = vadd.f32 %v842, 1.0
      %v890 = vadd.f32 %v844, 1.0
      %v891 = vadd.f32 %v846, 1.0
      %v892 = vadd.f32 %v848, 1.0
      %v893 = vadd.f32 %v850, 1.0
      %v894 = vadd.f32 %v852, 1.0
      %v895 = vadd.f32 %v854, 1.0
      %v896 = vadd.f32 %v856, 1.0
      %v897 = vadd.f32 %v858, 1.0
      %v898 = vadd.f32 %v860, 1.0
      %v899 = vadd.f32 %v862, 1.0
      %v900 = vadd.f32 %v864, 1.0
      %v901 = vadd.f32 %v866, 1.0
      %v902 = vadd.f32 %v868, 1.0
      %v903 = vadd.f32 %v870, 1.0
      %v904 = vadd.f32 %v872, 1.0
      %v905 = vrcp.pop %v873
      %v906 = vmul.f32 1.0, %v905
      %v907 = vrcp.pop %v874
      %v908 = vmul.f32 1.0, %v907
      %v909 = vrcp.pop %v875
      %v910 = vmul.f32 1.0, %v909
      %v911 = vrcp.pop %v876
      %v912 = vmul.f32 1.0, %v911
      %v913 = vrcp.pop %v877
      %v914 = vmul.f32 1.0, %v913
      %v915 = vrcp.pop %v878
      %v916 = vmul.f32 1.0, %v915
      %v917 = vrcp.pop %v879
      %v918 = vmul.f32 1.0, %v917
      %v919 = vrcp.pop %v880
      %v920 = vmul.f32 1.0, %v919
      %v921 = vrcp.pop %v881
      %v922 = vmul.f32 1.0, %v921
      %v923 = vrcp.pop %v882
      %v924 = vmul.f32 1.0, %v923
      %v925 = vrcp.pop %v883
      %v926 = vmul.f32 1.0, %v925
      %v927 = vrcp.pop %v884
      %v928 = vmul.f32 1.0, %v927
      %v929 = vrcp.pop %v885
      %v930 = vmul.f32 1.0, %v929
      %v931 = vrcp.pop %v886
      %v932 = vmul.f32 1.0, %v931
      %v933 = vrcp.pop %v887
      %v934 = vmul.f32 1.0, %v933
      %v935 = vrcp.pop %v888
      %v936 = vmul.f32 1.0, %v935
      %v937 = vrcp.pop %v889
      %v938 = vmul.f32 1.0, %v937
      %v939 = vrcp.pop %v890
      %v940 = vmul.f32 1.0, %v939
      %v941 = vrcp.pop %v891
      %v942 = vmul.f32 1.0, %v941
      %v943 = vrcp.pop %v892
      %v944 = vmul.f32 1.0, %v943
      %v945 = vrcp.pop %v893
      %v946 = vmul.f32 1.0, %v945
      %v947 = vrcp.pop %v894
      %v948 = vmul.f32 1.0, %v947
      %v949 = vrcp.pop %v895
      %v950 = vmul.f32 1.0, %v949
      %v951 = vrcp.pop %v896
      %v952 = vmul.f32 1.0, %v951
      %v953 = vrcp.pop %v897
      %v954 = vmul.f32 1.0, %v953
      %v955 = vrcp.pop %v898
      %v956 = vmul.f32 1.0, %v955
      %v957 = vrcp.pop %v899
      %v958 = vmul.f32 1.0, %v957
      %v959 = vrcp.pop %v900
      %v960 = vmul.f32 1.0, %v959
      %v961 = vrcp.pop %v901
      %v962 = vmul.f32 1.0, %v961
      %v963 = vrcp.pop %v902
      %v964 = vmul.f32 1.0, %v963
      %v965 = vrcp.pop %v903
      %v966 = vmul.f32 1.0, %v965
      %v967 = vrcp.pop %v904
      %v968 = vmul.f32 1.0, %v967
      %v969 = vmul.f32 %v745, %v906
      %v970 = vmul.f32 %v746, %v908
      %v971 = vmul.f32 %v747, %v910
      %v972 = vmul.f32 %v748, %v912
      %v973 = vmul.f32 %v749, %v914
      %v974 = vmul.f32 %v750, %v916
      %v975 = vmul.f32 %v751, %v918
      %v976 = vmul.f32 %v752, %v920
      %v977 = vmul.f32 %v753, %v922
      %v978 = vmul.f32 %v754, %v924
      %v979 = vmul.f32 %v755, %v926
      %v980 = vmul.f32 %v756, %v928
      %v981 = vmul.f32 %v757, %v930
      %v982 = vmul.f32 %v758, %v932
      %v983 = vmul.f32 %v759, %v934
      %v984 = vmul.f32 %v760, %v936
      %v985 = vmul.f32 %v761, %v938
      %v986 = vmul.f32 %v762, %v940
      %v987 = vmul.f32 %v763, %v942
      %v988 = vmul.f32 %v764, %v944
      %v989 = vmul.f32 %v765, %v946
      %v990 = vmul.f32 %v766, %v948
      %v991 = vmul.f32 %v767, %v950
      %v992 = vmul.f32 %v768, %v952
      %v993 = vmul.f32 %v769, %v954
      %v994 = vmul.f32 %v770, %v956
      %v995 = vmul.f32 %v771, %v958
      %v996 = vmul.f32 %v772, %v960
      %v997 = vmul.f32 %v773, %v962
      %v998 = vmul.f32 %v774, %v964
      %v999 = vmul.f32 %v775, %v966
      %v1000 = vmul.f32 %v776, %v968
      %vm1001 = vcmp.ge.s32.totalorder %v307, 1
      %vm1002 = vcmp.ge.s32.totalorder %v308, 1
      %vm1003 = vcmp.ge.s32.totalorder %v309, 1
      %vm1004 = vcmp.ge.s32.totalorder %v310, 1
      %vm1005 = vcmp.ge.s32.totalorder %v311, 1
      %vm1006 = vcmp.ge.s32.totalorder %v312, 1
      %vm1007 = vcmp.ge.s32.totalorder %v313, 1
      %vm1008 = vcmp.ge.s32.totalorder %v314, 1
      %vm1009 = vcmp.ge.s32.totalorder %v315, 1
      %vm1010 = vcmp.ge.s32.totalorder %v316, 1
      %vm1011 = vcmp.ge.s32.totalorder %v317, 1
      %vm1012 = vcmp.ge.s32.totalorder %v318, 1
      %vm1013 = vcmp.ge.s32.totalorder %v319, 1
      %vm1014 = vcmp.ge.s32.totalorder %v320, 1
      %vm1015 = vcmp.ge.s32.totalorder %v321, 1
      %vm1016 = vcmp.ge.s32.totalorder %v322, 1
      %vm1017 = vcmp.ge.s32.totalorder %v323, 1
      %vm1018 = vcmp.ge.s32.totalorder %v324, 1
      %vm1019 = vcmp.ge.s32.totalorder %v325, 1
      %vm1020 = vcmp.ge.s32.totalorder %v326, 1
      %vm1021 = vcmp.ge.s32.totalorder %v327, 1
      %vm1022 = vcmp.ge.s32.totalorder %v328, 1
      %vm1023 = vcmp.ge.s32.totalorder %v329, 1
      %vm1024 = vcmp.ge.s32.totalorder %v330, 1
      %vm1025 = vcmp.ge.s32.totalorder %v331, 1
      %vm1026 = vcmp.ge.s32.totalorder %v332, 1
      %vm1027 = vcmp.ge.s32.totalorder %v333, 1
      %vm1028 = vcmp.ge.s32.totalorder %v334, 1
      %vm1029 = vcmp.ge.s32.totalorder %v335, 1
      %vm1030 = vcmp.ge.s32.totalorder %v336, 1
      %vm1031 = vcmp.ge.s32.totalorder %v337, 1
      %vm1032 = vcmp.ge.s32.totalorder %v338, 1
      %v1034 = vrot.slane %v1000, 7
      %vm1067 = vcmask 1040384
      %v1068 = vrot.slane %v969, 7
      %v1069 = vrot.slane %v970, 7
      %v1070 = vsel %vm1067, %v1068, %v1069
      %v1071 = vrot.slane %v971, 7
      %v1072 = vsel %vm1067, %v1069, %v1071
      %v1073 = vrot.slane %v972, 7
      %v1074 = vsel %vm1067, %v1071, %v1073
      %v1075 = vrot.slane %v973, 7
      %v1076 = vsel %vm1067, %v1073, %v1075
      %v1077 = vrot.slane %v974, 7
      %v1078 = vsel %vm1067, %v1075, %v1077
      %v1079 = vrot.slane %v975, 7
      %v1080 = vsel %vm1067, %v1077, %v1079
      %v1081 = vrot.slane %v976, 7
      %v1082 = vsel %vm1067, %v1079, %v1081
      %v1083 = vrot.slane %v977, 7
      %v1084 = vsel %vm1067, %v1081, %v1083
      %v1085 = vrot.slane %v978, 7
      %v1086 = vsel %vm1067, %v1083, %v1085
      %v1087 = vrot.slane %v979, 7
      %v1088 = vsel %vm1067, %v1085, %v1087
      %v1089 = vrot.slane %v980, 7
      %v1090 = vsel %vm1067, %v1087, %v1089
      %v1091 = vrot.slane %v981, 7
      %v1092 = vsel %vm1067, %v1089, %v1091
      %v1093 = vrot.slane %v982, 7
      %v1094 = vsel %vm1067, %v1091, %v1093
      %v1095 = vrot.slane %v983, 7
      %v1096 = vsel %vm1067, %v1093, %v1095
      %v1097 = vrot.slane %v984, 7
      %v1098 = vsel %vm1067, %v1095, %v1097
      %v1099 = vrot.slane %v985, 7
      %v1100 = vsel %vm1067, %v1097, %v1099
      %v1101 = vrot.slane %v986, 7
      %v1102 = vsel %vm1067, %v1099, %v1101
      %v1103 = vrot.slane %v987, 7
      %v1104 = vsel %vm1067, %v1101, %v1103
      %v1105 = vrot.slane %v988, 7
      %v1106 = vsel %vm1067, %v1103, %v1105
      %v1107 = vrot.slane %v989, 7
      %v1108 = vsel %vm1067, %v1105, %v1107
      %v1109 = vrot.slane %v990, 7
      %v1110 = vsel %vm1067, %v1107, %v1109
      %v1111 = vrot.slane %v991, 7
      %v1112 = vsel %vm1067, %v1109, %v1111
      %v1113 = vrot.slane %v992, 7
      %v1114 = vsel %vm1067, %v1111, %v1113
      %v1115 = vrot.slane %v993, 7
      %v1116 = vsel %vm1067, %v1113, %v1115
      %v1117 = vrot.slane %v994, 7
      %v1118 = vsel %vm1067, %v1115, %v1117
      %v1119 = vrot.slane %v995, 7
      %v1120 = vsel %vm1067, %v1117, %v1119
      %v1121 = vrot.slane %v996, 7
      %v1122 = vsel %vm1067, %v1119, %v1121
      %v1123 = vrot.slane %v997, 7
      %v1124 = vsel %vm1067, %v1121, %v1123
      %v1125 = vrot.slane %v998, 7
      %v1126 = vsel %vm1067, %v1123, %v1125
      %v1127 = vrot.slane %v999, 7
      %v1128 = vsel %vm1067, %v1125, %v1127
      %v1129 = vsel %vm1067, %v1127, %v1034
      %v1162 = vsel %vm1067, %v1034, %v1068
      %v1163 = vsel %vm1001, 1, 0
      %v1164 = vsel %vm1002, 1, 0
      %v1165 = vsel %vm1003, 1, 0
      %v1166 = vsel %vm1004, 1, 0
      %v1167 = vsel %vm1005, 1, 0
      %v1168 = vsel %vm1006, 1, 0
      %v1169 = vsel %vm1007, 1, 0
      %v1170 = vsel %vm1008, 1, 0
      %v1171 = vsel %vm1009, 1, 0
      %v1172 = vsel %vm1010, 1, 0
      %v1173 = vsel %vm1011, 1, 0
      %v1174 = vsel %vm1012, 1, 0
      %v1175 = vsel %vm1013, 1, 0
      %v1176 = vsel %vm1014, 1, 0
      %v1177 = vsel %vm1015, 1, 0
      %v1178 = vsel %vm1016, 1, 0
      %v1179 = vsel %vm1017, 1, 0
      %v1180 = vsel %vm1018, 1, 0
      %v1181 = vsel %vm1019, 1, 0
      %v1182 = vsel %vm1020, 1, 0
      %v1183 = vsel %vm1021, 1, 0
      %v1184 = vsel %vm1022, 1, 0
      %v1185 = vsel %vm1023, 1, 0
      %v1186 = vsel %vm1024, 1, 0
      %v1187 = vsel %vm1025, 1, 0
      %v1188 = vsel %vm1026, 1, 0
      %v1189 = vsel %vm1027, 1, 0
      %v1190 = vsel %vm1028, 1, 0
      %v1191 = vsel %vm1029, 1, 0
      %v1192 = vsel %vm1030, 1, 0
      %v1193 = vsel %vm1031, 1, 0
      %v1194 = vsel %vm1032, 1, 0
      %1195 = vset.pattern.permute.xlu0 0
      %1196 = vperm.xlu0 %1195, %v1163
      %v1197 = vpop.permute.xlu0 %1196
      %1198 = vset.pattern.permute.xlu0 0
      %1199 = vperm.xlu0 %1198, %v1164
      %v1200 = vpop.permute.xlu0 %1199
      %1201 = vset.pattern.permute.xlu0 0
      %1202 = vperm.xlu0 %1201, %v1165
      %v1203 = vpop.permute.xlu0 %1202
      %1204 = vset.pattern.permute.xlu0 0
      %1205 = vperm.xlu0 %1204, %v1166
      %v1206 = vpop.permute.xlu0 %1205
      %1207 = vset.pattern.permute.xlu0 0
      %1208 = vperm.xlu0 %1207, %v1167
      %v1209 = vpop.permute.xlu0 %1208
      %1210 = vset.pattern.permute.xlu0 0
      %1211 = vperm.xlu0 %1210, %v1168
      %v1212 = vpop.permute.xlu0 %1211
      %1213 = vset.pattern.permute.xlu0 0
      %1214 = vperm.xlu0 %1213, %v1169
      %v1215 = vpop.permute.xlu0 %1214
      %1216 = vset.pattern.permute.xlu0 0
      %1217 = vperm.xlu0 %1216, %v1170
      %v1218 = vpop.permute.xlu0 %1217
      %1219 = vset.pattern.permute.xlu0 0
      %1220 = vperm.xlu0 %1219, %v1171
      %v1221 = vpop.permute.xlu0 %1220
      %1222 = vset.pattern.permute.xlu0 0
      %1223 = vperm.xlu0 %1222, %v1172
      %v1224 = vpop.permute.xlu0 %1223
      %1225 = vset.pattern.permute.xlu0 0
      %1226 = vperm.xlu0 %1225, %v1173
      %v1227 = vpop.permute.xlu0 %1226
      %1228 = vset.pattern.permute.xlu0 0
      %1229 = vperm.xlu0 %1228, %v1174
      %v1230 = vpop.permute.xlu0 %1229
      %1231 = vset.pattern.permute.xlu0 0
      %1232 = vperm.xlu0 %1231, %v1175
      %v1233 = vpop.permute.xlu0 %1232
      %1234 = vset.pattern.permute.xlu0 0
      %1235 = vperm.xlu0 %1234, %v1176
      %v1236 = vpop.permute.xlu0 %1235
      %1237 = vset.pattern.permute.xlu0 0
      %1238 = vperm.xlu0 %1237, %v1177
      %v1239 = vpop.permute.xlu0 %1238
      %1240 = vset.pattern.permute.xlu0 0
      %1241 = vperm.xlu0 %1240, %v1178
      %v1242 = vpop.permute.xlu0 %1241
      %1243 = vset.pattern.permute.xlu0 0
      %1244 = vperm.xlu0 %1243, %v1179
      %v1245 = vpop.permute.xlu0 %1244
      %1246 = vset.pattern.permute.xlu0 0
      %1247 = vperm.xlu0 %1246, %v1180
      %v1248 = vpop.permute.xlu0 %1247
      %1249 = vset.pattern.permute.xlu0 0
      %1250 = vperm.xlu0 %1249, %v1181
      %v1251 = vpop.permute.xlu0 %1250
      %1252 = vset.pattern.permute.xlu0 0
      %1253 = vperm.xlu0 %1252, %v1182
      %v1254 = vpop.permute.xlu0 %1253
      %1255 = vset.pattern.permute.xlu0 0
      %1256 = vperm.xlu0 %1255, %v1183
      %v1257 = vpop.permute.xlu0 %1256
      %1258 = vset.pattern.permute.xlu0 0
      %1259 = vperm.xlu0 %1258, %v1184
      %v1260 = vpop.permute.xlu0 %1259
      %1261 = vset.pattern.permute.xlu0 0
      %1262 = vperm.xlu0 %1261, %v1185
      %v1263 = vpop.permute.xlu0 %1262
      %1264 = vset.pattern.permute.xlu0 0
      %1265 = vperm.xlu0 %1264, %v1186
      %v1266 = vpop.permute.xlu0 %1265
      %1267 = vset.pattern.permute.xlu0 0
      %1268 = vperm.xlu0 %1267, %v1187
      %v1269 = vpop.permute.xlu0 %1268
      %1270 = vset.pattern.permute.xlu0 0
      %1271 = vperm.xlu0 %1270, %v1188
      %v1272 = vpop.permute.xlu0 %1271
      %1273 = vset.pattern.permute.xlu0 0
      %1274 = vperm.xlu0 %1273, %v1189
      %v1275 = vpop.permute.xlu0 %1274
      %1276 = vset.pattern.permute.xlu0 0
      %1277 = vperm.xlu0 %1276, %v1190
      %v1278 = vpop.permute.xlu0 %1277
      %1279 = vset.pattern.permute.xlu0 0
      %1280 = vperm.xlu0 %1279, %v1191
      %v1281 = vpop.permute.xlu0 %1280
      %1282 = vset.pattern.permute.xlu0 0
      %1283 = vperm.xlu0 %1282, %v1192
      %v1284 = vpop.permute.xlu0 %1283
      %1285 = vset.pattern.permute.xlu0 0
      %1286 = vperm.xlu0 %1285, %v1193
      %v1287 = vpop.permute.xlu0 %1286
      %1288 = vset.pattern.permute.xlu0 0
      %1289 = vperm.xlu0 %1288, %v1194
      %v1290 = vpop.permute.xlu0 %1289
      %vm1291 = vcmp.eq.s32.totalorder %v1197, 1
      %vm1292 = vcmp.eq.s32.totalorder %v1200, 1
      %vm1293 = vcmp.eq.s32.totalorder %v1203, 1
      %vm1294 = vcmp.eq.s32.totalorder %v1206, 1
      %vm1295 = vcmp.eq.s32.totalorder %v1209, 1
      %vm1296 = vcmp.eq.s32.totalorder %v1212, 1
      %vm1297 = vcmp.eq.s32.totalorder %v1215, 1
      %vm1298 = vcmp.eq.s32.totalorder %v1218, 1
      %vm1299 = vcmp.eq.s32.totalorder %v1221, 1
      %vm1300 = vcmp.eq.s32.totalorder %v1224, 1
      %vm1301 = vcmp.eq.s32.totalorder %v1227, 1
      %vm1302 = vcmp.eq.s32.totalorder %v1230, 1
      %vm1303 = vcmp.eq.s32.totalorder %v1233, 1
      %vm1304 = vcmp.eq.s32.totalorder %v1236, 1
      %vm1305 = vcmp.eq.s32.totalorder %v1239, 1
      %vm1306 = vcmp.eq.s32.totalorder %v1242, 1
      %vm1307 = vcmp.eq.s32.totalorder %v1245, 1
      %vm1308 = vcmp.eq.s32.totalorder %v1248, 1
      %vm1309 = vcmp.eq.s32.totalorder %v1251, 1
      %vm1310 = vcmp.eq.s32.totalorder %v1254, 1
      %vm1311 = vcmp.eq.s32.totalorder %v1257, 1
      %vm1312 = vcmp.eq.s32.totalorder %v1260, 1
      %vm1313 = vcmp.eq.s32.totalorder %v1263, 1
      %vm1314 = vcmp.eq.s32.totalorder %v1266, 1
      %vm1315 = vcmp.eq.s32.totalorder %v1269, 1
      %vm1316 = vcmp.eq.s32.totalorder %v1272, 1
      %vm1317 = vcmp.eq.s32.totalorder %v1275, 1
      %vm1318 = vcmp.eq.s32.totalorder %v1278, 1
      %vm1319 = vcmp.eq.s32.totalorder %v1281, 1
      %vm1320 = vcmp.eq.s32.totalorder %v1284, 1
      %vm1321 = vcmp.eq.s32.totalorder %v1287, 1
      %vm1322 = vcmp.eq.s32.totalorder %v1290, 1
      %v1323 = vsel %vm1291, %v1162, -1e+30
      %v1324 = vsel %vm1292, %v1070, -1e+30
      %v1325 = vsel %vm1293, %v1072, -1e+30
      %v1326 = vsel %vm1294, %v1074, -1e+30
      %v1327 = vsel %vm1295, %v1076, -1e+30
      %v1328 = vsel %vm1296, %v1078, -1e+30
      %v1329 = vsel %vm1297, %v1080, -1e+30
      %v1330 = vsel %vm1298, %v1082, -1e+30
      %v1331 = vsel %vm1299, %v1084, -1e+30
      %v1332 = vsel %vm1300, %v1086, -1e+30
      %v1333 = vsel %vm1301, %v1088, -1e+30
      %v1334 = vsel %vm1302, %v1090, -1e+30
      %v1335 = vsel %vm1303, %v1092, -1e+30
      %v1336 = vsel %vm1304, %v1094, -1e+30
      %v1337 = vsel %vm1305, %v1096, -1e+30
      %v1338 = vsel %vm1306, %v1098, -1e+30
      %v1339 = vsel %vm1307, %v1100, -1e+30
      %v1340 = vsel %vm1308, %v1102, -1e+30
      %v1341 = vsel %vm1309, %v1104, -1e+30
      %v1342 = vsel %vm1310, %v1106, -1e+30
      %v1343 = vsel %vm1311, %v1108, -1e+30
      %v1344 = vsel %vm1312, %v1110, -1e+30
      %v1345 = vsel %vm1313, %v1112, -1e+30
      %v1346 = vsel %vm1314, %v1114, -1e+30
      %v1347 = vsel %vm1315, %v1116, -1e+30
      %v1348 = vsel %vm1316, %v1118, -1e+30
      %v1349 = vsel %vm1317, %v1120, -1e+30
      %v1350 = vsel %vm1318, %v1122, -1e+30
      %v1351 = vsel %vm1319, %v1124, -1e+30
      %v1352 = vsel %vm1320, %v1126, -1e+30
      %v1353 = vsel %vm1321, %v1128, -1e+30
      %v1354 = vsel %vm1322, %v1129, -1e+30
      %vm1355 = vcmp.lt.s32.totalorder %v307, 15
      %vm1356 = vcmp.lt.s32.totalorder %v308, 15
      %vm1357 = vcmp.lt.s32.totalorder %v309, 15
      %vm1358 = vcmp.lt.s32.totalorder %v310, 15
      %vm1359 = vcmp.lt.s32.totalorder %v311, 15
      %vm1360 = vcmp.lt.s32.totalorder %v312, 15
      %vm1361 = vcmp.lt.s32.totalorder %v313, 15
      %vm1362 = vcmp.lt.s32.totalorder %v314, 15
      %vm1363 = vcmp.lt.s32.totalorder %v315, 15
      %vm1364 = vcmp.lt.s32.totalorder %v316, 15
      %vm1365 = vcmp.lt.s32.totalorder %v317, 15
      %vm1366 = vcmp.lt.s32.totalorder %v318, 15
      %vm1367 = vcmp.lt.s32.totalorder %v319, 15
      %vm1368 = vcmp.lt.s32.totalorder %v320, 15
      %vm1369 = vcmp.lt.s32.totalorder %v321, 15
      %vm1370 = vcmp.lt.s32.totalorder %v322, 15
      %vm1371 = vcmp.lt.s32.totalorder %v323, 15
      %vm1372 = vcmp.lt.s32.totalorder %v324, 15
      %vm1373 = vcmp.lt.s32.totalorder %v325, 15
      %vm1374 = vcmp.lt.s32.totalorder %v326, 15
      %vm1375 = vcmp.lt.s32.totalorder %v327, 15
      %vm1376 = vcmp.lt.s32.totalorder %v328, 15
      %vm1377 = vcmp.lt.s32.totalorder %v329, 15
      %vm1378 = vcmp.lt.s32.totalorder %v330, 15
      %vm1379 = vcmp.lt.s32.totalorder %v331, 15
      %vm1380 = vcmp.lt.s32.totalorder %v332, 15
      %vm1381 = vcmp.lt.s32.totalorder %v333, 15
      %vm1382 = vcmp.lt.s32.totalorder %v334, 15
      %vm1383 = vcmp.lt.s32.totalorder %v335, 15
      %vm1384 = vcmp.lt.s32.totalorder %v336, 15
      %vm1385 = vcmp.lt.s32.totalorder %v337, 15
      %vm1386 = vcmp.lt.s32.totalorder %v338, 15
      %vm1387 = vcmask 1046528
      %v1388 = vrot.slane %v969, 1
      %v1389 = vrot.slane %v970, 1
      %v1390 = vsel %vm1387, %v1388, %v1389
      %v1391 = vrot.slane %v971, 1
      %v1392 = vsel %vm1387, %v1389, %v1391
      %v1393 = vrot.slane %v972, 1
      %v1394 = vsel %vm1387, %v1391, %v1393
      %v1395 = vrot.slane %v973, 1
      %v1396 = vsel %vm1387, %v1393, %v1395
      %v1397 = vrot.slane %v974, 1
      %v1398 = vsel %vm1387, %v1395, %v1397
      %v1399 = vrot.slane %v975, 1
      %v1400 = vsel %vm1387, %v1397, %v1399
      %v1401 = vrot.slane %v976, 1
      %v1402 = vsel %vm1387, %v1399, %v1401
      %v1403 = vrot.slane %v977, 1
      %v1404 = vsel %vm1387, %v1401, %v1403
      %v1405 = vrot.slane %v978, 1
      %v1406 = vsel %vm1387, %v1403, %v1405
      %v1407 = vrot.slane %v979, 1
      %v1408 = vsel %vm1387, %v1405, %v1407
      %v1409 = vrot.slane %v980, 1
      %v1410 = vsel %vm1387, %v1407, %v1409
      %v1411 = vrot.slane %v981, 1
      %v1412 = vsel %vm1387, %v1409, %v1411
      %v1413 = vrot.slane %v982, 1
      %v1414 = vsel %vm1387, %v1411, %v1413
      %v1415 = vrot.slane %v983, 1
      %v1416 = vsel %vm1387, %v1413, %v1415
      %v1417 = vrot.slane %v984, 1
      %v1418 = vsel %vm1387, %v1415, %v1417
      %v1419 = vrot.slane %v985, 1
      %v1420 = vsel %vm1387, %v1417, %v1419
      %v1421 = vrot.slane %v986, 1
      %v1422 = vsel %vm1387, %v1419, %v1421
      %v1423 = vrot.slane %v987, 1
      %v1424 = vsel %vm1387, %v1421, %v1423
      %v1425 = vrot.slane %v988, 1
      %v1426 = vsel %vm1387, %v1423, %v1425
      %v1427 = vrot.slane %v989, 1
      %v1428 = vsel %vm1387, %v1425, %v1427
      %v1429 = vrot.slane %v990, 1
      %v1430 = vsel %vm1387, %v1427, %v1429
      %v1431 = vrot.slane %v991, 1
      %v1432 = vsel %vm1387, %v1429, %v1431
      %v1433 = vrot.slane %v992, 1
      %v1434 = vsel %vm1387, %v1431, %v1433
      %v1435 = vrot.slane %v993, 1
      %v1436 = vsel %vm1387, %v1433, %v1435
      %v1437 = vrot.slane %v994, 1
      %v1438 = vsel %vm1387, %v1435, %v1437
      %v1439 = vrot.slane %v995, 1
      %v1440 = vsel %vm1387, %v1437, %v1439
      %v1441 = vrot.slane %v996, 1
      %v1442 = vsel %vm1387, %v1439, %v1441
      %v1443 = vrot.slane %v997, 1
      %v1444 = vsel %vm1387, %v1441, %v1443
      %v1445 = vrot.slane %v998, 1
      %v1446 = vsel %vm1387, %v1443, %v1445
      %v1447 = vrot.slane %v999, 1
      %v1448 = vsel %vm1387, %v1445, %v1447
      %v1449 = vrot.slane %v1000, 1
      %v1450 = vsel %vm1387, %v1447, %v1449
      %v1484 = vsel %vm1387, %v1449, %v1388
      %v1485 = vsel %vm1355, 1, 0
      %v1486 = vsel %vm1356, 1, 0
      %v1487 = vsel %vm1357, 1, 0
      %v1488 = vsel %vm1358, 1, 0
      %v1489 = vsel %vm1359, 1, 0
      %v1490 = vsel %vm1360, 1, 0
      %v1491 = vsel %vm1361, 1, 0
      %v1492 = vsel %vm1362, 1, 0
      %v1493 = vsel %vm1363, 1, 0
      %v1494 = vsel %vm1364, 1, 0
      %v1495 = vsel %vm1365, 1, 0
      %v1496 = vsel %vm1366, 1, 0
      %v1497 = vsel %vm1367, 1, 0
      %v1498 = vsel %vm1368, 1, 0
      %v1499 = vsel %vm1369, 1, 0
      %v1500 = vsel %vm1370, 1, 0
      %v1501 = vsel %vm1371, 1, 0
      %v1502 = vsel %vm1372, 1, 0
      %v1503 = vsel %vm1373, 1, 0
      %v1504 = vsel %vm1374, 1, 0
      %v1505 = vsel %vm1375, 1, 0
      %v1506 = vsel %vm1376, 1, 0
      %v1507 = vsel %vm1377, 1, 0
      %v1508 = vsel %vm1378, 1, 0
      %v1509 = vsel %vm1379, 1, 0
      %v1510 = vsel %vm1380, 1, 0
      %v1511 = vsel %vm1381, 1, 0
      %v1512 = vsel %vm1382, 1, 0
      %v1513 = vsel %vm1383, 1, 0
      %v1514 = vsel %vm1384, 1, 0
      %v1515 = vsel %vm1385, 1, 0
      %v1516 = vsel %vm1386, 1, 0
      %1517 = vset.pattern.permute.xlu0 0
      %1518 = vperm.xlu0 %1517, %v1485
      %v1519 = vpop.permute.xlu0 %1518
      %1520 = vset.pattern.permute.xlu0 0
      %1521 = vperm.xlu0 %1520, %v1486
      %v1522 = vpop.permute.xlu0 %1521
      %1523 = vset.pattern.permute.xlu0 0
      %1524 = vperm.xlu0 %1523, %v1487
      %v1525 = vpop.permute.xlu0 %1524
      %1526 = vset.pattern.permute.xlu0 0
      %1527 = vperm.xlu0 %1526, %v1488
      %v1528 = vpop.permute.xlu0 %1527
      %1529 = vset.pattern.permute.xlu0 0
      %1530 = vperm.xlu0 %1529, %v1489
      %v1531 = vpop.permute.xlu0 %1530
      %1532 = vset.pattern.permute.xlu0 0
      %1533 = vperm.xlu0 %1532, %v1490
      %v1534 = vpop.permute.xlu0 %1533
      %1535 = vset.pattern.permute.xlu0 0
      %1536 = vperm.xlu0 %1535, %v1491
      %v1537 = vpop.permute.xlu0 %1536
      %1538 = vset.pattern.permute.xlu0 0
      %1539 = vperm.xlu0 %1538, %v1492
      %v1540 = vpop.permute.xlu0 %1539
      %1541 = vset.pattern.permute.xlu0 0
      %1542 = vperm.xlu0 %1541, %v1493
      %v1543 = vpop.permute.xlu0 %1542
      %1544 = vset.pattern.permute.xlu0 0
      %1545 = vperm.xlu0 %1544, %v1494
      %v1546 = vpop.permute.xlu0 %1545
      %1547 = vset.pattern.permute.xlu0 0
      %1548 = vperm.xlu0 %1547, %v1495
      %v1549 = vpop.permute.xlu0 %1548
      %1550 = vset.pattern.permute.xlu0 0
      %1551 = vperm.xlu0 %1550, %v1496
      %v1552 = vpop.permute.xlu0 %1551
      %1553 = vset.pattern.permute.xlu0 0
      %1554 = vperm.xlu0 %1553, %v1497
      %v1555 = vpop.permute.xlu0 %1554
      %1556 = vset.pattern.permute.xlu0 0
      %1557 = vperm.xlu0 %1556, %v1498
      %v1558 = vpop.permute.xlu0 %1557
      %1559 = vset.pattern.permute.xlu0 0
      %1560 = vperm.xlu0 %1559, %v1499
      %v1561 = vpop.permute.xlu0 %1560
      %1562 = vset.pattern.permute.xlu0 0
      %1563 = vperm.xlu0 %1562, %v1500
      %v1564 = vpop.permute.xlu0 %1563
      %1565 = vset.pattern.permute.xlu0 0
      %1566 = vperm.xlu0 %1565, %v1501
      %v1567 = vpop.permute.xlu0 %1566
      %1568 = vset.pattern.permute.xlu0 0
      %1569 = vperm.xlu0 %1568, %v1502
      %v1570 = vpop.permute.xlu0 %1569
      %1571 = vset.pattern.permute.xlu0 0
      %1572 = vperm.xlu0 %1571, %v1503
      %v1573 = vpop.permute.xlu0 %1572
      %1574 = vset.pattern.permute.xlu0 0
      %1575 = vperm.xlu0 %1574, %v1504
      %v1576 = vpop.permute.xlu0 %1575
      %1577 = vset.pattern.permute.xlu0 0
      %1578 = vperm.xlu0 %1577, %v1505
      %v1579 = vpop.permute.xlu0 %1578
      %1580 = vset.pattern.permute.xlu0 0
      %1581 = vperm.xlu0 %1580, %v1506
      %v1582 = vpop.permute.xlu0 %1581
      %1583 = vset.pattern.permute.xlu0 0
      %1584 = vperm.xlu0 %1583, %v1507
      %v1585 = vpop.permute.xlu0 %1584
      %1586 = vset.pattern.permute.xlu0 0
      %1587 = vperm.xlu0 %1586, %v1508
      %v1588 = vpop.permute.xlu0 %1587
      %1589 = vset.pattern.permute.xlu0 0
      %1590 = vperm.xlu0 %1589, %v1509
      %v1591 = vpop.permute.xlu0 %1590
      %1592 = vset.pattern.permute.xlu0 0
      %1593 = vperm.xlu0 %1592, %v1510
      %v1594 = vpop.permute.xlu0 %1593
      %1595 = vset.pattern.permute.xlu0 0
      %1596 = vperm.xlu0 %1595, %v1511
      %v1597 = vpop.permute.xlu0 %1596
      %1598 = vset.pattern.permute.xlu0 0
      %1599 = vperm.xlu0 %1598, %v1512
      %v1600 = vpop.permute.xlu0 %1599
      %1601 = vset.pattern.permute.xlu0 0
      %1602 = vperm.xlu0 %1601, %v1513
      %v1603 = vpop.permute.xlu0 %1602
      %1604 = vset.pattern.permute.xlu0 0
      %1605 = vperm.xlu0 %1604, %v1514
      %v1606 = vpop.permute.xlu0 %1605
      %1607 = vset.pattern.permute.xlu0 0
      %1608 = vperm.xlu0 %1607, %v1515
      %v1609 = vpop.permute.xlu0 %1608
      %1610 = vset.pattern.permute.xlu0 0
      %1611 = vperm.xlu0 %1610, %v1516
      %v1612 = vpop.permute.xlu0 %1611
      %vm1613 = vcmp.eq.s32.totalorder %v1519, 1
      %vm1614 = vcmp.eq.s32.totalorder %v1522, 1
      %vm1615 = vcmp.eq.s32.totalorder %v1525, 1
      %vm1616 = vcmp.eq.s32.totalorder %v1528, 1
      %vm1617 = vcmp.eq.s32.totalorder %v1531, 1
      %vm1618 = vcmp.eq.s32.totalorder %v1534, 1
      %vm1619 = vcmp.eq.s32.totalorder %v1537, 1
      %vm1620 = vcmp.eq.s32.totalorder %v1540, 1
      %vm1621 = vcmp.eq.s32.totalorder %v1543, 1
      %vm1622 = vcmp.eq.s32.totalorder %v1546, 1
      %vm1623 = vcmp.eq.s32.totalorder %v1549, 1
      %vm1624 = vcmp.eq.s32.totalorder %v1552, 1
      %vm1625 = vcmp.eq.s32.totalorder %v1555, 1
      %vm1626 = vcmp.eq.s32.totalorder %v1558, 1
      %vm1627 = vcmp.eq.s32.totalorder %v1561, 1
      %vm1628 = vcmp.eq.s32.totalorder %v1564, 1
      %vm1629 = vcmp.eq.s32.totalorder %v1567, 1
      %vm1630 = vcmp.eq.s32.totalorder %v1570, 1
      %vm1631 = vcmp.eq.s32.totalorder %v1573, 1
      %vm1632 = vcmp.eq.s32.totalorder %v1576, 1
      %vm1633 = vcmp.eq.s32.totalorder %v1579, 1
      %vm1634 = vcmp.eq.s32.totalorder %v1582, 1
      %vm1635 = vcmp.eq.s32.totalorder %v1585, 1
      %vm1636 = vcmp.eq.s32.totalorder %v1588, 1
      %vm1637 = vcmp.eq.s32.totalorder %v1591, 1
      %vm1638 = vcmp.eq.s32.totalorder %v1594, 1
      %vm1639 = vcmp.eq.s32.totalorder %v1597, 1
      %vm1640 = vcmp.eq.s32.totalorder %v1600, 1
      %vm1641 = vcmp.eq.s32.totalorder %v1603, 1
      %vm1642 = vcmp.eq.s32.totalorder %v1606, 1
      %vm1643 = vcmp.eq.s32.totalorder %v1609, 1
      %vm1644 = vcmp.eq.s32.totalorder %v1612, 1
      %v1645 = vsel %vm1613, %v1390, -1e+30
      %v1646 = vsel %vm1614, %v1392, -1e+30
      %v1647 = vsel %vm1615, %v1394, -1e+30
      %v1648 = vsel %vm1616, %v1396, -1e+30
      %v1649 = vsel %vm1617, %v1398, -1e+30
      %v1650 = vsel %vm1618, %v1400, -1e+30
      %v1651 = vsel %vm1619, %v1402, -1e+30
      %v1652 = vsel %vm1620, %v1404, -1e+30
      %v1653 = vsel %vm1621, %v1406, -1e+30
      %v1654 = vsel %vm1622, %v1408, -1e+30
      %v1655 = vsel %vm1623, %v1410, -1e+30
      %v1656 = vsel %vm1624, %v1412, -1e+30
      %v1657 = vsel %vm1625, %v1414, -1e+30
      %v1658 = vsel %vm1626, %v1416, -1e+30
      %v1659 = vsel %vm1627, %v1418, -1e+30
      %v1660 = vsel %vm1628, %v1420, -1e+30
      %v1661 = vsel %vm1629, %v1422, -1e+30
      %v1662 = vsel %vm1630, %v1424, -1e+30
      %v1663 = vsel %vm1631, %v1426, -1e+30
      %v1664 = vsel %vm1632, %v1428, -1e+30
      %v1665 = vsel %vm1633, %v1430, -1e+30
      %v1666 = vsel %vm1634, %v1432, -1e+30
      %v1667 = vsel %vm1635, %v1434, -1e+30
      %v1668 = vsel %vm1636, %v1436, -1e+30
      %v1669 = vsel %vm1637, %v1438, -1e+30
      %v1670 = vsel %vm1638, %v1440, -1e+30
      %v1671 = vsel %vm1639, %v1442, -1e+30
      %v1672 = vsel %vm1640, %v1444, -1e+30
      %v1673 = vsel %vm1641, %v1446, -1e+30
      %v1674 = vsel %vm1642, %v1448, -1e+30
      %v1675 = vsel %vm1643, %v1450, -1e+30
      %v1676 = vsel %vm1644, %v1484, -1e+30
      %v1677 = vmax.f32 %v1323, %v1645
      %v1678 = vmax.f32 %v1324, %v1646
      %v1679 = vmax.f32 %v1325, %v1647
      %v1680 = vmax.f32 %v1326, %v1648
      %v1681 = vmax.f32 %v1327, %v1649
      %v1682 = vmax.f32 %v1328, %v1650
      %v1683 = vmax.f32 %v1329, %v1651
      %v1684 = vmax.f32 %v1330, %v1652
      %v1685 = vmax.f32 %v1331, %v1653
      %v1686 = vmax.f32 %v1332, %v1654
      %v1687 = vmax.f32 %v1333, %v1655
      %v1688 = vmax.f32 %v1334, %v1656
      %v1689 = vmax.f32 %v1335, %v1657
      %v1690 = vmax.f32 %v1336, %v1658
      %v1691 = vmax.f32 %v1337, %v1659
      %v1692 = vmax.f32 %v1338, %v1660
      %v1693 = vmax.f32 %v1339, %v1661
      %v1694 = vmax.f32 %v1340, %v1662
      %v1695 = vmax.f32 %v1341, %v1663
      %v1696 = vmax.f32 %v1342, %v1664
      %v1697 = vmax.f32 %v1343, %v1665
      %v1698 = vmax.f32 %v1344, %v1666
      %v1699 = vmax.f32 %v1345, %v1667
      %v1700 = vmax.f32 %v1346, %v1668
      %v1701 = vmax.f32 %v1347, %v1669
      %v1702 = vmax.f32 %v1348, %v1670
      %v1703 = vmax.f32 %v1349, %v1671
      %v1704 = vmax.f32 %v1350, %v1672
      %v1705 = vmax.f32 %v1351, %v1673
      %v1706 = vmax.f32 %v1352, %v1674
      %v1707 = vmax.f32 %v1353, %v1675
      %v1708 = vmax.f32 %v1354, %v1676
      %v1709 = vmax.f32 %v969, %v1677
      %v1710 = vmax.f32 %v970, %v1678
      %v1711 = vmax.f32 %v971, %v1679
      %v1712 = vmax.f32 %v972, %v1680
      %v1713 = vmax.f32 %v973, %v1681
      %v1714 = vmax.f32 %v974, %v1682
      %v1715 = vmax.f32 %v975, %v1683
      %v1716 = vmax.f32 %v976, %v1684
      %v1717 = vmax.f32 %v977, %v1685
      %v1718 = vmax.f32 %v978, %v1686
      %v1719 = vmax.f32 %v979, %v1687
      %v1720 = vmax.f32 %v980, %v1688
      %v1721 = vmax.f32 %v981, %v1689
      %v1722 = vmax.f32 %v982, %v1690
      %v1723 = vmax.f32 %v983, %v1691
      %v1724 = vmax.f32 %v984, %v1692
      %v1725 = vmax.f32 %v985, %v1693
      %v1726 = vmax.f32 %v986, %v1694
      %v1727 = vmax.f32 %v987, %v1695
      %v1728 = vmax.f32 %v988, %v1696
      %v1729 = vmax.f32 %v989, %v1697
      %v1730 = vmax.f32 %v990, %v1698
      %v1731 = vmax.f32 %v991, %v1699
      %v1732 = vmax.f32 %v992, %v1700
      %v1733 = vmax.f32 %v993, %v1701
      %v1734 = vmax.f32 %v994, %v1702
      %v1735 = vmax.f32 %v995, %v1703
      %v1736 = vmax.f32 %v996, %v1704
      %v1737 = vmax.f32 %v997, %v1705
      %v1738 = vmax.f32 %v998, %v1706
      %v1739 = vmax.f32 %v999, %v1707
      %v1740 = vmax.f32 %v1000, %v1708
      %vm1741 = vcmp.ge.s32.totalorder %v307, 2
      %vm1742 = vcmp.ge.s32.totalorder %v308, 2
      %vm1743 = vcmp.ge.s32.totalorder %v309, 2
      %vm1744 = vcmp.ge.s32.totalorder %v310, 2
      %vm1745 = vcmp.ge.s32.totalorder %v311, 2
      %vm1746 = vcmp.ge.s32.totalorder %v312, 2
      %vm1747 = vcmp.ge.s32.totalorder %v313, 2
      %vm1748 = vcmp.ge.s32.totalorder %v314, 2
      %vm1749 = vcmp.ge.s32.totalorder %v315, 2
      %vm1750 = vcmp.ge.s32.totalorder %v316, 2
      %vm1751 = vcmp.ge.s32.totalorder %v317, 2
      %vm1752 = vcmp.ge.s32.totalorder %v318, 2
      %vm1753 = vcmp.ge.s32.totalorder %v319, 2
      %vm1754 = vcmp.ge.s32.totalorder %v320, 2
      %vm1755 = vcmp.ge.s32.totalorder %v321, 2
      %vm1756 = vcmp.ge.s32.totalorder %v322, 2
      %vm1757 = vcmp.ge.s32.totalorder %v323, 2
      %vm1758 = vcmp.ge.s32.totalorder %v324, 2
      %vm1759 = vcmp.ge.s32.totalorder %v325, 2
      %vm1760 = vcmp.ge.s32.totalorder %v326, 2
      %vm1761 = vcmp.ge.s32.totalorder %v327, 2
      %vm1762 = vcmp.ge.s32.totalorder %v328, 2
      %vm1763 = vcmp.ge.s32.totalorder %v329, 2
      %vm1764 = vcmp.ge.s32.totalorder %v330, 2
      %vm1765 = vcmp.ge.s32.totalorder %v331, 2
      %vm1766 = vcmp.ge.s32.totalorder %v332, 2
      %vm1767 = vcmp.ge.s32.totalorder %v333, 2
      %vm1768 = vcmp.ge.s32.totalorder %v334, 2
      %vm1769 = vcmp.ge.s32.totalorder %v335, 2
      %vm1770 = vcmp.ge.s32.totalorder %v336, 2
      %vm1771 = vcmp.ge.s32.totalorder %v337, 2
      %vm1772 = vcmp.ge.s32.totalorder %v338, 2
      %v1773 = vrot.slane %v1000, 6
      %v1775 = vrot.slane %v969, 6
      %v1776 = vrot.slane %v970, 6
      %v1777 = vsel %vm536, %v1775, %v1776
      %v1778 = vrot.slane %v971, 6
      %v1779 = vsel %vm536, %v1776, %v1778
      %v1780 = vrot.slane %v972, 6
      %v1781 = vsel %vm536, %v1778, %v1780
      %v1782 = vrot.slane %v973, 6
      %v1783 = vsel %vm536, %v1780, %v1782
      %v1784 = vrot.slane %v974, 6
      %v1785 = vsel %vm536, %v1782, %v1784
      %v1786 = vrot.slane %v975, 6
      %v1787 = vsel %vm536, %v1784, %v1786
      %v1788 = vrot.slane %v976, 6
      %v1789 = vsel %vm536, %v1786, %v1788
      %v1790 = vrot.slane %v977, 6
      %v1791 = vsel %vm536, %v1788, %v1790
      %v1792 = vrot.slane %v978, 6
      %v1793 = vsel %vm536, %v1790, %v1792
      %v1794 = vrot.slane %v979, 6
      %v1795 = vsel %vm536, %v1792, %v1794
      %v1796 = vrot.slane %v980, 6
      %v1797 = vsel %vm536, %v1794, %v1796
      %v1798 = vrot.slane %v981, 6
      %v1799 = vsel %vm536, %v1796, %v1798
      %v1800 = vrot.slane %v982, 6
      %v1801 = vsel %vm536, %v1798, %v1800
      %v1802 = vrot.slane %v983, 6
      %v1803 = vsel %vm536, %v1800, %v1802
      %v1804 = vrot.slane %v984, 6
      %v1805 = vsel %vm536, %v1802, %v1804
      %v1806 = vrot.slane %v985, 6
      %v1807 = vsel %vm536, %v1804, %v1806
      %v1808 = vrot.slane %v986, 6
      %v1809 = vsel %vm536, %v1806, %v1808
      %v1810 = vrot.slane %v987, 6
      %v1811 = vsel %vm536, %v1808, %v1810
      %v1812 = vrot.slane %v988, 6
      %v1813 = vsel %vm536, %v1810, %v1812
      %v1814 = vrot.slane %v989, 6
      %v1815 = vsel %vm536, %v1812, %v1814
      %v1816 = vrot.slane %v990, 6
      %v1817 = vsel %vm536, %v1814, %v1816
      %v1818 = vrot.slane %v991, 6
      %v1819 = vsel %vm536, %v1816, %v1818
      %v1820 = vrot.slane %v992, 6
      %v1821 = vsel %vm536, %v1818, %v1820
      %v1822 = vrot.slane %v993, 6
      %v1823 = vsel %vm536, %v1820, %v1822
      %v1824 = vrot.slane %v994, 6
      %v1825 = vsel %vm536, %v1822, %v1824
      %v1826 = vrot.slane %v995, 6
      %v1827 = vsel %vm536, %v1824, %v1826
      %v1828 = vrot.slane %v996, 6
      %v1829 = vsel %vm536, %v1826, %v1828
      %v1830 = vrot.slane %v997, 6
      %v1831 = vsel %vm536, %v1828, %v1830
      %v1832 = vrot.slane %v998, 6
      %v1833 = vsel %vm536, %v1830, %v1832
      %v1834 = vrot.slane %v999, 6
      %v1835 = vsel %vm536, %v1832, %v1834
      %v1836 = vsel %vm536, %v1834, %v1773
      %v1869 = vsel %vm536, %v1773, %v1775
      %v1870 = vsel %vm1741, 1, 0
      %v1871 = vsel %vm1742, 1, 0
      %v1872 = vsel %vm1743, 1, 0
      %v1873 = vsel %vm1744, 1, 0
      %v1874 = vsel %vm1745, 1, 0
      %v1875 = vsel %vm1746, 1, 0
      %v1876 = vsel %vm1747, 1, 0
      %v1877 = vsel %vm1748, 1, 0
      %v1878 = vsel %vm1749, 1, 0
      %v1879 = vsel %vm1750, 1, 0
      %v1880 = vsel %vm1751, 1, 0
      %v1881 = vsel %vm1752, 1, 0
      %v1882 = vsel %vm1753, 1, 0
      %v1883 = vsel %vm1754, 1, 0
      %v1884 = vsel %vm1755, 1, 0
      %v1885 = vsel %vm1756, 1, 0
      %v1886 = vsel %vm1757, 1, 0
      %v1887 = vsel %vm1758, 1, 0
      %v1888 = vsel %vm1759, 1, 0
      %v1889 = vsel %vm1760, 1, 0
      %v1890 = vsel %vm1761, 1, 0
      %v1891 = vsel %vm1762, 1, 0
      %v1892 = vsel %vm1763, 1, 0
      %v1893 = vsel %vm1764, 1, 0
      %v1894 = vsel %vm1765, 1, 0
      %v1895 = vsel %vm1766, 1, 0
      %v1896 = vsel %vm1767, 1, 0
      %v1897 = vsel %vm1768, 1, 0
      %v1898 = vsel %vm1769, 1, 0
      %v1899 = vsel %vm1770, 1, 0
      %v1900 = vsel %vm1771, 1, 0
      %v1901 = vsel %vm1772, 1, 0
      %1902 = vset.pattern.permute.xlu0 0
      %1903 = vperm.xlu0 %1902, %v1870
      %v1904 = vpop.permute.xlu0 %1903
      %1905 = vset.pattern.permute.xlu0 0
      %1906 = vperm.xlu0 %1905, %v1871
      %v1907 = vpop.permute.xlu0 %1906
      %1908 = vset.pattern.permute.xlu0 0
      %1909 = vperm.xlu0 %1908, %v1872
      %v1910 = vpop.permute.xlu0 %1909
      %1911 = vset.pattern.permute.xlu0 0
      %1912 = vperm.xlu0 %1911, %v1873
      %v1913 = vpop.permute.xlu0 %1912
      %1914 = vset.pattern.permute.xlu0 0
      %1915 = vperm.xlu0 %1914, %v1874
      %v1916 = vpop.permute.xlu0 %1915
      %1917 = vset.pattern.permute.xlu0 0
      %1918 = vperm.xlu0 %1917, %v1875
      %v1919 = vpop.permute.xlu0 %1918
      %1920 = vset.pattern.permute.xlu0 0
      %1921 = vperm.xlu0 %1920, %v1876
      %v1922 = vpop.permute.xlu0 %1921
      %1923 = vset.pattern.permute.xlu0 0
      %1924 = vperm.xlu0 %1923, %v1877
      %v1925 = vpop.permute.xlu0 %1924
      %1926 = vset.pattern.permute.xlu0 0
      %1927 = vperm.xlu0 %1926, %v1878
      %v1928 = vpop.permute.xlu0 %1927
      %1929 = vset.pattern.permute.xlu0 0
      %1930 = vperm.xlu0 %1929, %v1879
      %v1931 = vpop.permute.xlu0 %1930
      %1932 = vset.pattern.permute.xlu0 0
      %1933 = vperm.xlu0 %1932, %v1880
      %v1934 = vpop.permute.xlu0 %1933
      %1935 = vset.pattern.permute.xlu0 0
      %1936 = vperm.xlu0 %1935, %v1881
      %v1937 = vpop.permute.xlu0 %1936
      %1938 = vset.pattern.permute.xlu0 0
      %1939 = vperm.xlu0 %1938, %v1882
      %v1940 = vpop.permute.xlu0 %1939
      %1941 = vset.pattern.permute.xlu0 0
      %1942 = vperm.xlu0 %1941, %v1883
      %v1943 = vpop.permute.xlu0 %1942
      %1944 = vset.pattern.permute.xlu0 0
      %1945 = vperm.xlu0 %1944, %v1884
      %v1946 = vpop.permute.xlu0 %1945
      %1947 = vset.pattern.permute.xlu0 0
      %1948 = vperm.xlu0 %1947, %v1885
      %v1949 = vpop.permute.xlu0 %1948
      %1950 = vset.pattern.permute.xlu0 0
      %1951 = vperm.xlu0 %1950, %v1886
      %v1952 = vpop.permute.xlu0 %1951
      %1953 = vset.pattern.permute.xlu0 0
      %1954 = vperm.xlu0 %1953, %v1887
      %v1955 = vpop.permute.xlu0 %1954
      %1956 = vset.pattern.permute.xlu0 0
      %1957 = vperm.xlu0 %1956, %v1888
      %v1958 = vpop.permute.xlu0 %1957
      %1959 = vset.pattern.permute.xlu0 0
      %1960 = vperm.xlu0 %1959, %v1889
      %v1961 = vpop.permute.xlu0 %1960
      %1962 = vset.pattern.permute.xlu0 0
      %1963 = vperm.xlu0 %1962, %v1890
      %v1964 = vpop.permute.xlu0 %1963
      %1965 = vset.pattern.permute.xlu0 0
      %1966 = vperm.xlu0 %1965, %v1891
      %v1967 = vpop.permute.xlu0 %1966
      %1968 = vset.pattern.permute.xlu0 0
      %1969 = vperm.xlu0 %1968, %v1892
      %v1970 = vpop.permute.xlu0 %1969
      %1971 = vset.pattern.permute.xlu0 0
      %1972 = vperm.xlu0 %1971, %v1893
      %v1973 = vpop.permute.xlu0 %1972
      %1974 = vset.pattern.permute.xlu0 0
      %1975 = vperm.xlu0 %1974, %v1894
      %v1976 = vpop.permute.xlu0 %1975
      %1977 = vset.pattern.permute.xlu0 0
      %1978 = vperm.xlu0 %1977, %v1895
      %v1979 = vpop.permute.xlu0 %1978
      %1980 = vset.pattern.permute.xlu0 0
      %1981 = vperm.xlu0 %1980, %v1896
      %v1982 = vpop.permute.xlu0 %1981
      %1983 = vset.pattern.permute.xlu0 0
      %1984 = vperm.xlu0 %1983, %v1897
      %v1985 = vpop.permute.xlu0 %1984
      %1986 = vset.pattern.permute.xlu0 0
      %1987 = vperm.xlu0 %1986, %v1898
      %v1988 = vpop.permute.xlu0 %1987
      %1989 = vset.pattern.permute.xlu0 0
      %1990 = vperm.xlu0 %1989, %v1899
      %v1991 = vpop.permute.xlu0 %1990
      %1992 = vset.pattern.permute.xlu0 0
      %1993 = vperm.xlu0 %1992, %v1900
      %v1994 = vpop.permute.xlu0 %1993
      %1995 = vset.pattern.permute.xlu0 0
      %1996 = vperm.xlu0 %1995, %v1901
      %v1997 = vpop.permute.xlu0 %1996
      %vm1998 = vcmp.eq.s32.totalorder %v1904, 1
      %vm1999 = vcmp.eq.s32.totalorder %v1907, 1
      %vm2000 = vcmp.eq.s32.totalorder %v1910, 1
      %vm2001 = vcmp.eq.s32.totalorder %v1913, 1
      %vm2002 = vcmp.eq.s32.totalorder %v1916, 1
      %vm2003 = vcmp.eq.s32.totalorder %v1919, 1
      %vm2004 = vcmp.eq.s32.totalorder %v1922, 1
      %vm2005 = vcmp.eq.s32.totalorder %v1925, 1
      %vm2006 = vcmp.eq.s32.totalorder %v1928, 1
      %vm2007 = vcmp.eq.s32.totalorder %v1931, 1
      %vm2008 = vcmp.eq.s32.totalorder %v1934, 1
      %vm2009 = vcmp.eq.s32.totalorder %v1937, 1
      %vm2010 = vcmp.eq.s32.totalorder %v1940, 1
      %vm2011 = vcmp.eq.s32.totalorder %v1943, 1
      %vm2012 = vcmp.eq.s32.totalorder %v1946, 1
      %vm2013 = vcmp.eq.s32.totalorder %v1949, 1
      %vm2014 = vcmp.eq.s32.totalorder %v1952, 1
      %vm2015 = vcmp.eq.s32.totalorder %v1955, 1
      %vm2016 = vcmp.eq.s32.totalorder %v1958, 1
      %vm2017 = vcmp.eq.s32.totalorder %v1961, 1
      %vm2018 = vcmp.eq.s32.totalorder %v1964, 1
      %vm2019 = vcmp.eq.s32.totalorder %v1967, 1
      %vm2020 = vcmp.eq.s32.totalorder %v1970, 1
      %vm2021 = vcmp.eq.s32.totalorder %v1973, 1
      %vm2022 = vcmp.eq.s32.totalorder %v1976, 1
      %vm2023 = vcmp.eq.s32.totalorder %v1979, 1
      %vm2024 = vcmp.eq.s32.totalorder %v1982, 1
      %vm2025 = vcmp.eq.s32.totalorder %v1985, 1
      %vm2026 = vcmp.eq.s32.totalorder %v1988, 1
      %vm2027 = vcmp.eq.s32.totalorder %v1991, 1
      %vm2028 = vcmp.eq.s32.totalorder %v1994, 1
      %vm2029 = vcmp.eq.s32.totalorder %v1997, 1
      %v2030 = vsel %vm1998, %v1869, -1e+30
      %v2031 = vsel %vm1999, %v1777, -1e+30
      %v2032 = vsel %vm2000, %v1779, -1e+30
      %v2033 = vsel %vm2001, %v1781, -1e+30
      %v2034 = vsel %vm2002, %v1783, -1e+30
      %v2035 = vsel %vm2003, %v1785, -1e+30
      %v2036 = vsel %vm2004, %v1787, -1e+30
      %v2037 = vsel %vm2005, %v1789, -1e+30
      %v2038 = vsel %vm2006, %v1791, -1e+30
      %v2039 = vsel %vm2007, %v1793, -1e+30
      %v2040 = vsel %vm2008, %v1795, -1e+30
      %v2041 = vsel %vm2009, %v1797, -1e+30
      %v2042 = vsel %vm2010, %v1799, -1e+30
      %v2043 = vsel %vm2011, %v1801, -1e+30
      %v2044 = vsel %vm2012, %v1803, -1e+30
      %v2045 = vsel %vm2013, %v1805, -1e+30
      %v2046 = vsel %vm2014, %v1807, -1e+30
      %v2047 = vsel %vm2015, %v1809, -1e+30
      %v2048 = vsel %vm2016, %v1811, -1e+30
      %v2049 = vsel %vm2017, %v1813, -1e+30
      %v2050 = vsel %vm2018, %v1815, -1e+30
      %v2051 = vsel %vm2019, %v1817, -1e+30
      %v2052 = vsel %vm2020, %v1819, -1e+30
      %v2053 = vsel %vm2021, %v1821, -1e+30
      %v2054 = vsel %vm2022, %v1823, -1e+30
      %v2055 = vsel %vm2023, %v1825, -1e+30
      %v2056 = vsel %vm2024, %v1827, -1e+30
      %v2057 = vsel %vm2025, %v1829, -1e+30
      %v2058 = vsel %vm2026, %v1831, -1e+30
      %v2059 = vsel %vm2027, %v1833, -1e+30
      %v2060 = vsel %vm2028, %v1835, -1e+30
      %v2061 = vsel %vm2029, %v1836, -1e+30
      %vm2062 = vcmp.lt.s32.totalorder %v307, 14
      %vm2063 = vcmp.lt.s32.totalorder %v308, 14
      %vm2064 = vcmp.lt.s32.totalorder %v309, 14
      %vm2065 = vcmp.lt.s32.totalorder %v310, 14
      %vm2066 = vcmp.lt.s32.totalorder %v311, 14
      %vm2067 = vcmp.lt.s32.totalorder %v312, 14
      %vm2068 = vcmp.lt.s32.totalorder %v313, 14
      %vm2069 = vcmp.lt.s32.totalorder %v314, 14
      %vm2070 = vcmp.lt.s32.totalorder %v315, 14
      %vm2071 = vcmp.lt.s32.totalorder %v316, 14
      %vm2072 = vcmp.lt.s32.totalorder %v317, 14
      %vm2073 = vcmp.lt.s32.totalorder %v318, 14
      %vm2074 = vcmp.lt.s32.totalorder %v319, 14
      %vm2075 = vcmp.lt.s32.totalorder %v320, 14
      %vm2076 = vcmp.lt.s32.totalorder %v321, 14
      %vm2077 = vcmp.lt.s32.totalorder %v322, 14
      %vm2078 = vcmp.lt.s32.totalorder %v323, 14
      %vm2079 = vcmp.lt.s32.totalorder %v324, 14
      %vm2080 = vcmp.lt.s32.totalorder %v325, 14
      %vm2081 = vcmp.lt.s32.totalorder %v326, 14
      %vm2082 = vcmp.lt.s32.totalorder %v327, 14
      %vm2083 = vcmp.lt.s32.totalorder %v328, 14
      %vm2084 = vcmp.lt.s32.totalorder %v329, 14
      %vm2085 = vcmp.lt.s32.totalorder %v330, 14
      %vm2086 = vcmp.lt.s32.totalorder %v331, 14
      %vm2087 = vcmp.lt.s32.totalorder %v332, 14
      %vm2088 = vcmp.lt.s32.totalorder %v333, 14
      %vm2089 = vcmp.lt.s32.totalorder %v334, 14
      %vm2090 = vcmp.lt.s32.totalorder %v335, 14
      %vm2091 = vcmp.lt.s32.totalorder %v336, 14
      %vm2092 = vcmp.lt.s32.totalorder %v337, 14
      %vm2093 = vcmp.lt.s32.totalorder %v338, 14
      %vm2094 = vcmask 1045504
      %v2095 = vrot.slane %v969, 2
      %v2096 = vrot.slane %v970, 2
      %v2097 = vsel %vm2094, %v2095, %v2096
      %v2098 = vrot.slane %v971, 2
      %v2099 = vsel %vm2094, %v2096, %v2098
      %v2100 = vrot.slane %v972, 2
      %v2101 = vsel %vm2094, %v2098, %v2100
      %v2102 = vrot.slane %v973, 2
      %v2103 = vsel %vm2094, %v2100, %v2102
      %v2104 = vrot.slane %v974, 2
      %v2105 = vsel %vm2094, %v2102, %v2104
      %v2106 = vrot.slane %v975, 2
      %v2107 = vsel %vm2094, %v2104, %v2106
      %v2108 = vrot.slane %v976, 2
      %v2109 = vsel %vm2094, %v2106, %v2108
      %v2110 = vrot.slane %v977, 2
      %v2111 = vsel %vm2094, %v2108, %v2110
      %v2112 = vrot.slane %v978, 2
      %v2113 = vsel %vm2094, %v2110, %v2112
      %v2114 = vrot.slane %v979, 2
      %v2115 = vsel %vm2094, %v2112, %v2114
      %v2116 = vrot.slane %v980, 2
      %v2117 = vsel %vm2094, %v2114, %v2116
      %v2118 = vrot.slane %v981, 2
      %v2119 = vsel %vm2094, %v2116, %v2118
      %v2120 = vrot.slane %v982, 2
      %v2121 = vsel %vm2094, %v2118, %v2120
      %v2122 = vrot.slane %v983, 2
      %v2123 = vsel %vm2094, %v2120, %v2122
      %v2124 = vrot.slane %v984, 2
      %v2125 = vsel %vm2094, %v2122, %v2124
      %v2126 = vrot.slane %v985, 2
      %v2127 = vsel %vm2094, %v2124, %v2126
      %v2128 = vrot.slane %v986, 2
      %v2129 = vsel %vm2094, %v2126, %v2128
      %v2130 = vrot.slane %v987, 2
      %v2131 = vsel %vm2094, %v2128, %v2130
      %v2132 = vrot.slane %v988, 2
      %v2133 = vsel %vm2094, %v2130, %v2132
      %v2134 = vrot.slane %v989, 2
      %v2135 = vsel %vm2094, %v2132, %v2134
      %v2136 = vrot.slane %v990, 2
      %v2137 = vsel %vm2094, %v2134, %v2136
      %v2138 = vrot.slane %v991, 2
      %v2139 = vsel %vm2094, %v2136, %v2138
      %v2140 = vrot.slane %v992, 2
      %v2141 = vsel %vm2094, %v2138, %v2140
      %v2142 = vrot.slane %v993, 2
      %v2143 = vsel %vm2094, %v2140, %v2142
      %v2144 = vrot.slane %v994, 2
      %v2145 = vsel %vm2094, %v2142, %v2144
      %v2146 = vrot.slane %v995, 2
      %v2147 = vsel %vm2094, %v2144, %v2146
      %v2148 = vrot.slane %v996, 2
      %v2149 = vsel %vm2094, %v2146, %v2148
      %v2150 = vrot.slane %v997, 2
      %v2151 = vsel %vm2094, %v2148, %v2150
      %v2152 = vrot.slane %v998, 2
      %v2153 = vsel %vm2094, %v2150, %v2152
      %v2154 = vrot.slane %v999, 2
      %v2155 = vsel %vm2094, %v2152, %v2154
      %v2156 = vrot.slane %v1000, 2
      %v2157 = vsel %vm2094, %v2154, %v2156
      %v2191 = vsel %vm2094, %v2156, %v2095
      %v2192 = vsel %vm2062, 1, 0
      %v2193 = vsel %vm2063, 1, 0
      %v2194 = vsel %vm2064, 1, 0
      %v2195 = vsel %vm2065, 1, 0
      %v2196 = vsel %vm2066, 1, 0
      %v2197 = vsel %vm2067, 1, 0
      %v2198 = vsel %vm2068, 1, 0
      %v2199 = vsel %vm2069, 1, 0
      %v2200 = vsel %vm2070, 1, 0
      %v2201 = vsel %vm2071, 1, 0
      %v2202 = vsel %vm2072, 1, 0
      %v2203 = vsel %vm2073, 1, 0
      %v2204 = vsel %vm2074, 1, 0
      %v2205 = vsel %vm2075, 1, 0
      %v2206 = vsel %vm2076, 1, 0
      %v2207 = vsel %vm2077, 1, 0
      %v2208 = vsel %vm2078, 1, 0
      %v2209 = vsel %vm2079, 1, 0
      %v2210 = vsel %vm2080, 1, 0
      %v2211 = vsel %vm2081, 1, 0
      %v2212 = vsel %vm2082, 1, 0
      %v2213 = vsel %vm2083, 1, 0
      %v2214 = vsel %vm2084, 1, 0
      %v2215 = vsel %vm2085, 1, 0
      %v2216 = vsel %vm2086, 1, 0
      %v2217 = vsel %vm2087, 1, 0
      %v2218 = vsel %vm2088, 1, 0
      %v2219 = vsel %vm2089, 1, 0
      %v2220 = vsel %vm2090, 1, 0
      %v2221 = vsel %vm2091, 1, 0
      %v2222 = vsel %vm2092, 1, 0
      %v2223 = vsel %vm2093, 1, 0
      %2224 = vset.pattern.permute.xlu0 0
      %2225 = vperm.xlu0 %2224, %v2192
      %v2226 = vpop.permute.xlu0 %2225
      %2227 = vset.pattern.permute.xlu0 0
      %2228 = vperm.xlu0 %2227, %v2193
      %v2229 = vpop.permute.xlu0 %2228
      %2230 = vset.pattern.permute.xlu0 0
      %2231 = vperm.xlu0 %2230, %v2194
      %v2232 = vpop.permute.xlu0 %2231
      %2233 = vset.pattern.permute.xlu0 0
      %2234 = vperm.xlu0 %2233, %v2195
      %v2235 = vpop.permute.xlu0 %2234
      %2236 = vset.pattern.permute.xlu0 0
      %2237 = vperm.xlu0 %2236, %v2196
      %v2238 = vpop.permute.xlu0 %2237
      %2239 = vset.pattern.permute.xlu0 0
      %2240 = vperm.xlu0 %2239, %v2197
      %v2241 = vpop.permute.xlu0 %2240
      %2242 = vset.pattern.permute.xlu0 0
      %2243 = vperm.xlu0 %2242, %v2198
      %v2244 = vpop.permute.xlu0 %2243
      %2245 = vset.pattern.permute.xlu0 0
      %2246 = vperm.xlu0 %2245, %v2199
      %v2247 = vpop.permute.xlu0 %2246
      %2248 = vset.pattern.permute.xlu0 0
      %2249 = vperm.xlu0 %2248, %v2200
      %v2250 = vpop.permute.xlu0 %2249
      %2251 = vset.pattern.permute.xlu0 0
      %2252 = vperm.xlu0 %2251, %v2201
      %v2253 = vpop.permute.xlu0 %2252
      %2254 = vset.pattern.permute.xlu0 0
      %2255 = vperm.xlu0 %2254, %v2202
      %v2256 = vpop.permute.xlu0 %2255
      %2257 = vset.pattern.permute.xlu0 0
      %2258 = vperm.xlu0 %2257, %v2203
      %v2259 = vpop.permute.xlu0 %2258
      %2260 = vset.pattern.permute.xlu0 0
      %2261 = vperm.xlu0 %2260, %v2204
      %v2262 = vpop.permute.xlu0 %2261
      %2263 = vset.pattern.permute.xlu0 0
      %2264 = vperm.xlu0 %2263, %v2205
      %v2265 = vpop.permute.xlu0 %2264
      %2266 = vset.pattern.permute.xlu0 0
      %2267 = vperm.xlu0 %2266, %v2206
      %v2268 = vpop.permute.xlu0 %2267
      %2269 = vset.pattern.permute.xlu0 0
      %2270 = vperm.xlu0 %2269, %v2207
      %v2271 = vpop.permute.xlu0 %2270
      %2272 = vset.pattern.permute.xlu0 0
      %2273 = vperm.xlu0 %2272, %v2208
      %v2274 = vpop.permute.xlu0 %2273
      %2275 = vset.pattern.permute.xlu0 0
      %2276 = vperm.xlu0 %2275, %v2209
      %v2277 = vpop.permute.xlu0 %2276
      %2278 = vset.pattern.permute.xlu0 0
      %2279 = vperm.xlu0 %2278, %v2210
      %v2280 = vpop.permute.xlu0 %2279
      %2281 = vset.pattern.permute.xlu0 0
      %2282 = vperm.xlu0 %2281, %v2211
      %v2283 = vpop.permute.xlu0 %2282
      %2284 = vset.pattern.permute.xlu0 0
      %2285 = vperm.xlu0 %2284, %v2212
      %v2286 = vpop.permute.xlu0 %2285
      %2287 = vset.pattern.permute.xlu0 0
      %2288 = vperm.xlu0 %2287, %v2213
      %v2289 = vpop.permute.xlu0 %2288
      %2290 = vset.pattern.permute.xlu0 0
      %2291 = vperm.xlu0 %2290, %v2214
      %v2292 = vpop.permute.xlu0 %2291
      %2293 = vset.pattern.permute.xlu0 0
      %2294 = vperm.xlu0 %2293, %v2215
      %v2295 = vpop.permute.xlu0 %2294
      %2296 = vset.pattern.permute.xlu0 0
      %2297 = vperm.xlu0 %2296, %v2216
      %v2298 = vpop.permute.xlu0 %2297
      %2299 = vset.pattern.permute.xlu0 0
      %2300 = vperm.xlu0 %2299, %v2217
      %v2301 = vpop.permute.xlu0 %2300
      %2302 = vset.pattern.permute.xlu0 0
      %2303 = vperm.xlu0 %2302, %v2218
      %v2304 = vpop.permute.xlu0 %2303
      %2305 = vset.pattern.permute.xlu0 0
      %2306 = vperm.xlu0 %2305, %v2219
      %v2307 = vpop.permute.xlu0 %2306
      %2308 = vset.pattern.permute.xlu0 0
      %2309 = vperm.xlu0 %2308, %v2220
      %v2310 = vpop.permute.xlu0 %2309
      %2311 = vset.pattern.permute.xlu0 0
      %2312 = vperm.xlu0 %2311, %v2221
      %v2313 = vpop.permute.xlu0 %2312
      %2314 = vset.pattern.permute.xlu0 0
      %2315 = vperm.xlu0 %2314, %v2222
      %v2316 = vpop.permute.xlu0 %2315
      %2317 = vset.pattern.permute.xlu0 0
      %2318 = vperm.xlu0 %2317, %v2223
      %v2319 = vpop.permute.xlu0 %2318
      %vm2320 = vcmp.eq.s32.totalorder %v2226, 1
      %vm2321 = vcmp.eq.s32.totalorder %v2229, 1
      %vm2322 = vcmp.eq.s32.totalorder %v2232, 1
      %vm2323 = vcmp.eq.s32.totalorder %v2235, 1
      %vm2324 = vcmp.eq.s32.totalorder %v2238, 1
      %vm2325 = vcmp.eq.s32.totalorder %v2241, 1
      %vm2326 = vcmp.eq.s32.totalorder %v2244, 1
      %vm2327 = vcmp.eq.s32.totalorder %v2247, 1
      %vm2328 = vcmp.eq.s32.totalorder %v2250, 1
      %vm2329 = vcmp.eq.s32.totalorder %v2253, 1
      %vm2330 = vcmp.eq.s32.totalorder %v2256, 1
      %vm2331 = vcmp.eq.s32.totalorder %v2259, 1
      %vm2332 = vcmp.eq.s32.totalorder %v2262, 1
      %vm2333 = vcmp.eq.s32.totalorder %v2265, 1
      %vm2334 = vcmp.eq.s32.totalorder %v2268, 1
      %vm2335 = vcmp.eq.s32.totalorder %v2271, 1
      %vm2336 = vcmp.eq.s32.totalorder %v2274, 1
      %vm2337 = vcmp.eq.s32.totalorder %v2277, 1
      %vm2338 = vcmp.eq.s32.totalorder %v2280, 1
      %vm2339 = vcmp.eq.s32.totalorder %v2283, 1
      %vm2340 = vcmp.eq.s32.totalorder %v2286, 1
      %vm2341 = vcmp.eq.s32.totalorder %v2289, 1
      %vm2342 = vcmp.eq.s32.totalorder %v2292, 1
      %vm2343 = vcmp.eq.s32.totalorder %v2295, 1
      %vm2344 = vcmp.eq.s32.totalorder %v2298, 1
      %vm2345 = vcmp.eq.s32.totalorder %v2301, 1
      %vm2346 = vcmp.eq.s32.totalorder %v2304, 1
      %vm2347 = vcmp.eq.s32.totalorder %v2307, 1
      %vm2348 = vcmp.eq.s32.totalorder %v2310, 1
      %vm2349 = vcmp.eq.s32.totalorder %v2313, 1
      %vm2350 = vcmp.eq.s32.totalorder %v2316, 1
      %vm2351 = vcmp.eq.s32.totalorder %v2319, 1
      %v2352 = vsel %vm2320, %v2097, -1e+30
      %v2353 = vsel %vm2321, %v2099, -1e+30
      %v2354 = vsel %vm2322, %v2101, -1e+30
      %v2355 = vsel %vm2323, %v2103, -1e+30
      %v2356 = vsel %vm2324, %v2105, -1e+30
      %v2357 = vsel %vm2325, %v2107, -1e+30
      %v2358 = vsel %vm2326, %v2109, -1e+30
      %v2359 = vsel %vm2327, %v2111, -1e+30
      %v2360 = vsel %vm2328, %v2113, -1e+30
      %v2361 = vsel %vm2329, %v2115, -1e+30
      %v2362 = vsel %vm2330, %v2117, -1e+30
      %v2363 = vsel %vm2331, %v2119, -1e+30
      %v2364 = vsel %vm2332, %v2121, -1e+30
      %v2365 = vsel %vm2333, %v2123, -1e+30
      %v2366 = vsel %vm2334, %v2125, -1e+30
      %v2367 = vsel %vm2335, %v2127, -1e+30
      %v2368 = vsel %vm2336, %v2129, -1e+30
      %v2369 = vsel %vm2337, %v2131, -1e+30
      %v2370 = vsel %vm2338, %v2133, -1e+30
      %v2371 = vsel %vm2339, %v2135, -1e+30
      %v2372 = vsel %vm2340, %v2137, -1e+30
      %v2373 = vsel %vm2341, %v2139, -1e+30
      %v2374 = vsel %vm2342, %v2141, -1e+30
      %v2375 = vsel %vm2343, %v2143, -1e+30
      %v2376 = vsel %vm2344, %v2145, -1e+30
      %v2377 = vsel %vm2345, %v2147, -1e+30
      %v2378 = vsel %vm2346, %v2149, -1e+30
      %v2379 = vsel %vm2347, %v2151, -1e+30
      %v2380 = vsel %vm2348, %v2153, -1e+30
      %v2381 = vsel %vm2349, %v2155, -1e+30
      %v2382 = vsel %vm2350, %v2157, -1e+30
      %v2383 = vsel %vm2351, %v2191, -1e+30
      %v2384 = vmax.f32 %v2030, %v2352
      %v2385 = vmax.f32 %v2031, %v2353
      %v2386 = vmax.f32 %v2032, %v2354
      %v2387 = vmax.f32 %v2033, %v2355
      %v2388 = vmax.f32 %v2034, %v2356
      %v2389 = vmax.f32 %v2035, %v2357
      %v2390 = vmax.f32 %v2036, %v2358
      %v2391 = vmax.f32 %v2037, %v2359
      %v2392 = vmax.f32 %v2038, %v2360
      %v2393 = vmax.f32 %v2039, %v2361
      %v2394 = vmax.f32 %v2040, %v2362
      %v2395 = vmax.f32 %v2041, %v2363
      %v2396 = vmax.f32 %v2042, %v2364
      %v2397 = vmax.f32 %v2043, %v2365
      %v2398 = vmax.f32 %v2044, %v2366
      %v2399 = vmax.f32 %v2045, %v2367
      %v2400 = vmax.f32 %v2046, %v2368
      %v2401 = vmax.f32 %v2047, %v2369
      %v2402 = vmax.f32 %v2048, %v2370
      %v2403 = vmax.f32 %v2049, %v2371
      %v2404 = vmax.f32 %v2050, %v2372
      %v2405 = vmax.f32 %v2051, %v2373
      %v2406 = vmax.f32 %v2052, %v2374
      %v2407 = vmax.f32 %v2053, %v2375
      %v2408 = vmax.f32 %v2054, %v2376
      %v2409 = vmax.f32 %v2055, %v2377
      %v2410 = vmax.f32 %v2056, %v2378
      %v2411 = vmax.f32 %v2057, %v2379
      %v2412 = vmax.f32 %v2058, %v2380
      %v2413 = vmax.f32 %v2059, %v2381
      %v2414 = vmax.f32 %v2060, %v2382
      %v2415 = vmax.f32 %v2061, %v2383
      %v2416 = vmax.f32 %v1709, %v2384
      %v2417 = vmax.f32 %v1710, %v2385
      %v2418 = vmax.f32 %v1711, %v2386
      %v2419 = vmax.f32 %v1712, %v2387
      %v2420 = vmax.f32 %v1713, %v2388
      %v2421 = vmax.f32 %v1714, %v2389
      %v2422 = vmax.f32 %v1715, %v2390
      %v2423 = vmax.f32 %v1716, %v2391
      %v2424 = vmax.f32 %v1717, %v2392
      %v2425 = vmax.f32 %v1718, %v2393
      %v2426 = vmax.f32 %v1719, %v2394
      %v2427 = vmax.f32 %v1720, %v2395
      %v2428 = vmax.f32 %v1721, %v2396
      %v2429 = vmax.f32 %v1722, %v2397
      %v2430 = vmax.f32 %v1723, %v2398
      %v2431 = vmax.f32 %v1724, %v2399
      %v2432 = vmax.f32 %v1725, %v2400
      %v2433 = vmax.f32 %v1726, %v2401
      %v2434 = vmax.f32 %v1727, %v2402
      %v2435 = vmax.f32 %v1728, %v2403
      %v2436 = vmax.f32 %v1729, %v2404
      %v2437 = vmax.f32 %v1730, %v2405
      %v2438 = vmax.f32 %v1731, %v2406
      %v2439 = vmax.f32 %v1732, %v2407
      %v2440 = vmax.f32 %v1733, %v2408
      %v2441 = vmax.f32 %v1734, %v2409
      %v2442 = vmax.f32 %v1735, %v2410
      %v2443 = vmax.f32 %v1736, %v2411
      %v2444 = vmax.f32 %v1737, %v2412
      %v2445 = vmax.f32 %v1738, %v2413
      %v2446 = vmax.f32 %v1739, %v2414
      %v2447 = vmax.f32 %v1740, %v2415
      %vm2448 = vcmp.ge.s32.totalorder %v340, 16
      %vm2449 = vcmp.ge.s32.totalorder %v341, 16
      %vm2450 = vcmp.ge.s32.totalorder %v342, 16
      %vm2451 = vcmp.ge.s32.totalorder %v343, 16
      %vm2452 = vcmp.ge.s32.totalorder %v344, 16
      %vm2453 = vcmp.ge.s32.totalorder %v345, 16
      %vm2454 = vcmp.ge.s32.totalorder %v346, 16
      %vm2455 = vcmp.ge.s32.totalorder %v347, 16
      %vm2456 = vcmp.ge.s32.totalorder %v348, 16
      %vm2457 = vcmp.ge.s32.totalorder %v349, 16
      %vm2458 = vcmp.ge.s32.totalorder %v350, 16
      %vm2459 = vcmp.ge.s32.totalorder %v351, 16
      %vm2460 = vcmp.ge.s32.totalorder %v352, 16
      %vm2461 = vcmp.ge.s32.totalorder %v353, 16
      %vm2462 = vcmp.ge.s32.totalorder %v354, 16
      %vm2463 = vcmp.ge.s32.totalorder %v355, 16
      %vm2464 = vcmp.ge.s32.totalorder %v356, 16
      %vm2465 = vcmp.ge.s32.totalorder %v357, 16
      %vm2466 = vcmp.ge.s32.totalorder %v358, 16
      %vm2467 = vcmp.ge.s32.totalorder %v359, 16
      %vm2468 = vcmp.ge.s32.totalorder %v360, 16
      %vm2469 = vcmp.ge.s32.totalorder %v361, 16
      %vm2470 = vcmp.ge.s32.totalorder %v362, 16
      %vm2471 = vcmp.ge.s32.totalorder %v363, 16
      %vm2472 = vcmp.ge.s32.totalorder %v364, 16
      %vm2473 = vcmp.ge.s32.totalorder %v365, 16
      %vm2474 = vcmp.ge.s32.totalorder %v366, 16
      %vm2475 = vcmp.ge.s32.totalorder %v367, 16
      %vm2476 = vcmp.ge.s32.totalorder %v368, 16
      %vm2477 = vcmp.ge.s32.totalorder %v369, 16
      %vm2478 = vcmp.ge.s32.totalorder %v370, 16
      %vm2479 = vcmp.ge.s32.totalorder %v371, 16
      %v2480 = vsel %vm2448, 1, 0
      %v2481 = vsel %vm2449, 1, 0
      %v2482 = vsel %vm2450, 1, 0
      %v2483 = vsel %vm2451, 1, 0
      %v2484 = vsel %vm2452, 1, 0
      %v2485 = vsel %vm2453, 1, 0
      %v2486 = vsel %vm2454, 1, 0
      %v2487 = vsel %vm2455, 1, 0
      %v2488 = vsel %vm2456, 1, 0
      %v2489 = vsel %vm2457, 1, 0
      %v2490 = vsel %vm2458, 1, 0
      %v2491 = vsel %vm2459, 1, 0
      %v2492 = vsel %vm2460, 1, 0
      %v2493 = vsel %vm2461, 1, 0
      %v2494 = vsel %vm2462, 1, 0
      %v2495 = vsel %vm2463, 1, 0
      %v2496 = vsel %vm2464, 1, 0
      %v2497 = vsel %vm2465, 1, 0
      %v2498 = vsel %vm2466, 1, 0
      %v2499 = vsel %vm2467, 1, 0
      %v2500 = vsel %vm2468, 1, 0
      %v2501 = vsel %vm2469, 1, 0
      %v2502 = vsel %vm2470, 1, 0
      %v2503 = vsel %vm2471, 1, 0
      %v2504 = vsel %vm2472, 1, 0
      %v2505 = vsel %vm2473, 1, 0
      %v2506 = vsel %vm2474, 1, 0
      %v2507 = vsel %vm2475, 1, 0
      %v2508 = vsel %vm2476, 1, 0
      %v2509 = vsel %vm2477, 1, 0
      %v2510 = vsel %vm2478, 1, 0
      %v2511 = vsel %vm2479, 1, 0
      %vm2512 = vcmp.eq.s32.totalorder %v2480, 1
      %vm2513 = vcmp.eq.s32.totalorder %v2481, 1
      %vm2514 = vcmp.eq.s32.totalorder %v2482, 1
      %vm2515 = vcmp.eq.s32.totalorder %v2483, 1
      %vm2516 = vcmp.eq.s32.totalorder %v2484, 1
      %vm2517 = vcmp.eq.s32.totalorder %v2485, 1
      %vm2518 = vcmp.eq.s32.totalorder %v2486, 1
      %vm2519 = vcmp.eq.s32.totalorder %v2487, 1
      %vm2520 = vcmp.eq.s32.totalorder %v2488, 1
      %vm2521 = vcmp.eq.s32.totalorder %v2489, 1
      %vm2522 = vcmp.eq.s32.totalorder %v2490, 1
      %vm2523 = vcmp.eq.s32.totalorder %v2491, 1
      %vm2524 = vcmp.eq.s32.totalorder %v2492, 1
      %vm2525 = vcmp.eq.s32.totalorder %v2493, 1
      %vm2526 = vcmp.eq.s32.totalorder %v2494, 1
      %vm2527 = vcmp.eq.s32.totalorder %v2495, 1
      %vm2528 = vcmp.eq.s32.totalorder %v2496, 1
      %vm2529 = vcmp.eq.s32.totalorder %v2497, 1
      %vm2530 = vcmp.eq.s32.totalorder %v2498, 1
      %vm2531 = vcmp.eq.s32.totalorder %v2499, 1
      %vm2532 = vcmp.eq.s32.totalorder %v2500, 1
      %vm2533 = vcmp.eq.s32.totalorder %v2501, 1
      %vm2534 = vcmp.eq.s32.totalorder %v2502, 1
      %vm2535 = vcmp.eq.s32.totalorder %v2503, 1
      %vm2536 = vcmp.eq.s32.totalorder %v2504, 1
      %vm2537 = vcmp.eq.s32.totalorder %v2505, 1
      %vm2538 = vcmp.eq.s32.totalorder %v2506, 1
      %vm2539 = vcmp.eq.s32.totalorder %v2507, 1
      %vm2540 = vcmp.eq.s32.totalorder %v2508, 1
      %vm2541 = vcmp.eq.s32.totalorder %v2509, 1
      %vm2542 = vcmp.eq.s32.totalorder %v2510, 1
      %vm2543 = vcmp.eq.s32.totalorder %v2511, 1
      %v2544 = vsel %vm2512, %v2446, -1e+30
      %v2545 = vsel %vm2513, %v2447, -1e+30
      %v2546 = vsel %vm2514, %v2416, -1e+30
      %v2547 = vsel %vm2515, %v2417, -1e+30
      %v2548 = vsel %vm2516, %v2418, -1e+30
      %v2549 = vsel %vm2517, %v2419, -1e+30
      %v2550 = vsel %vm2518, %v2420, -1e+30
      %v2551 = vsel %vm2519, %v2421, -1e+30
      %v2552 = vsel %vm2520, %v2422, -1e+30
      %v2553 = vsel %vm2521, %v2423, -1e+30
      %v2554 = vsel %vm2522, %v2424, -1e+30
      %v2555 = vsel %vm2523, %v2425, -1e+30
      %v2556 = vsel %vm2524, %v2426, -1e+30
      %v2557 = vsel %vm2525, %v2427, -1e+30
      %v2558 = vsel %vm2526, %v2428, -1e+30
      %v2559 = vsel %vm2527, %v2429, -1e+30
      %v2560 = vsel %vm2528, %v2430, -1e+30
      %v2561 = vsel %vm2529, %v2431, -1e+30
      %v2562 = vsel %vm2530, %v2432, -1e+30
      %v2563 = vsel %vm2531, %v2433, -1e+30
      %v2564 = vsel %vm2532, %v2434, -1e+30
      %v2565 = vsel %vm2533, %v2435, -1e+30
      %v2566 = vsel %vm2534, %v2436, -1e+30
      %v2567 = vsel %vm2535, %v2437, -1e+30
      %v2568 = vsel %vm2536, %v2438, -1e+30
      %v2569 = vsel %vm2537, %v2439, -1e+30
      %v2570 = vsel %vm2538, %v2440, -1e+30
      %v2571 = vsel %vm2539, %v2441, -1e+30
      %v2572 = vsel %vm2540, %v2442, -1e+30
      %v2573 = vsel %vm2541, %v2443, -1e+30
      %v2574 = vsel %vm2542, %v2444, -1e+30
      %v2575 = vsel %vm2543, %v2445, -1e+30
      %vm2576 = vcmp.lt.s32.totalorder %v340, 240
      %vm2577 = vcmp.lt.s32.totalorder %v341, 240
      %vm2578 = vcmp.lt.s32.totalorder %v342, 240
      %vm2579 = vcmp.lt.s32.totalorder %v343, 240
      %vm2580 = vcmp.lt.s32.totalorder %v344, 240
      %vm2581 = vcmp.lt.s32.totalorder %v345, 240
      %vm2582 = vcmp.lt.s32.totalorder %v346, 240
      %vm2583 = vcmp.lt.s32.totalorder %v347, 240
      %vm2584 = vcmp.lt.s32.totalorder %v348, 240
      %vm2585 = vcmp.lt.s32.totalorder %v349, 240
      %vm2586 = vcmp.lt.s32.totalorder %v350, 240
      %vm2587 = vcmp.lt.s32.totalorder %v351, 240
      %vm2588 = vcmp.lt.s32.totalorder %v352, 240
      %vm2589 = vcmp.lt.s32.totalorder %v353, 240
      %vm2590 = vcmp.lt.s32.totalorder %v354, 240
      %vm2591 = vcmp.lt.s32.totalorder %v355, 240
      %vm2592 = vcmp.lt.s32.totalorder %v356, 240
      %vm2593 = vcmp.lt.s32.totalorder %v357, 240
      %vm2594 = vcmp.lt.s32.totalorder %v358, 240
      %vm2595 = vcmp.lt.s32.totalorder %v359, 240
      %vm2596 = vcmp.lt.s32.totalorder %v360, 240
      %vm2597 = vcmp.lt.s32.totalorder %v361, 240
      %vm2598 = vcmp.lt.s32.totalorder %v362, 240
      %vm2599 = vcmp.lt.s32.totalorder %v363, 240
      %vm2600 = vcmp.lt.s32.totalorder %v364, 240
      %vm2601 = vcmp.lt.s32.totalorder %v365, 240
      %vm2602 = vcmp.lt.s32.totalorder %v366, 240
      %vm2603 = vcmp.lt.s32.totalorder %v367, 240
      %vm2604 = vcmp.lt.s32.totalorder %v368, 240
      %vm2605 = vcmp.lt.s32.totalorder %v369, 240
      %vm2606 = vcmp.lt.s32.totalorder %v370, 240
      %vm2607 = vcmp.lt.s32.totalorder %v371, 240
      %v2608 = vsel %vm2576, 1, 0
      %v2609 = vsel %vm2577, 1, 0
      %v2610 = vsel %vm2578, 1, 0
      %v2611 = vsel %vm2579, 1, 0
      %v2612 = vsel %vm2580, 1, 0
      %v2613 = vsel %vm2581, 1, 0
      %v2614 = vsel %vm2582, 1, 0
      %v2615 = vsel %vm2583, 1, 0
      %v2616 = vsel %vm2584, 1, 0
      %v2617 = vsel %vm2585, 1, 0
      %v2618 = vsel %vm2586, 1, 0
      %v2619 = vsel %vm2587, 1, 0
      %v2620 = vsel %vm2588, 1, 0
      %v2621 = vsel %vm2589, 1, 0
      %v2622 = vsel %vm2590, 1, 0
      %v2623 = vsel %vm2591, 1, 0
      %v2624 = vsel %vm2592, 1, 0
      %v2625 = vsel %vm2593, 1, 0
      %v2626 = vsel %vm2594, 1, 0
      %v2627 = vsel %vm2595, 1, 0
      %v2628 = vsel %vm2596, 1, 0
      %v2629 = vsel %vm2597, 1, 0
      %v2630 = vsel %vm2598, 1, 0
      %v2631 = vsel %vm2599, 1, 0
      %v2632 = vsel %vm2600, 1, 0
      %v2633 = vsel %vm2601, 1, 0
      %v2634 = vsel %vm2602, 1, 0
      %v2635 = vsel %vm2603, 1, 0
      %v2636 = vsel %vm2604, 1, 0
      %v2637 = vsel %vm2605, 1, 0
      %v2638 = vsel %vm2606, 1, 0
      %v2639 = vsel %vm2607, 1, 0
      %vm2640 = vcmp.eq.s32.totalorder %v2608, 1
      %vm2641 = vcmp.eq.s32.totalorder %v2609, 1
      %vm2642 = vcmp.eq.s32.totalorder %v2610, 1
      %vm2643 = vcmp.eq.s32.totalorder %v2611, 1
      %vm2644 = vcmp.eq.s32.totalorder %v2612, 1
      %vm2645 = vcmp.eq.s32.totalorder %v2613, 1
      %vm2646 = vcmp.eq.s32.totalorder %v2614, 1
      %vm2647 = vcmp.eq.s32.totalorder %v2615, 1
      %vm2648 = vcmp.eq.s32.totalorder %v2616, 1
      %vm2649 = vcmp.eq.s32.totalorder %v2617, 1
      %vm2650 = vcmp.eq.s32.totalorder %v2618, 1
      %vm2651 = vcmp.eq.s32.totalorder %v2619, 1
      %vm2652 = vcmp.eq.s32.totalorder %v2620, 1
      %vm2653 = vcmp.eq.s32.totalorder %v2621, 1
      %vm2654 = vcmp.eq.s32.totalorder %v2622, 1
      %vm2655 = vcmp.eq.s32.totalorder %v2623, 1
      %vm2656 = vcmp.eq.s32.totalorder %v2624, 1
      %vm2657 = vcmp.eq.s32.totalorder %v2625, 1
      %vm2658 = vcmp.eq.s32.totalorder %v2626, 1
      %vm2659 = vcmp.eq.s32.totalorder %v2627, 1
      %vm2660 = vcmp.eq.s32.totalorder %v2628, 1
      %vm2661 = vcmp.eq.s32.totalorder %v2629, 1
      %vm2662 = vcmp.eq.s32.totalorder %v2630, 1
      %vm2663 = vcmp.eq.s32.totalorder %v2631, 1
      %vm2664 = vcmp.eq.s32.totalorder %v2632, 1
      %vm2665 = vcmp.eq.s32.totalorder %v2633, 1
      %vm2666 = vcmp.eq.s32.totalorder %v2634, 1
      %vm2667 = vcmp.eq.s32.totalorder %v2635, 1
      %vm2668 = vcmp.eq.s32.totalorder %v2636, 1
      %vm2669 = vcmp.eq.s32.totalorder %v2637, 1
      %vm2670 = vcmp.eq.s32.totalorder %v2638, 1
      %vm2671 = vcmp.eq.s32.totalorder %v2639, 1
      %v2672 = vsel %vm2640, %v2418, -1e+30
      %v2673 = vsel %vm2641, %v2419, -1e+30
      %v2674 = vsel %vm2642, %v2420, -1e+30
      %v2675 = vsel %vm2643, %v2421, -1e+30
      %v2676 = vsel %vm2644, %v2422, -1e+30
      %v2677 = vsel %vm2645, %v2423, -1e+30
      %v2678 = vsel %vm2646, %v2424, -1e+30
      %v2679 = vsel %vm2647, %v2425, -1e+30
      %v2680 = vsel %vm2648, %v2426, -1e+30
      %v2681 = vsel %vm2649, %v2427, -1e+30
      %v2682 = vsel %vm2650, %v2428, -1e+30
      %v2683 = vsel %vm2651, %v2429, -1e+30
      %v2684 = vsel %vm2652, %v2430, -1e+30
      %v2685 = vsel %vm2653, %v2431, -1e+30
      %v2686 = vsel %vm2654, %v2432, -1e+30
      %v2687 = vsel %vm2655, %v2433, -1e+30
      %v2688 = vsel %vm2656, %v2434, -1e+30
      %v2689 = vsel %vm2657, %v2435, -1e+30
      %v2690 = vsel %vm2658, %v2436, -1e+30
      %v2691 = vsel %vm2659, %v2437, -1e+30
      %v2692 = vsel %vm2660, %v2438, -1e+30
      %v2693 = vsel %vm2661, %v2439, -1e+30
      %v2694 = vsel %vm2662, %v2440, -1e+30
      %v2695 = vsel %vm2663, %v2441, -1e+30
      %v2696 = vsel %vm2664, %v2442, -1e+30
      %v2697 = vsel %vm2665, %v2443, -1e+30
      %v2698 = vsel %vm2666, %v2444, -1e+30
      %v2699 = vsel %vm2667, %v2445, -1e+30
      %v2700 = vsel %vm2668, %v2446, -1e+30
      %v2701 = vsel %vm2669, %v2447, -1e+30
      %v2702 = vsel %vm2670, %v2416, -1e+30
      %v2703 = vsel %vm2671, %v2417, -1e+30
      %v2704 = vmax.f32 %v2544, %v2672
      %v2705 = vmax.f32 %v2545, %v2673
      %v2706 = vmax.f32 %v2546, %v2674
      %v2707 = vmax.f32 %v2547, %v2675
      %v2708 = vmax.f32 %v2548, %v2676
      %v2709 = vmax.f32 %v2549, %v2677
      %v2710 = vmax.f32 %v2550, %v2678
      %v2711 = vmax.f32 %v2551, %v2679
      %v2712 = vmax.f32 %v2552, %v2680
      %v2713 = vmax.f32 %v2553, %v2681
      %v2714 = vmax.f32 %v2554, %v2682
      %v2715 = vmax.f32 %v2555, %v2683
      %v2716 = vmax.f32 %v2556, %v2684
      %v2717 = vmax.f32 %v2557, %v2685
      %v2718 = vmax.f32 %v2558, %v2686
      %v2719 = vmax.f32 %v2559, %v2687
      %v2720 = vmax.f32 %v2560, %v2688
      %v2721 = vmax.f32 %v2561, %v2689
      %v2722 = vmax.f32 %v2562, %v2690
      %v2723 = vmax.f32 %v2563, %v2691
      %v2724 = vmax.f32 %v2564, %v2692
      %v2725 = vmax.f32 %v2565, %v2693
      %v2726 = vmax.f32 %v2566, %v2694
      %v2727 = vmax.f32 %v2567, %v2695
      %v2728 = vmax.f32 %v2568, %v2696
      %v2729 = vmax.f32 %v2569, %v2697
      %v2730 = vmax.f32 %v2570, %v2698
      %v2731 = vmax.f32 %v2571, %v2699
      %v2732 = vmax.f32 %v2572, %v2700
      %v2733 = vmax.f32 %v2573, %v2701
      %v2734 = vmax.f32 %v2574, %v2702
      %v2735 = vmax.f32 %v2575, %v2703
      %v2736 = vmax.f32 %v2416, %v2704
      %v2737 = vmax.f32 %v2417, %v2705
      %v2738 = vmax.f32 %v2418, %v2706
      %v2739 = vmax.f32 %v2419, %v2707
      %v2740 = vmax.f32 %v2420, %v2708
      %v2741 = vmax.f32 %v2421, %v2709
      %v2742 = vmax.f32 %v2422, %v2710
      %v2743 = vmax.f32 %v2423, %v2711
      %v2744 = vmax.f32 %v2424, %v2712
      %v2745 = vmax.f32 %v2425, %v2713
      %v2746 = vmax.f32 %v2426, %v2714
      %v2747 = vmax.f32 %v2427, %v2715
      %v2748 = vmax.f32 %v2428, %v2716
      %v2749 = vmax.f32 %v2429, %v2717
      %v2750 = vmax.f32 %v2430, %v2718
      %v2751 = vmax.f32 %v2431, %v2719
      %v2752 = vmax.f32 %v2432, %v2720
      %v2753 = vmax.f32 %v2433, %v2721
      %v2754 = vmax.f32 %v2434, %v2722
      %v2755 = vmax.f32 %v2435, %v2723
      %v2756 = vmax.f32 %v2436, %v2724
      %v2757 = vmax.f32 %v2437, %v2725
      %v2758 = vmax.f32 %v2438, %v2726
      %v2759 = vmax.f32 %v2439, %v2727
      %v2760 = vmax.f32 %v2440, %v2728
      %v2761 = vmax.f32 %v2441, %v2729
      %v2762 = vmax.f32 %v2442, %v2730
      %v2763 = vmax.f32 %v2443, %v2731
      %v2764 = vmax.f32 %v2444, %v2732
      %v2765 = vmax.f32 %v2445, %v2733
      %v2766 = vmax.f32 %v2446, %v2734
      %v2767 = vmax.f32 %v2447, %v2735
      %vm2768 = vcmp.ge.s32.totalorder %v340, 32
      %vm2769 = vcmp.ge.s32.totalorder %v341, 32
      %vm2770 = vcmp.ge.s32.totalorder %v342, 32
      %vm2771 = vcmp.ge.s32.totalorder %v343, 32
      %vm2772 = vcmp.ge.s32.totalorder %v344, 32
      %vm2773 = vcmp.ge.s32.totalorder %v345, 32
      %vm2774 = vcmp.ge.s32.totalorder %v346, 32
      %vm2775 = vcmp.ge.s32.totalorder %v347, 32
      %vm2776 = vcmp.ge.s32.totalorder %v348, 32
      %vm2777 = vcmp.ge.s32.totalorder %v349, 32
      %vm2778 = vcmp.ge.s32.totalorder %v350, 32
      %vm2779 = vcmp.ge.s32.totalorder %v351, 32
      %vm2780 = vcmp.ge.s32.totalorder %v352, 32
      %vm2781 = vcmp.ge.s32.totalorder %v353, 32
      %vm2782 = vcmp.ge.s32.totalorder %v354, 32
      %vm2783 = vcmp.ge.s32.totalorder %v355, 32
      %vm2784 = vcmp.ge.s32.totalorder %v356, 32
      %vm2785 = vcmp.ge.s32.totalorder %v357, 32
      %vm2786 = vcmp.ge.s32.totalorder %v358, 32
      %vm2787 = vcmp.ge.s32.totalorder %v359, 32
      %vm2788 = vcmp.ge.s32.totalorder %v360, 32
      %vm2789 = vcmp.ge.s32.totalorder %v361, 32
      %vm2790 = vcmp.ge.s32.totalorder %v362, 32
      %vm2791 = vcmp.ge.s32.totalorder %v363, 32
      %vm2792 = vcmp.ge.s32.totalorder %v364, 32
      %vm2793 = vcmp.ge.s32.totalorder %v365, 32
      %vm2794 = vcmp.ge.s32.totalorder %v366, 32
      %vm2795 = vcmp.ge.s32.totalorder %v367, 32
      %vm2796 = vcmp.ge.s32.totalorder %v368, 32
      %vm2797 = vcmp.ge.s32.totalorder %v369, 32
      %vm2798 = vcmp.ge.s32.totalorder %v370, 32
      %vm2799 = vcmp.ge.s32.totalorder %v371, 32
      %v2800 = vsel %vm2768, 1, 0
      %v2801 = vsel %vm2769, 1, 0
      %v2802 = vsel %vm2770, 1, 0
      %v2803 = vsel %vm2771, 1, 0
      %v2804 = vsel %vm2772, 1, 0
      %v2805 = vsel %vm2773, 1, 0
      %v2806 = vsel %vm2774, 1, 0
      %v2807 = vsel %vm2775, 1, 0
      %v2808 = vsel %vm2776, 1, 0
      %v2809 = vsel %vm2777, 1, 0
      %v2810 = vsel %vm2778, 1, 0
      %v2811 = vsel %vm2779, 1, 0
      %v2812 = vsel %vm2780, 1, 0
      %v2813 = vsel %vm2781, 1, 0
      %v2814 = vsel %vm2782, 1, 0
      %v2815 = vsel %vm2783, 1, 0
      %v2816 = vsel %vm2784, 1, 0
      %v2817 = vsel %vm2785, 1, 0
      %v2818 = vsel %vm2786, 1, 0
      %v2819 = vsel %vm2787, 1, 0
      %v2820 = vsel %vm2788, 1, 0
      %v2821 = vsel %vm2789, 1, 0
      %v2822 = vsel %vm2790, 1, 0
      %v2823 = vsel %vm2791, 1, 0
      %v2824 = vsel %vm2792, 1, 0
      %v2825 = vsel %vm2793, 1, 0
      %v2826 = vsel %vm2794, 1, 0
      %v2827 = vsel %vm2795, 1, 0
      %v2828 = vsel %vm2796, 1, 0
      %v2829 = vsel %vm2797, 1, 0
      %v2830 = vsel %vm2798, 1, 0
      %v2831 = vsel %vm2799, 1, 0
      %vm2832 = vcmp.eq.s32.totalorder %v2800, 1
      %vm2833 = vcmp.eq.s32.totalorder %v2801, 1
      %vm2834 = vcmp.eq.s32.totalorder %v2802, 1
      %vm2835 = vcmp.eq.s32.totalorder %v2803, 1
      %vm2836 = vcmp.eq.s32.totalorder %v2804, 1
      %vm2837 = vcmp.eq.s32.totalorder %v2805, 1
      %vm2838 = vcmp.eq.s32.totalorder %v2806, 1
      %vm2839 = vcmp.eq.s32.totalorder %v2807, 1
      %vm2840 = vcmp.eq.s32.totalorder %v2808, 1
      %vm2841 = vcmp.eq.s32.totalorder %v2809, 1
      %vm2842 = vcmp.eq.s32.totalorder %v2810, 1
      %vm2843 = vcmp.eq.s32.totalorder %v2811, 1
      %vm2844 = vcmp.eq.s32.totalorder %v2812, 1
      %vm2845 = vcmp.eq.s32.totalorder %v2813, 1
      %vm2846 = vcmp.eq.s32.totalorder %v2814, 1
      %vm2847 = vcmp.eq.s32.totalorder %v2815, 1
      %vm2848 = vcmp.eq.s32.totalorder %v2816, 1
      %vm2849 = vcmp.eq.s32.totalorder %v2817, 1
      %vm2850 = vcmp.eq.s32.totalorder %v2818, 1
      %vm2851 = vcmp.eq.s32.totalorder %v2819, 1
      %vm2852 = vcmp.eq.s32.totalorder %v2820, 1
      %vm2853 = vcmp.eq.s32.totalorder %v2821, 1
      %vm2854 = vcmp.eq.s32.totalorder %v2822, 1
      %vm2855 = vcmp.eq.s32.totalorder %v2823, 1
      %vm2856 = vcmp.eq.s32.totalorder %v2824, 1
      %vm2857 = vcmp.eq.s32.totalorder %v2825, 1
      %vm2858 = vcmp.eq.s32.totalorder %v2826, 1
      %vm2859 = vcmp.eq.s32.totalorder %v2827, 1
      %vm2860 = vcmp.eq.s32.totalorder %v2828, 1
      %vm2861 = vcmp.eq.s32.totalorder %v2829, 1
      %vm2862 = vcmp.eq.s32.totalorder %v2830, 1
      %vm2863 = vcmp.eq.s32.totalorder %v2831, 1
      %v2864 = vsel %vm2832, %v2444, -1e+30
      %v2865 = vsel %vm2833, %v2445, -1e+30
      %v2866 = vsel %vm2834, %v2446, -1e+30
      %v2867 = vsel %vm2835, %v2447, -1e+30
      %v2868 = vsel %vm2836, %v2416, -1e+30
      %v2869 = vsel %vm2837, %v2417, -1e+30
      %v2870 = vsel %vm2838, %v2418, -1e+30
      %v2871 = vsel %vm2839, %v2419, -1e+30
      %v2872 = vsel %vm2840, %v2420, -1e+30
      %v2873 = vsel %vm2841, %v2421, -1e+30
      %v2874 = vsel %vm2842, %v2422, -1e+30
      %v2875 = vsel %vm2843, %v2423, -1e+30
      %v2876 = vsel %vm2844, %v2424, -1e+30
      %v2877 = vsel %vm2845, %v2425, -1e+30
      %v2878 = vsel %vm2846, %v2426, -1e+30
      %v2879 = vsel %vm2847, %v2427, -1e+30
      %v2880 = vsel %vm2848, %v2428, -1e+30
      %v2881 = vsel %vm2849, %v2429, -1e+30
      %v2882 = vsel %vm2850, %v2430, -1e+30
      %v2883 = vsel %vm2851, %v2431, -1e+30
      %v2884 = vsel %vm2852, %v2432, -1e+30
      %v2885 = vsel %vm2853, %v2433, -1e+30
      %v2886 = vsel %vm2854, %v2434, -1e+30
      %v2887 = vsel %vm2855, %v2435, -1e+30
      %v2888 = vsel %vm2856, %v2436, -1e+30
      %v2889 = vsel %vm2857, %v2437, -1e+30
      %v2890 = vsel %vm2858, %v2438, -1e+30
      %v2891 = vsel %vm2859, %v2439, -1e+30
      %v2892 = vsel %vm2860, %v2440, -1e+30
      %v2893 = vsel %vm2861, %v2441, -1e+30
      %v2894 = vsel %vm2862, %v2442, -1e+30
      %v2895 = vsel %vm2863, %v2443, -1e+30
      %vm2896 = vcmp.lt.s32.totalorder %v340, 224
      %vm2897 = vcmp.lt.s32.totalorder %v341, 224
      %vm2898 = vcmp.lt.s32.totalorder %v342, 224
      %vm2899 = vcmp.lt.s32.totalorder %v343, 224
      %vm2900 = vcmp.lt.s32.totalorder %v344, 224
      %vm2901 = vcmp.lt.s32.totalorder %v345, 224
      %vm2902 = vcmp.lt.s32.totalorder %v346, 224
      %vm2903 = vcmp.lt.s32.totalorder %v347, 224
      %vm2904 = vcmp.lt.s32.totalorder %v348, 224
      %vm2905 = vcmp.lt.s32.totalorder %v349, 224
      %vm2906 = vcmp.lt.s32.totalorder %v350, 224
      %vm2907 = vcmp.lt.s32.totalorder %v351, 224
      %vm2908 = vcmp.lt.s32.totalorder %v352, 224
      %vm2909 = vcmp.lt.s32.totalorder %v353, 224
      %vm2910 = vcmp.lt.s32.totalorder %v354, 224
      %vm2911 = vcmp.lt.s32.totalorder %v355, 224
      %vm2912 = vcmp.lt.s32.totalorder %v356, 224
      %vm2913 = vcmp.lt.s32.totalorder %v357, 224
      %vm2914 = vcmp.lt.s32.totalorder %v358, 224
      %vm2915 = vcmp.lt.s32.totalorder %v359, 224
      %vm2916 = vcmp.lt.s32.totalorder %v360, 224
      %vm2917 = vcmp.lt.s32.totalorder %v361, 224
      %vm2918 = vcmp.lt.s32.totalorder %v362, 224
      %vm2919 = vcmp.lt.s32.totalorder %v363, 224
      %vm2920 = vcmp.lt.s32.totalorder %v364, 224
      %vm2921 = vcmp.lt.s32.totalorder %v365, 224
      %vm2922 = vcmp.lt.s32.totalorder %v366, 224
      %vm2923 = vcmp.lt.s32.totalorder %v367, 224
      %vm2924 = vcmp.lt.s32.totalorder %v368, 224
      %vm2925 = vcmp.lt.s32.totalorder %v369, 224
      %vm2926 = vcmp.lt.s32.totalorder %v370, 224
      %vm2927 = vcmp.lt.s32.totalorder %v371, 224
      %v2928 = vsel %vm2896, 1, 0
      %v2929 = vsel %vm2897, 1, 0
      %v2930 = vsel %vm2898, 1, 0
      %v2931 = vsel %vm2899, 1, 0
      %v2932 = vsel %vm2900, 1, 0
      %v2933 = vsel %vm2901, 1, 0
      %v2934 = vsel %vm2902, 1, 0
      %v2935 = vsel %vm2903, 1, 0
      %v2936 = vsel %vm2904, 1, 0
      %v2937 = vsel %vm2905, 1, 0
      %v2938 = vsel %vm2906, 1, 0
      %v2939 = vsel %vm2907, 1, 0
      %v2940 = vsel %vm2908, 1, 0
      %v2941 = vsel %vm2909, 1, 0
      %v2942 = vsel %vm2910, 1, 0
      %v2943 = vsel %vm2911, 1, 0
      %v2944 = vsel %vm2912, 1, 0
      %v2945 = vsel %vm2913, 1, 0
      %v2946 = vsel %vm2914, 1, 0
      %v2947 = vsel %vm2915, 1, 0
      %v2948 = vsel %vm2916, 1, 0
      %v2949 = vsel %vm2917, 1, 0
      %v2950 = vsel %vm2918, 1, 0
      %v2951 = vsel %vm2919, 1, 0
      %v2952 = vsel %vm2920, 1, 0
      %v2953 = vsel %vm2921, 1, 0
      %v2954 = vsel %vm2922, 1, 0
      %v2955 = vsel %vm2923, 1, 0
      %v2956 = vsel %vm2924, 1, 0
      %v2957 = vsel %vm2925, 1, 0
      %v2958 = vsel %vm2926, 1, 0
      %v2959 = vsel %vm2927, 1, 0
      %vm2960 = vcmp.eq.s32.totalorder %v2928, 1
      %vm2961 = vcmp.eq.s32.totalorder %v2929, 1
      %vm2962 = vcmp.eq.s32.totalorder %v2930, 1
      %vm2963 = vcmp.eq.s32.totalorder %v2931, 1
      %vm2964 = vcmp.eq.s32.totalorder %v2932, 1
      %vm2965 = vcmp.eq.s32.totalorder %v2933, 1
      %vm2966 = vcmp.eq.s32.totalorder %v2934, 1
      %vm2967 = vcmp.eq.s32.totalorder %v2935, 1
      %vm2968 = vcmp.eq.s32.totalorder %v2936, 1
      %vm2969 = vcmp.eq.s32.totalorder %v2937, 1
      %vm2970 = vcmp.eq.s32.totalorder %v2938, 1
      %vm2971 = vcmp.eq.s32.totalorder %v2939, 1
      %vm2972 = vcmp.eq.s32.totalorder %v2940, 1
      %vm2973 = vcmp.eq.s32.totalorder %v2941, 1
      %vm2974 = vcmp.eq.s32.totalorder %v2942, 1
      %vm2975 = vcmp.eq.s32.totalorder %v2943, 1
      %vm2976 = vcmp.eq.s32.totalorder %v2944, 1
      %vm2977 = vcmp.eq.s32.totalorder %v2945, 1
      %vm2978 = vcmp.eq.s32.totalorder %v2946, 1
      %vm2979 = vcmp.eq.s32.totalorder %v2947, 1
      %vm2980 = vcmp.eq.s32.totalorder %v2948, 1
      %vm2981 = vcmp.eq.s32.totalorder %v2949, 1
      %vm2982 = vcmp.eq.s32.totalorder %v2950, 1
      %vm2983 = vcmp.eq.s32.totalorder %v2951, 1
      %vm2984 = vcmp.eq.s32.totalorder %v2952, 1
      %vm2985 = vcmp.eq.s32.totalorder %v2953, 1
      %vm2986 = vcmp.eq.s32.totalorder %v2954, 1
      %vm2987 = vcmp.eq.s32.totalorder %v2955, 1
      %vm2988 = vcmp.eq.s32.totalorder %v2956, 1
      %vm2989 = vcmp.eq.s32.totalorder %v2957, 1
      %vm2990 = vcmp.eq.s32.totalorder %v2958, 1
      %vm2991 = vcmp.eq.s32.totalorder %v2959, 1
      %v2992 = vsel %vm2960, %v2420, -1e+30
      %v2993 = vsel %vm2961, %v2421, -1e+30
      %v2994 = vsel %vm2962, %v2422, -1e+30
      %v2995 = vsel %vm2963, %v2423, -1e+30
      %v2996 = vsel %vm2964, %v2424, -1e+30
      %v2997 = vsel %vm2965, %v2425, -1e+30
      %v2998 = vsel %vm2966, %v2426, -1e+30
      %v2999 = vsel %vm2967, %v2427, -1e+30
      %v3000 = vsel %vm2968, %v2428, -1e+30
      %v3001 = vsel %vm2969, %v2429, -1e+30
      %v3002 = vsel %vm2970, %v2430, -1e+30
      %v3003 = vsel %vm2971, %v2431, -1e+30
      %v3004 = vsel %vm2972, %v2432, -1e+30
      %v3005 = vsel %vm2973, %v2433, -1e+30
      %v3006 = vsel %vm2974, %v2434, -1e+30
      %v3007 = vsel %vm2975, %v2435, -1e+30
      %v3008 = vsel %vm2976, %v2436, -1e+30
      %v3009 = vsel %vm2977, %v2437, -1e+30
      %v3010 = vsel %vm2978, %v2438, -1e+30
      %v3011 = vsel %vm2979, %v2439, -1e+30
      %v3012 = vsel %vm2980, %v2440, -1e+30
      %v3013 = vsel %vm2981, %v2441, -1e+30
      %v3014 = vsel %vm2982, %v2442, -1e+30
      %v3015 = vsel %vm2983, %v2443, -1e+30
      %v3016 = vsel %vm2984, %v2444, -1e+30
      %v3017 = vsel %vm2985, %v2445, -1e+30
      %v3018 = vsel %vm2986, %v2446, -1e+30
      %v3019 = vsel %vm2987, %v2447, -1e+30
      %v3020 = vsel %vm2988, %v2416, -1e+30
      %v3021 = vsel %vm2989, %v2417, -1e+30
      %v3022 = vsel %vm2990, %v2418, -1e+30
      %v3023 = vsel %vm2991, %v2419, -1e+30
      %v3024 = vmax.f32 %v2864, %v2992
      %v3025 = vmax.f32 %v2865, %v2993
      %v3026 = vmax.f32 %v2866, %v2994
      %v3027 = vmax.f32 %v2867, %v2995
      %v3028 = vmax.f32 %v2868, %v2996
      %v3029 = vmax.f32 %v2869, %v2997
      %v3030 = vmax.f32 %v2870, %v2998
      %v3031 = vmax.f32 %v2871, %v2999
      %v3032 = vmax.f32 %v2872, %v3000
      %v3033 = vmax.f32 %v2873, %v3001
      %v3034 = vmax.f32 %v2874, %v3002
      %v3035 = vmax.f32 %v2875, %v3003
      %v3036 = vmax.f32 %v2876, %v3004
      %v3037 = vmax.f32 %v2877, %v3005
      %v3038 = vmax.f32 %v2878, %v3006
      %v3039 = vmax.f32 %v2879, %v3007
      %v3040 = vmax.f32 %v2880, %v3008
      %v3041 = vmax.f32 %v2881, %v3009
      %v3042 = vmax.f32 %v2882, %v3010
      %v3043 = vmax.f32 %v2883, %v3011
      %v3044 = vmax.f32 %v2884, %v3012
      %v3045 = vmax.f32 %v2885, %v3013
      %v3046 = vmax.f32 %v2886, %v3014
      %v3047 = vmax.f32 %v2887, %v3015
      %v3048 = vmax.f32 %v2888, %v3016
      %v3049 = vmax.f32 %v2889, %v3017
      %v3050 = vmax.f32 %v2890, %v3018
      %v3051 = vmax.f32 %v2891, %v3019
      %v3052 = vmax.f32 %v2892, %v3020
      %v3053 = vmax.f32 %v2893, %v3021
      %v3054 = vmax.f32 %v2894, %v3022
      %v3055 = vmax.f32 %v2895, %v3023
      %v3056 = vmax.f32 %v2736, %v3024
      %v3057 = vmax.f32 %v2737, %v3025
      %v3058 = vmax.f32 %v2738, %v3026
      %v3059 = vmax.f32 %v2739, %v3027
      %v3060 = vmax.f32 %v2740, %v3028
      %v3061 = vmax.f32 %v2741, %v3029
      %v3062 = vmax.f32 %v2742, %v3030
      %v3063 = vmax.f32 %v2743, %v3031
      %v3064 = vmax.f32 %v2744, %v3032
      %v3065 = vmax.f32 %v2745, %v3033
      %v3066 = vmax.f32 %v2746, %v3034
      %v3067 = vmax.f32 %v2747, %v3035
      %v3068 = vmax.f32 %v2748, %v3036
      %v3069 = vmax.f32 %v2749, %v3037
      %v3070 = vmax.f32 %v2750, %v3038
      %v3071 = vmax.f32 %v2751, %v3039
      %v3072 = vmax.f32 %v2752, %v3040
      %v3073 = vmax.f32 %v2753, %v3041
      %v3074 = vmax.f32 %v2754, %v3042
      %v3075 = vmax.f32 %v2755, %v3043
      %v3076 = vmax.f32 %v2756, %v3044
      %v3077 = vmax.f32 %v2757, %v3045
      %v3078 = vmax.f32 %v2758, %v3046
      %v3079 = vmax.f32 %v2759, %v3047
      %v3080 = vmax.f32 %v2760, %v3048
      %v3081 = vmax.f32 %v2761, %v3049
      %v3082 = vmax.f32 %v2762, %v3050
      %v3083 = vmax.f32 %v2763, %v3051
      %v3084 = vmax.f32 %v2764, %v3052
      %v3085 = vmax.f32 %v2765, %v3053
      %v3086 = vmax.f32 %v2766, %v3054
      %v3087 = vmax.f32 %v2767, %v3055
      %v3089 = vrot.slane %v3087, 7
      %v3122 = vrot.slane %v3056, 7
      %v3123 = vrot.slane %v3057, 7
      %v3124 = vsel %vm1067, %v3122, %v3123
      %v3125 = vrot.slane %v3058, 7
      %v3126 = vsel %vm1067, %v3123, %v3125
      %v3127 = vrot.slane %v3059, 7
      %v3128 = vsel %vm1067, %v3125, %v3127
      %v3129 = vrot.slane %v3060, 7
      %v3130 = vsel %vm1067, %v3127, %v3129
      %v3131 = vrot.slane %v3061, 7
      %v3132 = vsel %vm1067, %v3129, %v3131
      %v3133 = vrot.slane %v3062, 7
      %v3134 = vsel %vm1067, %v3131, %v3133
      %v3135 = vrot.slane %v3063, 7
      %v3136 = vsel %vm1067, %v3133, %v3135
      %v3137 = vrot.slane %v3064, 7
      %v3138 = vsel %vm1067, %v3135, %v3137
      %v3139 = vrot.slane %v3065, 7
      %v3140 = vsel %vm1067, %v3137, %v3139
      %v3141 = vrot.slane %v3066, 7
      %v3142 = vsel %vm1067, %v3139, %v3141
      %v3143 = vrot.slane %v3067, 7
      %v3144 = vsel %vm1067, %v3141, %v3143
      %v3145 = vrot.slane %v3068, 7
      %v3146 = vsel %vm1067, %v3143, %v3145
      %v3147 = vrot.slane %v3069, 7
      %v3148 = vsel %vm1067, %v3145, %v3147
      %v3149 = vrot.slane %v3070, 7
      %v3150 = vsel %vm1067, %v3147, %v3149
      %v3151 = vrot.slane %v3071, 7
      %v3152 = vsel %vm1067, %v3149, %v3151
      %v3153 = vrot.slane %v3072, 7
      %v3154 = vsel %vm1067, %v3151, %v3153
      %v3155 = vrot.slane %v3073, 7
      %v3156 = vsel %vm1067, %v3153, %v3155
      %v3157 = vrot.slane %v3074, 7
      %v3158 = vsel %vm1067, %v3155, %v3157
      %v3159 = vrot.slane %v3075, 7
      %v3160 = vsel %vm1067, %v3157, %v3159
      %v3161 = vrot.slane %v3076, 7
      %v3162 = vsel %vm1067, %v3159, %v3161
      %v3163 = vrot.slane %v3077, 7
      %v3164 = vsel %vm1067, %v3161, %v3163
      %v3165 = vrot.slane %v3078, 7
      %v3166 = vsel %vm1067, %v3163, %v3165
      %v3167 = vrot.slane %v3079, 7
      %v3168 = vsel %vm1067, %v3165, %v3167
      %v3169 = vrot.slane %v3080, 7
      %v3170 = vsel %vm1067, %v3167, %v3169
      %v3171 = vrot.slane %v3081, 7
      %v3172 = vsel %vm1067, %v3169, %v3171
      %v3173 = vrot.slane %v3082, 7
      %v3174 = vsel %vm1067, %v3171, %v3173
      %v3175 = vrot.slane %v3083, 7
      %v3176 = vsel %vm1067, %v3173, %v3175
      %v3177 = vrot.slane %v3084, 7
      %v3178 = vsel %vm1067, %v3175, %v3177
      %v3179 = vrot.slane %v3085, 7
      %v3180 = vsel %vm1067, %v3177, %v3179
      %v3181 = vrot.slane %v3086, 7
      %v3182 = vsel %vm1067, %v3179, %v3181
      %v3183 = vsel %vm1067, %v3181, %v3089
      %v3216 = vsel %vm1067, %v3089, %v3122
      %v3217 = vsel %vm1291, %v3216, -1e+30
      %v3218 = vsel %vm1292, %v3124, -1e+30
      %v3219 = vsel %vm1293, %v3126, -1e+30
      %v3220 = vsel %vm1294, %v3128, -1e+30
      %v3221 = vsel %vm1295, %v3130, -1e+30
      %v3222 = vsel %vm1296, %v3132, -1e+30
      %v3223 = vsel %vm1297, %v3134, -1e+30
      %v3224 = vsel %vm1298, %v3136, -1e+30
      %v3225 = vsel %vm1299, %v3138, -1e+30
      %v3226 = vsel %vm1300, %v3140, -1e+30
      %v3227 = vsel %vm1301, %v3142, -1e+30
      %v3228 = vsel %vm1302, %v3144, -1e+30
      %v3229 = vsel %vm1303, %v3146, -1e+30
      %v3230 = vsel %vm1304, %v3148, -1e+30
      %v3231 = vsel %vm1305, %v3150, -1e+30
      %v3232 = vsel %vm1306, %v3152, -1e+30
      %v3233 = vsel %vm1307, %v3154, -1e+30
      %v3234 = vsel %vm1308, %v3156, -1e+30
      %v3235 = vsel %vm1309, %v3158, -1e+30
      %v3236 = vsel %vm1310, %v3160, -1e+30
      %v3237 = vsel %vm1311, %v3162, -1e+30
      %v3238 = vsel %vm1312, %v3164, -1e+30
      %v3239 = vsel %vm1313, %v3166, -1e+30
      %v3240 = vsel %vm1314, %v3168, -1e+30
      %v3241 = vsel %vm1315, %v3170, -1e+30
      %v3242 = vsel %vm1316, %v3172, -1e+30
      %v3243 = vsel %vm1317, %v3174, -1e+30
      %v3244 = vsel %vm1318, %v3176, -1e+30
      %v3245 = vsel %vm1319, %v3178, -1e+30
      %v3246 = vsel %vm1320, %v3180, -1e+30
      %v3247 = vsel %vm1321, %v3182, -1e+30
      %v3248 = vsel %vm1322, %v3183, -1e+30
      %v3249 = vrot.slane %v3056, 1
      %v3250 = vrot.slane %v3057, 1
      %v3251 = vsel %vm1387, %v3249, %v3250
      %v3252 = vrot.slane %v3058, 1
      %v3253 = vsel %vm1387, %v3250, %v3252
      %v3254 = vrot.slane %v3059, 1
      %v3255 = vsel %vm1387, %v3252, %v3254
      %v3256 = vrot.slane %v3060, 1
      %v3257 = vsel %vm1387, %v3254, %v3256
      %v3258 = vrot.slane %v3061, 1
      %v3259 = vsel %vm1387, %v3256, %v3258
      %v3260 = vrot.slane %v3062, 1
      %v3261 = vsel %vm1387, %v3258, %v3260
      %v3262 = vrot.slane %v3063, 1
      %v3263 = vsel %vm1387, %v3260, %v3262
      %v3264 = vrot.slane %v3064, 1
      %v3265 = vsel %vm1387, %v3262, %v3264
      %v3266 = vrot.slane %v3065, 1
      %v3267 = vsel %vm1387, %v3264, %v3266
      %v3268 = vrot.slane %v3066, 1
      %v3269 = vsel %vm1387, %v3266, %v3268
      %v3270 = vrot.slane %v3067, 1
      %v3271 = vsel %vm1387, %v3268, %v3270
      %v3272 = vrot.slane %v3068, 1
      %v3273 = vsel %vm1387, %v3270, %v3272
      %v3274 = vrot.slane %v3069, 1
      %v3275 = vsel %vm1387, %v3272, %v3274
      %v3276 = vrot.slane %v3070, 1
      %v3277 = vsel %vm1387, %v3274, %v3276
      %v3278 = vrot.slane %v3071, 1
      %v3279 = vsel %vm1387, %v3276, %v3278
      %v3280 = vrot.slane %v3072, 1
      %v3281 = vsel %vm1387, %v3278, %v3280
      %v3282 = vrot.slane %v3073, 1
      %v3283 = vsel %vm1387, %v3280, %v3282
      %v3284 = vrot.slane %v3074, 1
      %v3285 = vsel %vm1387, %v3282, %v3284
      %v3286 = vrot.slane %v3075, 1
      %v3287 = vsel %vm1387, %v3284, %v3286
      %v3288 = vrot.slane %v3076, 1
      %v3289 = vsel %vm1387, %v3286, %v3288
      %v3290 = vrot.slane %v3077, 1
      %v3291 = vsel %vm1387, %v3288, %v3290
      %v3292 = vrot.slane %v3078, 1
      %v3293 = vsel %vm1387, %v3290, %v3292
      %v3294 = vrot.slane %v3079, 1
      %v3295 = vsel %vm1387, %v3292, %v3294
      %v3296 = vrot.slane %v3080, 1
      %v3297 = vsel %vm1387, %v3294, %v3296
      %v3298 = vrot.slane %v3081, 1
      %v3299 = vsel %vm1387, %v3296, %v3298
      %v3300 = vrot.slane %v3082, 1
      %v3301 = vsel %vm1387, %v3298, %v3300
      %v3302 = vrot.slane %v3083, 1
      %v3303 = vsel %vm1387, %v3300, %v3302
      %v3304 = vrot.slane %v3084, 1
      %v3305 = vsel %vm1387, %v3302, %v3304
      %v3306 = vrot.slane %v3085, 1
      %v3307 = vsel %vm1387, %v3304, %v3306
      %v3308 = vrot.slane %v3086, 1
      %v3309 = vsel %vm1387, %v3306, %v3308
      %v3310 = vrot.slane %v3087, 1
      %v3311 = vsel %vm1387, %v3308, %v3310
      %v3345 = vsel %vm1387, %v3310, %v3249
      %v3346 = vsel %vm1613, %v3251, -1e+30
      %v3347 = vsel %vm1614, %v3253, -1e+30
      %v3348 = vsel %vm1615, %v3255, -1e+30
      %v3349 = vsel %vm1616, %v3257, -1e+30
      %v3350 = vsel %vm1617, %v3259, -1e+30
      %v3351 = vsel %vm1618, %v3261, -1e+30
      %v3352 = vsel %vm1619, %v3263, -1e+30
      %v3353 = vsel %vm1620, %v3265, -1e+30
      %v3354 = vsel %vm1621, %v3267, -1e+30
      %v3355 = vsel %vm1622, %v3269, -1e+30
      %v3356 = vsel %vm1623, %v3271, -1e+30
      %v3357 = vsel %vm1624, %v3273, -1e+30
      %v3358 = vsel %vm1625, %v3275, -1e+30
      %v3359 = vsel %vm1626, %v3277, -1e+30
      %v3360 = vsel %vm1627, %v3279, -1e+30
      %v3361 = vsel %vm1628, %v3281, -1e+30
      %v3362 = vsel %vm1629, %v3283, -1e+30
      %v3363 = vsel %vm1630, %v3285, -1e+30
      %v3364 = vsel %vm1631, %v3287, -1e+30
      %v3365 = vsel %vm1632, %v3289, -1e+30
      %v3366 = vsel %vm1633, %v3291, -1e+30
      %v3367 = vsel %vm1634, %v3293, -1e+30
      %v3368 = vsel %vm1635, %v3295, -1e+30
      %v3369 = vsel %vm1636, %v3297, -1e+30
      %v3370 = vsel %vm1637, %v3299, -1e+30
      %v3371 = vsel %vm1638, %v3301, -1e+30
      %v3372 = vsel %vm1639, %v3303, -1e+30
      %v3373 = vsel %vm1640, %v3305, -1e+30
      %v3374 = vsel %vm1641, %v3307, -1e+30
      %v3375 = vsel %vm1642, %v3309, -1e+30
      %v3376 = vsel %vm1643, %v3311, -1e+30
      %v3377 = vsel %vm1644, %v3345, -1e+30
      %v3378 = vmax.f32 %v3217, %v3346
      %v3379 = vmax.f32 %v3218, %v3347
      %v3380 = vmax.f32 %v3219, %v3348
      %v3381 = vmax.f32 %v3220, %v3349
      %v3382 = vmax.f32 %v3221, %v3350
      %v3383 = vmax.f32 %v3222, %v3351
      %v3384 = vmax.f32 %v3223, %v3352
      %v3385 = vmax.f32 %v3224, %v3353
      %v3386 = vmax.f32 %v3225, %v3354
      %v3387 = vmax.f32 %v3226, %v3355
      %v3388 = vmax.f32 %v3227, %v3356
      %v3389 = vmax.f32 %v3228, %v3357
      %v3390 = vmax.f32 %v3229, %v3358
      %v3391 = vmax.f32 %v3230, %v3359
      %v3392 = vmax.f32 %v3231, %v3360
      %v3393 = vmax.f32 %v3232, %v3361
      %v3394 = vmax.f32 %v3233, %v3362
      %v3395 = vmax.f32 %v3234, %v3363
      %v3396 = vmax.f32 %v3235, %v3364
      %v3397 = vmax.f32 %v3236, %v3365
      %v3398 = vmax.f32 %v3237, %v3366
      %v3399 = vmax.f32 %v3238, %v3367
      %v3400 = vmax.f32 %v3239, %v3368
      %v3401 = vmax.f32 %v3240, %v3369
      %v3402 = vmax.f32 %v3241, %v3370
      %v3403 = vmax.f32 %v3242, %v3371
      %v3404 = vmax.f32 %v3243, %v3372
      %v3405 = vmax.f32 %v3244, %v3373
      %v3406 = vmax.f32 %v3245, %v3374
      %v3407 = vmax.f32 %v3246, %v3375
      %v3408 = vmax.f32 %v3247, %v3376
      %v3409 = vmax.f32 %v3248, %v3377
      %v3410 = vmax.f32 %v3056, %v3378
      %v3411 = vmax.f32 %v3057, %v3379
      %v3412 = vmax.f32 %v3058, %v3380
      %v3413 = vmax.f32 %v3059, %v3381
      %v3414 = vmax.f32 %v3060, %v3382
      %v3415 = vmax.f32 %v3061, %v3383
      %v3416 = vmax.f32 %v3062, %v3384
      %v3417 = vmax.f32 %v3063, %v3385
      %v3418 = vmax.f32 %v3064, %v3386
      %v3419 = vmax.f32 %v3065, %v3387
      %v3420 = vmax.f32 %v3066, %v3388
      %v3421 = vmax.f32 %v3067, %v3389
      %v3422 = vmax.f32 %v3068, %v3390
      %v3423 = vmax.f32 %v3069, %v3391
      %v3424 = vmax.f32 %v3070, %v3392
      %v3425 = vmax.f32 %v3071, %v3393
      %v3426 = vmax.f32 %v3072, %v3394
      %v3427 = vmax.f32 %v3073, %v3395
      %v3428 = vmax.f32 %v3074, %v3396
      %v3429 = vmax.f32 %v3075, %v3397
      %v3430 = vmax.f32 %v3076, %v3398
      %v3431 = vmax.f32 %v3077, %v3399
      %v3432 = vmax.f32 %v3078, %v3400
      %v3433 = vmax.f32 %v3079, %v3401
      %v3434 = vmax.f32 %v3080, %v3402
      %v3435 = vmax.f32 %v3081, %v3403
      %v3436 = vmax.f32 %v3082, %v3404
      %v3437 = vmax.f32 %v3083, %v3405
      %v3438 = vmax.f32 %v3084, %v3406
      %v3439 = vmax.f32 %v3085, %v3407
      %v3440 = vmax.f32 %v3086, %v3408
      %v3441 = vmax.f32 %v3087, %v3409
      %v3442 = vrot.slane %v3087, 6
      %v3444 = vrot.slane %v3056, 6
      %v3445 = vrot.slane %v3057, 6
      %v3446 = vsel %vm536, %v3444, %v3445
      %v3447 = vrot.slane %v3058, 6
      %v3448 = vsel %vm536, %v3445, %v3447
      %v3449 = vrot.slane %v3059, 6
      %v3450 = vsel %vm536, %v3447, %v3449
      %v3451 = vrot.slane %v3060, 6
      %v3452 = vsel %vm536, %v3449, %v3451
      %v3453 = vrot.slane %v3061, 6
      %v3454 = vsel %vm536, %v3451, %v3453
      %v3455 = vrot.slane %v3062, 6
      %v3456 = vsel %vm536, %v3453, %v3455
      %v3457 = vrot.slane %v3063, 6
      %v3458 = vsel %vm536, %v3455, %v3457
      %v3459 = vrot.slane %v3064, 6
      %v3460 = vsel %vm536, %v3457, %v3459
      %v3461 = vrot.slane %v3065, 6
      %v3462 = vsel %vm536, %v3459, %v3461
      %v3463 = vrot.slane %v3066, 6
      %v3464 = vsel %vm536, %v3461, %v3463
      %v3465 = vrot.slane %v3067, 6
      %v3466 = vsel %vm536, %v3463, %v3465
      %v3467 = vrot.slane %v3068, 6
      %v3468 = vsel %vm536, %v3465, %v3467
      %v3469 = vrot.slane %v3069, 6
      %v3470 = vsel %vm536, %v3467, %v3469
      %v3471 = vrot.slane %v3070, 6
      %v3472 = vsel %vm536, %v3469, %v3471
      %v3473 = vrot.slane %v3071, 6
      %v3474 = vsel %vm536, %v3471, %v3473
      %v3475 = vrot.slane %v3072, 6
      %v3476 = vsel %vm536, %v3473, %v3475
      %v3477 = vrot.slane %v3073, 6
      %v3478 = vsel %vm536, %v3475, %v3477
      %v3479 = vrot.slane %v3074, 6
      %v3480 = vsel %vm536, %v3477, %v3479
      %v3481 = vrot.slane %v3075, 6
      %v3482 = vsel %vm536, %v3479, %v3481
      %v3483 = vrot.slane %v3076, 6
      %v3484 = vsel %vm536, %v3481, %v3483
      %v3485 = vrot.slane %v3077, 6
      %v3486 = vsel %vm536, %v3483, %v3485
      %v3487 = vrot.slane %v3078, 6
      %v3488 = vsel %vm536, %v3485, %v3487
      %v3489 = vrot.slane %v3079, 6
      %v3490 = vsel %vm536, %v3487, %v3489
      %v3491 = vrot.slane %v3080, 6
      %v3492 = vsel %vm536, %v3489, %v3491
      %v3493 = vrot.slane %v3081, 6
      %v3494 = vsel %vm536, %v3491, %v3493
      %v3495 = vrot.slane %v3082, 6
      %v3496 = vsel %vm536, %v3493, %v3495
      %v3497 = vrot.slane %v3083, 6
      %v3498 = vsel %vm536, %v3495, %v3497
      %v3499 = vrot.slane %v3084, 6
      %v3500 = vsel %vm536, %v3497, %v3499
      %v3501 = vrot.slane %v3085, 6
      %v3502 = vsel %vm536, %v3499, %v3501
      %v3503 = vrot.slane %v3086, 6
      %v3504 = vsel %vm536, %v3501, %v3503
      %v3505 = vsel %vm536, %v3503, %v3442
      %v3538 = vsel %vm536, %v3442, %v3444
      %v3539 = vsel %vm1998, %v3538, -1e+30
      %v3540 = vsel %vm1999, %v3446, -1e+30
      %v3541 = vsel %vm2000, %v3448, -1e+30
      %v3542 = vsel %vm2001, %v3450, -1e+30
      %v3543 = vsel %vm2002, %v3452, -1e+30
      %v3544 = vsel %vm2003, %v3454, -1e+30
      %v3545 = vsel %vm2004, %v3456, -1e+30
      %v3546 = vsel %vm2005, %v3458, -1e+30
      %v3547 = vsel %vm2006, %v3460, -1e+30
      %v3548 = vsel %vm2007, %v3462, -1e+30
      %v3549 = vsel %vm2008, %v3464, -1e+30
      %v3550 = vsel %vm2009, %v3466, -1e+30
      %v3551 = vsel %vm2010, %v3468, -1e+30
      %v3552 = vsel %vm2011, %v3470, -1e+30
      %v3553 = vsel %vm2012, %v3472, -1e+30
      %v3554 = vsel %vm2013, %v3474, -1e+30
      %v3555 = vsel %vm2014, %v3476, -1e+30
      %v3556 = vsel %vm2015, %v3478, -1e+30
      %v3557 = vsel %vm2016, %v3480, -1e+30
      %v3558 = vsel %vm2017, %v3482, -1e+30
      %v3559 = vsel %vm2018, %v3484, -1e+30
      %v3560 = vsel %vm2019, %v3486, -1e+30
      %v3561 = vsel %vm2020, %v3488, -1e+30
      %v3562 = vsel %vm2021, %v3490, -1e+30
      %v3563 = vsel %vm2022, %v3492, -1e+30
      %v3564 = vsel %vm2023, %v3494, -1e+30
      %v3565 = vsel %vm2024, %v3496, -1e+30
      %v3566 = vsel %vm2025, %v3498, -1e+30
      %v3567 = vsel %vm2026, %v3500, -1e+30
      %v3568 = vsel %vm2027, %v3502, -1e+30
      %v3569 = vsel %vm2028, %v3504, -1e+30
      %v3570 = vsel %vm2029, %v3505, -1e+30
      %v3571 = vrot.slane %v3056, 2
      %v3572 = vrot.slane %v3057, 2
      %v3573 = vsel %vm2094, %v3571, %v3572
      %v3574 = vrot.slane %v3058, 2
      %v3575 = vsel %vm2094, %v3572, %v3574
      %v3576 = vrot.slane %v3059, 2
      %v3577 = vsel %vm2094, %v3574, %v3576
      %v3578 = vrot.slane %v3060, 2
      %v3579 = vsel %vm2094, %v3576, %v3578
      %v3580 = vrot.slane %v3061, 2
      %v3581 = vsel %vm2094, %v3578, %v3580
      %v3582 = vrot.slane %v3062, 2
      %v3583 = vsel %vm2094, %v3580, %v3582
      %v3584 = vrot.slane %v3063, 2
      %v3585 = vsel %vm2094, %v3582, %v3584
      %v3586 = vrot.slane %v3064, 2
      %v3587 = vsel %vm2094, %v3584, %v3586
      %v3588 = vrot.slane %v3065, 2
      %v3589 = vsel %vm2094, %v3586, %v3588
      %v3590 = vrot.slane %v3066, 2
      %v3591 = vsel %vm2094, %v3588, %v3590
      %v3592 = vrot.slane %v3067, 2
      %v3593 = vsel %vm2094, %v3590, %v3592
      %v3594 = vrot.slane %v3068, 2
      %v3595 = vsel %vm2094, %v3592, %v3594
      %v3596 = vrot.slane %v3069, 2
      %v3597 = vsel %vm2094, %v3594, %v3596
      %v3598 = vrot.slane %v3070, 2
      %v3599 = vsel %vm2094, %v3596, %v3598
      %v3600 = vrot.slane %v3071, 2
      %v3601 = vsel %vm2094, %v3598, %v3600
      %v3602 = vrot.slane %v3072, 2
      %v3603 = vsel %vm2094, %v3600, %v3602
      %v3604 = vrot.slane %v3073, 2
      %v3605 = vsel %vm2094, %v3602, %v3604
      %v3606 = vrot.slane %v3074, 2
      %v3607 = vsel %vm2094, %v3604, %v3606
      %v3608 = vrot.slane %v3075, 2
      %v3609 = vsel %vm2094, %v3606, %v3608
      %v3610 = vrot.slane %v3076, 2
      %v3611 = vsel %vm2094, %v3608, %v3610
      %v3612 = vrot.slane %v3077, 2
      %v3613 = vsel %vm2094, %v3610, %v3612
      %v3614 = vrot.slane %v3078, 2
      %v3615 = vsel %vm2094, %v3612, %v3614
      %v3616 = vrot.slane %v3079, 2
      %v3617 = vsel %vm2094, %v3614, %v3616
      %v3618 = vrot.slane %v3080, 2
      %v3619 = vsel %vm2094, %v3616, %v3618
      %v3620 = vrot.slane %v3081, 2
      %v3621 = vsel %vm2094, %v3618, %v3620
      %v3622 = vrot.slane %v3082, 2
      %v3623 = vsel %vm2094, %v3620, %v3622
      %v3624 = vrot.slane %v3083, 2
      %v3625 = vsel %vm2094, %v3622, %v3624
      %v3626 = vrot.slane %v3084, 2
      %v3627 = vsel %vm2094, %v3624, %v3626
      %v3628 = vrot.slane %v3085, 2
      %v3629 = vsel %vm2094, %v3626, %v3628
      %v3630 = vrot.slane %v3086, 2
      %v3631 = vsel %vm2094, %v3628, %v3630
      %v3632 = vrot.slane %v3087, 2
      %v3633 = vsel %vm2094, %v3630, %v3632
      %v3667 = vsel %vm2094, %v3632, %v3571
      %v3668 = vsel %vm2320, %v3573, -1e+30
      %v3669 = vsel %vm2321, %v3575, -1e+30
      %v3670 = vsel %vm2322, %v3577, -1e+30
      %v3671 = vsel %vm2323, %v3579, -1e+30
      %v3672 = vsel %vm2324, %v3581, -1e+30
      %v3673 = vsel %vm2325, %v3583, -1e+30
      %v3674 = vsel %vm2326, %v3585, -1e+30
      %v3675 = vsel %vm2327, %v3587, -1e+30
      %v3676 = vsel %vm2328, %v3589, -1e+30
      %v3677 = vsel %vm2329, %v3591, -1e+30
      %v3678 = vsel %vm2330, %v3593, -1e+30
      %v3679 = vsel %vm2331, %v3595, -1e+30
      %v3680 = vsel %vm2332, %v3597, -1e+30
      %v3681 = vsel %vm2333, %v3599, -1e+30
      %v3682 = vsel %vm2334, %v3601, -1e+30
      %v3683 = vsel %vm2335, %v3603, -1e+30
      %v3684 = vsel %vm2336, %v3605, -1e+30
      %v3685 = vsel %vm2337, %v3607, -1e+30
      %v3686 = vsel %vm2338, %v3609, -1e+30
      %v3687 = vsel %vm2339, %v3611, -1e+30
      %v3688 = vsel %vm2340, %v3613, -1e+30
      %v3689 = vsel %vm2341, %v3615, -1e+30
      %v3690 = vsel %vm2342, %v3617, -1e+30
      %v3691 = vsel %vm2343, %v3619, -1e+30
      %v3692 = vsel %vm2344, %v3621, -1e+30
      %v3693 = vsel %vm2345, %v3623, -1e+30
      %v3694 = vsel %vm2346, %v3625, -1e+30
      %v3695 = vsel %vm2347, %v3627, -1e+30
      %v3696 = vsel %vm2348, %v3629, -1e+30
      %v3697 = vsel %vm2349, %v3631, -1e+30
      %v3698 = vsel %vm2350, %v3633, -1e+30
      %v3699 = vsel %vm2351, %v3667, -1e+30
      %v3700 = vmax.f32 %v3539, %v3668
      %v3701 = vmax.f32 %v3540, %v3669
      %v3702 = vmax.f32 %v3541, %v3670
      %v3703 = vmax.f32 %v3542, %v3671
      %v3704 = vmax.f32 %v3543, %v3672
      %v3705 = vmax.f32 %v3544, %v3673
      %v3706 = vmax.f32 %v3545, %v3674
      %v3707 = vmax.f32 %v3546, %v3675
      %v3708 = vmax.f32 %v3547, %v3676
      %v3709 = vmax.f32 %v3548, %v3677
      %v3710 = vmax.f32 %v3549, %v3678
      %v3711 = vmax.f32 %v3550, %v3679
      %v3712 = vmax.f32 %v3551, %v3680
      %v3713 = vmax.f32 %v3552, %v3681
      %v3714 = vmax.f32 %v3553, %v3682
      %v3715 = vmax.f32 %v3554, %v3683
      %v3716 = vmax.f32 %v3555, %v3684
      %v3717 = vmax.f32 %v3556, %v3685
      %v3718 = vmax.f32 %v3557, %v3686
      %v3719 = vmax.f32 %v3558, %v3687
      %v3720 = vmax.f32 %v3559, %v3688
      %v3721 = vmax.f32 %v3560, %v3689
      %v3722 = vmax.f32 %v3561, %v3690
      %v3723 = vmax.f32 %v3562, %v3691
      %v3724 = vmax.f32 %v3563, %v3692
      %v3725 = vmax.f32 %v3564, %v3693
      %v3726 = vmax.f32 %v3565, %v3694
      %v3727 = vmax.f32 %v3566, %v3695
      %v3728 = vmax.f32 %v3567, %v3696
      %v3729 = vmax.f32 %v3568, %v3697
      %v3730 = vmax.f32 %v3569, %v3698
      %v3731 = vmax.f32 %v3570, %v3699
      %v3732 = vmax.f32 %v3410, %v3700
      %v3733 = vmax.f32 %v3411, %v3701
      %v3734 = vmax.f32 %v3412, %v3702
      %v3735 = vmax.f32 %v3413, %v3703
      %v3736 = vmax.f32 %v3414, %v3704
      %v3737 = vmax.f32 %v3415, %v3705
      %v3738 = vmax.f32 %v3416, %v3706
      %v3739 = vmax.f32 %v3417, %v3707
      %v3740 = vmax.f32 %v3418, %v3708
      %v3741 = vmax.f32 %v3419, %v3709
      %v3742 = vmax.f32 %v3420, %v3710
      %v3743 = vmax.f32 %v3421, %v3711
      %v3744 = vmax.f32 %v3422, %v3712
      %v3745 = vmax.f32 %v3423, %v3713
      %v3746 = vmax.f32 %v3424, %v3714
      %v3747 = vmax.f32 %v3425, %v3715
      %v3748 = vmax.f32 %v3426, %v3716
      %v3749 = vmax.f32 %v3427, %v3717
      %v3750 = vmax.f32 %v3428, %v3718
      %v3751 = vmax.f32 %v3429, %v3719
      %v3752 = vmax.f32 %v3430, %v3720
      %v3753 = vmax.f32 %v3431, %v3721
      %v3754 = vmax.f32 %v3432, %v3722
      %v3755 = vmax.f32 %v3433, %v3723
      %v3756 = vmax.f32 %v3434, %v3724
      %v3757 = vmax.f32 %v3435, %v3725
      %v3758 = vmax.f32 %v3436, %v3726
      %v3759 = vmax.f32 %v3437, %v3727
      %v3760 = vmax.f32 %v3438, %v3728
      %v3761 = vmax.f32 %v3439, %v3729
      %v3762 = vmax.f32 %v3440, %v3730
      %v3763 = vmax.f32 %v3441, %v3731
      %v3764 = vsel %vm2512, %v3762, -1e+30
      %v3765 = vsel %vm2513, %v3763, -1e+30
      %v3766 = vsel %vm2514, %v3732, -1e+30
      %v3767 = vsel %vm2515, %v3733, -1e+30
      %v3768 = vsel %vm2516, %v3734, -1e+30
      %v3769 = vsel %vm2517, %v3735, -1e+30
      %v3770 = vsel %vm2518, %v3736, -1e+30
      %v3771 = vsel %vm2519, %v3737, -1e+30
      %v3772 = vsel %vm2520, %v3738, -1e+30
      %v3773 = vsel %vm2521, %v3739, -1e+30
      %v3774 = vsel %vm2522, %v3740, -1e+30
      %v3775 = vsel %vm2523, %v3741, -1e+30
      %v3776 = vsel %vm2524, %v3742, -1e+30
      %v3777 = vsel %vm2525, %v3743, -1e+30
      %v3778 = vsel %vm2526, %v3744, -1e+30
      %v3779 = vsel %vm2527, %v3745, -1e+30
      %v3780 = vsel %vm2528, %v3746, -1e+30
      %v3781 = vsel %vm2529, %v3747, -1e+30
      %v3782 = vsel %vm2530, %v3748, -1e+30
      %v3783 = vsel %vm2531, %v3749, -1e+30
      %v3784 = vsel %vm2532, %v3750, -1e+30
      %v3785 = vsel %vm2533, %v3751, -1e+30
      %v3786 = vsel %vm2534, %v3752, -1e+30
      %v3787 = vsel %vm2535, %v3753, -1e+30
      %v3788 = vsel %vm2536, %v3754, -1e+30
      %v3789 = vsel %vm2537, %v3755, -1e+30
      %v3790 = vsel %vm2538, %v3756, -1e+30
      %v3791 = vsel %vm2539, %v3757, -1e+30
      %v3792 = vsel %vm2540, %v3758, -1e+30
      %v3793 = vsel %vm2541, %v3759, -1e+30
      %v3794 = vsel %vm2542, %v3760, -1e+30
      %v3795 = vsel %vm2543, %v3761, -1e+30
      %v3796 = vsel %vm2640, %v3734, -1e+30
      %v3797 = vsel %vm2641, %v3735, -1e+30
      %v3798 = vsel %vm2642, %v3736, -1e+30
      %v3799 = vsel %vm2643, %v3737, -1e+30
      %v3800 = vsel %vm2644, %v3738, -1e+30
      %v3801 = vsel %vm2645, %v3739, -1e+30
      %v3802 = vsel %vm2646, %v3740, -1e+30
      %v3803 = vsel %vm2647, %v3741, -1e+30
      %v3804 = vsel %vm2648, %v3742, -1e+30
      %v3805 = vsel %vm2649, %v3743, -1e+30
      %v3806 = vsel %vm2650, %v3744, -1e+30
      %v3807 = vsel %vm2651, %v3745, -1e+30
      %v3808 = vsel %vm2652, %v3746, -1e+30
      %v3809 = vsel %vm2653, %v3747, -1e+30
      %v3810 = vsel %vm2654, %v3748, -1e+30
      %v3811 = vsel %vm2655, %v3749, -1e+30
      %v3812 = vsel %vm2656, %v3750, -1e+30
      %v3813 = vsel %vm2657, %v3751, -1e+30
      %v3814 = vsel %vm2658, %v3752, -1e+30
      %v3815 = vsel %vm2659, %v3753, -1e+30
      %v3816 = vsel %vm2660, %v3754, -1e+30
      %v3817 = vsel %vm2661, %v3755, -1e+30
      %v3818 = vsel %vm2662, %v3756, -1e+30
      %v3819 = vsel %vm2663, %v3757, -1e+30
      %v3820 = vsel %vm2664, %v3758, -1e+30
      %v3821 = vsel %vm2665, %v3759, -1e+30
      %v3822 = vsel %vm2666, %v3760, -1e+30
      %v3823 = vsel %vm2667, %v3761, -1e+30
      %v3824 = vsel %vm2668, %v3762, -1e+30
      %v3825 = vsel %vm2669, %v3763, -1e+30
      %v3826 = vsel %vm2670, %v3732, -1e+30
      %v3827 = vsel %vm2671, %v3733, -1e+30
      %v3828 = vmax.f32 %v3764, %v3796
      %v3829 = vmax.f32 %v3765, %v3797
      %v3830 = vmax.f32 %v3766, %v3798
      %v3831 = vmax.f32 %v3767, %v3799
      %v3832 = vmax.f32 %v3768, %v3800
      %v3833 = vmax.f32 %v3769, %v3801
      %v3834 = vmax.f32 %v3770, %v3802
      %v3835 = vmax.f32 %v3771, %v3803
      %v3836 = vmax.f32 %v3772, %v3804
      %v3837 = vmax.f32 %v3773, %v3805
      %v3838 = vmax.f32 %v3774, %v3806
      %v3839 = vmax.f32 %v3775, %v3807
      %v3840 = vmax.f32 %v3776, %v3808
      %v3841 = vmax.f32 %v3777, %v3809
      %v3842 = vmax.f32 %v3778, %v3810
      %v3843 = vmax.f32 %v3779, %v3811
      %v3844 = vmax.f32 %v3780, %v3812
      %v3845 = vmax.f32 %v3781, %v3813
      %v3846 = vmax.f32 %v3782, %v3814
      %v3847 = vmax.f32 %v3783, %v3815
      %v3848 = vmax.f32 %v3784, %v3816
      %v3849 = vmax.f32 %v3785, %v3817
      %v3850 = vmax.f32 %v3786, %v3818
      %v3851 = vmax.f32 %v3787, %v3819
      %v3852 = vmax.f32 %v3788, %v3820
      %v3853 = vmax.f32 %v3789, %v3821
      %v3854 = vmax.f32 %v3790, %v3822
      %v3855 = vmax.f32 %v3791, %v3823
      %v3856 = vmax.f32 %v3792, %v3824
      %v3857 = vmax.f32 %v3793, %v3825
      %v3858 = vmax.f32 %v3794, %v3826
      %v3859 = vmax.f32 %v3795, %v3827
      %v3860 = vmax.f32 %v3732, %v3828
      %v3861 = vmax.f32 %v3733, %v3829
      %v3862 = vmax.f32 %v3734, %v3830
      %v3863 = vmax.f32 %v3735, %v3831
      %v3864 = vmax.f32 %v3736, %v3832
      %v3865 = vmax.f32 %v3737, %v3833
      %v3866 = vmax.f32 %v3738, %v3834
      %v3867 = vmax.f32 %v3739, %v3835
      %v3868 = vmax.f32 %v3740, %v3836
      %v3869 = vmax.f32 %v3741, %v3837
      %v3870 = vmax.f32 %v3742, %v3838
      %v3871 = vmax.f32 %v3743, %v3839
      %v3872 = vmax.f32 %v3744, %v3840
      %v3873 = vmax.f32 %v3745, %v3841
      %v3874 = vmax.f32 %v3746, %v3842
      %v3875 = vmax.f32 %v3747, %v3843
      %v3876 = vmax.f32 %v3748, %v3844
      %v3877 = vmax.f32 %v3749, %v3845
      %v3878 = vmax.f32 %v3750, %v3846
      %v3879 = vmax.f32 %v3751, %v3847
      %v3880 = vmax.f32 %v3752, %v3848
      %v3881 = vmax.f32 %v3753, %v3849
      %v3882 = vmax.f32 %v3754, %v3850
      %v3883 = vmax.f32 %v3755, %v3851
      %v3884 = vmax.f32 %v3756, %v3852
      %v3885 = vmax.f32 %v3757, %v3853
      %v3886 = vmax.f32 %v3758, %v3854
      %v3887 = vmax.f32 %v3759, %v3855
      %v3888 = vmax.f32 %v3760, %v3856
      %v3889 = vmax.f32 %v3761, %v3857
      %v3890 = vmax.f32 %v3762, %v3858
      %v3891 = vmax.f32 %v3763, %v3859
      %v3892 = vsel %vm2832, %v3760, -1e+30
      %v3893 = vsel %vm2833, %v3761, -1e+30
      %v3894 = vsel %vm2834, %v3762, -1e+30
      %v3895 = vsel %vm2835, %v3763, -1e+30
      %v3896 = vsel %vm2836, %v3732, -1e+30
      %v3897 = vsel %vm2837, %v3733, -1e+30
      %v3898 = vsel %vm2838, %v3734, -1e+30
      %v3899 = vsel %vm2839, %v3735, -1e+30
      %v3900 = vsel %vm2840, %v3736, -1e+30
      %v3901 = vsel %vm2841, %v3737, -1e+30
      %v3902 = vsel %vm2842, %v3738, -1e+30
      %v3903 = vsel %vm2843, %v3739, -1e+30
      %v3904 = vsel %vm2844, %v3740, -1e+30
      %v3905 = vsel %vm2845, %v3741, -1e+30
      %v3906 = vsel %vm2846, %v3742, -1e+30
      %v3907 = vsel %vm2847, %v3743, -1e+30
      %v3908 = vsel %vm2848, %v3744, -1e+30
      %v3909 = vsel %vm2849, %v3745, -1e+30
      %v3910 = vsel %vm2850, %v3746, -1e+30
      %v3911 = vsel %vm2851, %v3747, -1e+30
      %v3912 = vsel %vm2852, %v3748, -1e+30
      %v3913 = vsel %vm2853, %v3749, -1e+30
      %v3914 = vsel %vm2854, %v3750, -1e+30
      %v3915 = vsel %vm2855, %v3751, -1e+30
      %v3916 = vsel %vm2856, %v3752, -1e+30
      %v3917 = vsel %vm2857, %v3753, -1e+30
      %v3918 = vsel %vm2858, %v3754, -1e+30
      %v3919 = vsel %vm2859, %v3755, -1e+30
      %v3920 = vsel %vm2860, %v3756, -1e+30
      %v3921 = vsel %vm2861, %v3757, -1e+30
      %v3922 = vsel %vm2862, %v3758, -1e+30
      %v3923 = vsel %vm2863, %v3759, -1e+30
      %v3924 = vsel %vm2960, %v3736, -1e+30
      %v3925 = vsel %vm2961, %v3737, -1e+30
      %v3926 = vsel %vm2962, %v3738, -1e+30
      %v3927 = vsel %vm2963, %v3739, -1e+30
      %v3928 = vsel %vm2964, %v3740, -1e+30
      %v3929 = vsel %vm2965, %v3741, -1e+30
      %v3930 = vsel %vm2966, %v3742, -1e+30
      %v3931 = vsel %vm2967, %v3743, -1e+30
      %v3932 = vsel %vm2968, %v3744, -1e+30
      %v3933 = vsel %vm2969, %v3745, -1e+30
      %v3934 = vsel %vm2970, %v3746, -1e+30
      %v3935 = vsel %vm2971, %v3747, -1e+30
      %v3936 = vsel %vm2972, %v3748, -1e+30
      %v3937 = vsel %vm2973, %v3749, -1e+30
      %v3938 = vsel %vm2974, %v3750, -1e+30
      %v3939 = vsel %vm2975, %v3751, -1e+30
      %v3940 = vsel %vm2976, %v3752, -1e+30
      %v3941 = vsel %vm2977, %v3753, -1e+30
      %v3942 = vsel %vm2978, %v3754, -1e+30
      %v3943 = vsel %vm2979, %v3755, -1e+30
      %v3944 = vsel %vm2980, %v3756, -1e+30
      %v3945 = vsel %vm2981, %v3757, -1e+30
      %v3946 = vsel %vm2982, %v3758, -1e+30
      %v3947 = vsel %vm2983, %v3759, -1e+30
      %v3948 = vsel %vm2984, %v3760, -1e+30
      %v3949 = vsel %vm2985, %v3761, -1e+30
      %v3950 = vsel %vm2986, %v3762, -1e+30
      %v3951 = vsel %vm2987, %v3763, -1e+30
      %v3952 = vsel %vm2988, %v3732, -1e+30
      %v3953 = vsel %vm2989, %v3733, -1e+30
      %v3954 = vsel %vm2990, %v3734, -1e+30
      %v3955 = vsel %vm2991, %v3735, -1e+30
      %v3956 = vmax.f32 %v3892, %v3924
      %v3957 = vmax.f32 %v3893, %v3925
      %v3958 = vmax.f32 %v3894, %v3926
      %v3959 = vmax.f32 %v3895, %v3927
      %v3960 = vmax.f32 %v3896, %v3928
      %v3961 = vmax.f32 %v3897, %v3929
      %v3962 = vmax.f32 %v3898, %v3930
      %v3963 = vmax.f32 %v3899, %v3931
      %v3964 = vmax.f32 %v3900, %v3932
      %v3965 = vmax.f32 %v3901, %v3933
      %v3966 = vmax.f32 %v3902, %v3934
      %v3967 = vmax.f32 %v3903, %v3935
      %v3968 = vmax.f32 %v3904, %v3936
      %v3969 = vmax.f32 %v3905, %v3937
      %v3970 = vmax.f32 %v3906, %v3938
      %v3971 = vmax.f32 %v3907, %v3939
      %v3972 = vmax.f32 %v3908, %v3940
      %v3973 = vmax.f32 %v3909, %v3941
      %v3974 = vmax.f32 %v3910, %v3942
      %v3975 = vmax.f32 %v3911, %v3943
      %v3976 = vmax.f32 %v3912, %v3944
      %v3977 = vmax.f32 %v3913, %v3945
      %v3978 = vmax.f32 %v3914, %v3946
      %v3979 = vmax.f32 %v3915, %v3947
      %v3980 = vmax.f32 %v3916, %v3948
      %v3981 = vmax.f32 %v3917, %v3949
      %v3982 = vmax.f32 %v3918, %v3950
      %v3983 = vmax.f32 %v3919, %v3951
      %v3984 = vmax.f32 %v3920, %v3952
      %v3985 = vmax.f32 %v3921, %v3953
      %v3986 = vmax.f32 %v3922, %v3954
      %v3987 = vmax.f32 %v3923, %v3955
      %v3988 = vmax.f32 %v3860, %v3956
      %v3989 = vmax.f32 %v3861, %v3957
      %v3990 = vmax.f32 %v3862, %v3958
      %v3991 = vmax.f32 %v3863, %v3959
      %v3992 = vmax.f32 %v3864, %v3960
      %v3993 = vmax.f32 %v3865, %v3961
      %v3994 = vmax.f32 %v3866, %v3962
      %v3995 = vmax.f32 %v3867, %v3963
      %v3996 = vmax.f32 %v3868, %v3964
      %v3997 = vmax.f32 %v3869, %v3965
      %v3998 = vmax.f32 %v3870, %v3966
      %v3999 = vmax.f32 %v3871, %v3967
      %v4000 = vmax.f32 %v3872, %v3968
      %v4001 = vmax.f32 %v3873, %v3969
      %v4002 = vmax.f32 %v3874, %v3970
      %v4003 = vmax.f32 %v3875, %v3971
      %v4004 = vmax.f32 %v3876, %v3972
      %v4005 = vmax.f32 %v3877, %v3973
      %v4006 = vmax.f32 %v3878, %v3974
      %v4007 = vmax.f32 %v3879, %v3975
      %v4008 = vmax.f32 %v3880, %v3976
      %v4009 = vmax.f32 %v3881, %v3977
      %v4010 = vmax.f32 %v3882, %v3978
      %v4011 = vmax.f32 %v3883, %v3979
      %v4012 = vmax.f32 %v3884, %v3980
      %v4013 = vmax.f32 %v3885, %v3981
      %v4014 = vmax.f32 %v3886, %v3982
      %v4015 = vmax.f32 %v3887, %v3983
      %v4016 = vmax.f32 %v3888, %v3984
      %v4017 = vmax.f32 %v3889, %v3985
      %v4018 = vmax.f32 %v3890, %v3986
      %v4019 = vmax.f32 %v3891, %v3987
      %v4021 = vrot.slane %v4019, 7
      %v4054 = vrot.slane %v3988, 7
      %v4055 = vrot.slane %v3989, 7
      %v4056 = vsel %vm1067, %v4054, %v4055
      %v4057 = vrot.slane %v3990, 7
      %v4058 = vsel %vm1067, %v4055, %v4057
      %v4059 = vrot.slane %v3991, 7
      %v4060 = vsel %vm1067, %v4057, %v4059
      %v4061 = vrot.slane %v3992, 7
      %v4062 = vsel %vm1067, %v4059, %v4061
      %v4063 = vrot.slane %v3993, 7
      %v4064 = vsel %vm1067, %v4061, %v4063
      %v4065 = vrot.slane %v3994, 7
      %v4066 = vsel %vm1067, %v4063, %v4065
      %v4067 = vrot.slane %v3995, 7
      %v4068 = vsel %vm1067, %v4065, %v4067
      %v4069 = vrot.slane %v3996, 7
      %v4070 = vsel %vm1067, %v4067, %v4069
      %v4071 = vrot.slane %v3997, 7
      %v4072 = vsel %vm1067, %v4069, %v4071
      %v4073 = vrot.slane %v3998, 7
      %v4074 = vsel %vm1067, %v4071, %v4073
      %v4075 = vrot.slane %v3999, 7
      %v4076 = vsel %vm1067, %v4073, %v4075
      %v4077 = vrot.slane %v4000, 7
      %v4078 = vsel %vm1067, %v4075, %v4077
      %v4079 = vrot.slane %v4001, 7
      %v4080 = vsel %vm1067, %v4077, %v4079
      %v4081 = vrot.slane %v4002, 7
      %v4082 = vsel %vm1067, %v4079, %v4081
      %v4083 = vrot.slane %v4003, 7
      %v4084 = vsel %vm1067, %v4081, %v4083
      %v4085 = vrot.slane %v4004, 7
      %v4086 = vsel %vm1067, %v4083, %v4085
      %v4087 = vrot.slane %v4005, 7
      %v4088 = vsel %vm1067, %v4085, %v4087
      %v4089 = vrot.slane %v4006, 7
      %v4090 = vsel %vm1067, %v4087, %v4089
      %v4091 = vrot.slane %v4007, 7
      %v4092 = vsel %vm1067, %v4089, %v4091
      %v4093 = vrot.slane %v4008, 7
      %v4094 = vsel %vm1067, %v4091, %v4093
      %v4095 = vrot.slane %v4009, 7
      %v4096 = vsel %vm1067, %v4093, %v4095
      %v4097 = vrot.slane %v4010, 7
      %v4098 = vsel %vm1067, %v4095, %v4097
      %v4099 = vrot.slane %v4011, 7
      %v4100 = vsel %vm1067, %v4097, %v4099
      %v4101 = vrot.slane %v4012, 7
      %v4102 = vsel %vm1067, %v4099, %v4101
      %v4103 = vrot.slane %v4013, 7
      %v4104 = vsel %vm1067, %v4101, %v4103
      %v4105 = vrot.slane %v4014, 7
      %v4106 = vsel %vm1067, %v4103, %v4105
      %v4107 = vrot.slane %v4015, 7
      %v4108 = vsel %vm1067, %v4105, %v4107
      %v4109 = vrot.slane %v4016, 7
      %v4110 = vsel %vm1067, %v4107, %v4109
      %v4111 = vrot.slane %v4017, 7
      %v4112 = vsel %vm1067, %v4109, %v4111
      %v4113 = vrot.slane %v4018, 7
      %v4114 = vsel %vm1067, %v4111, %v4113
      %v4115 = vsel %vm1067, %v4113, %v4021
      %v4148 = vsel %vm1067, %v4021, %v4054
      %v4149 = vsel %vm1291, %v4148, -1e+30
      %v4150 = vsel %vm1292, %v4056, -1e+30
      %v4151 = vsel %vm1293, %v4058, -1e+30
      %v4152 = vsel %vm1294, %v4060, -1e+30
      %v4153 = vsel %vm1295, %v4062, -1e+30
      %v4154 = vsel %vm1296, %v4064, -1e+30
      %v4155 = vsel %vm1297, %v4066, -1e+30
      %v4156 = vsel %vm1298, %v4068, -1e+30
      %v4157 = vsel %vm1299, %v4070, -1e+30
      %v4158 = vsel %vm1300, %v4072, -1e+30
      %v4159 = vsel %vm1301, %v4074, -1e+30
      %v4160 = vsel %vm1302, %v4076, -1e+30
      %v4161 = vsel %vm1303, %v4078, -1e+30
      %v4162 = vsel %vm1304, %v4080, -1e+30
      %v4163 = vsel %vm1305, %v4082, -1e+30
      %v4164 = vsel %vm1306, %v4084, -1e+30
      %v4165 = vsel %vm1307, %v4086, -1e+30
      %v4166 = vsel %vm1308, %v4088, -1e+30
      %v4167 = vsel %vm1309, %v4090, -1e+30
      %v4168 = vsel %vm1310, %v4092, -1e+30
      %v4169 = vsel %vm1311, %v4094, -1e+30
      %v4170 = vsel %vm1312, %v4096, -1e+30
      %v4171 = vsel %vm1313, %v4098, -1e+30
      %v4172 = vsel %vm1314, %v4100, -1e+30
      %v4173 = vsel %vm1315, %v4102, -1e+30
      %v4174 = vsel %vm1316, %v4104, -1e+30
      %v4175 = vsel %vm1317, %v4106, -1e+30
      %v4176 = vsel %vm1318, %v4108, -1e+30
      %v4177 = vsel %vm1319, %v4110, -1e+30
      %v4178 = vsel %vm1320, %v4112, -1e+30
      %v4179 = vsel %vm1321, %v4114, -1e+30
      %v4180 = vsel %vm1322, %v4115, -1e+30
      %v4181 = vrot.slane %v3988, 1
      %v4182 = vrot.slane %v3989, 1
      %v4183 = vsel %vm1387, %v4181, %v4182
      %v4184 = vrot.slane %v3990, 1
      %v4185 = vsel %vm1387, %v4182, %v4184
      %v4186 = vrot.slane %v3991, 1
      %v4187 = vsel %vm1387, %v4184, %v4186
      %v4188 = vrot.slane %v3992, 1
      %v4189 = vsel %vm1387, %v4186, %v4188
      %v4190 = vrot.slane %v3993, 1
      %v4191 = vsel %vm1387, %v4188, %v4190
      %v4192 = vrot.slane %v3994, 1
      %v4193 = vsel %vm1387, %v4190, %v4192
      %v4194 = vrot.slane %v3995, 1
      %v4195 = vsel %vm1387, %v4192, %v4194
      %v4196 = vrot.slane %v3996, 1
      %v4197 = vsel %vm1387, %v4194, %v4196
      %v4198 = vrot.slane %v3997, 1
      %v4199 = vsel %vm1387, %v4196, %v4198
      %v4200 = vrot.slane %v3998, 1
      %v4201 = vsel %vm1387, %v4198, %v4200
      %v4202 = vrot.slane %v3999, 1
      %v4203 = vsel %vm1387, %v4200, %v4202
      %v4204 = vrot.slane %v4000, 1
      %v4205 = vsel %vm1387, %v4202, %v4204
      %v4206 = vrot.slane %v4001, 1
      %v4207 = vsel %vm1387, %v4204, %v4206
      %v4208 = vrot.slane %v4002, 1
      %v4209 = vsel %vm1387, %v4206, %v4208
      %v4210 = vrot.slane %v4003, 1
      %v4211 = vsel %vm1387, %v4208, %v4210
      %v4212 = vrot.slane %v4004, 1
      %v4213 = vsel %vm1387, %v4210, %v4212
      %v4214 = vrot.slane %v4005, 1
      %v4215 = vsel %vm1387, %v4212, %v4214
      %v4216 = vrot.slane %v4006, 1
      %v4217 = vsel %vm1387, %v4214, %v4216
      %v4218 = vrot.slane %v4007, 1
      %v4219 = vsel %vm1387, %v4216, %v4218
      %v4220 = vrot.slane %v4008, 1
      %v4221 = vsel %vm1387, %v4218, %v4220
      %v4222 = vrot.slane %v4009, 1
      %v4223 = vsel %vm1387, %v4220, %v4222
      %v4224 = vrot.slane %v4010, 1
      %v4225 = vsel %vm1387, %v4222, %v4224
      %v4226 = vrot.slane %v4011, 1
      %v4227 = vsel %vm1387, %v4224, %v4226
      %v4228 = vrot.slane %v4012, 1
      %v4229 = vsel %vm1387, %v4226, %v4228
      %v4230 = vrot.slane %v4013, 1
      %v4231 = vsel %vm1387, %v4228, %v4230
      %v4232 = vrot.slane %v4014, 1
      %v4233 = vsel %vm1387, %v4230, %v4232
      %v4234 = vrot.slane %v4015, 1
      %v4235 = vsel %vm1387, %v4232, %v4234
      %v4236 = vrot.slane %v4016, 1
      %v4237 = vsel %vm1387, %v4234, %v4236
      %v4238 = vrot.slane %v4017, 1
      %v4239 = vsel %vm1387, %v4236, %v4238
      %v4240 = vrot.slane %v4018, 1
      %v4241 = vsel %vm1387, %v4238, %v4240
      %v4242 = vrot.slane %v4019, 1
      %v4243 = vsel %vm1387, %v4240, %v4242
      %v4277 = vsel %vm1387, %v4242, %v4181
      %v4278 = vsel %vm1613, %v4183, -1e+30
      %v4279 = vsel %vm1614, %v4185, -1e+30
      %v4280 = vsel %vm1615, %v4187, -1e+30
      %v4281 = vsel %vm1616, %v4189, -1e+30
      %v4282 = vsel %vm1617, %v4191, -1e+30
      %v4283 = vsel %vm1618, %v4193, -1e+30
      %v4284 = vsel %vm1619, %v4195, -1e+30
      %v4285 = vsel %vm1620, %v4197, -1e+30
      %v4286 = vsel %vm1621, %v4199, -1e+30
      %v4287 = vsel %vm1622, %v4201, -1e+30
      %v4288 = vsel %vm1623, %v4203, -1e+30
      %v4289 = vsel %vm1624, %v4205, -1e+30
      %v4290 = vsel %vm1625, %v4207, -1e+30
      %v4291 = vsel %vm1626, %v4209, -1e+30
      %v4292 = vsel %vm1627, %v4211, -1e+30
      %v4293 = vsel %vm1628, %v4213, -1e+30
      %v4294 = vsel %vm1629, %v4215, -1e+30
      %v4295 = vsel %vm1630, %v4217, -1e+30
      %v4296 = vsel %vm1631, %v4219, -1e+30
      %v4297 = vsel %vm1632, %v4221, -1e+30
      %v4298 = vsel %vm1633, %v4223, -1e+30
      %v4299 = vsel %vm1634, %v4225, -1e+30
      %v4300 = vsel %vm1635, %v4227, -1e+30
      %v4301 = vsel %vm1636, %v4229, -1e+30
      %v4302 = vsel %vm1637, %v4231, -1e+30
      %v4303 = vsel %vm1638, %v4233, -1e+30
      %v4304 = vsel %vm1639, %v4235, -1e+30
      %v4305 = vsel %vm1640, %v4237, -1e+30
      %v4306 = vsel %vm1641, %v4239, -1e+30
      %v4307 = vsel %vm1642, %v4241, -1e+30
      %v4308 = vsel %vm1643, %v4243, -1e+30
      %v4309 = vsel %vm1644, %v4277, -1e+30
      %v4310 = vmax.f32 %v4149, %v4278
      %v4311 = vmax.f32 %v4150, %v4279
      %v4312 = vmax.f32 %v4151, %v4280
      %v4313 = vmax.f32 %v4152, %v4281
      %v4314 = vmax.f32 %v4153, %v4282
      %v4315 = vmax.f32 %v4154, %v4283
      %v4316 = vmax.f32 %v4155, %v4284
      %v4317 = vmax.f32 %v4156, %v4285
      %v4318 = vmax.f32 %v4157, %v4286
      %v4319 = vmax.f32 %v4158, %v4287
      %v4320 = vmax.f32 %v4159, %v4288
      %v4321 = vmax.f32 %v4160, %v4289
      %v4322 = vmax.f32 %v4161, %v4290
      %v4323 = vmax.f32 %v4162, %v4291
      %v4324 = vmax.f32 %v4163, %v4292
      %v4325 = vmax.f32 %v4164, %v4293
      %v4326 = vmax.f32 %v4165, %v4294
      %v4327 = vmax.f32 %v4166, %v4295
      %v4328 = vmax.f32 %v4167, %v4296
      %v4329 = vmax.f32 %v4168, %v4297
      %v4330 = vmax.f32 %v4169, %v4298
      %v4331 = vmax.f32 %v4170, %v4299
      %v4332 = vmax.f32 %v4171, %v4300
      %v4333 = vmax.f32 %v4172, %v4301
      %v4334 = vmax.f32 %v4173, %v4302
      %v4335 = vmax.f32 %v4174, %v4303
      %v4336 = vmax.f32 %v4175, %v4304
      %v4337 = vmax.f32 %v4176, %v4305
      %v4338 = vmax.f32 %v4177, %v4306
      %v4339 = vmax.f32 %v4178, %v4307
      %v4340 = vmax.f32 %v4179, %v4308
      %v4341 = vmax.f32 %v4180, %v4309
      %v4342 = vmax.f32 %v3988, %v4310
      %v4343 = vmax.f32 %v3989, %v4311
      %v4344 = vmax.f32 %v3990, %v4312
      %v4345 = vmax.f32 %v3991, %v4313
      %v4346 = vmax.f32 %v3992, %v4314
      %v4347 = vmax.f32 %v3993, %v4315
      %v4348 = vmax.f32 %v3994, %v4316
      %v4349 = vmax.f32 %v3995, %v4317
      %v4350 = vmax.f32 %v3996, %v4318
      %v4351 = vmax.f32 %v3997, %v4319
      %v4352 = vmax.f32 %v3998, %v4320
      %v4353 = vmax.f32 %v3999, %v4321
      %v4354 = vmax.f32 %v4000, %v4322
      %v4355 = vmax.f32 %v4001, %v4323
      %v4356 = vmax.f32 %v4002, %v4324
      %v4357 = vmax.f32 %v4003, %v4325
      %v4358 = vmax.f32 %v4004, %v4326
      %v4359 = vmax.f32 %v4005, %v4327
      %v4360 = vmax.f32 %v4006, %v4328
      %v4361 = vmax.f32 %v4007, %v4329
      %v4362 = vmax.f32 %v4008, %v4330
      %v4363 = vmax.f32 %v4009, %v4331
      %v4364 = vmax.f32 %v4010, %v4332
      %v4365 = vmax.f32 %v4011, %v4333
      %v4366 = vmax.f32 %v4012, %v4334
      %v4367 = vmax.f32 %v4013, %v4335
      %v4368 = vmax.f32 %v4014, %v4336
      %v4369 = vmax.f32 %v4015, %v4337
      %v4370 = vmax.f32 %v4016, %v4338
      %v4371 = vmax.f32 %v4017, %v4339
      %v4372 = vmax.f32 %v4018, %v4340
      %v4373 = vmax.f32 %v4019, %v4341
      %v4374 = vrot.slane %v4019, 6
      %v4376 = vrot.slane %v3988, 6
      %v4377 = vrot.slane %v3989, 6
      %v4378 = vsel %vm536, %v4376, %v4377
      %v4379 = vrot.slane %v3990, 6
      %v4380 = vsel %vm536, %v4377, %v4379
      %v4381 = vrot.slane %v3991, 6
      %v4382 = vsel %vm536, %v4379, %v4381
      %v4383 = vrot.slane %v3992, 6
      %v4384 = vsel %vm536, %v4381, %v4383
      %v4385 = vrot.slane %v3993, 6
      %v4386 = vsel %vm536, %v4383, %v4385
      %v4387 = vrot.slane %v3994, 6
      %v4388 = vsel %vm536, %v4385, %v4387
      %v4389 = vrot.slane %v3995, 6
      %v4390 = vsel %vm536, %v4387, %v4389
      %v4391 = vrot.slane %v3996, 6
      %v4392 = vsel %vm536, %v4389, %v4391
      %v4393 = vrot.slane %v3997, 6
      %v4394 = vsel %vm536, %v4391, %v4393
      %v4395 = vrot.slane %v3998, 6
      %v4396 = vsel %vm536, %v4393, %v4395
      %v4397 = vrot.slane %v3999, 6
      %v4398 = vsel %vm536, %v4395, %v4397
      %v4399 = vrot.slane %v4000, 6
      %v4400 = vsel %vm536, %v4397, %v4399
      %v4401 = vrot.slane %v4001, 6
      %v4402 = vsel %vm536, %v4399, %v4401
      %v4403 = vrot.slane %v4002, 6
      %v4404 = vsel %vm536, %v4401, %v4403
      %v4405 = vrot.slane %v4003, 6
      %v4406 = vsel %vm536, %v4403, %v4405
      %v4407 = vrot.slane %v4004, 6
      %v4408 = vsel %vm536, %v4405, %v4407
      %v4409 = vrot.slane %v4005, 6
      %v4410 = vsel %vm536, %v4407, %v4409
      %v4411 = vrot.slane %v4006, 6
      %v4412 = vsel %vm536, %v4409, %v4411
      %v4413 = vrot.slane %v4007, 6
      %v4414 = vsel %vm536, %v4411, %v4413
      %v4415 = vrot.slane %v4008, 6
      %v4416 = vsel %vm536, %v4413, %v4415
      %v4417 = vrot.slane %v4009, 6
      %v4418 = vsel %vm536, %v4415, %v4417
      %v4419 = vrot.slane %v4010, 6
      %v4420 = vsel %vm536, %v4417, %v4419
      %v4421 = vrot.slane %v4011, 6
      %v4422 = vsel %vm536, %v4419, %v4421
      %v4423 = vrot.slane %v4012, 6
      %v4424 = vsel %vm536, %v4421, %v4423
      %v4425 = vrot.slane %v4013, 6
      %v4426 = vsel %vm536, %v4423, %v4425
      %v4427 = vrot.slane %v4014, 6
      %v4428 = vsel %vm536, %v4425, %v4427
      %v4429 = vrot.slane %v4015, 6
      %v4430 = vsel %vm536, %v4427, %v4429
      %v4431 = vrot.slane %v4016, 6
      %v4432 = vsel %vm536, %v4429, %v4431
      %v4433 = vrot.slane %v4017, 6
      %v4434 = vsel %vm536, %v4431, %v4433
      %v4435 = vrot.slane %v4018, 6
      %v4436 = vsel %vm536, %v4433, %v4435
      %v4437 = vsel %vm536, %v4435, %v4374
      %v4470 = vsel %vm536, %v4374, %v4376
      %v4471 = vsel %vm1998, %v4470, -1e+30
      %v4472 = vsel %vm1999, %v4378, -1e+30
      %v4473 = vsel %vm2000, %v4380, -1e+30
      %v4474 = vsel %vm2001, %v4382, -1e+30
      %v4475 = vsel %vm2002, %v4384, -1e+30
      %v4476 = vsel %vm2003, %v4386, -1e+30
      %v4477 = vsel %vm2004, %v4388, -1e+30
      %v4478 = vsel %vm2005, %v4390, -1e+30
      %v4479 = vsel %vm2006, %v4392, -1e+30
      %v4480 = vsel %vm2007, %v4394, -1e+30
      %v4481 = vsel %vm2008, %v4396, -1e+30
      %v4482 = vsel %vm2009, %v4398, -1e+30
      %v4483 = vsel %vm2010, %v4400, -1e+30
      %v4484 = vsel %vm2011, %v4402, -1e+30
      %v4485 = vsel %vm2012, %v4404, -1e+30
      %v4486 = vsel %vm2013, %v4406, -1e+30
      %v4487 = vsel %vm2014, %v4408, -1e+30
      %v4488 = vsel %vm2015, %v4410, -1e+30
      %v4489 = vsel %vm2016, %v4412, -1e+30
      %v4490 = vsel %vm2017, %v4414, -1e+30
      %v4491 = vsel %vm2018, %v4416, -1e+30
      %v4492 = vsel %vm2019, %v4418, -1e+30
      %v4493 = vsel %vm2020, %v4420, -1e+30
      %v4494 = vsel %vm2021, %v4422, -1e+30
      %v4495 = vsel %vm2022, %v4424, -1e+30
      %v4496 = vsel %vm2023, %v4426, -1e+30
      %v4497 = vsel %vm2024, %v4428, -1e+30
      %v4498 = vsel %vm2025, %v4430, -1e+30
      %v4499 = vsel %vm2026, %v4432, -1e+30
      %v4500 = vsel %vm2027, %v4434, -1e+30
      %v4501 = vsel %vm2028, %v4436, -1e+30
      %v4502 = vsel %vm2029, %v4437, -1e+30
      %v4503 = vrot.slane %v3988, 2
      %v4504 = vrot.slane %v3989, 2
      %v4505 = vsel %vm2094, %v4503, %v4504
      %v4506 = vrot.slane %v3990, 2
      %v4507 = vsel %vm2094, %v4504, %v4506
      %v4508 = vrot.slane %v3991, 2
      %v4509 = vsel %vm2094, %v4506, %v4508
      %v4510 = vrot.slane %v3992, 2
      %v4511 = vsel %vm2094, %v4508, %v4510
      %v4512 = vrot.slane %v3993, 2
      %v4513 = vsel %vm2094, %v4510, %v4512
      %v4514 = vrot.slane %v3994, 2
      %v4515 = vsel %vm2094, %v4512, %v4514
      %v4516 = vrot.slane %v3995, 2
      %v4517 = vsel %vm2094, %v4514, %v4516
      %v4518 = vrot.slane %v3996, 2
      %v4519 = vsel %vm2094, %v4516, %v4518
      %v4520 = vrot.slane %v3997, 2
      %v4521 = vsel %vm2094, %v4518, %v4520
      %v4522 = vrot.slane %v3998, 2
      %v4523 = vsel %vm2094, %v4520, %v4522
      %v4524 = vrot.slane %v3999, 2
      %v4525 = vsel %vm2094, %v4522, %v4524
      %v4526 = vrot.slane %v4000, 2
      %v4527 = vsel %vm2094, %v4524, %v4526
      %v4528 = vrot.slane %v4001, 2
      %v4529 = vsel %vm2094, %v4526, %v4528
      %v4530 = vrot.slane %v4002, 2
      %v4531 = vsel %vm2094, %v4528, %v4530
      %v4532 = vrot.slane %v4003, 2
      %v4533 = vsel %vm2094, %v4530, %v4532
      %v4534 = vrot.slane %v4004, 2
      %v4535 = vsel %vm2094, %v4532, %v4534
      %v4536 = vrot.slane %v4005, 2
      %v4537 = vsel %vm2094, %v4534, %v4536
      %v4538 = vrot.slane %v4006, 2
      %v4539 = vsel %vm2094, %v4536, %v4538
      %v4540 = vrot.slane %v4007, 2
      %v4541 = vsel %vm2094, %v4538, %v4540
      %v4542 = vrot.slane %v4008, 2
      %v4543 = vsel %vm2094, %v4540, %v4542
      %v4544 = vrot.slane %v4009, 2
      %v4545 = vsel %vm2094, %v4542, %v4544
      %v4546 = vrot.slane %v4010, 2
      %v4547 = vsel %vm2094, %v4544, %v4546
      %v4548 = vrot.slane %v4011, 2
      %v4549 = vsel %vm2094, %v4546, %v4548
      %v4550 = vrot.slane %v4012, 2
      %v4551 = vsel %vm2094, %v4548, %v4550
      %v4552 = vrot.slane %v4013, 2
      %v4553 = vsel %vm2094, %v4550, %v4552
      %v4554 = vrot.slane %v4014, 2
      %v4555 = vsel %vm2094, %v4552, %v4554
      %v4556 = vrot.slane %v4015, 2
      %v4557 = vsel %vm2094, %v4554, %v4556
      %v4558 = vrot.slane %v4016, 2
      %v4559 = vsel %vm2094, %v4556, %v4558
      %v4560 = vrot.slane %v4017, 2
      %v4561 = vsel %vm2094, %v4558, %v4560
      %v4562 = vrot.slane %v4018, 2
      %v4563 = vsel %vm2094, %v4560, %v4562
      %v4564 = vrot.slane %v4019, 2
      %v4565 = vsel %vm2094, %v4562, %v4564
      %v4599 = vsel %vm2094, %v4564, %v4503
      %v4600 = vsel %vm2320, %v4505, -1e+30
      %v4601 = vsel %vm2321, %v4507, -1e+30
      %v4602 = vsel %vm2322, %v4509, -1e+30
      %v4603 = vsel %vm2323, %v4511, -1e+30
      %v4604 = vsel %vm2324, %v4513, -1e+30
      %v4605 = vsel %vm2325, %v4515, -1e+30
      %v4606 = vsel %vm2326, %v4517, -1e+30
      %v4607 = vsel %vm2327, %v4519, -1e+30
      %v4608 = vsel %vm2328, %v4521, -1e+30
      %v4609 = vsel %vm2329, %v4523, -1e+30
      %v4610 = vsel %vm2330, %v4525, -1e+30
      %v4611 = vsel %vm2331, %v4527, -1e+30
      %v4612 = vsel %vm2332, %v4529, -1e+30
      %v4613 = vsel %vm2333, %v4531, -1e+30
      %v4614 = vsel %vm2334, %v4533, -1e+30
      %v4615 = vsel %vm2335, %v4535, -1e+30
      %v4616 = vsel %vm2336, %v4537, -1e+30
      %v4617 = vsel %vm2337, %v4539, -1e+30
      %v4618 = vsel %vm2338, %v4541, -1e+30
      %v4619 = vsel %vm2339, %v4543, -1e+30
      %v4620 = vsel %vm2340, %v4545, -1e+30
      %v4621 = vsel %vm2341, %v4547, -1e+30
      %v4622 = vsel %vm2342, %v4549, -1e+30
      %v4623 = vsel %vm2343, %v4551, -1e+30
      %v4624 = vsel %vm2344, %v4553, -1e+30
      %v4625 = vsel %vm2345, %v4555, -1e+30
      %v4626 = vsel %vm2346, %v4557, -1e+30
      %v4627 = vsel %vm2347, %v4559, -1e+30
      %v4628 = vsel %vm2348, %v4561, -1e+30
      %v4629 = vsel %vm2349, %v4563, -1e+30
      %v4630 = vsel %vm2350, %v4565, -1e+30
      %v4631 = vsel %vm2351, %v4599, -1e+30
      %v4632 = vmax.f32 %v4471, %v4600
      %v4633 = vmax.f32 %v4472, %v4601
      %v4634 = vmax.f32 %v4473, %v4602
      %v4635 = vmax.f32 %v4474, %v4603
      %v4636 = vmax.f32 %v4475, %v4604
      %v4637 = vmax.f32 %v4476, %v4605
      %v4638 = vmax.f32 %v4477, %v4606
      %v4639 = vmax.f32 %v4478, %v4607
      %v4640 = vmax.f32 %v4479, %v4608
      %v4641 = vmax.f32 %v4480, %v4609
      %v4642 = vmax.f32 %v4481, %v4610
      %v4643 = vmax.f32 %v4482, %v4611
      %v4644 = vmax.f32 %v4483, %v4612
      %v4645 = vmax.f32 %v4484, %v4613
      %v4646 = vmax.f32 %v4485, %v4614
      %v4647 = vmax.f32 %v4486, %v4615
      %v4648 = vmax.f32 %v4487, %v4616
      %v4649 = vmax.f32 %v4488, %v4617
      %v4650 = vmax.f32 %v4489, %v4618
      %v4651 = vmax.f32 %v4490, %v4619
      %v4652 = vmax.f32 %v4491, %v4620
      %v4653 = vmax.f32 %v4492, %v4621
      %v4654 = vmax.f32 %v4493, %v4622
      %v4655 = vmax.f32 %v4494, %v4623
      %v4656 = vmax.f32 %v4495, %v4624
      %v4657 = vmax.f32 %v4496, %v4625
      %v4658 = vmax.f32 %v4497, %v4626
      %v4659 = vmax.f32 %v4498, %v4627
      %v4660 = vmax.f32 %v4499, %v4628
      %v4661 = vmax.f32 %v4500, %v4629
      %v4662 = vmax.f32 %v4501, %v4630
      %v4663 = vmax.f32 %v4502, %v4631
      %v4664 = vmax.f32 %v4342, %v4632
      %v4665 = vmax.f32 %v4343, %v4633
      %v4666 = vmax.f32 %v4344, %v4634
      %v4667 = vmax.f32 %v4345, %v4635
      %v4668 = vmax.f32 %v4346, %v4636
      %v4669 = vmax.f32 %v4347, %v4637
      %v4670 = vmax.f32 %v4348, %v4638
      %v4671 = vmax.f32 %v4349, %v4639
      %v4672 = vmax.f32 %v4350, %v4640
      %v4673 = vmax.f32 %v4351, %v4641
      %v4674 = vmax.f32 %v4352, %v4642
      %v4675 = vmax.f32 %v4353, %v4643
      %v4676 = vmax.f32 %v4354, %v4644
      %v4677 = vmax.f32 %v4355, %v4645
      %v4678 = vmax.f32 %v4356, %v4646
      %v4679 = vmax.f32 %v4357, %v4647
      %v4680 = vmax.f32 %v4358, %v4648
      %v4681 = vmax.f32 %v4359, %v4649
      %v4682 = vmax.f32 %v4360, %v4650
      %v4683 = vmax.f32 %v4361, %v4651
      %v4684 = vmax.f32 %v4362, %v4652
      %v4685 = vmax.f32 %v4363, %v4653
      %v4686 = vmax.f32 %v4364, %v4654
      %v4687 = vmax.f32 %v4365, %v4655
      %v4688 = vmax.f32 %v4366, %v4656
      %v4689 = vmax.f32 %v4367, %v4657
      %v4690 = vmax.f32 %v4368, %v4658
      %v4691 = vmax.f32 %v4369, %v4659
      %v4692 = vmax.f32 %v4370, %v4660
      %v4693 = vmax.f32 %v4371, %v4661
      %v4694 = vmax.f32 %v4372, %v4662
      %v4695 = vmax.f32 %v4373, %v4663
      %v4696 = vsel %vm2512, %v4694, -1e+30
      %v4697 = vsel %vm2513, %v4695, -1e+30
      %v4698 = vsel %vm2514, %v4664, -1e+30
      %v4699 = vsel %vm2515, %v4665, -1e+30
      %v4700 = vsel %vm2516, %v4666, -1e+30
      %v4701 = vsel %vm2517, %v4667, -1e+30
      %v4702 = vsel %vm2518, %v4668, -1e+30
      %v4703 = vsel %vm2519, %v4669, -1e+30
      %v4704 = vsel %vm2520, %v4670, -1e+30
      %v4705 = vsel %vm2521, %v4671, -1e+30
      %v4706 = vsel %vm2522, %v4672, -1e+30
      %v4707 = vsel %vm2523, %v4673, -1e+30
      %v4708 = vsel %vm2524, %v4674, -1e+30
      %v4709 = vsel %vm2525, %v4675, -1e+30
      %v4710 = vsel %vm2526, %v4676, -1e+30
      %v4711 = vsel %vm2527, %v4677, -1e+30
      %v4712 = vsel %vm2528, %v4678, -1e+30
      %v4713 = vsel %vm2529, %v4679, -1e+30
      %v4714 = vsel %vm2530, %v4680, -1e+30
      %v4715 = vsel %vm2531, %v4681, -1e+30
      %v4716 = vsel %vm2532, %v4682, -1e+30
      %v4717 = vsel %vm2533, %v4683, -1e+30
      %v4718 = vsel %vm2534, %v4684, -1e+30
      %v4719 = vsel %vm2535, %v4685, -1e+30
      %v4720 = vsel %vm2536, %v4686, -1e+30
      %v4721 = vsel %vm2537, %v4687, -1e+30
      %v4722 = vsel %vm2538, %v4688, -1e+30
      %v4723 = vsel %vm2539, %v4689, -1e+30
      %v4724 = vsel %vm2540, %v4690, -1e+30
      %v4725 = vsel %vm2541, %v4691, -1e+30
      %v4726 = vsel %vm2542, %v4692, -1e+30
      %v4727 = vsel %vm2543, %v4693, -1e+30
      %v4728 = vsel %vm2640, %v4666, -1e+30
      %v4729 = vsel %vm2641, %v4667, -1e+30
      %v4730 = vsel %vm2642, %v4668, -1e+30
      %v4731 = vsel %vm2643, %v4669, -1e+30
      %v4732 = vsel %vm2644, %v4670, -1e+30
      %v4733 = vsel %vm2645, %v4671, -1e+30
      %v4734 = vsel %vm2646, %v4672, -1e+30
      %v4735 = vsel %vm2647, %v4673, -1e+30
      %v4736 = vsel %vm2648, %v4674, -1e+30
      %v4737 = vsel %vm2649, %v4675, -1e+30
      %v4738 = vsel %vm2650, %v4676, -1e+30
      %v4739 = vsel %vm2651, %v4677, -1e+30
      %v4740 = vsel %vm2652, %v4678, -1e+30
      %v4741 = vsel %vm2653, %v4679, -1e+30
      %v4742 = vsel %vm2654, %v4680, -1e+30
      %v4743 = vsel %vm2655, %v4681, -1e+30
      %v4744 = vsel %vm2656, %v4682, -1e+30
      %v4745 = vsel %vm2657, %v4683, -1e+30
      %v4746 = vsel %vm2658, %v4684, -1e+30
      %v4747 = vsel %vm2659, %v4685, -1e+30
      %v4748 = vsel %vm2660, %v4686, -1e+30
      %v4749 = vsel %vm2661, %v4687, -1e+30
      %v4750 = vsel %vm2662, %v4688, -1e+30
      %v4751 = vsel %vm2663, %v4689, -1e+30
      %v4752 = vsel %vm2664, %v4690, -1e+30
      %v4753 = vsel %vm2665, %v4691, -1e+30
      %v4754 = vsel %vm2666, %v4692, -1e+30
      %v4755 = vsel %vm2667, %v4693, -1e+30
      %v4756 = vsel %vm2668, %v4694, -1e+30
      %v4757 = vsel %vm2669, %v4695, -1e+30
      %v4758 = vsel %vm2670, %v4664, -1e+30
      %v4759 = vsel %vm2671, %v4665, -1e+30
      %v4760 = vmax.f32 %v4696, %v4728
      %v4761 = vmax.f32 %v4697, %v4729
      %v4762 = vmax.f32 %v4698, %v4730
      %v4763 = vmax.f32 %v4699, %v4731
      %v4764 = vmax.f32 %v4700, %v4732
      %v4765 = vmax.f32 %v4701, %v4733
      %v4766 = vmax.f32 %v4702, %v4734
      %v4767 = vmax.f32 %v4703, %v4735
      %v4768 = vmax.f32 %v4704, %v4736
      %v4769 = vmax.f32 %v4705, %v4737
      %v4770 = vmax.f32 %v4706, %v4738
      %v4771 = vmax.f32 %v4707, %v4739
      %v4772 = vmax.f32 %v4708, %v4740
      %v4773 = vmax.f32 %v4709, %v4741
      %v4774 = vmax.f32 %v4710, %v4742
      %v4775 = vmax.f32 %v4711, %v4743
      %v4776 = vmax.f32 %v4712, %v4744
      %v4777 = vmax.f32 %v4713, %v4745
      %v4778 = vmax.f32 %v4714, %v4746
      %v4779 = vmax.f32 %v4715, %v4747
      %v4780 = vmax.f32 %v4716, %v4748
      %v4781 = vmax.f32 %v4717, %v4749
      %v4782 = vmax.f32 %v4718, %v4750
      %v4783 = vmax.f32 %v4719, %v4751
      %v4784 = vmax.f32 %v4720, %v4752
      %v4785 = vmax.f32 %v4721, %v4753
      %v4786 = vmax.f32 %v4722, %v4754
      %v4787 = vmax.f32 %v4723, %v4755
      %v4788 = vmax.f32 %v4724, %v4756
      %v4789 = vmax.f32 %v4725, %v4757
      %v4790 = vmax.f32 %v4726, %v4758
      %v4791 = vmax.f32 %v4727, %v4759
      %v4792 = vmax.f32 %v4664, %v4760
      %v4793 = vmax.f32 %v4665, %v4761
      %v4794 = vmax.f32 %v4666, %v4762
      %v4795 = vmax.f32 %v4667, %v4763
      %v4796 = vmax.f32 %v4668, %v4764
      %v4797 = vmax.f32 %v4669, %v4765
      %v4798 = vmax.f32 %v4670, %v4766
      %v4799 = vmax.f32 %v4671, %v4767
      %v4800 = vmax.f32 %v4672, %v4768
      %v4801 = vmax.f32 %v4673, %v4769
      %v4802 = vmax.f32 %v4674, %v4770
      %v4803 = vmax.f32 %v4675, %v4771
      %v4804 = vmax.f32 %v4676, %v4772
      %v4805 = vmax.f32 %v4677, %v4773
      %v4806 = vmax.f32 %v4678, %v4774
      %v4807 = vmax.f32 %v4679, %v4775
      %v4808 = vmax.f32 %v4680, %v4776
      %v4809 = vmax.f32 %v4681, %v4777
      %v4810 = vmax.f32 %v4682, %v4778
      %v4811 = vmax.f32 %v4683, %v4779
      %v4812 = vmax.f32 %v4684, %v4780
      %v4813 = vmax.f32 %v4685, %v4781
      %v4814 = vmax.f32 %v4686, %v4782
      %v4815 = vmax.f32 %v4687, %v4783
      %v4816 = vmax.f32 %v4688, %v4784
      %v4817 = vmax.f32 %v4689, %v4785
      %v4818 = vmax.f32 %v4690, %v4786
      %v4819 = vmax.f32 %v4691, %v4787
      %v4820 = vmax.f32 %v4692, %v4788
      %v4821 = vmax.f32 %v4693, %v4789
      %v4822 = vmax.f32 %v4694, %v4790
      %v4823 = vmax.f32 %v4695, %v4791
      %v4824 = vsel %vm2832, %v4692, -1e+30
      %v4825 = vsel %vm2833, %v4693, -1e+30
      %v4826 = vsel %vm2834, %v4694, -1e+30
      %v4827 = vsel %vm2835, %v4695, -1e+30
      %v4828 = vsel %vm2836, %v4664, -1e+30
      %v4829 = vsel %vm2837, %v4665, -1e+30
      %v4830 = vsel %vm2838, %v4666, -1e+30
      %v4831 = vsel %vm2839, %v4667, -1e+30
      %v4832 = vsel %vm2840, %v4668, -1e+30
      %v4833 = vsel %vm2841, %v4669, -1e+30
      %v4834 = vsel %vm2842, %v4670, -1e+30
      %v4835 = vsel %vm2843, %v4671, -1e+30
      %v4836 = vsel %vm2844, %v4672, -1e+30
      %v4837 = vsel %vm2845, %v4673, -1e+30
      %v4838 = vsel %vm2846, %v4674, -1e+30
      %v4839 = vsel %vm2847, %v4675, -1e+30
      %v4840 = vsel %vm2848, %v4676, -1e+30
      %v4841 = vsel %vm2849, %v4677, -1e+30
      %v4842 = vsel %vm2850, %v4678, -1e+30
      %v4843 = vsel %vm2851, %v4679, -1e+30
      %v4844 = vsel %vm2852, %v4680, -1e+30
      %v4845 = vsel %vm2853, %v4681, -1e+30
      %v4846 = vsel %vm2854, %v4682, -1e+30
      %v4847 = vsel %vm2855, %v4683, -1e+30
      %v4848 = vsel %vm2856, %v4684, -1e+30
      %v4849 = vsel %vm2857, %v4685, -1e+30
      %v4850 = vsel %vm2858, %v4686, -1e+30
      %v4851 = vsel %vm2859, %v4687, -1e+30
      %v4852 = vsel %vm2860, %v4688, -1e+30
      %v4853 = vsel %vm2861, %v4689, -1e+30
      %v4854 = vsel %vm2862, %v4690, -1e+30
      %v4855 = vsel %vm2863, %v4691, -1e+30
      %v4856 = vsel %vm2960, %v4668, -1e+30
      %v4857 = vsel %vm2961, %v4669, -1e+30
      %v4858 = vsel %vm2962, %v4670, -1e+30
      %v4859 = vsel %vm2963, %v4671, -1e+30
      %v4860 = vsel %vm2964, %v4672, -1e+30
      %v4861 = vsel %vm2965, %v4673, -1e+30
      %v4862 = vsel %vm2966, %v4674, -1e+30
      %v4863 = vsel %vm2967, %v4675, -1e+30
      %v4864 = vsel %vm2968, %v4676, -1e+30
      %v4865 = vsel %vm2969, %v4677, -1e+30
      %v4866 = vsel %vm2970, %v4678, -1e+30
      %v4867 = vsel %vm2971, %v4679, -1e+30
      %v4868 = vsel %vm2972, %v4680, -1e+30
      %v4869 = vsel %vm2973, %v4681, -1e+30
      %v4870 = vsel %vm2974, %v4682, -1e+30
      %v4871 = vsel %vm2975, %v4683, -1e+30
      %v4872 = vsel %vm2976, %v4684, -1e+30
      %v4873 = vsel %vm2977, %v4685, -1e+30
      %v4874 = vsel %vm2978, %v4686, -1e+30
      %v4875 = vsel %vm2979, %v4687, -1e+30
      %v4876 = vsel %vm2980, %v4688, -1e+30
      %v4877 = vsel %vm2981, %v4689, -1e+30
      %v4878 = vsel %vm2982, %v4690, -1e+30
      %v4879 = vsel %vm2983, %v4691, -1e+30
      %v4880 = vsel %vm2984, %v4692, -1e+30
      %v4881 = vsel %vm2985, %v4693, -1e+30
      %v4882 = vsel %vm2986, %v4694, -1e+30
      %v4883 = vsel %vm2987, %v4695, -1e+30
      %v4884 = vsel %vm2988, %v4664, -1e+30
      %v4885 = vsel %vm2989, %v4665, -1e+30
      %v4886 = vsel %vm2990, %v4666, -1e+30
      %v4887 = vsel %vm2991, %v4667, -1e+30
      %v4888 = vmax.f32 %v4824, %v4856
      %v4889 = vmax.f32 %v4825, %v4857
      %v4890 = vmax.f32 %v4826, %v4858
      %v4891 = vmax.f32 %v4827, %v4859
      %v4892 = vmax.f32 %v4828, %v4860
      %v4893 = vmax.f32 %v4829, %v4861
      %v4894 = vmax.f32 %v4830, %v4862
      %v4895 = vmax.f32 %v4831, %v4863
      %v4896 = vmax.f32 %v4832, %v4864
      %v4897 = vmax.f32 %v4833, %v4865
      %v4898 = vmax.f32 %v4834, %v4866
      %v4899 = vmax.f32 %v4835, %v4867
      %v4900 = vmax.f32 %v4836, %v4868
      %v4901 = vmax.f32 %v4837, %v4869
      %v4902 = vmax.f32 %v4838, %v4870
      %v4903 = vmax.f32 %v4839, %v4871
      %v4904 = vmax.f32 %v4840, %v4872
      %v4905 = vmax.f32 %v4841, %v4873
      %v4906 = vmax.f32 %v4842, %v4874
      %v4907 = vmax.f32 %v4843, %v4875
      %v4908 = vmax.f32 %v4844, %v4876
      %v4909 = vmax.f32 %v4845, %v4877
      %v4910 = vmax.f32 %v4846, %v4878
      %v4911 = vmax.f32 %v4847, %v4879
      %v4912 = vmax.f32 %v4848, %v4880
      %v4913 = vmax.f32 %v4849, %v4881
      %v4914 = vmax.f32 %v4850, %v4882
      %v4915 = vmax.f32 %v4851, %v4883
      %v4916 = vmax.f32 %v4852, %v4884
      %v4917 = vmax.f32 %v4853, %v4885
      %v4918 = vmax.f32 %v4854, %v4886
      %v4919 = vmax.f32 %v4855, %v4887
      %v4920 = vmax.f32 %v4792, %v4888
      %v4921 = vmax.f32 %v4793, %v4889
      %v4922 = vmax.f32 %v4794, %v4890
      %v4923 = vmax.f32 %v4795, %v4891
      %v4924 = vmax.f32 %v4796, %v4892
      %v4925 = vmax.f32 %v4797, %v4893
      %v4926 = vmax.f32 %v4798, %v4894
      %v4927 = vmax.f32 %v4799, %v4895
      %v4928 = vmax.f32 %v4800, %v4896
      %v4929 = vmax.f32 %v4801, %v4897
      %v4930 = vmax.f32 %v4802, %v4898
      %v4931 = vmax.f32 %v4803, %v4899
      %v4932 = vmax.f32 %v4804, %v4900
      %v4933 = vmax.f32 %v4805, %v4901
      %v4934 = vmax.f32 %v4806, %v4902
      %v4935 = vmax.f32 %v4807, %v4903
      %v4936 = vmax.f32 %v4808, %v4904
      %v4937 = vmax.f32 %v4809, %v4905
      %v4938 = vmax.f32 %v4810, %v4906
      %v4939 = vmax.f32 %v4811, %v4907
      %v4940 = vmax.f32 %v4812, %v4908
      %v4941 = vmax.f32 %v4813, %v4909
      %v4942 = vmax.f32 %v4814, %v4910
      %v4943 = vmax.f32 %v4815, %v4911
      %v4944 = vmax.f32 %v4816, %v4912
      %v4945 = vmax.f32 %v4817, %v4913
      %v4946 = vmax.f32 %v4818, %v4914
      %v4947 = vmax.f32 %v4819, %v4915
      %v4948 = vmax.f32 %v4820, %v4916
      %v4949 = vmax.f32 %v4821, %v4917
      %v4950 = vmax.f32 %v4822, %v4918
      %v4951 = vmax.f32 %v4823, %v4919
      %v4952 = vld [vmem:[%s5] sm:$0xf]
      %v4953 = vld [vmem:[%s6] sm:$0x1]
      %v4954 = vld [vmem:[%s7] sm:$0x1]
      %v4955 = vpack.c.bf16 %v970, %v969
      %v4956 = vpack.c.bf16 %v972, %v971
      %v4957 = vpack.c.bf16 %v974, %v973
      %v4958 = vpack.c.bf16 %v976, %v975
      %v4959 = vpack.c.bf16 %v978, %v977
      %v4960 = vpack.c.bf16 %v980, %v979
      %v4961 = vpack.c.bf16 %v982, %v981
      %v4962 = vpack.c.bf16 %v984, %v983
      %v4963 = vpack.c.bf16 %v986, %v985
      %v4964 = vpack.c.bf16 %v988, %v987
      %v4965 = vpack.c.bf16 %v990, %v989
      %v4966 = vpack.c.bf16 %v992, %v991
      %v4967 = vpack.c.bf16 %v994, %v993
      %v4968 = vpack.c.bf16 %v996, %v995
      %v4969 = vpack.c.bf16 %v998, %v997
      %v4970 = vpack.c.bf16 %v1000, %v999
      %v4971 = vpack.c.bf16 %v3057, %v3056
      %v4972 = vpack.c.bf16 %v3059, %v3058
      %v4973 = vpack.c.bf16 %v3061, %v3060
      %v4974 = vpack.c.bf16 %v3063, %v3062
      %v4975 = vpack.c.bf16 %v3065, %v3064
      %v4976 = vpack.c.bf16 %v3067, %v3066
      %v4977 = vpack.c.bf16 %v3069, %v3068
      %v4978 = vpack.c.bf16 %v3071, %v3070
      %v4979 = vpack.c.bf16 %v3073, %v3072
      %v4980 = vpack.c.bf16 %v3075, %v3074
      %v4981 = vpack.c.bf16 %v3077, %v3076
      %v4982 = vpack.c.bf16 %v3079, %v3078
      %v4983 = vpack.c.bf16 %v3081, %v3080
      %v4984 = vpack.c.bf16 %v3083, %v3082
      %v4985 = vpack.c.bf16 %v3085, %v3084
      %v4986 = vpack.c.bf16 %v3087, %v3086
      %v4988 = vunpack.c.l.b16 %v4952
      %v4989 = vpack.c.b16 %v4988, %v4988
      %v4990 = vrot.slane %v4989, 1
      %vm4991 = vcmask 15360
      %v4993 = vsel %vm4991, %v4971, 0
      %v4996 = vsel %vm4991, %v4972, 0
      %v4999 = vsel %vm4991, %v4973, 0
      %v5002 = vsel %vm4991, %v4974, 0
      %v5005 = vsel %vm4991, %v4975, 0
      %v5008 = vsel %vm4991, %v4976, 0
      %v5011 = vsel %vm4991, %v4977, 0
      %v5014 = vsel %vm4991, %v4978, 0
      %v5017 = vsel %vm4991, %v4979, 0
      %v5020 = vsel %vm4991, %v4980, 0
      %v5023 = vsel %vm4991, %v4981, 0
      %v5026 = vsel %vm4991, %v4982, 0
      %v5029 = vsel %vm4991, %v4983, 0
      %v5032 = vsel %vm4991, %v4984, 0
      %v5035 = vsel %vm4991, %v4985, 0
      %v5038 = vsel %vm4991, %v4986, 0
      %v5041 = vsel %vm1067, %v4990, 0
      %5043 = vmatprep.subr.bf16.mxu0 0
      %5044 = vmatpush1.bf16.msra.mxu0 %v5041
      %5045 = vmatprep.subr.bf16.mxu0 0
      %5046 = vmatpush1.bf16.msra.mxu0 0
      %5047 = vmatprep.subr.bf16.mxu0 0
      %5048 = vmatpush1.bf16.msra.mxu0 0
      %5049 = vmatprep.subr.bf16.mxu0 0
      %5050 = vmatpush1.bf16.msra.mxu0 0
      %5051 = vmatprep.subr.bf16.mxu0 0
      %5052 = vmatpush1.bf16.msra.mxu0 0
      %5053 = vmatprep.subr.bf16.mxu0 0
      %5054 = vmatpush1.bf16.msra.mxu0 0
      %5055 = vmatprep.subr.bf16.mxu0 0
      %5056 = vmatpush1.bf16.msra.mxu0 0
      %5057 = vmatprep.subr.bf16.mxu0 0
      %5058 = vmatpush1.bf16.msra.mxu0 0
      %5059 = vmatprep.subr.bf16.mxu0 0
      %5060 = vmatpush1.bf16.msra.mxu0 0
      %5061 = vmatprep.subr.bf16.mxu0 0
      %5062 = vmatpush1.bf16.msra.mxu0 0
      %5063 = vmatprep.subr.bf16.mxu0 0
      %5064 = vmatpush1.bf16.msra.mxu0 0
      %5065 = vmatprep.subr.bf16.mxu0 0
      %5066 = vmatpush1.bf16.msra.mxu0 0
      %5067 = vmatprep.subr.bf16.mxu0 0
      %5068 = vmatpush1.bf16.msra.mxu0 0
      %5069 = vmatprep.subr.bf16.mxu0 0
      %5070 = vmatpush1.bf16.msra.mxu0 0
      %5071 = vmatprep.subr.bf16.mxu0 0
      %5072 = vmatpush1.bf16.msra.mxu0 0
      %5073 = vmatprep.subr.bf16.mxu0 0
      %5074 = vmatpush1.bf16.msra.mxu0 0
      %5075 = vmatprep.mubr.bf16.mxu0 0
      %5076 = vmatmul.mubr.bf16.gmra.mrb[0].mxu0 %v4993
      %v5077 = vpop.f32.mrb[0].mxu0
      %v5078 = vadd.f32 0.0, %v5077
      %v5079 = vpop.f32.mrb[0].mxu0
      %v5080 = vpop.f32.mrb[0].mxu0
      %v5081 = vadd.f32 0.0, %v5080
      %v5082 = vpop.f32.mrb[0].mxu0
      %5083 = vmatprep.mubr.bf16.mxu0 0
      %5084 = vmatmul.mubr.bf16.gmra.mrb[0].mxu0 %v4996
      %v5085 = vpop.f32.mrb[0].mxu0
      %v5086 = vadd.f32 0.0, %v5085
      %v5087 = vpop.f32.mrb[0].mxu0
      %v5088 = vpop.f32.mrb[0].mxu0
      %v5089 = vadd.f32 0.0, %v5088
      %v5090 = vpop.f32.mrb[0].mxu0
      %5091 = vmatprep.mubr.bf16.mxu0 0
      %5092 = vmatmul.mubr.bf16.gmra.mrb[0].mxu0 %v4999
      %v5093 = vpop.f32.mrb[0].mxu0
      %v5094 = vadd.f32 0.0, %v5093
      %v5095 = vpop.f32.mrb[0].mxu0
      %v5096 = vpop.f32.mrb[0].mxu0
      %v5097 = vadd.f32 0.0, %v5096
      %v5098 = vpop.f32.mrb[0].mxu0
      %5099 = vmatprep.mubr.bf16.mxu0 0
      %5100 = vmatmul.mubr.bf16.gmra.mrb[0].mxu0 %v5002
      %v5101 = vpop.f32.mrb[0].mxu0
      %v5102 = vadd.f32 0.0, %v5101
      %v5103 = vpop.f32.mrb[0].mxu0
      %v5104 = vpop.f32.mrb[0].mxu0
      %v5105 = vadd.f32 0.0, %v5104
      %v5106 = vpop.f32.mrb[0].mxu0
      %5107 = vmatprep.mubr.bf16.mxu0 0
      %5108 = vmatmul.mubr.bf16.gmra.mrb[0].mxu0 %v5005
      %v5109 = vpop.f32.mrb[0].mxu0
      %v5110 = vadd.f32 0.0, %v5109
      %v5111 = vpop.f32.mrb[0].mxu0
      %v5112 = vpop.f32.mrb[0].mxu0
      %v5113 = vadd.f32 0.0, %v5112
      %v5114 = vpop.f32.mrb[0].mxu0
      %5115 = vmatprep.mubr.bf16.mxu0 0
      %5116 = vmatmul.mubr.bf16.gmra.mrb[0].mxu0 %v5008
      %v5117 = vpop.f32.mrb[0].mxu0
      %v5118 = vadd.f32 0.0, %v5117
      %v5119 = vpop.f32.mrb[0].mxu0
      %v5120 = vpop.f32.mrb[0].mxu0
      %v5121 = vadd.f32 0.0, %v5120
      %v5122 = vpop.f32.mrb[0].mxu0
      %5123 = vmatprep.mubr.bf16.mxu0 0
      %5124 = vmatmul.mubr.bf16.gmra.mrb[0].mxu0 %v5011
      %v5125 = vpop.f32.mrb[0].mxu0
      %v5126 = vadd.f32 0.0, %v5125
      %v5127 = vpop.f32.mrb[0].mxu0
      %v5128 = vpop.f32.mrb[0].mxu0
      %v5129 = vadd.f32 0.0, %v5128
      %v5130 = vpop.f32.mrb[0].mxu0
      %5131 = vmatprep.mubr.bf16.mxu0 0
      %5132 = vmatmul.mubr.bf16.gmra.mrb[0].mxu0 %v5014
      %v5133 = vpop.f32.mrb[0].mxu0
      %v5134 = vadd.f32 0.0, %v5133
      %v5135 = vpop.f32.mrb[0].mxu0
      %v5136 = vpop.f32.mrb[0].mxu0
      %v5137 = vadd.f32 0.0, %v5136
      %v5138 = vpop.f32.mrb[0].mxu0
      %5139 = vmatprep.mubr.bf16.mxu0 0
      %5140 = vmatmul.mubr.bf16.gmra.mrb[0].mxu0 %v5017
      %v5141 = vpop.f32.mrb[0].mxu0
      %v5142 = vadd.f32 0.0, %v5141
      %v5143 = vpop.f32.mrb[0].mxu0
      %v5144 = vpop.f32.mrb[0].mxu0
      %v5145 = vadd.f32 0.0, %v5144
      %v5146 = vpop.f32.mrb[0].mxu0
      %5147 = vmatprep.mubr.bf16.mxu0 0
      %5148 = vmatmul.mubr.bf16.gmra.mrb[0].mxu0 %v5020
      %v5149 = vpop.f32.mrb[0].mxu0
      %v5150 = vadd.f32 0.0, %v5149
      %v5151 = vpop.f32.mrb[0].mxu0
      %v5152 = vpop.f32.mrb[0].mxu0
      %v5153 = vadd.f32 0.0, %v5152
      %v5154 = vpop.f32.mrb[0].mxu0
      %5155 = vmatprep.mubr.bf16.mxu0 0
      %5156 = vmatmul.mubr.bf16.gmra.mrb[0].mxu0 %v5023
      %v5157 = vpop.f32.mrb[0].mxu0
      %v5158 = vadd.f32 0.0, %v5157
      %v5159 = vpop.f32.mrb[0].mxu0
      %v5160 = vpop.f32.mrb[0].mxu0
      %v5161 = vadd.f32 0.0, %v5160
      %v5162 = vpop.f32.mrb[0].mxu0
      %5163 = vmatprep.mubr.bf16.mxu0 0
      %5164 = vmatmul.mubr.bf16.gmra.mrb[0].mxu0 %v5026
      %v5165 = vpop.f32.mrb[0].mxu0
      %v5166 = vadd.f32 0.0, %v5165
      %v5167 = vpop.f32.mrb[0].mxu0
      %v5168 = vpop.f32.mrb[0].mxu0
      %v5169 = vadd.f32 0.0, %v5168
      %v5170 = vpop.f32.mrb[0].mxu0
      %5171 = vmatprep.mubr.bf16.mxu0 0
      %5172 = vmatmul.mubr.bf16.gmra.mrb[0].mxu0 %v5029
      %v5173 = vpop.f32.mrb[0].mxu0
      %v5174 = vadd.f32 0.0, %v5173
      %v5175 = vpop.f32.mrb[0].mxu0
      %v5176 = vpop.f32.mrb[0].mxu0
      %v5177 = vadd.f32 0.0, %v5176
      %v5178 = vpop.f32.mrb[0].mxu0
      %5179 = vmatprep.mubr.bf16.mxu0 0
      %5180 = vmatmul.mubr.bf16.gmra.mrb[0].mxu0 %v5032
      %v5181 = vpop.f32.mrb[0].mxu0
      %v5182 = vadd.f32 0.0, %v5181
      %v5183 = vpop.f32.mrb[0].mxu0
      %v5184 = vpop.f32.mrb[0].mxu0
      %v5185 = vadd.f32 0.0, %v5184
      %v5186 = vpop.f32.mrb[0].mxu0
      %5187 = vmatprep.mubr.bf16.mxu0 0
      %5188 = vmatmul.mubr.bf16.gmra.mrb[0].mxu0 %v5035
      %v5189 = vpop.f32.mrb[0].mxu0
      %v5190 = vadd.f32 0.0, %v5189
      %v5191 = vpop.f32.mrb[0].mxu0
      %v5192 = vpop.f32.mrb[0].mxu0
      %v5193 = vadd.f32 0.0, %v5192
      %v5194 = vpop.f32.mrb[0].mxu0
      %5195 = vmatprep.mubr.bf16.mxu0 0
      %5196 = vmatmul.mubr.bf16.gmra.mrb[0].mxu0 %v5038
      %v5197 = vpop.f32.mrb[0].mxu0
      %v5198 = vadd.f32 0.0, %v5197
      %v5199 = vpop.f32.mrb[0].mxu0
      %v5200 = vpop.f32.mrb[0].mxu0
      %v5201 = vadd.f32 0.0, %v5200
      %v5202 = vpop.f32.mrb[0].mxu0
      %5203 = vdwg.mxu0
      %v5205 = vsel %vm4991, %v4955, 0
      %v5208 = vsel %vm4991, %v4956, 0
      %v5211 = vsel %vm4991, %v4957, 0
      %v5214 = vsel %vm4991, %v4958, 0
      %v5217 = vsel %vm4991, %v4959, 0
      %v5220 = vsel %vm4991, %v4960, 0
      %v5223 = vsel %vm4991, %v4961, 0
      %v5226 = vsel %vm4991, %v4962, 0
      %v5229 = vsel %vm4991, %v4963, 0
      %v5232 = vsel %vm4991, %v4964, 0
      %v5235 = vsel %vm4991, %v4965, 0
      %v5238 = vsel %vm4991, %v4966, 0
      %v5241 = vsel %vm4991, %v4967, 0
      %v5244 = vsel %vm4991, %v4968, 0
      %v5247 = vsel %vm4991, %v4969, 0
      %v5250 = vsel %vm4991, %v4970, 0
      %v5253 = vsel %vm1067, %v4952, 0
      %5255 = vmatprep.subr.bf16.mxu0 0
      %5256 = vmatpush1.bf16.msra.mxu0 %v5253
      %5257 = vmatprep.subr.bf16.mxu0 0
      %5258 = vmatpush1.bf16.msra.mxu0 0
      %5259 = vmatprep.subr.bf16.mxu0 0
      %5260 = vmatpush1.bf16.msra.mxu0 0
      %5261 = vmatprep.subr.bf16.mxu0 0
      %5262 = vmatpush1.bf16.msra.mxu0 0
      %5263 = vmatprep.subr.bf16.mxu0 0
      %5264 = vmatpush1.bf16.msra.mxu0 0
      %5265 = vmatprep.subr.bf16.mxu0 0
      %5266 = vmatpush1.bf16.msra.mxu0 0
      %5267 = vmatprep.subr.bf16.mxu0 0
      %5268 = vmatpush1.bf16.msra.mxu0 0
      %5269 = vmatprep.subr.bf16.mxu0 0
      %5270 = vmatpush1.bf16.msra.mxu0 0
      %5271 = vmatprep.subr.bf16.mxu0 0
      %5272 = vmatpush1.bf16.msra.mxu0 0
      %5273 = vmatprep.subr.bf16.mxu0 0
      %5274 = vmatpush1.bf16.msra.mxu0 0
      %5275 = vmatprep.subr.bf16.mxu0 0
      %5276 = vmatpush1.bf16.msra.mxu0 0
      %5277 = vmatprep.subr.bf16.mxu0 0
      %5278 = vmatpush1.bf16.msra.mxu0 0
      %5279 = vmatprep.subr.bf16.mxu0 0
      %5280 = vmatpush1.bf16.msra.mxu0 0
      %5281 = vmatprep.subr.bf16.mxu0 0
      %5282 = vmatpush1.bf16.msra.mxu0 0
      %5283 = vmatprep.subr.bf16.mxu0 0
      %5284 = vmatpush1.bf16.msra.mxu0 0
      %5285 = vmatprep.subr.bf16.mxu0 0
      %5286 = vmatpush1.bf16.msra.mxu0 0
      %5287 = vmatprep.mubr.bf16.mxu0 0
      %5288 = vmatmul.mubr.bf16.gmra.mrb[0].mxu0 %v5205
      %v5289 = vpop.f32.mrb[0].mxu0
      %v5290 = vadd.f32 %v5078, %v5289
      %v5291 = vpop.f32.mrb[0].mxu0
      %v5292 = vpop.f32.mrb[0].mxu0
      %v5293 = vadd.f32 %v5081, %v5292
      %v5294 = vpop.f32.mrb[0].mxu0
      %5295 = vmatprep.mubr.bf16.mxu0 0
      %5296 = vmatmul.mubr.bf16.gmra.mrb[0].mxu0 %v5208
      %v5297 = vpop.f32.mrb[0].mxu0
      %v5298 = vadd.f32 %v5086, %v5297
      %v5299 = vpop.f32.mrb[0].mxu0
      %v5300 = vpop.f32.mrb[0].mxu0
      %v5301 = vadd.f32 %v5089, %v5300
      %v5302 = vpop.f32.mrb[0].mxu0
      %5303 = vmatprep.mubr.bf16.mxu0 0
      %5304 = vmatmul.mubr.bf16.gmra.mrb[0].mxu0 %v5211
      %v5305 = vpop.f32.mrb[0].mxu0
      %v5306 = vadd.f32 %v5094, %v5305
      %v5307 = vpop.f32.mrb[0].mxu0
      %v5308 = vpop.f32.mrb[0].mxu0
      %v5309 = vadd.f32 %v5097, %v5308
      %v5310 = vpop.f32.mrb[0].mxu0
      %5311 = vmatprep.mubr.bf16.mxu0 0
      %5312 = vmatmul.mubr.bf16.gmra.mrb[0].mxu0 %v5214
      %v5313 = vpop.f32.mrb[0].mxu0
      %v5314 = vadd.f32 %v5102, %v5313
      %v5315 = vpop.f32.mrb[0].mxu0
      %v5316 = vpop.f32.mrb[0].mxu0
      %v5317 = vadd.f32 %v5105, %v5316
      %v5318 = vpop.f32.mrb[0].mxu0
      %5319 = vmatprep.mubr.bf16.mxu0 0
      %5320 = vmatmul.mubr.bf16.gmra.mrb[0].mxu0 %v5217
      %v5321 = vpop.f32.mrb[0].mxu0
      %v5322 = vadd.f32 %v5110, %v5321
      %v5323 = vpop.f32.mrb[0].mxu0
      %v5324 = vpop.f32.mrb[0].mxu0
      %v5325 = vadd.f32 %v5113, %v5324
      %v5326 = vpop.f32.mrb[0].mxu0
      %5327 = vmatprep.mubr.bf16.mxu0 0
      %5328 = vmatmul.mubr.bf16.gmra.mrb[0].mxu0 %v5220
      %v5329 = vpop.f32.mrb[0].mxu0
      %v5330 = vadd.f32 %v5118, %v5329
      %v5331 = vpop.f32.mrb[0].mxu0
      %v5332 = vpop.f32.mrb[0].mxu0
      %v5333 = vadd.f32 %v5121, %v5332
      %v5334 = vpop.f32.mrb[0].mxu0
      %5335 = vmatprep.mubr.bf16.mxu0 0
      %5336 = vmatmul.mubr.bf16.gmra.mrb[0].mxu0 %v5223
      %v5337 = vpop.f32.mrb[0].mxu0
      %v5338 = vadd.f32 %v5126, %v5337
      %v5339 = vpop.f32.mrb[0].mxu0
      %v5340 = vpop.f32.mrb[0].mxu0
      %v5341 = vadd.f32 %v5129, %v5340
      %v5342 = vpop.f32.mrb[0].mxu0
      %5343 = vmatprep.mubr.bf16.mxu0 0
      %5344 = vmatmul.mubr.bf16.gmra.mrb[0].mxu0 %v5226
      %v5345 = vpop.f32.mrb[0].mxu0
      %v5346 = vadd.f32 %v5134, %v5345
      %v5347 = vpop.f32.mrb[0].mxu0
      %v5348 = vpop.f32.mrb[0].mxu0
      %v5349 = vadd.f32 %v5137, %v5348
      %v5350 = vpop.f32.mrb[0].mxu0
      %5351 = vmatprep.mubr.bf16.mxu0 0
      %5352 = vmatmul.mubr.bf16.gmra.mrb[0].mxu0 %v5229
      %v5353 = vpop.f32.mrb[0].mxu0
      %v5354 = vadd.f32 %v5142, %v5353
      %v5355 = vpop.f32.mrb[0].mxu0
      %v5356 = vpop.f32.mrb[0].mxu0
      %v5357 = vadd.f32 %v5145, %v5356
      %v5358 = vpop.f32.mrb[0].mxu0
      %5359 = vmatprep.mubr.bf16.mxu0 0
      %5360 = vmatmul.mubr.bf16.gmra.mrb[0].mxu0 %v5232
      %v5361 = vpop.f32.mrb[0].mxu0
      %v5362 = vadd.f32 %v5150, %v5361
      %v5363 = vpop.f32.mrb[0].mxu0
      %v5364 = vpop.f32.mrb[0].mxu0
      %v5365 = vadd.f32 %v5153, %v5364
      %v5366 = vpop.f32.mrb[0].mxu0
      %5367 = vmatprep.mubr.bf16.mxu0 0
      %5368 = vmatmul.mubr.bf16.gmra.mrb[0].mxu0 %v5235
      %v5369 = vpop.f32.mrb[0].mxu0
      %v5370 = vadd.f32 %v5158, %v5369
      %v5371 = vpop.f32.mrb[0].mxu0
      %v5372 = vpop.f32.mrb[0].mxu0
      %v5373 = vadd.f32 %v5161, %v5372
      %v5374 = vpop.f32.mrb[0].mxu0
      %5375 = vmatprep.mubr.bf16.mxu0 0
      %5376 = vmatmul.mubr.bf16.gmra.mrb[0].mxu0 %v5238
      %v5377 = vpop.f32.mrb[0].mxu0
      %v5378 = vadd.f32 %v5166, %v5377
      %v5379 = vpop.f32.mrb[0].mxu0
      %v5380 = vpop.f32.mrb[0].mxu0
      %v5381 = vadd.f32 %v5169, %v5380
      %v5382 = vpop.f32.mrb[0].mxu0
      %5383 = vmatprep.mubr.bf16.mxu0 0
      %5384 = vmatmul.mubr.bf16.gmra.mrb[0].mxu0 %v5241
      %v5385 = vpop.f32.mrb[0].mxu0
      %v5386 = vadd.f32 %v5174, %v5385
      %v5387 = vpop.f32.mrb[0].mxu0
      %v5388 = vpop.f32.mrb[0].mxu0
      %v5389 = vadd.f32 %v5177, %v5388
      %v5390 = vpop.f32.mrb[0].mxu0
      %5391 = vmatprep.mubr.bf16.mxu0 0
      %5392 = vmatmul.mubr.bf16.gmra.mrb[0].mxu0 %v5244
      %v5393 = vpop.f32.mrb[0].mxu0
      %v5394 = vadd.f32 %v5182, %v5393
      %v5395 = vpop.f32.mrb[0].mxu0
      %v5396 = vpop.f32.mrb[0].mxu0
      %v5397 = vadd.f32 %v5185, %v5396
      %v5398 = vpop.f32.mrb[0].mxu0
      %5399 = vmatprep.mubr.bf16.mxu0 0
      %5400 = vmatmul.mubr.bf16.gmra.mrb[0].mxu0 %v5247
      %v5401 = vpop.f32.mrb[0].mxu0
      %v5402 = vadd.f32 %v5190, %v5401
      %v5403 = vpop.f32.mrb[0].mxu0
      %v5404 = vpop.f32.mrb[0].mxu0
      %v5405 = vadd.f32 %v5193, %v5404
      %v5406 = vpop.f32.mrb[0].mxu0
      %5407 = vmatprep.mubr.bf16.mxu0 0
      %5408 = vmatmul.mubr.bf16.gmra.mrb[0].mxu0 %v5250
      %v5409 = vpop.f32.mrb[0].mxu0
      %v5410 = vadd.f32 %v5198, %v5409
      %v5411 = vpop.f32.mrb[0].mxu0
      %v5412 = vpop.f32.mrb[0].mxu0
      %v5413 = vadd.f32 %v5201, %v5412
      %v5414 = vpop.f32.mrb[0].mxu0
      %5415 = vdwg.mxu0
      %v5416 = vpack.c.bf16 %v3989, %v3988
      %v5417 = vpack.c.bf16 %v3991, %v3990
      %v5418 = vpack.c.bf16 %v3993, %v3992
      %v5419 = vpack.c.bf16 %v3995, %v3994
      %v5420 = vpack.c.bf16 %v3997, %v3996
      %v5421 = vpack.c.bf16 %v3999, %v3998
      %v5422 = vpack.c.bf16 %v4001, %v4000
      %v5423 = vpack.c.bf16 %v4003, %v4002
      %v5424 = vpack.c.bf16 %v4005, %v4004
      %v5425 = vpack.c.bf16 %v4007, %v4006
      %v5426 = vpack.c.bf16 %v4009, %v4008
      %v5427 = vpack.c.bf16 %v4011, %v4010
      %v5428 = vpack.c.bf16 %v4013, %v4012
      %v5429 = vpack.c.bf16 %v4015, %v4014
      %v5430 = vpack.c.bf16 %v4017, %v4016
      %v5431 = vpack.c.bf16 %v4019, %v4018
      %v5432 = vrot.slane %v4989, 2
      %v5434 = vsel %vm4991, %v5416, 0
      %v5437 = vsel %vm4991, %v5417, 0
      %v5440 = vsel %vm4991, %v5418, 0
      %v5443 = vsel %vm4991, %v5419, 0
      %v5446 = vsel %vm4991, %v5420, 0
      %v5449 = vsel %vm4991, %v5421, 0
      %v5452 = vsel %vm4991, %v5422, 0
      %v5455 = vsel %vm4991, %v5423, 0
      %v5458 = vsel %vm4991, %v5424, 0
      %v5461 = vsel %vm4991, %v5425, 0
      %v5464 = vsel %vm4991, %v5426, 0
      %v5467 = vsel %vm4991, %v5427, 0
      %v5470 = vsel %vm4991, %v5428, 0
      %v5473 = vsel %vm4991, %v5429, 0
      %v5476 = vsel %vm4991, %v5430, 0
      %v5479 = vsel %vm4991, %v5431, 0
      %v5482 = vsel %vm1067, %v5432, 0
      %5484 = vmatprep.subr.bf16.mxu0 0
      %5485 = vmatpush1.bf16.msra.mxu0 %v5482
      %5486 = vmatprep.subr.bf16.mxu0 0
      %5487 = vmatpush1.bf16.msra.mxu0 0
      %5488 = vmatprep.subr.bf16.mxu0 0
      %5489 = vmatpush1.bf16.msra.mxu0 0
      %5490 = vmatprep.subr.bf16.mxu0 0
      %5491 = vmatpush1.bf16.msra.mxu0 0
      %5492 = vmatprep.subr.bf16.mxu0 0
      %5493 = vmatpush1.bf16.msra.mxu0 0
      %5494 = vmatprep.subr.bf16.mxu0 0
      %5495 = vmatpush1.bf16.msra.mxu0 0
      %5496 = vmatprep.subr.bf16.mxu0 0
      %5497 = vmatpush1.bf16.msra.mxu0 0
      %5498 = vmatprep.subr.bf16.mxu0 0
      %5499 = vmatpush1.bf16.msra.mxu0 0
      %5500 = vmatprep.subr.bf16.mxu0 0
      %5501 = vmatpush1.bf16.msra.mxu0 0
      %5502 = vmatprep.subr.bf16.mxu0 0
      %5503 = vmatpush1.bf16.msra.mxu0 0
      %5504 = vmatprep.subr.bf16.mxu0 0
      %5505 = vmatpush1.bf16.msra.mxu0 0
      %5506 = vmatprep.subr.bf16.mxu0 0
      %5507 = vmatpush1.bf16.msra.mxu0 0
      %5508 = vmatprep.subr.bf16.mxu0 0
      %5509 = vmatpush1.bf16.msra.mxu0 0
      %5510 = vmatprep.subr.bf16.mxu0 0
      %5511 = vmatpush1.bf16.msra.mxu0 0
      %5512 = vmatprep.subr.bf16.mxu0 0
      %5513 = vmatpush1.bf16.msra.mxu0 0
      %5514 = vmatprep.subr.bf16.mxu0 0
      %5515 = vmatpush1.bf16.msra.mxu0 0
      %5516 = vmatprep.mubr.bf16.mxu0 0
      %5517 = vmatmul.mubr.bf16.gmra.mrb[0].mxu0 %v5434
      %v5518 = vpop.f32.mrb[0].mxu0
      %v5519 = vadd.f32 0.0, %v5518
      %v5520 = vpop.f32.mrb[0].mxu0
      %v5521 = vpop.f32.mrb[0].mxu0
      %v5522 = vadd.f32 0.0, %v5521
      %v5523 = vpop.f32.mrb[0].mxu0
      %5524 = vmatprep.mubr.bf16.mxu0 0
      %5525 = vmatmul.mubr.bf16.gmra.mrb[0].mxu0 %v5437
      %v5526 = vpop.f32.mrb[0].mxu0
      %v5527 = vadd.f32 0.0, %v5526
      %v5528 = vpop.f32.mrb[0].mxu0
      %v5529 = vpop.f32.mrb[0].mxu0
      %v5530 = vadd.f32 0.0, %v5529
      %v5531 = vpop.f32.mrb[0].mxu0
      %5532 = vmatprep.mubr.bf16.mxu0 0
      %5533 = vmatmul.mubr.bf16.gmra.mrb[0].mxu0 %v5440
      %v5534 = vpop.f32.mrb[0].mxu0
      %v5535 = vadd.f32 0.0, %v5534
      %v5536 = vpop.f32.mrb[0].mxu0
      %v5537 = vpop.f32.mrb[0].mxu0
      %v5538 = vadd.f32 0.0, %v5537
      %v5539 = vpop.f32.mrb[0].mxu0
      %5540 = vmatprep.mubr.bf16.mxu0 0
      %5541 = vmatmul.mubr.bf16.gmra.mrb[0].mxu0 %v5443
      %v5542 = vpop.f32.mrb[0].mxu0
      %v5543 = vadd.f32 0.0, %v5542
      %v5544 = vpop.f32.mrb[0].mxu0
      %v5545 = vpop.f32.mrb[0].mxu0
      %v5546 = vadd.f32 0.0, %v5545
      %v5547 = vpop.f32.mrb[0].mxu0
      %5548 = vmatprep.mubr.bf16.mxu0 0
      %5549 = vmatmul.mubr.bf16.gmra.mrb[0].mxu0 %v5446
      %v5550 = vpop.f32.mrb[0].mxu0
      %v5551 = vadd.f32 0.0, %v5550
      %v5552 = vpop.f32.mrb[0].mxu0
      %v5553 = vpop.f32.mrb[0].mxu0
      %v5554 = vadd.f32 0.0, %v5553
      %v5555 = vpop.f32.mrb[0].mxu0
      %5556 = vmatprep.mubr.bf16.mxu0 0
      %5557 = vmatmul.mubr.bf16.gmra.mrb[0].mxu0 %v5449
      %v5558 = vpop.f32.mrb[0].mxu0
      %v5559 = vadd.f32 0.0, %v5558
      %v5560 = vpop.f32.mrb[0].mxu0
      %v5561 = vpop.f32.mrb[0].mxu0
      %v5562 = vadd.f32 0.0, %v5561
      %v5563 = vpop.f32.mrb[0].mxu0
      %5564 = vmatprep.mubr.bf16.mxu0 0
      %5565 = vmatmul.mubr.bf16.gmra.mrb[0].mxu0 %v5452
      %v5566 = vpop.f32.mrb[0].mxu0
      %v5567 = vadd.f32 0.0, %v5566
      %v5568 = vpop.f32.mrb[0].mxu0
      %v5569 = vpop.f32.mrb[0].mxu0
      %v5570 = vadd.f32 0.0, %v5569
      %v5571 = vpop.f32.mrb[0].mxu0
      %5572 = vmatprep.mubr.bf16.mxu0 0
      %5573 = vmatmul.mubr.bf16.gmra.mrb[0].mxu0 %v5455
      %v5574 = vpop.f32.mrb[0].mxu0
      %v5575 = vadd.f32 0.0, %v5574
      %v5576 = vpop.f32.mrb[0].mxu0
      %v5577 = vpop.f32.mrb[0].mxu0
      %v5578 = vadd.f32 0.0, %v5577
      %v5579 = vpop.f32.mrb[0].mxu0
      %5580 = vmatprep.mubr.bf16.mxu0 0
      %5581 = vmatmul.mubr.bf16.gmra.mrb[0].mxu0 %v5458
      %v5582 = vpop.f32.mrb[0].mxu0
      %v5583 = vadd.f32 0.0, %v5582
      %v5584 = vpop.f32.mrb[0].mxu0
      %v5585 = vpop.f32.mrb[0].mxu0
      %v5586 = vadd.f32 0.0, %v5585
      %v5587 = vpop.f32.mrb[0].mxu0
      %5588 = vmatprep.mubr.bf16.mxu0 0
      %5589 = vmatmul.mubr.bf16.gmra.mrb[0].mxu0 %v5461
      %v5590 = vpop.f32.mrb[0].mxu0
      %v5591 = vadd.f32 0.0, %v5590
      %v5592 = vpop.f32.mrb[0].mxu0
      %v5593 = vpop.f32.mrb[0].mxu0
      %v5594 = vadd.f32 0.0, %v5593
      %v5595 = vpop.f32.mrb[0].mxu0
      %5596 = vmatprep.mubr.bf16.mxu0 0
      %5597 = vmatmul.mubr.bf16.gmra.mrb[0].mxu0 %v5464
      %v5598 = vpop.f32.mrb[0].mxu0
      %v5599 = vadd.f32 0.0, %v5598
      %v5600 = vpop.f32.mrb[0].mxu0
      %v5601 = vpop.f32.mrb[0].mxu0
      %v5602 = vadd.f32 0.0, %v5601
      %v5603 = vpop.f32.mrb[0].mxu0
      %5604 = vmatprep.mubr.bf16.mxu0 0
      %5605 = vmatmul.mubr.bf16.gmra.mrb[0].mxu0 %v5467
      %v5606 = vpop.f32.mrb[0].mxu0
      %v5607 = vadd.f32 0.0, %v5606
      %v5608 = vpop.f32.mrb[0].mxu0
      %v5609 = vpop.f32.mrb[0].mxu0
      %v5610 = vadd.f32 0.0, %v5609
      %v5611 = vpop.f32.mrb[0].mxu0
      %5612 = vmatprep.mubr.bf16.mxu0 0
      %5613 = vmatmul.mubr.bf16.gmra.mrb[0].mxu0 %v5470
      %v5614 = vpop.f32.mrb[0].mxu0
      %v5615 = vadd.f32 0.0, %v5614
      %v5616 = vpop.f32.mrb[0].mxu0
      %v5617 = vpop.f32.mrb[0].mxu0
      %v5618 = vadd.f32 0.0, %v5617
      %v5619 = vpop.f32.mrb[0].mxu0
      %5620 = vmatprep.mubr.bf16.mxu0 0
      %5621 = vmatmul.mubr.bf16.gmra.mrb[0].mxu0 %v5473
      %v5622 = vpop.f32.mrb[0].mxu0
      %v5623 = vadd.f32 0.0, %v5622
      %v5624 = vpop.f32.mrb[0].mxu0
      %v5625 = vpop.f32.mrb[0].mxu0
      %v5626 = vadd.f32 0.0, %v5625
      %v5627 = vpop.f32.mrb[0].mxu0
      %5628 = vmatprep.mubr.bf16.mxu0 0
      %5629 = vmatmul.mubr.bf16.gmra.mrb[0].mxu0 %v5476
      %v5630 = vpop.f32.mrb[0].mxu0
      %v5631 = vadd.f32 0.0, %v5630
      %v5632 = vpop.f32.mrb[0].mxu0
      %v5633 = vpop.f32.mrb[0].mxu0
      %v5634 = vadd.f32 0.0, %v5633
      %v5635 = vpop.f32.mrb[0].mxu0
      %5636 = vmatprep.mubr.bf16.mxu0 0
      %5637 = vmatmul.mubr.bf16.gmra.mrb[0].mxu0 %v5479
      %v5638 = vpop.f32.mrb[0].mxu0
      %v5639 = vadd.f32 0.0, %v5638
      %v5640 = vpop.f32.mrb[0].mxu0
      %v5641 = vpop.f32.mrb[0].mxu0
      %v5642 = vadd.f32 0.0, %v5641
      %v5643 = vpop.f32.mrb[0].mxu0
      %5644 = vdwg.mxu0
      %v5645 = vadd.f32 %v5290, %v5519
      %v5646 = vadd.f32 %v5293, %v5522
      %v5647 = vadd.f32 %v5298, %v5527
      %v5648 = vadd.f32 %v5301, %v5530
      %v5649 = vadd.f32 %v5306, %v5535
      %v5650 = vadd.f32 %v5309, %v5538
      %v5651 = vadd.f32 %v5314, %v5543
      %v5652 = vadd.f32 %v5317, %v5546
      %v5653 = vadd.f32 %v5322, %v5551
      %v5654 = vadd.f32 %v5325, %v5554
      %v5655 = vadd.f32 %v5330, %v5559
      %v5656 = vadd.f32 %v5333, %v5562
      %v5657 = vadd.f32 %v5338, %v5567
      %v5658 = vadd.f32 %v5341, %v5570
      %v5659 = vadd.f32 %v5346, %v5575
      %v5660 = vadd.f32 %v5349, %v5578
      %v5661 = vadd.f32 %v5354, %v5583
      %v5662 = vadd.f32 %v5357, %v5586
      %v5663 = vadd.f32 %v5362, %v5591
      %v5664 = vadd.f32 %v5365, %v5594
      %v5665 = vadd.f32 %v5370, %v5599
      %v5666 = vadd.f32 %v5373, %v5602
      %v5667 = vadd.f32 %v5378, %v5607
      %v5668 = vadd.f32 %v5381, %v5610
      %v5669 = vadd.f32 %v5386, %v5615
      %v5670 = vadd.f32 %v5389, %v5618
      %v5671 = vadd.f32 %v5394, %v5623
      %v5672 = vadd.f32 %v5397, %v5626
      %v5673 = vadd.f32 %v5402, %v5631
      %v5674 = vadd.f32 %v5405, %v5634
      %v5675 = vadd.f32 %v5410, %v5639
      %v5676 = vadd.f32 %v5413, %v5642
      %v5677 = vpack.c.bf16 %v4921, %v4920
      %v5678 = vpack.c.bf16 %v4923, %v4922
      %v5679 = vpack.c.bf16 %v4925, %v4924
      %v5680 = vpack.c.bf16 %v4927, %v4926
      %v5681 = vpack.c.bf16 %v4929, %v4928
      %v5682 = vpack.c.bf16 %v4931, %v4930
      %v5683 = vpack.c.bf16 %v4933, %v4932
      %v5684 = vpack.c.bf16 %v4935, %v4934
      %v5685 = vpack.c.bf16 %v4937, %v4936
      %v5686 = vpack.c.bf16 %v4939, %v4938
      %v5687 = vpack.c.bf16 %v4941, %v4940
      %v5688 = vpack.c.bf16 %v4943, %v4942
      %v5689 = vpack.c.bf16 %v4945, %v4944
      %v5690 = vpack.c.bf16 %v4947, %v4946
      %v5691 = vpack.c.bf16 %v4949, %v4948
      %v5692 = vpack.c.bf16 %v4951, %v4950
      %v5693 = vrot.slane %v4989, 3
      %v5695 = vsel %vm4991, %v5677, 0
      %v5698 = vsel %vm4991, %v5678, 0
      %v5701 = vsel %vm4991, %v5679, 0
      %v5704 = vsel %vm4991, %v5680, 0
      %v5707 = vsel %vm4991, %v5681, 0
      %v5710 = vsel %vm4991, %v5682, 0
      %v5713 = vsel %vm4991, %v5683, 0
      %v5716 = vsel %vm4991, %v5684, 0
      %v5719 = vsel %vm4991, %v5685, 0
      %v5722 = vsel %vm4991, %v5686, 0
      %v5725 = vsel %vm4991, %v5687, 0
      %v5728 = vsel %vm4991, %v5688, 0
      %v5731 = vsel %vm4991, %v5689, 0
      %v5734 = vsel %vm4991, %v5690, 0
      %v5737 = vsel %vm4991, %v5691, 0
      %v5740 = vsel %vm4991, %v5692, 0
      %v5743 = vsel %vm1067, %v5693, 0
      %5745 = vmatprep.subr.bf16.mxu0 0
      %5746 = vmatpush1.bf16.msra.mxu0 %v5743
      %5747 = vmatprep.subr.bf16.mxu0 0
      %5748 = vmatpush1.bf16.msra.mxu0 0
      %5749 = vmatprep.subr.bf16.mxu0 0
      %5750 = vmatpush1.bf16.msra.mxu0 0
      %5751 = vmatprep.subr.bf16.mxu0 0
      %5752 = vmatpush1.bf16.msra.mxu0 0
      %5753 = vmatprep.subr.bf16.mxu0 0
      %5754 = vmatpush1.bf16.msra.mxu0 0
      %5755 = vmatprep.subr.bf16.mxu0 0
      %5756 = vmatpush1.bf16.msra.mxu0 0
      %5757 = vmatprep.subr.bf16.mxu0 0
      %5758 = vmatpush1.bf16.msra.mxu0 0
      %5759 = vmatprep.subr.bf16.mxu0 0
      %5760 = vmatpush1.bf16.msra.mxu0 0
      %5761 = vmatprep.subr.bf16.mxu0 0
      %5762 = vmatpush1.bf16.msra.mxu0 0
      %5763 = vmatprep.subr.bf16.mxu0 0
      %5764 = vmatpush1.bf16.msra.mxu0 0
      %5765 = vmatprep.subr.bf16.mxu0 0
      %5766 = vmatpush1.bf16.msra.mxu0 0
      %5767 = vmatprep.subr.bf16.mxu0 0
      %5768 = vmatpush1.bf16.msra.mxu0 0
      %5769 = vmatprep.subr.bf16.mxu0 0
      %5770 = vmatpush1.bf16.msra.mxu0 0
      %5771 = vmatprep.subr.bf16.mxu0 0
      %5772 = vmatpush1.bf16.msra.mxu0 0
      %5773 = vmatprep.subr.bf16.mxu0 0
      %5774 = vmatpush1.bf16.msra.mxu0 0
      %5775 = vmatprep.subr.bf16.mxu0 0
      %5776 = vmatpush1.bf16.msra.mxu0 0
      %5777 = vmatprep.mubr.bf16.mxu0 0
      %5778 = vmatmul.mubr.bf16.gmra.mrb[0].mxu0 %v5695
      %v5779 = vpop.f32.mrb[0].mxu0
      %v5780 = vadd.f32 0.0, %v5779
      %v5781 = vpop.f32.mrb[0].mxu0
      %v5782 = vpop.f32.mrb[0].mxu0
      %v5783 = vadd.f32 0.0, %v5782
      %v5784 = vpop.f32.mrb[0].mxu0
      %5785 = vmatprep.mubr.bf16.mxu0 0
      %5786 = vmatmul.mubr.bf16.gmra.mrb[0].mxu0 %v5698
      %v5787 = vpop.f32.mrb[0].mxu0
      %v5788 = vadd.f32 0.0, %v5787
      %v5789 = vpop.f32.mrb[0].mxu0
      %v5790 = vpop.f32.mrb[0].mxu0
      %v5791 = vadd.f32 0.0, %v5790
      %v5792 = vpop.f32.mrb[0].mxu0
      %5793 = vmatprep.mubr.bf16.mxu0 0
      %5794 = vmatmul.mubr.bf16.gmra.mrb[0].mxu0 %v5701
      %v5795 = vpop.f32.mrb[0].mxu0
      %v5796 = vadd.f32 0.0, %v5795
      %v5797 = vpop.f32.mrb[0].mxu0
      %v5798 = vpop.f32.mrb[0].mxu0
      %v5799 = vadd.f32 0.0, %v5798
      %v5800 = vpop.f32.mrb[0].mxu0
      %5801 = vmatprep.mubr.bf16.mxu0 0
      %5802 = vmatmul.mubr.bf16.gmra.mrb[0].mxu0 %v5704
      %v5803 = vpop.f32.mrb[0].mxu0
      %v5804 = vadd.f32 0.0, %v5803
      %v5805 = vpop.f32.mrb[0].mxu0
      %v5806 = vpop.f32.mrb[0].mxu0
      %v5807 = vadd.f32 0.0, %v5806
      %v5808 = vpop.f32.mrb[0].mxu0
      %5809 = vmatprep.mubr.bf16.mxu0 0
      %5810 = vmatmul.mubr.bf16.gmra.mrb[0].mxu0 %v5707
      %v5811 = vpop.f32.mrb[0].mxu0
      %v5812 = vadd.f32 0.0, %v5811
      %v5813 = vpop.f32.mrb[0].mxu0
      %v5814 = vpop.f32.mrb[0].mxu0
      %v5815 = vadd.f32 0.0, %v5814
      %v5816 = vpop.f32.mrb[0].mxu0
      %5817 = vmatprep.mubr.bf16.mxu0 0
      %5818 = vmatmul.mubr.bf16.gmra.mrb[0].mxu0 %v5710
      %v5819 = vpop.f32.mrb[0].mxu0
      %v5820 = vadd.f32 0.0, %v5819
      %v5821 = vpop.f32.mrb[0].mxu0
      %v5822 = vpop.f32.mrb[0].mxu0
      %v5823 = vadd.f32 0.0, %v5822
      %v5824 = vpop.f32.mrb[0].mxu0
      %5825 = vmatprep.mubr.bf16.mxu0 0
      %5826 = vmatmul.mubr.bf16.gmra.mrb[0].mxu0 %v5713
      %v5827 = vpop.f32.mrb[0].mxu0
      %v5828 = vadd.f32 0.0, %v5827
      %v5829 = vpop.f32.mrb[0].mxu0
      %v5830 = vpop.f32.mrb[0].mxu0
      %v5831 = vadd.f32 0.0, %v5830
      %v5832 = vpop.f32.mrb[0].mxu0
      %5833 = vmatprep.mubr.bf16.mxu0 0
      %5834 = vmatmul.mubr.bf16.gmra.mrb[0].mxu0 %v5716
      %v5835 = vpop.f32.mrb[0].mxu0
      %v5836 = vadd.f32 0.0, %v5835
      %v5837 = vpop.f32.mrb[0].mxu0
      %v5838 = vpop.f32.mrb[0].mxu0
      %v5839 = vadd.f32 0.0, %v5838
      %v5840 = vpop.f32.mrb[0].mxu0
      %5841 = vmatprep.mubr.bf16.mxu0 0
      %5842 = vmatmul.mubr.bf16.gmra.mrb[0].mxu0 %v5719
      %v5843 = vpop.f32.mrb[0].mxu0
      %v5844 = vadd.f32 0.0, %v5843
      %v5845 = vpop.f32.mrb[0].mxu0
      %v5846 = vpop.f32.mrb[0].mxu0
      %v5847 = vadd.f32 0.0, %v5846
      %v5848 = vpop.f32.mrb[0].mxu0
      %5849 = vmatprep.mubr.bf16.mxu0 0
      %5850 = vmatmul.mubr.bf16.gmra.mrb[0].mxu0 %v5722
      %v5851 = vpop.f32.mrb[0].mxu0
      %v5852 = vadd.f32 0.0, %v5851
      %v5853 = vpop.f32.mrb[0].mxu0
      %v5854 = vpop.f32.mrb[0].mxu0
      %v5855 = vadd.f32 0.0, %v5854
      %v5856 = vpop.f32.mrb[0].mxu0
      %5857 = vmatprep.mubr.bf16.mxu0 0
      %5858 = vmatmul.mubr.bf16.gmra.mrb[0].mxu0 %v5725
      %v5859 = vpop.f32.mrb[0].mxu0
      %v5860 = vadd.f32 0.0, %v5859
      %v5861 = vpop.f32.mrb[0].mxu0
      %v5862 = vpop.f32.mrb[0].mxu0
      %v5863 = vadd.f32 0.0, %v5862
      %v5864 = vpop.f32.mrb[0].mxu0
      %5865 = vmatprep.mubr.bf16.mxu0 0
      %5866 = vmatmul.mubr.bf16.gmra.mrb[0].mxu0 %v5728
      %v5867 = vpop.f32.mrb[0].mxu0
      %v5868 = vadd.f32 0.0, %v5867
      %v5869 = vpop.f32.mrb[0].mxu0
      %v5870 = vpop.f32.mrb[0].mxu0
      %v5871 = vadd.f32 0.0, %v5870
      %v5872 = vpop.f32.mrb[0].mxu0
      %5873 = vmatprep.mubr.bf16.mxu0 0
      %5874 = vmatmul.mubr.bf16.gmra.mrb[0].mxu0 %v5731
      %v5875 = vpop.f32.mrb[0].mxu0
      %v5876 = vadd.f32 0.0, %v5875
      %v5877 = vpop.f32.mrb[0].mxu0
      %v5878 = vpop.f32.mrb[0].mxu0
      %v5879 = vadd.f32 0.0, %v5878
      %v5880 = vpop.f32.mrb[0].mxu0
      %5881 = vmatprep.mubr.bf16.mxu0 0
      %5882 = vmatmul.mubr.bf16.gmra.mrb[0].mxu0 %v5734
      %v5883 = vpop.f32.mrb[0].mxu0
      %v5884 = vadd.f32 0.0, %v5883
      %v5885 = vpop.f32.mrb[0].mxu0
      %v5886 = vpop.f32.mrb[0].mxu0
      %v5887 = vadd.f32 0.0, %v5886
      %v5888 = vpop.f32.mrb[0].mxu0
      %5889 = vmatprep.mubr.bf16.mxu0 0
      %5890 = vmatmul.mubr.bf16.gmra.mrb[0].mxu0 %v5737
      %v5891 = vpop.f32.mrb[0].mxu0
      %v5892 = vadd.f32 0.0, %v5891
      %v5893 = vpop.f32.mrb[0].mxu0
      %v5894 = vpop.f32.mrb[0].mxu0
      %v5895 = vadd.f32 0.0, %v5894
      %v5896 = vpop.f32.mrb[0].mxu0
      %5897 = vmatprep.mubr.bf16.mxu0 0
      %5898 = vmatmul.mubr.bf16.gmra.mrb[0].mxu0 %v5740
      %v5899 = vpop.f32.mrb[0].mxu0
      %v5900 = vadd.f32 0.0, %v5899
      %v5901 = vpop.f32.mrb[0].mxu0
      %v5902 = vpop.f32.mrb[0].mxu0
      %v5903 = vadd.f32 0.0, %v5902
      %v5904 = vpop.f32.mrb[0].mxu0
      %5905 = vdwg.mxu0
      %v5906 = vadd.f32 %v5645, %v5780
      %v5907 = vadd.f32 %v5646, %v5783
      %v5908 = vadd.f32 %v5647, %v5788
      %v5909 = vadd.f32 %v5648, %v5791
      %v5910 = vadd.f32 %v5649, %v5796
      %v5911 = vadd.f32 %v5650, %v5799
      %v5912 = vadd.f32 %v5651, %v5804
      %v5913 = vadd.f32 %v5652, %v5807
      %v5914 = vadd.f32 %v5653, %v5812
      %v5915 = vadd.f32 %v5654, %v5815
      %v5916 = vadd.f32 %v5655, %v5820
      %v5917 = vadd.f32 %v5656, %v5823
      %v5918 = vadd.f32 %v5657, %v5828
      %v5919 = vadd.f32 %v5658, %v5831
      %v5920 = vadd.f32 %v5659, %v5836
      %v5921 = vadd.f32 %v5660, %v5839
      %v5922 = vadd.f32 %v5661, %v5844
      %v5923 = vadd.f32 %v5662, %v5847
      %v5924 = vadd.f32 %v5663, %v5852
      %v5925 = vadd.f32 %v5664, %v5855
      %v5926 = vadd.f32 %v5665, %v5860
      %v5927 = vadd.f32 %v5666, %v5863
      %v5928 = vadd.f32 %v5667, %v5868
      %v5929 = vadd.f32 %v5668, %v5871
      %v5930 = vadd.f32 %v5669, %v5876
      %v5931 = vadd.f32 %v5670, %v5879
      %v5932 = vadd.f32 %v5671, %v5884
      %v5933 = vadd.f32 %v5672, %v5887
      %v5934 = vadd.f32 %v5673, %v5892
      %v5935 = vadd.f32 %v5674, %v5895
      %v5936 = vadd.f32 %v5675, %v5900
      %v5937 = vadd.f32 %v5676, %v5903
      %v5939 = vlaneseq
      %v5940 = vshrl.u32 %v5939, 7
      %v5941 = vsub.s32 0, %v5940
      %v5942 = vrot.slane %v4953, %v5941
      %v5944 = vmul.f32 %v5906, %v5942
      %v5945 = vmul.f32 %v5907, %v5942
      %v5946 = vmul.f32 %v5908, %v5942
      %v5947 = vmul.f32 %v5909, %v5942
      %v5948 = vmul.f32 %v5910, %v5942
      %v5949 = vmul.f32 %v5911, %v5942
      %v5950 = vmul.f32 %v5912, %v5942
      %v5951 = vmul.f32 %v5913, %v5942
      %v5952 = vmul.f32 %v5914, %v5942
      %v5953 = vmul.f32 %v5915, %v5942
      %v5954 = vmul.f32 %v5916, %v5942
      %v5955 = vmul.f32 %v5917, %v5942
      %v5956 = vmul.f32 %v5918, %v5942
      %v5957 = vmul.f32 %v5919, %v5942
      %v5958 = vmul.f32 %v5920, %v5942
      %v5959 = vmul.f32 %v5921, %v5942
      %v5960 = vmul.f32 %v5922, %v5942
      %v5961 = vmul.f32 %v5923, %v5942
      %v5962 = vmul.f32 %v5924, %v5942
      %v5963 = vmul.f32 %v5925, %v5942
      %v5964 = vmul.f32 %v5926, %v5942
      %v5965 = vmul.f32 %v5927, %v5942
      %v5966 = vmul.f32 %v5928, %v5942
      %v5967 = vmul.f32 %v5929, %v5942
      %v5968 = vmul.f32 %v5930, %v5942
      %v5969 = vmul.f32 %v5931, %v5942
      %v5970 = vmul.f32 %v5932, %v5942
      %v5971 = vmul.f32 %v5933, %v5942
      %v5972 = vmul.f32 %v5934, %v5942
      %v5973 = vmul.f32 %v5935, %v5942
      %v5974 = vmul.f32 %v5936, %v5942
      %v5975 = vmul.f32 %v5937, %v5942
      %v5977 = vlaneseq
      %v5978 = vshrl.u32 %v5977, 7
      %v5979 = vsub.s32 0, %v5978
      %v5980 = vrot.slane %v4954, %v5979
      %v5982 = vadd.f32 %v5944, %v5980
      %v5983 = vadd.f32 %v5945, %v5980
      %v5984 = vadd.f32 %v5946, %v5980
      %v5985 = vadd.f32 %v5947, %v5980
      %v5986 = vadd.f32 %v5948, %v5980
      %v5987 = vadd.f32 %v5949, %v5980
      %v5988 = vadd.f32 %v5950, %v5980
      %v5989 = vadd.f32 %v5951, %v5980
      %v5990 = vadd.f32 %v5952, %v5980
      %v5991 = vadd.f32 %v5953, %v5980
      %v5992 = vadd.f32 %v5954, %v5980
      %v5993 = vadd.f32 %v5955, %v5980
      %v5994 = vadd.f32 %v5956, %v5980
      %v5995 = vadd.f32 %v5957, %v5980
      %v5996 = vadd.f32 %v5958, %v5980
      %v5997 = vadd.f32 %v5959, %v5980
      %v5998 = vadd.f32 %v5960, %v5980
      %v5999 = vadd.f32 %v5961, %v5980
      %v6000 = vadd.f32 %v5962, %v5980
      %v6001 = vadd.f32 %v5963, %v5980
      %v6002 = vadd.f32 %v5964, %v5980
      %v6003 = vadd.f32 %v5965, %v5980
      %v6004 = vadd.f32 %v5966, %v5980
      %v6005 = vadd.f32 %v5967, %v5980
      %v6006 = vadd.f32 %v5968, %v5980
      %v6007 = vadd.f32 %v5969, %v5980
      %v6008 = vadd.f32 %v5970, %v5980
      %v6009 = vadd.f32 %v5971, %v5980
      %v6010 = vadd.f32 %v5972, %v5980
      %v6011 = vadd.f32 %v5973, %v5980
      %v6012 = vadd.f32 %v5974, %v5980
      %v6013 = vadd.f32 %v5975, %v5980
      %v6014 = vxor.u32 %v5982, 2147483648
      %v6015 = vxor.u32 %v5983, 2147483648
      %v6016 = vxor.u32 %v5984, 2147483648
      %v6017 = vxor.u32 %v5985, 2147483648
      %v6018 = vxor.u32 %v5986, 2147483648
      %v6019 = vxor.u32 %v5987, 2147483648
      %v6020 = vxor.u32 %v5988, 2147483648
      %v6021 = vxor.u32 %v5989, 2147483648
      %v6022 = vxor.u32 %v5990, 2147483648
      %v6023 = vxor.u32 %v5991, 2147483648
      %v6024 = vxor.u32 %v5992, 2147483648
      %v6025 = vxor.u32 %v5993, 2147483648
      %v6026 = vxor.u32 %v5994, 2147483648
      %v6027 = vxor.u32 %v5995, 2147483648
      %v6028 = vxor.u32 %v5996, 2147483648
      %v6029 = vxor.u32 %v5997, 2147483648
      %v6030 = vxor.u32 %v5998, 2147483648
      %v6031 = vxor.u32 %v5999, 2147483648
      %v6032 = vxor.u32 %v6000, 2147483648
      %v6033 = vxor.u32 %v6001, 2147483648
      %v6034 = vxor.u32 %v6002, 2147483648
      %v6035 = vxor.u32 %v6003, 2147483648
      %v6036 = vxor.u32 %v6004, 2147483648
      %v6037 = vxor.u32 %v6005, 2147483648
      %v6038 = vxor.u32 %v6006, 2147483648
      %v6039 = vxor.u32 %v6007, 2147483648
      %v6040 = vxor.u32 %v6008, 2147483648
      %v6041 = vxor.u32 %v6009, 2147483648
      %v6042 = vxor.u32 %v6010, 2147483648
      %v6043 = vxor.u32 %v6011, 2147483648
      %v6044 = vxor.u32 %v6012, 2147483648
      %v6045 = vxor.u32 %v6013, 2147483648
      %v6046 = vmul.f32 %v6014, 1.442695
      %v6047 = vpow.pop %v6046
      %v6048 = vmul.f32 %v6015, 1.442695
      %v6049 = vpow.pop %v6048
      %v6050 = vmul.f32 %v6016, 1.442695
      %v6051 = vpow.pop %v6050
      %v6052 = vmul.f32 %v6017, 1.442695
      %v6053 = vpow.pop %v6052
      %v6054 = vmul.f32 %v6018, 1.442695
      %v6055 = vpow.pop %v6054
      %v6056 = vmul.f32 %v6019, 1.442695
      %v6057 = vpow.pop %v6056
      %v6058 = vmul.f32 %v6020, 1.442695
      %v6059 = vpow.pop %v6058
      %v6060 = vmul.f32 %v6021, 1.442695
      %v6061 = vpow.pop %v6060
      %v6062 = vmul.f32 %v6022, 1.442695
      %v6063 = vpow.pop %v6062
      %v6064 = vmul.f32 %v6023, 1.442695
      %v6065 = vpow.pop %v6064
      %v6066 = vmul.f32 %v6024, 1.442695
      %v6067 = vpow.pop %v6066
      %v6068 = vmul.f32 %v6025, 1.442695
      %v6069 = vpow.pop %v6068
      %v6070 = vmul.f32 %v6026, 1.442695
      %v6071 = vpow.pop %v6070
      %v6072 = vmul.f32 %v6027, 1.442695
      %v6073 = vpow.pop %v6072
      %v6074 = vmul.f32 %v6028, 1.442695
      %v6075 = vpow.pop %v6074
      %v6076 = vmul.f32 %v6029, 1.442695
      %v6077 = vpow.pop %v6076
      %v6078 = vmul.f32 %v6030, 1.442695
      %v6079 = vpow.pop %v6078
      %v6080 = vmul.f32 %v6031, 1.442695
      %v6081 = vpow.pop %v6080
      %v6082 = vmul.f32 %v6032, 1.442695
      %v6083 = vpow.pop %v6082
      %v6084 = vmul.f32 %v6033, 1.442695
      %v6085 = vpow.pop %v6084
      %v6086 = vmul.f32 %v6034, 1.442695
      %v6087 = vpow.pop %v6086
      %v6088 = vmul.f32 %v6035, 1.442695
      %v6089 = vpow.pop %v6088
      %v6090 = vmul.f32 %v6036, 1.442695
      %v6091 = vpow.pop %v6090
      %v6092 = vmul.f32 %v6037, 1.442695
      %v6093 = vpow.pop %v6092
      %v6094 = vmul.f32 %v6038, 1.442695
      %v6095 = vpow.pop %v6094
      %v6096 = vmul.f32 %v6039, 1.442695
      %v6097 = vpow.pop %v6096
      %v6098 = vmul.f32 %v6040, 1.442695
      %v6099 = vpow.pop %v6098
      %v6100 = vmul.f32 %v6041, 1.442695
      %v6101 = vpow.pop %v6100
      %v6102 = vmul.f32 %v6042, 1.442695
      %v6103 = vpow.pop %v6102
      %v6104 = vmul.f32 %v6043, 1.442695
      %v6105 = vpow.pop %v6104
      %v6106 = vmul.f32 %v6044, 1.442695
      %v6107 = vpow.pop %v6106
      %v6108 = vmul.f32 %v6045, 1.442695
      %v6109 = vpow.pop %v6108
      %v6110 = vadd.f32 %v6047, 1.0
      %v6111 = vadd.f32 %v6049, 1.0
      %v6112 = vadd.f32 %v6051, 1.0
      %v6113 = vadd.f32 %v6053, 1.0
      %v6114 = vadd.f32 %v6055, 1.0
      %v6115 = vadd.f32 %v6057, 1.0
      %v6116 = vadd.f32 %v6059, 1.0
      %v6117 = vadd.f32 %v6061, 1.0
      %v6118 = vadd.f32 %v6063, 1.0
      %v6119 = vadd.f32 %v6065, 1.0
      %v6120 = vadd.f32 %v6067, 1.0
      %v6121 = vadd.f32 %v6069, 1.0
      %v6122 = vadd.f32 %v6071, 1.0
      %v6123 = vadd.f32 %v6073, 1.0
      %v6124 = vadd.f32 %v6075, 1.0
      %v6125 = vadd.f32 %v6077, 1.0
      %v6126 = vadd.f32 %v6079, 1.0
      %v6127 = vadd.f32 %v6081, 1.0
      %v6128 = vadd.f32 %v6083, 1.0
      %v6129 = vadd.f32 %v6085, 1.0
      %v6130 = vadd.f32 %v6087, 1.0
      %v6131 = vadd.f32 %v6089, 1.0
      %v6132 = vadd.f32 %v6091, 1.0
      %v6133 = vadd.f32 %v6093, 1.0
      %v6134 = vadd.f32 %v6095, 1.0
      %v6135 = vadd.f32 %v6097, 1.0
      %v6136 = vadd.f32 %v6099, 1.0
      %v6137 = vadd.f32 %v6101, 1.0
      %v6138 = vadd.f32 %v6103, 1.0
      %v6139 = vadd.f32 %v6105, 1.0
      %v6140 = vadd.f32 %v6107, 1.0
      %v6141 = vadd.f32 %v6109, 1.0
      %v6142 = vrcp.pop %v6110
      %v6143 = vmul.f32 1.0, %v6142
      %v6144 = vrcp.pop %v6111
      %v6145 = vmul.f32 1.0, %v6144
      %v6146 = vrcp.pop %v6112
      %v6147 = vmul.f32 1.0, %v6146
      %v6148 = vrcp.pop %v6113
      %v6149 = vmul.f32 1.0, %v6148
      %v6150 = vrcp.pop %v6114
      %v6151 = vmul.f32 1.0, %v6150
      %v6152 = vrcp.pop %v6115
      %v6153 = vmul.f32 1.0, %v6152
      %v6154 = vrcp.pop %v6116
      %v6155 = vmul.f32 1.0, %v6154
      %v6156 = vrcp.pop %v6117
      %v6157 = vmul.f32 1.0, %v6156
      %v6158 = vrcp.pop %v6118
      %v6159 = vmul.f32 1.0, %v6158
      %v6160 = vrcp.pop %v6119
      %v6161 = vmul.f32 1.0, %v6160
      %v6162 = vrcp.pop %v6120
      %v6163 = vmul.f32 1.0, %v6162
      %v6164 = vrcp.pop %v6121
      %v6165 = vmul.f32 1.0, %v6164
      %v6166 = vrcp.pop %v6122
      %v6167 = vmul.f32 1.0, %v6166
      %v6168 = vrcp.pop %v6123
      %v6169 = vmul.f32 1.0, %v6168
      %v6170 = vrcp.pop %v6124
      %v6171 = vmul.f32 1.0, %v6170
      %v6172 = vrcp.pop %v6125
      %v6173 = vmul.f32 1.0, %v6172
      %v6174 = vrcp.pop %v6126
      %v6175 = vmul.f32 1.0, %v6174
      %v6176 = vrcp.pop %v6127
      %v6177 = vmul.f32 1.0, %v6176
      %v6178 = vrcp.pop %v6128
      %v6179 = vmul.f32 1.0, %v6178
      %v6180 = vrcp.pop %v6129
      %v6181 = vmul.f32 1.0, %v6180
      %v6182 = vrcp.pop %v6130
      %v6183 = vmul.f32 1.0, %v6182
      %v6184 = vrcp.pop %v6131
      %v6185 = vmul.f32 1.0, %v6184
      %v6186 = vrcp.pop %v6132
      %v6187 = vmul.f32 1.0, %v6186
      %v6188 = vrcp.pop %v6133
      %v6189 = vmul.f32 1.0, %v6188
      %v6190 = vrcp.pop %v6134
      %v6191 = vmul.f32 1.0, %v6190
      %v6192 = vrcp.pop %v6135
      %v6193 = vmul.f32 1.0, %v6192
      %v6194 = vrcp.pop %v6136
      %v6195 = vmul.f32 1.0, %v6194
      %v6196 = vrcp.pop %v6137
      %v6197 = vmul.f32 1.0, %v6196
      %v6198 = vrcp.pop %v6138
      %v6199 = vmul.f32 1.0, %v6198
      %v6200 = vrcp.pop %v6139
      %v6201 = vmul.f32 1.0, %v6200
      %v6202 = vrcp.pop %v6140
      %v6203 = vmul.f32 1.0, %v6202
      %v6204 = vrcp.pop %v6141
      %v6205 = vmul.f32 1.0, %v6204
      %v6206 = vmul.f32 %v5982, %v6143
      %v6207 = vmul.f32 %v5983, %v6145
      %v6208 = vmul.f32 %v5984, %v6147
      %v6209 = vmul.f32 %v5985, %v6149
      %v6210 = vmul.f32 %v5986, %v6151
      %v6211 = vmul.f32 %v5987, %v6153
      %v6212 = vmul.f32 %v5988, %v6155
      %v6213 = vmul.f32 %v5989, %v6157
      %v6214 = vmul.f32 %v5990, %v6159
      %v6215 = vmul.f32 %v5991, %v6161
      %v6216 = vmul.f32 %v5992, %v6163
      %v6217 = vmul.f32 %v5993, %v6165
      %v6218 = vmul.f32 %v5994, %v6167
      %v6219 = vmul.f32 %v5995, %v6169
      %v6220 = vmul.f32 %v5996, %v6171
      %v6221 = vmul.f32 %v5997, %v6173
      %v6222 = vmul.f32 %v5998, %v6175
      %v6223 = vmul.f32 %v5999, %v6177
      %v6224 = vmul.f32 %v6000, %v6179
      %v6225 = vmul.f32 %v6001, %v6181
      %v6226 = vmul.f32 %v6002, %v6183
      %v6227 = vmul.f32 %v6003, %v6185
      %v6228 = vmul.f32 %v6004, %v6187
      %v6229 = vmul.f32 %v6005, %v6189
      %v6230 = vmul.f32 %v6006, %v6191
      %v6231 = vmul.f32 %v6007, %v6193
      %v6232 = vmul.f32 %v6008, %v6195
      %v6233 = vmul.f32 %v6009, %v6197
      %v6234 = vmul.f32 %v6010, %v6199
      %v6235 = vmul.f32 %v6011, %v6201
      %v6236 = vmul.f32 %v6012, %v6203
      %v6237 = vmul.f32 %v6013, %v6205
      %vm6238 = vcmask 64512
      %6239 = vst.msk [vmem:[%s305] sm:$0xff] %vm6238, %v6206
      %6240 = vst.msk [vmem:[%s305 + $0x8] sm:$0xff] %vm6238, %v6207
      %6241 = vst.msk [vmem:[%s305 + $0x10] sm:$0xff] %vm6238, %v6208
      %6242 = vst.msk [vmem:[%s305 + $0x18] sm:$0xff] %vm6238, %v6209
      %6243 = vst.msk [vmem:[%s305 + $0x20] sm:$0xff] %vm6238, %v6210
      %6244 = vst.msk [vmem:[%s305 + $0x28] sm:$0xff] %vm6238, %v6211
      %6245 = vst.msk [vmem:[%s305 + $0x30] sm:$0xff] %vm6238, %v6212
      %6246 = vst.msk [vmem:[%s305 + $0x38] sm:$0xff] %vm6238, %v6213
      %6247 = vst.msk [vmem:[%s305 + $0x40] sm:$0xff] %vm6238, %v6214
      %6248 = vst.msk [vmem:[%s305 + $0x48] sm:$0xff] %vm6238, %v6215
      %6249 = vst.msk [vmem:[%s305 + $0x50] sm:$0xff] %vm6238, %v6216
      %6250 = vst.msk [vmem:[%s305 + $0x58] sm:$0xff] %vm6238, %v6217
      %6251 = vst.msk [vmem:[%s305 + $0x60] sm:$0xff] %vm6238, %v6218
      %6252 = vst.msk [vmem:[%s305 + $0x68] sm:$0xff] %vm6238, %v6219
      %6253 = vst.msk [vmem:[%s305 + $0x70] sm:$0xff] %vm6238, %v6220
      %6254 = vst.msk [vmem:[%s305 + $0x78] sm:$0xff] %vm6238, %v6221
      %6255 = vst.msk [vmem:[%s305 + $0x80] sm:$0xff] %vm6238, %v6222
      %6256 = vst.msk [vmem:[%s305 + $0x88] sm:$0xff] %vm6238, %v6223
      %6257 = vst.msk [vmem:[%s305 + $0x90] sm:$0xff] %vm6238, %v6224
      %6258 = vst.msk [vmem:[%s305 + $0x98] sm:$0xff] %vm6238, %v6225
      %6259 = vst.msk [vmem:[%s305 + $0xa0] sm:$0xff] %vm6238, %v6226
      %6260 = vst.msk [vmem:[%s305 + $0xa8] sm:$0xff] %vm6238, %v6227
      %6261 = vst.msk [vmem:[%s305 + $0xb0] sm:$0xff] %vm6238, %v6228
      %6262 = vst.msk [vmem:[%s305 + $0xb8] sm:$0xff] %vm6238, %v6229
      %6263 = vst.msk [vmem:[%s305 + $0xc0] sm:$0xff] %vm6238, %v6230
      %6264 = vst.msk [vmem:[%s305 + $0xc8] sm:$0xff] %vm6238, %v6231
      %6265 = vst.msk [vmem:[%s305 + $0xd0] sm:$0xff] %vm6238, %v6232
      %6266 = vst.msk [vmem:[%s305 + $0xd8] sm:$0xff] %vm6238, %v6233
      %6267 = vst.msk [vmem:[%s305 + $0xe0] sm:$0xff] %vm6238, %v6234
      %6268 = vst.msk [vmem:[%s305 + $0xe8] sm:$0xff] %vm6238, %v6235
      %6269 = vst.msk [vmem:[%s305 + $0xf0] sm:$0xff] %vm6238, %v6236
      %6270 = vst.msk [vmem:[%s305 + $0xf8] sm:$0xff] %vm6238, %v6237
      %p6271 = scmp.lt.s32.totalorder %s19, 1
      %s6272 = scalar_select %p6271, %s19, 1
      %s6273 = smul.addr %s6272, 32
      %s6274 = smul.addr %s6273, 8
      %s6275 = scalar_lea.vmem %s8, %s6274
      // Predicated region
      $region53: #{tpu_custom_call.1} parent=51 // pred_check
        %p6276 = pneg %p210
      $region54: #{tpu_custom_call.1} parent=51 // pred_check_branch
        %6278 = sbr.rel (%p6276) target = $region56
      $region55: #{tpu_custom_call.1} parent=51 // pred_region
        _
      $region56: #{tpu_custom_call.1} parent=51 // pred_fallthru
        _
    $region52: #{tpu_custom_call.1} parent=5 // pred_fallthru
      _
    %p6279 = scmp.le.s32.totalorder 2, %s14
    // Predicated region
    $region57: #{tpu_custom_call.1} parent=5 // pred_check
      %p6280 = pneg %p6279
    $region58: #{tpu_custom_call.1} parent=5 // pred_check_branch
      %6282 = sbr.rel (%p6280) target = $region60
    $region59: #{tpu_custom_call.1} parent=5 // pred_region
      %s6283 = ssub.s32 %s14, 2
      // Predicated region
      $region61: #{tpu_custom_call.1} parent=59 // pred_check
        %p6284 = pneg %p216
      $region62: #{tpu_custom_call.1} parent=59 // pred_check_branch
        %6286 = sbr.rel (%p6284) target = $region64
      $region63: #{tpu_custom_call.1} parent=59 // pred_region
        %p6287 = scmp.lt.s32.totalorder %s20, 1
        %s6288 = scalar_select %p6287, %s20, 1
        %s6289 = smul.addr %s6288, 32
        %s6290 = smul.addr %s6289, 8
        %s6291 = scalar_lea.vmem %s8, %s6290
      $region64: #{tpu_custom_call.1} parent=59 // pred_fallthru
        _
    $region60: #{tpu_custom_call.1} parent=5 // pred_fallthru
      _
  $region6: #{tpu_custom_call.1} parent=0 // loop_footer
    %s18 = sadd.s32 1, %s14
  $region7: #{tpu_custom_call.1} parent=0 // loop_footer_branch
    %13 = sbr.rel target = $region3
  $region8: #{tpu_custom_call.1} parent=0 // loop_exit
    _

</llo_original>
